<compile_context>
chip_gen: v7x
topology: tpu7x:2x2x1
jax: 0.10.0
libtpu: 0.0.40
codegen_flags: <defaults>
</compile_context>

<pallas_src>
import numpy as np
import jax
import jax.numpy as jnp
from jax import lax
from jax.experimental import pallas as pl
from jax.experimental.pallas import tpu as pltpu

L_TARGET = 2048  # target minor (lane) extent of each kernel matmul / output block


def _make_conv_kernel(taps, n_phases, Wf, L):
    """Builds a kernel computing a 3x3 conv + bias + LeakyReLU(0.1) for one slab.

    taps: list of 9 (phase_index, row_offset, col_offset) tuples (static).
    Each phase ref block is (1, Cin_p, Lin) channels-major; output block is
    (1, Cout, L) channels-major (lane-dense).
    """
    def kernel(*args):
        ph_refs = args[:n_phases]
        w_ref = args[n_phases]        # (9, Cout, Cin_p)
        b_ref = args[n_phases + 1]    # (Cout, 1)
        o_ref = args[n_phases + 2]    # (1, Cout, L)

        acc = None
        for t, (p, dr, dc) in enumerate(taps):
            off = dr * Wf + dc                              # static flat shift
            x_sl = ph_refs[p][0, :, off:off + L]            # (Cin_p, L)
            y = jnp.dot(w_ref[t], x_sl,                     # (Cout, L)
                        preferred_element_type=jnp.float32)
            acc = y if acc is None else acc + y
        acc = acc + b_ref[...]                              # bias (Cout, 1) bcast
        o_ref[0] = jnp.where(acc >= 0, acc, 0.1 * acc).astype(o_ref.dtype)

    return kernel


def conv3x3_leakyrelu(x_nchw, w_hwio, b, stride):
    """3x3 conv, padding=1, given stride, bias, LeakyReLU(0.1). NCHW in/out."""
    N, Cin, H, W = x_nchw.shape
    Cout = w_hwio.shape[-1]
    s = stride
    Hout = (H - 1) // s + 1
    Wout = (W - 1) // s + 1

    # Pad channels up to a multiple of 8 (sublane-friendly); zero-padded weights
    # contribute nothing.
    Cin_p = -(-Cin // 8) * 8
    if Cin_p != Cin:
        x_nchw = jnp.pad(x_nchw, ((0, 0), (0, Cin_p - Cin), (0, 0), (0, 0)))
        w_hwio = jnp.pad(w_hwio, ((0, 0), (0, 0), (0, Cin_p - Cin), (0, 0)))

    xp = jnp.pad(x_nchw, ((0, 0), (0, 0), (1, 1), (1, 1)))   # spatial pad=1
    Hp, Wp = H + 2, W + 2

    if s == 1:
        Hph, Wf, DR = Hp, Wp, 2
        phases = [xp]
        taps = [(0, ky, kx) for ky in range(3) for kx in range(3)]
    else:  # s == 2: split into row/col parity phases so all accesses are unit-stride
        Hph, Wf, DR = -(-Hp // 2), -(-Wp // 2), 1
        phases = []
        for py in range(2):
            for px in range(2):
                ph = xp[:, :, py::2, px::2]
                ph = jnp.pad(ph, ((0, 0), (0, 0),
                                  (0, Hph - ph.shape[2]), (0, Wf - ph.shape[3])))
                phases.append(ph)
        taps = [(2 * (ky % 2) + (kx % 2), ky // 2, kx // 2)
                for ky in range(3) for kx in range(3)]

    # Row-slab tiling: TR output rows per grid step, L = TR*Wf lane-dense columns.
    TR = int(min(max(1, L_TARGET // Wf), Hout))
    NB = -(-Hout // TR)
    R_in = TR + DR + 1            # +1 safety row so the flat tap slices stay in-bounds
    L = TR * Wf
    Lin = R_in * Wf

    # Gather overlapping (halo) row blocks per phase: ~1x bytes (tiny halo dup).
    row_idx = np.minimum(np.arange(NB)[:, None] * TR + np.arange(R_in)[None, :],
                         Hph - 1)
    row_idx = jnp.asarray(row_idx.reshape(-1), dtype=jnp.int32)

    blocks = []
    for ph in phases:
        g = jnp.take(ph, row_idx, axis=2)                   # (N, Cin_p, NB*R_in, Wf)
        g = g.reshape(N, Cin_p, NB, R_in, Wf)
        g = jnp.transpose(g, (0, 2, 1, 3, 4)).reshape(N * NB, Cin_p, Lin)
        blocks.append(g)

    # Per-tap transposed weights: (9, Cout, Cin_p), tap order = 3*ky + kx.
    wt = jnp.transpose(w_hwio, (0, 1, 3, 2)).reshape(9, Cout, Cin_p)
    bt = b.reshape(Cout, 1).astype(jnp.float32)

    kernel = _make_conv_kernel(taps, len(phases), Wf, L)

    in_specs = [pl.BlockSpec((1, Cin_p, Lin), lambda i: (i, 0, 0))
                for _ in range(len(phases))]
    in_specs += [pl.BlockSpec((9, Cout, Cin_p), lambda i: (0, 0, 0)),
                 pl.BlockSpec((Cout, 1), lambda i: (0, 0))]

    out = pl.pallas_call(
        kernel,
        out_shape=jax.ShapeDtypeStruct((N * NB, Cout, L), jnp.float32),
        grid_spec=pltpu.PrefetchScalarGridSpec(
            num_scalar_prefetch=0,
            grid=(N * NB,),
            in_specs=in_specs,
            out_specs=pl.BlockSpec((1, Cout, L), lambda i: (i, 0, 0)),
        ),
        compiler_params=pltpu.CompilerParams(dimension_semantics=("parallel",)),
    )(*blocks, wt, bt)

    # Assemble NCHW: drop junk columns/rows introduced by slab padding.
    y = out.reshape(N, NB, Cout, TR, Wf)[:, :, :, :, :Wout]
    y = jnp.transpose(y, (0, 2, 1, 3, 4)).reshape(N, Cout, NB * TR, Wout)
    return y[:, :, :Hout, :]


class FeatureExtractorPallas:
    """JAX/Pallas port of lib/models/MFDS_model.py::FeatureExtractor (NCHW in/out)."""

    def __init__(self, num_chs, key):
        self.num_chs = num_chs
        self.params = []
        for cin, cout in zip(num_chs[:-1], num_chs[1:]):
            key, k1, k2, k3, k4 = jax.random.split(key, 5)
            # Deterministic synthetic init (PyTorch-default-like uniform fan-in bound).
            s1 = 1.0 / (cin * 9) ** 0.5
            w1 = jax.random.uniform(k1, (3, 3, cin, cout), jnp.float32, -s1, s1)
            b1 = jax.random.uniform(k2, (cout,), jnp.float32, -s1, s1)
            s2 = 1.0 / (cout * 9) ** 0.5
            w2 = jax.random.uniform(k3, (3, 3, cout, cout), jnp.float32, -s2, s2)
            b2 = jax.random.uniform(k4, (cout,), jnp.float32, -s2, s2)
            self.params.append((w1, b1, w2, b2))

    def __call__(self, x_nchw):
        x = x_nchw
        pyramid = []
        for (w1, b1, w2, b2) in self.params:
            x = conv3x3_leakyrelu(x, w1, b1, stride=2)   # conv(stride=2) + LeakyReLU
            x = conv3x3_leakyrelu(x, w2, b2, stride=1)   # conv(stride=1) + LeakyReLU
            pyramid.append(x)
        return pyramid[::-1]                             # coarse-to-fine, like PyTorch


def _ref_conv(x_nchw, w_hwio, b, stride):
    y = lax.conv_general_dilated(
        x_nchw, w_hwio, (stride, stride), ((1, 1), (1, 1)),
        dimension_numbers=("NCHW", "HWIO", "NCHW"))
    y = y + b.reshape(1, -1, 1, 1)
    return jnp.where(y >= 0, y, 0.1 * y)


if __name__ == "__main__":
    key = jax.random.PRNGKey(0)
    kx, kp = jax.random.split(key)

    num_chs = [3, 8, 16, 32]                                 # small pyramid: 3 levels
    x = jax.random.normal(kx, (2, 3, 16, 16), jnp.float32)   # NCHW like PyTorch

    model = FeatureExtractorPallas(num_chs, kp)
    fwd = jax.jit(lambda inp: model(inp))
    pyramid = jax.block_until_ready(fwd(x))

    # Cross-check against XLA's conv to validate the Pallas path.
    xr = x
    ref = []
    for (w1, b1, w2, b2) in model.params:
        xr = _ref_conv(xr, w1, b1, 2)
        xr = _ref_conv(xr, w2, b2, 1)
        ref.append(xr)
    ref = ref[::-1]

    assert len(pyramid) == len(ref)
    for a, r in zip(pyramid, ref):
        assert a.shape == r.shape, (a.shape, r.shape)
        assert jnp.allclose(a, r, atol=1e-4, rtol=1e-4), \
            float(jnp.max(jnp.abs(a - r)))

    print("KERNEL_OK")
</pallas_src>

<mosaic_0001>
module attributes {stable_mosaic.version = 11 : i64} {
  func.func @kernel(%arg0: i32, %arg1: memref<1x8x90xf32, #tpu.memory_space<vmem>>, %arg2: memref<1x8x90xf32, #tpu.memory_space<vmem>>, %arg3: memref<1x8x90xf32, #tpu.memory_space<vmem>>, %arg4: memref<1x8x90xf32, #tpu.memory_space<vmem>>, %arg5: memref<9x8x8xf32, #tpu.memory_space<vmem>>, %arg6: memref<8x1xf32, #tpu.memory_space<vmem>>, %arg7: memref<1x8x72xf32, #tpu.memory_space<vmem>>) attributes {dimension_semantics = [#tpu.dimension_semantics<parallel>], iteration_bounds = array<i64: 2>, scalar_prefetch = 0 : i64, scratch_operands = 0 : i64, tpu.core_type = #tpu.core_type<tc>, window_params = [{transform_indices = @transform_0, window_bounds = array<i64: 1, 8, 90>}, {transform_indices = @transform_1, window_bounds = array<i64: 1, 8, 90>}, {transform_indices = @transform_2, window_bounds = array<i64: 1, 8, 90>}, {transform_indices = @transform_3, window_bounds = array<i64: 1, 8, 90>}, {pipeline_mode = #tpu.pipeline_mode<synchronous>, transform_indices = @transform_4, window_bounds = array<i64: 9, 8, 8>}, {pipeline_mode = #tpu.pipeline_mode<synchronous>, transform_indices = @transform_5, window_bounds = array<i64: 8, 1>}, {transform_indices = @transform_6, window_bounds = array<i64: 1, 8, 72>}]} {
    %c0 = arith.constant 0 : index
    %c0_0 = arith.constant 0 : index
    %c0_1 = arith.constant 0 : index
    %0 = vector.load %arg1[%c0, %c0_0, %c0_1] : memref<1x8x90xf32, #tpu.memory_space<vmem>>, vector<1x8x72xf32>
    %1 = vector.shape_cast %0 : vector<1x8x72xf32> to vector<8x72xf32>
    %c0_2 = arith.constant 0 : index
    %c0_3 = arith.constant 0 : index
    %c0_4 = arith.constant 0 : index
    %2 = vector.load %arg5[%c0_2, %c0_3, %c0_4] : memref<9x8x8xf32, #tpu.memory_space<vmem>>, vector<1x8x8xf32>
    %3 = vector.shape_cast %2 : vector<1x8x8xf32> to vector<8x8xf32>
    %cst = arith.constant dense<0.000000e+00> : vector<8x72xf32>
    %4 = tpu.matmul %3, %1, %cst {dimension_numbers = #tpu.dot_dimension_numbers<[1], [0], [0], [1], [0, 0, 1, 1], [], []>} : vector<8x8xf32>, vector<8x72xf32>, vector<8x72xf32> -> vector<8x72xf32>
    %c0_5 = arith.constant 0 : index
    %c0_6 = arith.constant 0 : index
    %c0_7 = arith.constant 0 : index
    %5 = vector.load %arg2[%c0_5, %c0_6, %c0_7] : memref<1x8x90xf32, #tpu.memory_space<vmem>>, vector<1x8x72xf32>
    %6 = vector.shape_cast %5 : vector<1x8x72xf32> to vector<8x72xf32>
    %c1 = arith.constant 1 : index
    %c0_8 = arith.constant 0 : index
    %c0_9 = arith.constant 0 : index
    %7 = vector.load %arg5[%c1, %c0_8, %c0_9] : memref<9x8x8xf32, #tpu.memory_space<vmem>>, vector<1x8x8xf32>
    %8 = vector.shape_cast %7 : vector<1x8x8xf32> to vector<8x8xf32>
    %cst_10 = arith.constant dense<0.000000e+00> : vector<8x72xf32>
    %9 = tpu.matmul %8, %6, %cst_10 {dimension_numbers = #tpu.dot_dimension_numbers<[1], [0], [0], [1], [0, 0, 1, 1], [], []>} : vector<8x8xf32>, vector<8x72xf32>, vector<8x72xf32> -> vector<8x72xf32>
    %10 = arith.addf %4, %9 : vector<8x72xf32>
    %c0_11 = arith.constant 0 : index
    %c0_12 = arith.constant 0 : index
    %c1_13 = arith.constant 1 : index
    %11 = vector.load %arg1[%c0_11, %c0_12, %c1_13] : memref<1x8x90xf32, #tpu.memory_space<vmem>>, vector<1x8x72xf32>
    %12 = vector.shape_cast %11 : vector<1x8x72xf32> to vector<8x72xf32>
    %c2 = arith.constant 2 : index
    %c0_14 = arith.constant 0 : index
    %c0_15 = arith.constant 0 : index
    %13 = vector.load %arg5[%c2, %c0_14, %c0_15] : memref<9x8x8xf32, #tpu.memory_space<vmem>>, vector<1x8x8xf32>
    %14 = vector.shape_cast %13 : vector<1x8x8xf32> to vector<8x8xf32>
    %cst_16 = arith.constant dense<0.000000e+00> : vector<8x72xf32>
    %15 = tpu.matmul %14, %12, %cst_16 {dimension_numbers = #tpu.dot_dimension_numbers<[1], [0], [0], [1], [0, 0, 1, 1], [], []>} : vector<8x8xf32>, vector<8x72xf32>, vector<8x72xf32> -> vector<8x72xf32>
    %16 = arith.addf %10, %15 : vector<8x72xf32>
    %c0_17 = arith.constant 0 : index
    %c0_18 = arith.constant 0 : index
    %c0_19 = arith.constant 0 : index
    %17 = vector.load %arg3[%c0_17, %c0_18, %c0_19] : memref<1x8x90xf32, #tpu.memory_space<vmem>>, vector<1x8x72xf32>
    %18 = vector.shape_cast %17 : vector<1x8x72xf32> to vector<8x72xf32>
    %c3 = arith.constant 3 : index
    %c0_20 = arith.constant 0 : index
    %c0_21 = arith.constant 0 : index
    %19 = vector.load %arg5[%c3, %c0_20, %c0_21] : memref<9x8x8xf32, #tpu.memory_space<vmem>>, vector<1x8x8xf32>
    %20 = vector.shape_cast %19 : vector<1x8x8xf32> to vector<8x8xf32>
    %cst_22 = arith.constant dense<0.000000e+00> : vector<8x72xf32>
    %21 = tpu.matmul %20, %18, %cst_22 {dimension_numbers = #tpu.dot_dimension_numbers<[1], [0], [0], [1], [0, 0, 1, 1], [], []>} : vector<8x8xf32>, vector<8x72xf32>, vector<8x72xf32> -> vector<8x72xf32>
    %22 = arith.addf %16, %21 : vector<8x72xf32>
    %c0_23 = arith.constant 0 : index
    %c0_24 = arith.constant 0 : index
    %c0_25 = arith.constant 0 : index
    %23 = vector.load %arg4[%c0_23, %c0_24, %c0_25] : memref<1x8x90xf32, #tpu.memory_space<vmem>>, vector<1x8x72xf32>
    %24 = vector.shape_cast %23 : vector<1x8x72xf32> to vector<8x72xf32>
    %c4 = arith.constant 4 : index
    %c0_26 = arith.constant 0 : index
    %c0_27 = arith.constant 0 : index
    %25 = vector.load %arg5[%c4, %c0_26, %c0_27] : memref<9x8x8xf32, #tpu.memory_space<vmem>>, vector<1x8x8xf32>
    %26 = vector.shape_cast %25 : vector<1x8x8xf32> to vector<8x8xf32>
    %cst_28 = arith.constant dense<0.000000e+00> : vector<8x72xf32>
    %27 = tpu.matmul %26, %24, %cst_28 {dimension_numbers = #tpu.dot_dimension_numbers<[1], [0], [0], [1], [0, 0, 1, 1], [], []>} : vector<8x8xf32>, vector<8x72xf32>, vector<8x72xf32> -> vector<8x72xf32>
    %28 = arith.addf %22, %27 : vector<8x72xf32>
    %c0_29 = arith.constant 0 : index
    %c0_30 = arith.constant 0 : index
    %c1_31 = arith.constant 1 : index
    %29 = vector.load %arg3[%c0_29, %c0_30, %c1_31] : memref<1x8x90xf32, #tpu.memory_space<vmem>>, vector<1x8x72xf32>
    %30 = vector.shape_cast %29 : vector<1x8x72xf32> to vector<8x72xf32>
    %c5 = arith.constant 5 : index
    %c0_32 = arith.constant 0 : index
    %c0_33 = arith.constant 0 : index
    %31 = vector.load %arg5[%c5, %c0_32, %c0_33] : memref<9x8x8xf32, #tpu.memory_space<vmem>>, vector<1x8x8xf32>
    %32 = vector.shape_cast %31 : vector<1x8x8xf32> to vector<8x8xf32>
    %cst_34 = arith.constant dense<0.000000e+00> : vector<8x72xf32>
    %33 = tpu.matmul %32, %30, %cst_34 {dimension_numbers = #tpu.dot_dimension_numbers<[1], [0], [0], [1], [0, 0, 1, 1], [], []>} : vector<8x8xf32>, vector<8x72xf32>, vector<8x72xf32> -> vector<8x72xf32>
    %34 = arith.addf %28, %33 : vector<8x72xf32>
    %c0_35 = arith.constant 0 : index
    %c0_36 = arith.constant 0 : index
    %c9 = arith.constant 9 : index
    %35 = vector.load %arg1[%c0_35, %c0_36, %c9] : memref<1x8x90xf32, #tpu.memory_space<vmem>>, vector<1x8x72xf32>
    %36 = vector.shape_cast %35 : vector<1x8x72xf32> to vector<8x72xf32>
    %c6 = arith.constant 6 : index
    %c0_37 = arith.constant 0 : index
    %c0_38 = arith.constant 0 : index
    %37 = vector.load %arg5[%c6, %c0_37, %c0_38] : memref<9x8x8xf32, #tpu.memory_space<vmem>>, vector<1x8x8xf32>
    %38 = vector.shape_cast %37 : vector<1x8x8xf32> to vector<8x8xf32>
    %cst_39 = arith.constant dense<0.000000e+00> : vector<8x72xf32>
    %39 = tpu.matmul %38, %36, %cst_39 {dimension_numbers = #tpu.dot_dimension_numbers<[1], [0], [0], [1], [0, 0, 1, 1], [], []>} : vector<8x8xf32>, vector<8x72xf32>, vector<8x72xf32> -> vector<8x72xf32>
    %40 = arith.addf %34, %39 : vector<8x72xf32>
    %c0_40 = arith.constant 0 : index
    %c0_41 = arith.constant 0 : index
    %c9_42 = arith.constant 9 : index
    %41 = vector.load %arg2[%c0_40, %c0_41, %c9_42] : memref<1x8x90xf32, #tpu.memory_space<vmem>>, vector<1x8x72xf32>
    %42 = vector.shape_cast %41 : vector<1x8x72xf32> to vector<8x72xf32>
    %c7 = arith.constant 7 : index
    %c0_43 = arith.constant 0 : index
    %c0_44 = arith.constant 0 : index
    %43 = vector.load %arg5[%c7, %c0_43, %c0_44] : memref<9x8x8xf32, #tpu.memory_space<vmem>>, vector<1x8x8xf32>
    %44 = vector.shape_cast %43 : vector<1x8x8xf32> to vector<8x8xf32>
    %cst_45 = arith.constant dense<0.000000e+00> : vector<8x72xf32>
    %45 = tpu.matmul %44, %42, %cst_45 {dimension_numbers = #tpu.dot_dimension_numbers<[1], [0], [0], [1], [0, 0, 1, 1], [], []>} : vector<8x8xf32>, vector<8x72xf32>, vector<8x72xf32> -> vector<8x72xf32>
    %46 = arith.addf %40, %45 : vector<8x72xf32>
    %c0_46 = arith.constant 0 : index
    %c0_47 = arith.constant 0 : index
    %c10 = arith.constant 10 : index
    %47 = vector.load %arg1[%c0_46, %c0_47, %c10] : memref<1x8x90xf32, #tpu.memory_space<vmem>>, vector<1x8x72xf32>
    %48 = vector.shape_cast %47 : vector<1x8x72xf32> to vector<8x72xf32>
    %c8 = arith.constant 8 : index
    %c0_48 = arith.constant 0 : index
    %c0_49 = arith.constant 0 : index
    %49 = vector.load %arg5[%c8, %c0_48, %c0_49] : memref<9x8x8xf32, #tpu.memory_space<vmem>>, vector<1x8x8xf32>
    %50 = vector.shape_cast %49 : vector<1x8x8xf32> to vector<8x8xf32>
    %cst_50 = arith.constant dense<0.000000e+00> : vector<8x72xf32>
    %51 = tpu.matmul %50, %48, %cst_50 {dimension_numbers = #tpu.dot_dimension_numbers<[1], [0], [0], [1], [0, 0, 1, 1], [], []>} : vector<8x8xf32>, vector<8x72xf32>, vector<8x72xf32> -> vector<8x72xf32>
    %52 = arith.addf %46, %51 : vector<8x72xf32>
    %c0_51 = arith.constant 0 : index
    %c0_52 = arith.constant 0 : index
    %53 = vector.load %arg6[%c0_51, %c0_52] : memref<8x1xf32, #tpu.memory_space<vmem>>, vector<8x1xf32>
    %54 = vector.broadcast %53 : vector<8x1xf32> to vector<8x72xf32>
    %55 = arith.addf %52, %54 : vector<8x72xf32>
    %cst_53 = arith.constant 0.000000e+00 : f32
    %56 = vector.broadcast %cst_53 : f32 to vector<8x72xf32>
    %57 = arith.cmpf oge, %55, %56 : vector<8x72xf32>
    %cst_54 = arith.constant 1.000000e-01 : f32
    %58 = vector.broadcast %cst_54 : f32 to vector<8x72xf32>
    %59 = arith.mulf %58, %55 : vector<8x72xf32>
    %60 = arith.select %57, %55, %59 : vector<8x72xi1>, vector<8x72xf32>
    %c0_55 = arith.constant 0 : index
    %c0_56 = arith.constant 0 : index
    %c0_57 = arith.constant 0 : index
    %61 = vector.load %arg7[%c0_55, %c0_56, %c0_57] : memref<1x8x72xf32, #tpu.memory_space<vmem>>, vector<1x8x72xf32>
    %62 = vector.shape_cast %61 : vector<1x8x72xf32> to vector<8x72xf32>
    %63 = vector.shape_cast %60 : vector<8x72xf32> to vector<1x8x72xf32>
    tpu.vector_store %arg7[%c0_55, %c0_56, %c0_57], %63 {strides = array<i32>} : memref<1x8x72xf32, #tpu.memory_space<vmem>>, vector<1x8x72xf32>,
    return
  }
  func.func @transform_0(%arg0: i32) -> (i32, i32, i32) {
    %c0_i32 = arith.constant 0 : i32
    %c0_i32_0 = arith.constant 0 : i32
    %c0_i32_1 = arith.constant 0 : i32
    return %arg0, %c0_i32, %c0_i32_0 : i32, i32, i32
  }
  func.func @transform_1(%arg0: i32) -> (i32, i32, i32) {
    %c0_i32 = arith.constant 0 : i32
    %c0_i32_0 = arith.constant 0 : i32
    %c0_i32_1 = arith.constant 0 : i32
    return %arg0, %c0_i32, %c0_i32_0 : i32, i32, i32
  }
  func.func @transform_2(%arg0: i32) -> (i32, i32, i32) {
    %c0_i32 = arith.constant 0 : i32
    %c0_i32_0 = arith.constant 0 : i32
    %c0_i32_1 = arith.constant 0 : i32
    return %arg0, %c0_i32, %c0_i32_0 : i32, i32, i32
  }
  func.func @transform_3(%arg0: i32) -> (i32, i32, i32) {
    %c0_i32 = arith.constant 0 : i32
    %c0_i32_0 = arith.constant 0 : i32
    %c0_i32_1 = arith.constant 0 : i32
    return %arg0, %c0_i32, %c0_i32_0 : i32, i32, i32
  }
  func.func @transform_4(%arg0: i32) -> (i32, i32, i32) {
    %c0_i32 = arith.constant 0 : i32
    %c0_i32_0 = arith.constant 0 : i32
    %c0_i32_1 = arith.constant 0 : i32
    %c0_i32_2 = arith.constant 0 : i32
    return %c0_i32, %c0_i32_0, %c0_i32_1 : i32, i32, i32
  }
  func.func @transform_5(%arg0: i32) -> (i32, i32) {
    %c0_i32 = arith.constant 0 : i32
    %c0_i32_0 = arith.constant 0 : i32
    %c0_i32_1 = arith.constant 0 : i32
    return %c0_i32, %c0_i32_0 : i32, i32
  }
  func.func @transform_6(%arg0: i32) -> (i32, i32, i32) {
    %c0_i32 = arith.constant 0 : i32
    %c0_i32_0 = arith.constant 0 : i32
    %c0_i32_1 = arith.constant 0 : i32
    return %arg0, %c0_i32, %c0_i32_0 : i32, i32, i32
  }
}

module attributes {stable_mosaic.version = 11 : i64} {
  func.func @kernel(%arg0: i32, %arg1: memref<1x8x110xf32, #tpu.memory_space<vmem>>, %arg2: memref<9x8x8xf32, #tpu.memory_space<vmem>>, %arg3: memref<8x1xf32, #tpu.memory_space<vmem>>, %arg4: memref<1x8x80xf32, #tpu.memory_space<vmem>>) attributes {dimension_semantics = [#tpu.dimension_semantics<parallel>], iteration_bounds = array<i64: 2>, scalar_prefetch = 0 : i64, scratch_operands = 0 : i64, tpu.core_type = #tpu.core_type<tc>, window_params = [{transform_indices = @transform_0, window_bounds = array<i64: 1, 8, 110>}, {pipeline_mode = #tpu.pipeline_mode<synchronous>, transform_indices = @transform_1, window_bounds = array<i64: 9, 8, 8>}, {pipeline_mode = #tpu.pipeline_mode<synchronous>, transform_indices = @transform_2, window_bounds = array<i64: 8, 1>}, {transform_indices = @transform_3, window_bounds = array<i64: 1, 8, 80>}]} {
    %c0 = arith.constant 0 : index
    %c0_0 = arith.constant 0 : index
    %c0_1 = arith.constant 0 : index
    %0 = vector.load %arg1[%c0, %c0_0, %c0_1] : memref<1x8x110xf32, #tpu.memory_space<vmem>>, vector<1x8x80xf32>
    %1 = vector.shape_cast %0 : vector<1x8x80xf32> to vector<8x80xf32>
    %c0_2 = arith.constant 0 : index
    %c0_3 = arith.constant 0 : index
    %c0_4 = arith.constant 0 : index
    %2 = vector.load %arg2[%c0_2, %c0_3, %c0_4] : memref<9x8x8xf32, #tpu.memory_space<vmem>>, vector<1x8x8xf32>
    %3 = vector.shape_cast %2 : vector<1x8x8xf32> to vector<8x8xf32>
    %cst = arith.constant dense<0.000000e+00> : vector<8x80xf32>
    %4 = tpu.matmul %3, %1, %cst {dimension_numbers = #tpu.dot_dimension_numbers<[1], [0], [0], [1], [0, 0, 1, 1], [], []>} : vector<8x8xf32>, vector<8x80xf32>, vector<8x80xf32> -> vector<8x80xf32>
    %c0_5 = arith.constant 0 : index
    %c0_6 = arith.constant 0 : index
    %c1 = arith.constant 1 : index
    %5 = vector.load %arg1[%c0_5, %c0_6, %c1] : memref<1x8x110xf32, #tpu.memory_space<vmem>>, vector<1x8x80xf32>
    %6 = vector.shape_cast %5 : vector<1x8x80xf32> to vector<8x80xf32>
    %c1_7 = arith.constant 1 : index
    %c0_8 = arith.constant 0 : index
    %c0_9 = arith.constant 0 : index
    %7 = vector.load %arg2[%c1_7, %c0_8, %c0_9] : memref<9x8x8xf32, #tpu.memory_space<vmem>>, vector<1x8x8xf32>
    %8 = vector.shape_cast %7 : vector<1x8x8xf32> to vector<8x8xf32>
    %cst_10 = arith.constant dense<0.000000e+00> : vector<8x80xf32>
    %9 = tpu.matmul %8, %6, %cst_10 {dimension_numbers = #tpu.dot_dimension_numbers<[1], [0], [0], [1], [0, 0, 1, 1], [], []>} : vector<8x8xf32>, vector<8x80xf32>, vector<8x80xf32> -> vector<8x80xf32>
    %10 = arith.addf %4, %9 : vector<8x80xf32>
    %c0_11 = arith.constant 0 : index
    %c0_12 = arith.constant 0 : index
    %c2 = arith.constant 2 : index
    %11 = vector.load %arg1[%c0_11, %c0_12, %c2] : memref<1x8x110xf32, #tpu.memory_space<vmem>>, vector<1x8x80xf32>
    %12 = vector.shape_cast %11 : vector<1x8x80xf32> to vector<8x80xf32>
    %c2_13 = arith.constant 2 : index
    %c0_14 = arith.constant 0 : index
    %c0_15 = arith.constant 0 : index
    %13 = vector.load %arg2[%c2_13, %c0_14, %c0_15] : memref<9x8x8xf32, #tpu.memory_space<vmem>>, vector<1x8x8xf32>
    %14 = vector.shape_cast %13 : vector<1x8x8xf32> to vector<8x8xf32>
    %cst_16 = arith.constant dense<0.000000e+00> : vector<8x80xf32>
    %15 = tpu.matmul %14, %12, %cst_16 {dimension_numbers = #tpu.dot_dimension_numbers<[1], [0], [0], [1], [0, 0, 1, 1], [], []>} : vector<8x8xf32>, vector<8x80xf32>, vector<8x80xf32> -> vector<8x80xf32>
    %16 = arith.addf %10, %15 : vector<8x80xf32>
    %c0_17 = arith.constant 0 : index
    %c0_18 = arith.constant 0 : index
    %c10 = arith.constant 10 : index
    %17 = vector.load %arg1[%c0_17, %c0_18, %c10] : memref<1x8x110xf32, #tpu.memory_space<vmem>>, vector<1x8x80xf32>
    %18 = vector.shape_cast %17 : vector<1x8x80xf32> to vector<8x80xf32>
    %c3 = arith.constant 3 : index
    %c0_19 = arith.constant 0 : index
    %c0_20 = arith.constant 0 : index
    %19 = vector.load %arg2[%c3, %c0_19, %c0_20] : memref<9x8x8xf32, #tpu.memory_space<vmem>>, vector<1x8x8xf32>
    %20 = vector.shape_cast %19 : vector<1x8x8xf32> to vector<8x8xf32>
    %cst_21 = arith.constant dense<0.000000e+00> : vector<8x80xf32>
    %21 = tpu.matmul %20, %18, %cst_21 {dimension_numbers = #tpu.dot_dimension_numbers<[1], [0], [0], [1], [0, 0, 1, 1], [], []>} : vector<8x8xf32>, vector<8x80xf32>, vector<8x80xf32> -> vector<8x80xf32>
    %22 = arith.addf %16, %21 : vector<8x80xf32>
    %c0_22 = arith.constant 0 : index
    %c0_23 = arith.constant 0 : index
    %c11 = arith.constant 11 : index
    %23 = vector.load %arg1[%c0_22, %c0_23, %c11] : memref<1x8x110xf32, #tpu.memory_space<vmem>>, vector<1x8x80xf32>
    %24 = vector.shape_cast %23 : vector<1x8x80xf32> to vector<8x80xf32>
    %c4 = arith.constant 4 : index
    %c0_24 = arith.constant 0 : index
    %c0_25 = arith.constant 0 : index
    %25 = vector.load %arg2[%c4, %c0_24, %c0_25] : memref<9x8x8xf32, #tpu.memory_space<vmem>>, vector<1x8x8xf32>
    %26 = vector.shape_cast %25 : vector<1x8x8xf32> to vector<8x8xf32>
    %cst_26 = arith.constant dense<0.000000e+00> : vector<8x80xf32>
    %27 = tpu.matmul %26, %24, %cst_26 {dimension_numbers = #tpu.dot_dimension_numbers<[1], [0], [0], [1], [0, 0, 1, 1], [], []>} : vector<8x8xf32>, vector<8x80xf32>, vector<8x80xf32> -> vector<8x80xf32>
    %28 = arith.addf %22, %27 : vector<8x80xf32>
    %c0_27 = arith.constant 0 : index
    %c0_28 = arith.constant 0 : index
    %c12 = arith.constant 12 : index
    %29 = vector.load %arg1[%c0_27, %c0_28, %c12] : memref<1x8x110xf32, #tpu.memory_space<vmem>>, vector<1x8x80xf32>
    %30 = vector.shape_cast %29 : vector<1x8x80xf32> to vector<8x80xf32>
    %c5 = arith.constant 5 : index
    %c0_29 = arith.constant 0 : index
    %c0_30 = arith.constant 0 : index
    %31 = vector.load %arg2[%c5, %c0_29, %c0_30] : memref<9x8x8xf32, #tpu.memory_space<vmem>>, vector<1x8x8xf32>
    %32 = vector.shape_cast %31 : vector<1x8x8xf32> to vector<8x8xf32>
    %cst_31 = arith.constant dense<0.000000e+00> : vector<8x80xf32>
    %33 = tpu.matmul %32, %30, %cst_31 {dimension_numbers = #tpu.dot_dimension_numbers<[1], [0], [0], [1], [0, 0, 1, 1], [], []>} : vector<8x8xf32>, vector<8x80xf32>, vector<8x80xf32> -> vector<8x80xf32>
    %34 = arith.addf %28, %33 : vector<8x80xf32>
    %c0_32 = arith.constant 0 : index
    %c0_33 = arith.constant 0 : index
    %c20 = arith.constant 20 : index
    %35 = vector.load %arg1[%c0_32, %c0_33, %c20] : memref<1x8x110xf32, #tpu.memory_space<vmem>>, vector<1x8x80xf32>
    %36 = vector.shape_cast %35 : vector<1x8x80xf32> to vector<8x80xf32>
    %c6 = arith.constant 6 : index
    %c0_34 = arith.constant 0 : index
    %c0_35 = arith.constant 0 : index
    %37 = vector.load %arg2[%c6, %c0_34, %c0_35] : memref<9x8x8xf32, #tpu.memory_space<vmem>>, vector<1x8x8xf32>
    %38 = vector.shape_cast %37 : vector<1x8x8xf32> to vector<8x8xf32>
    %cst_36 = arith.constant dense<0.000000e+00> : vector<8x80xf32>
    %39 = tpu.matmul %38, %36, %cst_36 {dimension_numbers = #tpu.dot_dimension_numbers<[1], [0], [0], [1], [0, 0, 1, 1], [], []>} : vector<8x8xf32>, vector<8x80xf32>, vector<8x80xf32> -> vector<8x80xf32>
    %40 = arith.addf %34, %39 : vector<8x80xf32>
    %c0_37 = arith.constant 0 : index
    %c0_38 = arith.constant 0 : index
    %c21 = arith.constant 21 : index
    %41 = vector.load %arg1[%c0_37, %c0_38, %c21] : memref<1x8x110xf32, #tpu.memory_space<vmem>>, vector<1x8x80xf32>
    %42 = vector.shape_cast %41 : vector<1x8x80xf32> to vector<8x80xf32>
    %c7 = arith.constant 7 : index
    %c0_39 = arith.constant 0 : index
    %c0_40 = arith.constant 0 : index
    %43 = vector.load %arg2[%c7, %c0_39, %c0_40] : memref<9x8x8xf32, #tpu.memory_space<vmem>>, vector<1x8x8xf32>
    %44 = vector.shape_cast %43 : vector<1x8x8xf32> to vector<8x8xf32>
    %cst_41 = arith.constant dense<0.000000e+00> : vector<8x80xf32>
    %45 = tpu.matmul %44, %42, %cst_41 {dimension_numbers = #tpu.dot_dimension_numbers<[1], [0], [0], [1], [0, 0, 1, 1], [], []>} : vector<8x8xf32>, vector<8x80xf32>, vector<8x80xf32> -> vector<8x80xf32>
    %46 = arith.addf %40, %45 : vector<8x80xf32>
    %c0_42 = arith.constant 0 : index
    %c0_43 = arith.constant 0 : index
    %c22 = arith.constant 22 : index
    %47 = vector.load %arg1[%c0_42, %c0_43, %c22] : memref<1x8x110xf32, #tpu.memory_space<vmem>>, vector<1x8x80xf32>
    %48 = vector.shape_cast %47 : vector<1x8x80xf32> to vector<8x80xf32>
    %c8 = arith.constant 8 : index
    %c0_44 = arith.constant 0 : index
    %c0_45 = arith.constant 0 : index
    %49 = vector.load %arg2[%c8, %c0_44, %c0_45] : memref<9x8x8xf32, #tpu.memory_space<vmem>>, vector<1x8x8xf32>
    %50 = vector.shape_cast %49 : vector<1x8x8xf32> to vector<8x8xf32>
    %cst_46 = arith.constant dense<0.000000e+00> : vector<8x80xf32>
    %51 = tpu.matmul %50, %48, %cst_46 {dimension_numbers = #tpu.dot_dimension_numbers<[1], [0], [0], [1], [0, 0, 1, 1], [], []>} : vector<8x8xf32>, vector<8x80xf32>, vector<8x80xf32> -> vector<8x80xf32>
    %52 = arith.addf %46, %51 : vector<8x80xf32>
    %c0_47 = arith.constant 0 : index
    %c0_48 = arith.constant 0 : index
    %53 = vector.load %arg3[%c0_47, %c0_48] : memref<8x1xf32, #tpu.memory_space<vmem>>, vector<8x1xf32>
    %54 = vector.broadcast %53 : vector<8x1xf32> to vector<8x80xf32>
    %55 = arith.addf %52, %54 : vector<8x80xf32>
    %cst_49 = arith.constant 0.000000e+00 : f32
    %56 = vector.broadcast %cst_49 : f32 to vector<8x80xf32>
    %57 = arith.cmpf oge, %55, %56 : vector<8x80xf32>
    %cst_50 = arith.constant 1.000000e-01 : f32
    %58 = vector.broadcast %cst_50 : f32 to vector<8x80xf32>
    %59 = arith.mulf %58, %55 : vector<8x80xf32>
    %60 = arith.select %57, %55, %59 : vector<8x80xi1>, vector<8x80xf32>
    %c0_51 = arith.constant 0 : index
    %c0_52 = arith.constant 0 : index
    %c0_53 = arith.constant 0 : index
    %61 = vector.load %arg4[%c0_51, %c0_52, %c0_53] : memref<1x8x80xf32, #tpu.memory_space<vmem>>, vector<1x8x80xf32>
    %62 = vector.shape_cast %61 : vector<1x8x80xf32> to vector<8x80xf32>
    %63 = vector.shape_cast %60 : vector<8x80xf32> to vector<1x8x80xf32>
    tpu.vector_store %arg4[%c0_51, %c0_52, %c0_53], %63 {strides = array<i32>} : memref<1x8x80xf32, #tpu.memory_space<vmem>>, vector<1x8x80xf32>,
    return
  }
  func.func @transform_0(%arg0: i32) -> (i32, i32, i32) {
    %c0_i32 = arith.constant 0 : i32
    %c0_i32_0 = arith.constant 0 : i32
    %c0_i32_1 = arith.constant 0 : i32
    return %arg0, %c0_i32, %c0_i32_0 : i32, i32, i32
  }
  func.func @transform_1(%arg0: i32) -> (i32, i32, i32) {
    %c0_i32 = arith.constant 0 : i32
    %c0_i32_0 = arith.constant 0 : i32
    %c0_i32_1 = arith.constant 0 : i32
    %c0_i32_2 = arith.constant 0 : i32
    return %c0_i32, %c0_i32_0, %c0_i32_1 : i32, i32, i32
  }
  func.func @transform_2(%arg0: i32) -> (i32, i32) {
    %c0_i32 = arith.constant 0 : i32
    %c0_i32_0 = arith.constant 0 : i32
    %c0_i32_1 = arith.constant 0 : i32
    return %c0_i32, %c0_i32_0 : i32, i32
  }
  func.func @transform_3(%arg0: i32) -> (i32, i32, i32) {
    %c0_i32 = arith.constant 0 : i32
    %c0_i32_0 = arith.constant 0 : i32
    %c0_i32_1 = arith.constant 0 : i32
    return %arg0, %c0_i32, %c0_i32_0 : i32, i32, i32
  }
}

module attributes {stable_mosaic.version = 11 : i64} {
  func.func @kernel(%arg0: i32, %arg1: memref<1x8x30xf32, #tpu.memory_space<vmem>>, %arg2: memref<1x8x30xf32, #tpu.memory_space<vmem>>, %arg3: memref<1x8x30xf32, #tpu.memory_space<vmem>>, %arg4: memref<1x8x30xf32, #tpu.memory_space<vmem>>, %arg5: memref<9x16x8xf32, #tpu.memory_space<vmem>>, %arg6: memref<16x1xf32, #tpu.memory_space<vmem>>, %arg7: memref<1x16x20xf32, #tpu.memory_space<vmem>>) attributes {dimension_semantics = [#tpu.dimension_semantics<parallel>], iteration_bounds = array<i64: 2>, scalar_prefetch = 0 : i64, scratch_operands = 0 : i64, tpu.core_type = #tpu.core_type<tc>, window_params = [{transform_indices = @transform_0, window_bounds = array<i64: 1, 8, 30>}, {transform_indices = @transform_1, window_bounds = array<i64: 1, 8, 30>}, {transform_indices = @transform_2, window_bounds = array<i64: 1, 8, 30>}, {transform_indices = @transform_3, window_bounds = array<i64: 1, 8, 30>}, {pipeline_mode = #tpu.pipeline_mode<synchronous>, transform_indices = @transform_4, window_bounds = array<i64: 9, 16, 8>}, {pipeline_mode = #tpu.pipeline_mode<synchronous>, transform_indices = @transform_5, window_bounds = array<i64: 16, 1>}, {transform_indices = @transform_6, window_bounds = array<i64: 1, 16, 20>}]} {
    %c0 = arith.constant 0 : index
    %c0_0 = arith.constant 0 : index
    %c0_1 = arith.constant 0 : index
    %0 = vector.load %arg1[%c0, %c0_0, %c0_1] : memref<1x8x30xf32, #tpu.memory_space<vmem>>, vector<1x8x20xf32>
    %1 = vector.shape_cast %0 : vector<1x8x20xf32> to vector<8x20xf32>
    %c0_2 = arith.constant 0 : index
    %c0_3 = arith.constant 0 : index
    %c0_4 = arith.constant 0 : index
    %2 = vector.load %arg5[%c0_2, %c0_3, %c0_4] : memref<9x16x8xf32, #tpu.memory_space<vmem>>, vector<1x16x8xf32>
    %3 = vector.shape_cast %2 : vector<1x16x8xf32> to vector<16x8xf32>
    %cst = arith.constant dense<0.000000e+00> : vector<16x20xf32>
    %4 = tpu.matmul %3, %1, %cst {dimension_numbers = #tpu.dot_dimension_numbers<[1], [0], [0], [1], [0, 0, 1, 1], [], []>} : vector<16x8xf32>, vector<8x20xf32>, vector<16x20xf32> -> vector<16x20xf32>
    %c0_5 = arith.constant 0 : index
    %c0_6 = arith.constant 0 : index
    %c0_7 = arith.constant 0 : index
    %5 = vector.load %arg2[%c0_5, %c0_6, %c0_7] : memref<1x8x30xf32, #tpu.memory_space<vmem>>, vector<1x8x20xf32>
    %6 = vector.shape_cast %5 : vector<1x8x20xf32> to vector<8x20xf32>
    %c1 = arith.constant 1 : index
    %c0_8 = arith.constant 0 : index
    %c0_9 = arith.constant 0 : index
    %7 = vector.load %arg5[%c1, %c0_8, %c0_9] : memref<9x16x8xf32, #tpu.memory_space<vmem>>, vector<1x16x8xf32>
    %8 = vector.shape_cast %7 : vector<1x16x8xf32> to vector<16x8xf32>
    %cst_10 = arith.constant dense<0.000000e+00> : vector<16x20xf32>
    %9 = tpu.matmul %8, %6, %cst_10 {dimension_numbers = #tpu.dot_dimension_numbers<[1], [0], [0], [1], [0, 0, 1, 1], [], []>} : vector<16x8xf32>, vector<8x20xf32>, vector<16x20xf32> -> vector<16x20xf32>
    %10 = arith.addf %4, %9 : vector<16x20xf32>
    %c0_11 = arith.constant 0 : index
    %c0_12 = arith.constant 0 : index
    %c1_13 = arith.constant 1 : index
    %11 = vector.load %arg1[%c0_11, %c0_12, %c1_13] : memref<1x8x30xf32, #tpu.memory_space<vmem>>, vector<1x8x20xf32>
    %12 = vector.shape_cast %11 : vector<1x8x20xf32> to vector<8x20xf32>
    %c2 = arith.constant 2 : index
    %c0_14 = arith.constant 0 : index
    %c0_15 = arith.constant 0 : index
    %13 = vector.load %arg5[%c2, %c0_14, %c0_15] : memref<9x16x8xf32, #tpu.memory_space<vmem>>, vector<1x16x8xf32>
    %14 = vector.shape_cast %13 : vector<1x16x8xf32> to vector<16x8xf32>
    %cst_16 = arith.constant dense<0.000000e+00> : vector<16x20xf32>
    %15 = tpu.matmul %14, %12, %cst_16 {dimension_numbers = #tpu.dot_dimension_numbers<[1], [0], [0], [1], [0, 0, 1, 1], [], []>} : vector<16x8xf32>, vector<8x20xf32>, vector<16x20xf32> -> vector<16x20xf32>
    %16 = arith.addf %10, %15 : vector<16x20xf32>
    %c0_17 = arith.constant 0 : index
    %c0_18 = arith.constant 0 : index
    %c0_19 = arith.constant 0 : index
    %17 = vector.load %arg3[%c0_17, %c0_18, %c0_19] : memref<1x8x30xf32, #tpu.memory_space<vmem>>, vector<1x8x20xf32>
    %18 = vector.shape_cast %17 : vector<1x8x20xf32> to vector<8x20xf32>
    %c3 = arith.constant 3 : index
    %c0_20 = arith.constant 0 : index
    %c0_21 = arith.constant 0 : index
    %19 = vector.load %arg5[%c3, %c0_20, %c0_21] : memref<9x16x8xf32, #tpu.memory_space<vmem>>, vector<1x16x8xf32>
    %20 = vector.shape_cast %19 : vector<1x16x8xf32> to vector<16x8xf32>
    %cst_22 = arith.constant dense<0.000000e+00> : vector<16x20xf32>
    %21 = tpu.matmul %20, %18, %cst_22 {dimension_numbers = #tpu.dot_dimension_numbers<[1], [0], [0], [1], [0, 0, 1, 1], [], []>} : vector<16x8xf32>, vector<8x20xf32>, vector<16x20xf32> -> vector<16x20xf32>
    %22 = arith.addf %16, %21 : vector<16x20xf32>
    %c0_23 = arith.constant 0 : index
    %c0_24 = arith.constant 0 : index
    %c0_25 = arith.constant 0 : index
    %23 = vector.load %arg4[%c0_23, %c0_24, %c0_25] : memref<1x8x30xf32, #tpu.memory_space<vmem>>, vector<1x8x20xf32>
    %24 = vector.shape_cast %23 : vector<1x8x20xf32> to vector<8x20xf32>
    %c4 = arith.constant 4 : index
    %c0_26 = arith.constant 0 : index
    %c0_27 = arith.constant 0 : index
    %25 = vector.load %arg5[%c4, %c0_26, %c0_27] : memref<9x16x8xf32, #tpu.memory_space<vmem>>, vector<1x16x8xf32>
    %26 = vector.shape_cast %25 : vector<1x16x8xf32> to vector<16x8xf32>
    %cst_28 = arith.constant dense<0.000000e+00> : vector<16x20xf32>
    %27 = tpu.matmul %26, %24, %cst_28 {dimension_numbers = #tpu.dot_dimension_numbers<[1], [0], [0], [1], [0, 0, 1, 1], [], []>} : vector<16x8xf32>, vector<8x20xf32>, vector<16x20xf32> -> vector<16x20xf32>
    %28 = arith.addf %22, %27 : vector<16x20xf32>
    %c0_29 = arith.constant 0 : index
    %c0_30 = arith.constant 0 : index
    %c1_31 = arith.constant 1 : index
    %29 = vector.load %arg3[%c0_29, %c0_30, %c1_31] : memref<1x8x30xf32, #tpu.memory_space<vmem>>, vector<1x8x20xf32>
    %30 = vector.shape_cast %29 : vector<1x8x20xf32> to vector<8x20xf32>
    %c5 = arith.constant 5 : index
    %c0_32 = arith.constant 0 : index
    %c0_33 = arith.constant 0 : index
    %31 = vector.load %arg5[%c5, %c0_32, %c0_33] : memref<9x16x8xf32, #tpu.memory_space<vmem>>, vector<1x16x8xf32>
    %32 = vector.shape_cast %31 : vector<1x16x8xf32> to vector<16x8xf32>
    %cst_34 = arith.constant dense<0.000000e+00> : vector<16x20xf32>
    %33 = tpu.matmul %32, %30, %cst_34 {dimension_numbers = #tpu.dot_dimension_numbers<[1], [0], [0], [1], [0, 0, 1, 1], [], []>} : vector<16x8xf32>, vector<8x20xf32>, vector<16x20xf32> -> vector<16x20xf32>
    %34 = arith.addf %28, %33 : vector<16x20xf32>
    %c0_35 = arith.constant 0 : index
    %c0_36 = arith.constant 0 : index
    %c5_37 = arith.constant 5 : index
    %35 = vector.load %arg1[%c0_35, %c0_36, %c5_37] : memref<1x8x30xf32, #tpu.memory_space<vmem>>, vector<1x8x20xf32>
    %36 = vector.shape_cast %35 : vector<1x8x20xf32> to vector<8x20xf32>
    %c6 = arith.constant 6 : index
    %c0_38 = arith.constant 0 : index
    %c0_39 = arith.constant 0 : index
    %37 = vector.load %arg5[%c6, %c0_38, %c0_39] : memref<9x16x8xf32, #tpu.memory_space<vmem>>, vector<1x16x8xf32>
    %38 = vector.shape_cast %37 : vector<1x16x8xf32> to vector<16x8xf32>
    %cst_40 = arith.constant dense<0.000000e+00> : vector<16x20xf32>
    %39 = tpu.matmul %38, %36, %cst_40 {dimension_numbers = #tpu.dot_dimension_numbers<[1], [0], [0], [1], [0, 0, 1, 1], [], []>} : vector<16x8xf32>, vector<8x20xf32>, vector<16x20xf32> -> vector<16x20xf32>
    %40 = arith.addf %34, %39 : vector<16x20xf32>
    %c0_41 = arith.constant 0 : index
    %c0_42 = arith.constant 0 : index
    %c5_43 = arith.constant 5 : index
    %41 = vector.load %arg2[%c0_41, %c0_42, %c5_43] : memref<1x8x30xf32, #tpu.memory_space<vmem>>, vector<1x8x20xf32>
    %42 = vector.shape_cast %41 : vector<1x8x20xf32> to vector<8x20xf32>
    %c7 = arith.constant 7 : index
    %c0_44 = arith.constant 0 : index
    %c0_45 = arith.constant 0 : index
    %43 = vector.load %arg5[%c7, %c0_44, %c0_45] : memref<9x16x8xf32, #tpu.memory_space<vmem>>, vector<1x16x8xf32>
    %44 = vector.shape_cast %43 : vector<1x16x8xf32> to vector<16x8xf32>
    %cst_46 = arith.constant dense<0.000000e+00> : vector<16x20xf32>
    %45 = tpu.matmul %44, %42, %cst_46 {dimension_numbers = #tpu.dot_dimension_numbers<[1], [0], [0], [1], [0, 0, 1, 1], [], []>} : vector<16x8xf32>, vector<8x20xf32>, vector<16x20xf32> -> vector<16x20xf32>
    %46 = arith.addf %40, %45 : vector<16x20xf32>
    %c0_47 = arith.constant 0 : index
    %c0_48 = arith.constant 0 : index
    %c6_49 = arith.constant 6 : index
    %47 = vector.load %arg1[%c0_47, %c0_48, %c6_49] : memref<1x8x30xf32, #tpu.memory_space<vmem>>, vector<1x8x20xf32>
    %48 = vector.shape_cast %47 : vector<1x8x20xf32> to vector<8x20xf32>
    %c8 = arith.constant 8 : index
    %c0_50 = arith.constant 0 : index
    %c0_51 = arith.constant 0 : index
    %49 = vector.load %arg5[%c8, %c0_50, %c0_51] : memref<9x16x8xf32, #tpu.memory_space<vmem>>, vector<1x16x8xf32>
    %50 = vector.shape_cast %49 : vector<1x16x8xf32> to vector<16x8xf32>
    %cst_52 = arith.constant dense<0.000000e+00> : vector<16x20xf32>
    %51 = tpu.matmul %50, %48, %cst_52 {dimension_numbers = #tpu.dot_dimension_numbers<[1], [0], [0], [1], [0, 0, 1, 1], [], []>} : vector<16x8xf32>, vector<8x20xf32>, vector<16x20xf32> -> vector<16x20xf32>
    %52 = arith.addf %46, %51 : vector<16x20xf32>
    %c0_53 = arith.constant 0 : index
    %c0_54 = arith.constant 0 : index
    %53 = vector.load %arg6[%c0_53, %c0_54] : memref<16x1xf32, #tpu.memory_space<vmem>>, vector<16x1xf32>
    %54 = vector.broadcast %53 : vector<16x1xf32> to vector<16x20xf32>
    %55 = arith.addf %52, %54 : vector<16x20xf32>
    %cst_55 = arith.constant 0.000000e+00 : f32
    %56 = vector.broadcast %cst_55 : f32 to vector<16x20xf32>
    %57 = arith.cmpf oge, %55, %56 : vector<16x20xf32>
    %cst_56 = arith.constant 1.000000e-01 : f32
    %58 = vector.broadcast %cst_56 : f32 to vector<16x20xf32>
    %59 = arith.mulf %58, %55 : vector<16x20xf32>
    %60 = arith.select %57, %55, %59 : vector<16x20xi1>, vector<16x20xf32>
    %c0_57 = arith.constant 0 : index
    %c0_58 = arith.constant 0 : index
    %c0_59 = arith.constant 0 : index
    %61 = vector.load %arg7[%c0_57, %c0_58, %c0_59] : memref<1x16x20xf32, #tpu.memory_space<vmem>>, vector<1x16x20xf32>
    %62 = vector.shape_cast %61 : vector<1x16x20xf32> to vector<16x20xf32>
    %63 = vector.shape_cast %60 : vector<16x20xf32> to vector<1x16x20xf32>
    tpu.vector_store %arg7[%c0_57, %c0_58, %c0_59], %63 {strides = array<i32>} : memref<1x16x20xf32, #tpu.memory_space<vmem>>, vector<1x16x20xf32>,
    return
  }
  func.func @transform_0(%arg0: i32) -> (i32, i32, i32) {
    %c0_i32 = arith.constant 0 : i32
    %c0_i32_0 = arith.constant 0 : i32
    %c0_i32_1 = arith.constant 0 : i32
    return %arg0, %c0_i32, %c0_i32_0 : i32, i32, i32
  }
  func.func @transform_1(%arg0: i32) -> (i32, i32, i32) {
    %c0_i32 = arith.constant 0 : i32
    %c0_i32_0 = arith.constant 0 : i32
    %c0_i32_1 = arith.constant 0 : i32
    return %arg0, %c0_i32, %c0_i32_0 : i32, i32, i32
  }
  func.func @transform_2(%arg0: i32) -> (i32, i32, i32) {
    %c0_i32 = arith.constant 0 : i32
    %c0_i32_0 = arith.constant 0 : i32
    %c0_i32_1 = arith.constant 0 : i32
    return %arg0, %c0_i32, %c0_i32_0 : i32, i32, i32
  }
  func.func @transform_3(%arg0: i32) -> (i32, i32, i32) {
    %c0_i32 = arith.constant 0 : i32
    %c0_i32_0 = arith.constant 0 : i32
    %c0_i32_1 = arith.constant 0 : i32
    return %arg0, %c0_i32, %c0_i32_0 : i32, i32, i32
  }
  func.func @transform_4(%arg0: i32) -> (i32, i32, i32) {
    %c0_i32 = arith.constant 0 : i32
    %c0_i32_0 = arith.constant 0 : i32
    %c0_i32_1 = arith.constant 0 : i32
    %c0_i32_2 = arith.constant 0 : i32
    return %c0_i32, %c0_i32_0, %c0_i32_1 : i32, i32, i32
  }
  func.func @transform_5(%arg0: i32) -> (i32, i32) {
    %c0_i32 = arith.constant 0 : i32
    %c0_i32_0 = arith.constant 0 : i32
    %c0_i32_1 = arith.constant 0 : i32
    return %c0_i32, %c0_i32_0 : i32, i32
  }
  func.func @transform_6(%arg0: i32) -> (i32, i32, i32) {
    %c0_i32 = arith.constant 0 : i32
    %c0_i32_0 = arith.constant 0 : i32
    %c0_i32_1 = arith.constant 0 : i32
    return %arg0, %c0_i32, %c0_i32_0 : i32, i32, i32
  }
}

module attributes {stable_mosaic.version = 11 : i64} {
  func.func @kernel(%arg0: i32, %arg1: memref<1x16x42xf32, #tpu.memory_space<vmem>>, %arg2: memref<9x16x16xf32, #tpu.memory_space<vmem>>, %arg3: memref<16x1xf32, #tpu.memory_space<vmem>>, %arg4: memref<1x16x24xf32, #tpu.memory_space<vmem>>) attributes {dimension_semantics = [#tpu.dimension_semantics<parallel>], iteration_bounds = array<i64: 2>, scalar_prefetch = 0 : i64, scratch_operands = 0 : i64, tpu.core_type = #tpu.core_type<tc>, window_params = [{transform_indices = @transform_0, window_bounds = array<i64: 1, 16, 42>}, {pipeline_mode = #tpu.pipeline_mode<synchronous>, transform_indices = @transform_1, window_bounds = array<i64: 9, 16, 16>}, {pipeline_mode = #tpu.pipeline_mode<synchronous>, transform_indices = @transform_2, window_bounds = array<i64: 16, 1>}, {transform_indices = @transform_3, window_bounds = array<i64: 1, 16, 24>}]} {
    %c0 = arith.constant 0 : index
    %c0_0 = arith.constant 0 : index
    %c0_1 = arith.constant 0 : index
    %0 = vector.load %arg1[%c0, %c0_0, %c0_1] : memref<1x16x42xf32, #tpu.memory_space<vmem>>, vector<1x16x24xf32>
    %1 = vector.shape_cast %0 : vector<1x16x24xf32> to vector<16x24xf32>
    %c0_2 = arith.constant 0 : index
    %c0_3 = arith.constant 0 : index
    %c0_4 = arith.constant 0 : index
    %2 = vector.load %arg2[%c0_2, %c0_3, %c0_4] : memref<9x16x16xf32, #tpu.memory_space<vmem>>, vector<1x16x16xf32>
    %3 = vector.shape_cast %2 : vector<1x16x16xf32> to vector<16x16xf32>
    %cst = arith.constant dense<0.000000e+00> : vector<16x24xf32>
    %4 = tpu.matmul %3, %1, %cst {dimension_numbers = #tpu.dot_dimension_numbers<[1], [0], [0], [1], [0, 0, 1, 1], [], []>} : vector<16x16xf32>, vector<16x24xf32>, vector<16x24xf32> -> vector<16x24xf32>
    %c0_5 = arith.constant 0 : index
    %c0_6 = arith.constant 0 : index
    %c1 = arith.constant 1 : index
    %5 = vector.load %arg1[%c0_5, %c0_6, %c1] : memref<1x16x42xf32, #tpu.memory_space<vmem>>, vector<1x16x24xf32>
    %6 = vector.shape_cast %5 : vector<1x16x24xf32> to vector<16x24xf32>
    %c1_7 = arith.constant 1 : index
    %c0_8 = arith.constant 0 : index
    %c0_9 = arith.constant 0 : index
    %7 = vector.load %arg2[%c1_7, %c0_8, %c0_9] : memref<9x16x16xf32, #tpu.memory_space<vmem>>, vector<1x16x16xf32>
    %8 = vector.shape_cast %7 : vector<1x16x16xf32> to vector<16x16xf32>
    %cst_10 = arith.constant dense<0.000000e+00> : vector<16x24xf32>
    %9 = tpu.matmul %8, %6, %cst_10 {dimension_numbers = #tpu.dot_dimension_numbers<[1], [0], [0], [1], [0, 0, 1, 1], [], []>} : vector<16x16xf32>, vector<16x24xf32>, vector<16x24xf32> -> vector<16x24xf32>
    %10 = arith.addf %4, %9 : vector<16x24xf32>
    %c0_11 = arith.constant 0 : index
    %c0_12 = arith.constant 0 : index
    %c2 = arith.constant 2 : index
    %11 = vector.load %arg1[%c0_11, %c0_12, %c2] : memref<1x16x42xf32, #tpu.memory_space<vmem>>, vector<1x16x24xf32>
    %12 = vector.shape_cast %11 : vector<1x16x24xf32> to vector<16x24xf32>
    %c2_13 = arith.constant 2 : index
    %c0_14 = arith.constant 0 : index
    %c0_15 = arith.constant 0 : index
    %13 = vector.load %arg2[%c2_13, %c0_14, %c0_15] : memref<9x16x16xf32, #tpu.memory_space<vmem>>, vector<1x16x16xf32>
    %14 = vector.shape_cast %13 : vector<1x16x16xf32> to vector<16x16xf32>
    %cst_16 = arith.constant dense<0.000000e+00> : vector<16x24xf32>
    %15 = tpu.matmul %14, %12, %cst_16 {dimension_numbers = #tpu.dot_dimension_numbers<[1], [0], [0], [1], [0, 0, 1, 1], [], []>} : vector<16x16xf32>, vector<16x24xf32>, vector<16x24xf32> -> vector<16x24xf32>
    %16 = arith.addf %10, %15 : vector<16x24xf32>
    %c0_17 = arith.constant 0 : index
    %c0_18 = arith.constant 0 : index
    %c6 = arith.constant 6 : index
    %17 = vector.load %arg1[%c0_17, %c0_18, %c6] : memref<1x16x42xf32, #tpu.memory_space<vmem>>, vector<1x16x24xf32>
    %18 = vector.shape_cast %17 : vector<1x16x24xf32> to vector<16x24xf32>
    %c3 = arith.constant 3 : index
    %c0_19 = arith.constant 0 : index
    %c0_20 = arith.constant 0 : index
    %19 = vector.load %arg2[%c3, %c0_19, %c0_20] : memref<9x16x16xf32, #tpu.memory_space<vmem>>, vector<1x16x16xf32>
    %20 = vector.shape_cast %19 : vector<1x16x16xf32> to vector<16x16xf32>
    %cst_21 = arith.constant dense<0.000000e+00> : vector<16x24xf32>
    %21 = tpu.matmul %20, %18, %cst_21 {dimension_numbers = #tpu.dot_dimension_numbers<[1], [0], [0], [1], [0, 0, 1, 1], [], []>} : vector<16x16xf32>, vector<16x24xf32>, vector<16x24xf32> -> vector<16x24xf32>
    %22 = arith.addf %16, %21 : vector<16x24xf32>
    %c0_22 = arith.constant 0 : index
    %c0_23 = arith.constant 0 : index
    %c7 = arith.constant 7 : index
    %23 = vector.load %arg1[%c0_22, %c0_23, %c7] : memref<1x16x42xf32, #tpu.memory_space<vmem>>, vector<1x16x24xf32>
    %24 = vector.shape_cast %23 : vector<1x16x24xf32> to vector<16x24xf32>
    %c4 = arith.constant 4 : index
    %c0_24 = arith.constant 0 : index
    %c0_25 = arith.constant 0 : index
    %25 = vector.load %arg2[%c4, %c0_24, %c0_25] : memref<9x16x16xf32, #tpu.memory_space<vmem>>, vector<1x16x16xf32>
    %26 = vector.shape_cast %25 : vector<1x16x16xf32> to vector<16x16xf32>
    %cst_26 = arith.constant dense<0.000000e+00> : vector<16x24xf32>
    %27 = tpu.matmul %26, %24, %cst_26 {dimension_numbers = #tpu.dot_dimension_numbers<[1], [0], [0], [1], [0, 0, 1, 1], [], []>} : vector<16x16xf32>, vector<16x24xf32>, vector<16x24xf32> -> vector<16x24xf32>
    %28 = arith.addf %22, %27 : vector<16x24xf32>
    %c0_27 = arith.constant 0 : index
    %c0_28 = arith.constant 0 : index
    %c8 = arith.constant 8 : index
    %29 = vector.load %arg1[%c0_27, %c0_28, %c8] : memref<1x16x42xf32, #tpu.memory_space<vmem>>, vector<1x16x24xf32>
    %30 = vector.shape_cast %29 : vector<1x16x24xf32> to vector<16x24xf32>
    %c5 = arith.constant 5 : index
    %c0_29 = arith.constant 0 : index
    %c0_30 = arith.constant 0 : index
    %31 = vector.load %arg2[%c5, %c0_29, %c0_30] : memref<9x16x16xf32, #tpu.memory_space<vmem>>, vector<1x16x16xf32>
    %32 = vector.shape_cast %31 : vector<1x16x16xf32> to vector<16x16xf32>
    %cst_31 = arith.constant dense<0.000000e+00> : vector<16x24xf32>
    %33 = tpu.matmul %32, %30, %cst_31 {dimension_numbers = #tpu.dot_dimension_numbers<[1], [0], [0], [1], [0, 0, 1, 1], [], []>} : vector<16x16xf32>, vector<16x24xf32>, vector<16x24xf32> -> vector<16x24xf32>
    %34 = arith.addf %28, %33 : vector<16x24xf32>
    %c0_32 = arith.constant 0 : index
    %c0_33 = arith.constant 0 : index
    %c12 = arith.constant 12 : index
    %35 = vector.load %arg1[%c0_32, %c0_33, %c12] : memref<1x16x42xf32, #tpu.memory_space<vmem>>, vector<1x16x24xf32>
    %36 = vector.shape_cast %35 : vector<1x16x24xf32> to vector<16x24xf32>
    %c6_34 = arith.constant 6 : index
    %c0_35 = arith.constant 0 : index
    %c0_36 = arith.constant 0 : index
    %37 = vector.load %arg2[%c6_34, %c0_35, %c0_36] : memref<9x16x16xf32, #tpu.memory_space<vmem>>, vector<1x16x16xf32>
    %38 = vector.shape_cast %37 : vector<1x16x16xf32> to vector<16x16xf32>
    %cst_37 = arith.constant dense<0.000000e+00> : vector<16x24xf32>
    %39 = tpu.matmul %38, %36, %cst_37 {dimension_numbers = #tpu.dot_dimension_numbers<[1], [0], [0], [1], [0, 0, 1, 1], [], []>} : vector<16x16xf32>, vector<16x24xf32>, vector<16x24xf32> -> vector<16x24xf32>
    %40 = arith.addf %34, %39 : vector<16x24xf32>
    %c0_38 = arith.constant 0 : index
    %c0_39 = arith.constant 0 : index
    %c13 = arith.constant 13 : index
    %41 = vector.load %arg1[%c0_38, %c0_39, %c13] : memref<1x16x42xf32, #tpu.memory_space<vmem>>, vector<1x16x24xf32>
    %42 = vector.shape_cast %41 : vector<1x16x24xf32> to vector<16x24xf32>
    %c7_40 = arith.constant 7 : index
    %c0_41 = arith.constant 0 : index
    %c0_42 = arith.constant 0 : index
    %43 = vector.load %arg2[%c7_40, %c0_41, %c0_42] : memref<9x16x16xf32, #tpu.memory_space<vmem>>, vector<1x16x16xf32>
    %44 = vector.shape_cast %43 : vector<1x16x16xf32> to vector<16x16xf32>
    %cst_43 = arith.constant dense<0.000000e+00> : vector<16x24xf32>
    %45 = tpu.matmul %44, %42, %cst_43 {dimension_numbers = #tpu.dot_dimension_numbers<[1], [0], [0], [1], [0, 0, 1, 1], [], []>} : vector<16x16xf32>, vector<16x24xf32>, vector<16x24xf32> -> vector<16x24xf32>
    %46 = arith.addf %40, %45 : vector<16x24xf32>
    %c0_44 = arith.constant 0 : index
    %c0_45 = arith.constant 0 : index
    %c14 = arith.constant 14 : index
    %47 = vector.load %arg1[%c0_44, %c0_45, %c14] : memref<1x16x42xf32, #tpu.memory_space<vmem>>, vector<1x16x24xf32>
    %48 = vector.shape_cast %47 : vector<1x16x24xf32> to vector<16x24xf32>
    %c8_46 = arith.constant 8 : index
    %c0_47 = arith.constant 0 : index
    %c0_48 = arith.constant 0 : index
    %49 = vector.load %arg2[%c8_46, %c0_47, %c0_48] : memref<9x16x16xf32, #tpu.memory_space<vmem>>, vector<1x16x16xf32>
    %50 = vector.shape_cast %49 : vector<1x16x16xf32> to vector<16x16xf32>
    %cst_49 = arith.constant dense<0.000000e+00> : vector<16x24xf32>
    %51 = tpu.matmul %50, %48, %cst_49 {dimension_numbers = #tpu.dot_dimension_numbers<[1], [0], [0], [1], [0, 0, 1, 1], [], []>} : vector<16x16xf32>, vector<16x24xf32>, vector<16x24xf32> -> vector<16x24xf32>
    %52 = arith.addf %46, %51 : vector<16x24xf32>
    %c0_50 = arith.constant 0 : index
    %c0_51 = arith.constant 0 : index
    %53 = vector.load %arg3[%c0_50, %c0_51] : memref<16x1xf32, #tpu.memory_space<vmem>>, vector<16x1xf32>
    %54 = vector.broadcast %53 : vector<16x1xf32> to vector<16x24xf32>
    %55 = arith.addf %52, %54 : vector<16x24xf32>
    %cst_52 = arith.constant 0.000000e+00 : f32
    %56 = vector.broadcast %cst_52 : f32 to vector<16x24xf32>
    %57 = arith.cmpf oge, %55, %56 : vector<16x24xf32>
    %cst_53 = arith.constant 1.000000e-01 : f32
    %58 = vector.broadcast %cst_53 : f32 to vector<16x24xf32>
    %59 = arith.mulf %58, %55 : vector<16x24xf32>
    %60 = arith.select %57, %55, %59 : vector<16x24xi1>, vector<16x24xf32>
    %c0_54 = arith.constant 0 : index
    %c0_55 = arith.constant 0 : index
    %c0_56 = arith.constant 0 : index
    %61 = vector.load %arg4[%c0_54, %c0_55, %c0_56] : memref<1x16x24xf32, #tpu.memory_space<vmem>>, vector<1x16x24xf32>
    %62 = vector.shape_cast %61 : vector<1x16x24xf32> to vector<16x24xf32>
    %63 = vector.shape_cast %60 : vector<16x24xf32> to vector<1x16x24xf32>
    tpu.vector_store %arg4[%c0_54, %c0_55, %c0_56], %63 {strides = array<i32>} : memref<1x16x24xf32, #tpu.memory_space<vmem>>, vector<1x16x24xf32>,
    return
  }
  func.func @transform_0(%arg0: i32) -> (i32, i32, i32) {
    %c0_i32 = arith.constant 0 : i32
    %c0_i32_0 = arith.constant 0 : i32
    %c0_i32_1 = arith.constant 0 : i32
    return %arg0, %c0_i32, %c0_i32_0 : i32, i32, i32
  }
  func.func @transform_1(%arg0: i32) -> (i32, i32, i32) {
    %c0_i32 = arith.constant 0 : i32
    %c0_i32_0 = arith.constant 0 : i32
    %c0_i32_1 = arith.constant 0 : i32
    %c0_i32_2 = arith.constant 0 : i32
    return %c0_i32, %c0_i32_0, %c0_i32_1 : i32, i32, i32
  }
  func.func @transform_2(%arg0: i32) -> (i32, i32) {
    %c0_i32 = arith.constant 0 : i32
    %c0_i32_0 = arith.constant 0 : i32
    %c0_i32_1 = arith.constant 0 : i32
    return %c0_i32, %c0_i32_0 : i32, i32
  }
  func.func @transform_3(%arg0: i32) -> (i32, i32, i32) {
    %c0_i32 = arith.constant 0 : i32
    %c0_i32_0 = arith.constant 0 : i32
    %c0_i32_1 = arith.constant 0 : i32
    return %arg0, %c0_i32, %c0_i32_0 : i32, i32, i32
  }
}

module attributes {stable_mosaic.version = 11 : i64} {
  func.func @kernel(%arg0: i32, %arg1: memref<1x16x12xf32, #tpu.memory_space<vmem>>, %arg2: memref<1x16x12xf32, #tpu.memory_space<vmem>>, %arg3: memref<1x16x12xf32, #tpu.memory_space<vmem>>, %arg4: memref<1x16x12xf32, #tpu.memory_space<vmem>>, %arg5: memref<9x32x16xf32, #tpu.memory_space<vmem>>, %arg6: memref<32x1xf32, #tpu.memory_space<vmem>>, %arg7: memref<1x32x6xf32, #tpu.memory_space<vmem>>) attributes {dimension_semantics = [#tpu.dimension_semantics<parallel>], iteration_bounds = array<i64: 2>, scalar_prefetch = 0 : i64, scratch_operands = 0 : i64, tpu.core_type = #tpu.core_type<tc>, window_params = [{transform_indices = @transform_0, window_bounds = array<i64: 1, 16, 12>}, {transform_indices = @transform_1, window_bounds = array<i64: 1, 16, 12>}, {transform_indices = @transform_2, window_bounds = array<i64: 1, 16, 12>}, {transform_indices = @transform_3, window_bounds = array<i64: 1, 16, 12>}, {pipeline_mode = #tpu.pipeline_mode<synchronous>, transform_indices = @transform_4, window_bounds = array<i64: 9, 32, 16>}, {pipeline_mode = #tpu.pipeline_mode<synchronous>, transform_indices = @transform_5, window_bounds = array<i64: 32, 1>}, {transform_indices = @transform_6, window_bounds = array<i64: 1, 32, 6>}]} {
    %c0 = arith.constant 0 : index
    %c0_0 = arith.constant 0 : index
    %c0_1 = arith.constant 0 : index
    %0 = vector.load %arg1[%c0, %c0_0, %c0_1] : memref<1x16x12xf32, #tpu.memory_space<vmem>>, vector<1x16x6xf32>
    %1 = vector.shape_cast %0 : vector<1x16x6xf32> to vector<16x6xf32>
    %c0_2 = arith.constant 0 : index
    %c0_3 = arith.constant 0 : index
    %c0_4 = arith.constant 0 : index
    %2 = vector.load %arg5[%c0_2, %c0_3, %c0_4] : memref<9x32x16xf32, #tpu.memory_space<vmem>>, vector<1x32x16xf32>
    %3 = vector.shape_cast %2 : vector<1x32x16xf32> to vector<32x16xf32>
    %cst = arith.constant dense<0.000000e+00> : vector<32x6xf32>
    %4 = tpu.matmul %3, %1, %cst {dimension_numbers = #tpu.dot_dimension_numbers<[1], [0], [0], [1], [0, 0, 1, 1], [], []>} : vector<32x16xf32>, vector<16x6xf32>, vector<32x6xf32> -> vector<32x6xf32>
    %c0_5 = arith.constant 0 : index
    %c0_6 = arith.constant 0 : index
    %c0_7 = arith.constant 0 : index
    %5 = vector.load %arg2[%c0_5, %c0_6, %c0_7] : memref<1x16x12xf32, #tpu.memory_space<vmem>>, vector<1x16x6xf32>
    %6 = vector.shape_cast %5 : vector<1x16x6xf32> to vector<16x6xf32>
    %c1 = arith.constant 1 : index
    %c0_8 = arith.constant 0 : index
    %c0_9 = arith.constant 0 : index
    %7 = vector.load %arg5[%c1, %c0_8, %c0_9] : memref<9x32x16xf32, #tpu.memory_space<vmem>>, vector<1x32x16xf32>
    %8 = vector.shape_cast %7 : vector<1x32x16xf32> to vector<32x16xf32>
    %cst_10 = arith.constant dense<0.000000e+00> : vector<32x6xf32>
    %9 = tpu.matmul %8, %6, %cst_10 {dimension_numbers = #tpu.dot_dimension_numbers<[1], [0], [0], [1], [0, 0, 1, 1], [], []>} : vector<32x16xf32>, vector<16x6xf32>, vector<32x6xf32> -> vector<32x6xf32>
    %10 = arith.addf %4, %9 : vector<32x6xf32>
    %c0_11 = arith.constant 0 : index
    %c0_12 = arith.constant 0 : index
    %c1_13 = arith.constant 1 : index
    %11 = vector.load %arg1[%c0_11, %c0_12, %c1_13] : memref<1x16x12xf32, #tpu.memory_space<vmem>>, vector<1x16x6xf32>
    %12 = vector.shape_cast %11 : vector<1x16x6xf32> to vector<16x6xf32>
    %c2 = arith.constant 2 : index
    %c0_14 = arith.constant 0 : index
    %c0_15 = arith.constant 0 : index
    %13 = vector.load %arg5[%c2, %c0_14, %c0_15] : memref<9x32x16xf32, #tpu.memory_space<vmem>>, vector<1x32x16xf32>
    %14 = vector.shape_cast %13 : vector<1x32x16xf32> to vector<32x16xf32>
    %cst_16 = arith.constant dense<0.000000e+00> : vector<32x6xf32>
    %15 = tpu.matmul %14, %12, %cst_16 {dimension_numbers = #tpu.dot_dimension_numbers<[1], [0], [0], [1], [0, 0, 1, 1], [], []>} : vector<32x16xf32>, vector<16x6xf32>, vector<32x6xf32> -> vector<32x6xf32>
    %16 = arith.addf %10, %15 : vector<32x6xf32>
    %c0_17 = arith.constant 0 : index
    %c0_18 = arith.constant 0 : index
    %c0_19 = arith.constant 0 : index
    %17 = vector.load %arg3[%c0_17, %c0_18, %c0_19] : memref<1x16x12xf32, #tpu.memory_space<vmem>>, vector<1x16x6xf32>
    %18 = vector.shape_cast %17 : vector<1x16x6xf32> to vector<16x6xf32>
    %c3 = arith.constant 3 : index
    %c0_20 = arith.constant 0 : index
    %c0_21 = arith.constant 0 : index
    %19 = vector.load %arg5[%c3, %c0_20, %c0_21] : memref<9x32x16xf32, #tpu.memory_space<vmem>>, vector<1x32x16xf32>
    %20 = vector.shape_cast %19 : vector<1x32x16xf32> to vector<32x16xf32>
    %cst_22 = arith.constant dense<0.000000e+00> : vector<32x6xf32>
    %21 = tpu.matmul %20, %18, %cst_22 {dimension_numbers = #tpu.dot_dimension_numbers<[1], [0], [0], [1], [0, 0, 1, 1], [], []>} : vector<32x16xf32>, vector<16x6xf32>, vector<32x6xf32> -> vector<32x6xf32>
    %22 = arith.addf %16, %21 : vector<32x6xf32>
    %c0_23 = arith.constant 0 : index
    %c0_24 = arith.constant 0 : index
    %c0_25 = arith.constant 0 : index
    %23 = vector.load %arg4[%c0_23, %c0_24, %c0_25] : memref<1x16x12xf32, #tpu.memory_space<vmem>>, vector<1x16x6xf32>
    %24 = vector.shape_cast %23 : vector<1x16x6xf32> to vector<16x6xf32>
    %c4 = arith.constant 4 : index
    %c0_26 = arith.constant 0 : index
    %c0_27 = arith.constant 0 : index
    %25 = vector.load %arg5[%c4, %c0_26, %c0_27] : memref<9x32x16xf32, #tpu.memory_space<vmem>>, vector<1x32x16xf32>
    %26 = vector.shape_cast %25 : vector<1x32x16xf32> to vector<32x16xf32>
    %cst_28 = arith.constant dense<0.000000e+00> : vector<32x6xf32>
    %27 = tpu.matmul %26, %24, %cst_28 {dimension_numbers = #tpu.dot_dimension_numbers<[1], [0], [0], [1], [0, 0, 1, 1], [], []>} : vector<32x16xf32>, vector<16x6xf32>, vector<32x6xf32> -> vector<32x6xf32>
    %28 = arith.addf %22, %27 : vector<32x6xf32>
    %c0_29 = arith.constant 0 : index
    %c0_30 = arith.constant 0 : index
    %c1_31 = arith.constant 1 : index
    %29 = vector.load %arg3[%c0_29, %c0_30, %c1_31] : memref<1x16x12xf32, #tpu.memory_space<vmem>>, vector<1x16x6xf32>
    %30 = vector.shape_cast %29 : vector<1x16x6xf32> to vector<16x6xf32>
    %c5 = arith.constant 5 : index
    %c0_32 = arith.constant 0 : index
    %c0_33 = arith.constant 0 : index
    %31 = vector.load %arg5[%c5, %c0_32, %c0_33] : memref<9x32x16xf32, #tpu.memory_space<vmem>>, vector<1x32x16xf32>
    %32 = vector.shape_cast %31 : vector<1x32x16xf32> to vector<32x16xf32>
    %cst_34 = arith.constant dense<0.000000e+00> : vector<32x6xf32>
    %33 = tpu.matmul %32, %30, %cst_34 {dimension_numbers = #tpu.dot_dimension_numbers<[1], [0], [0], [1], [0, 0, 1, 1], [], []>} : vector<32x16xf32>, vector<16x6xf32>, vector<32x6xf32> -> vector<32x6xf32>
    %34 = arith.addf %28, %33 : vector<32x6xf32>
    %c0_35 = arith.constant 0 : index
    %c0_36 = arith.constant 0 : index
    %c3_37 = arith.constant 3 : index
    %35 = vector.load %arg1[%c0_35, %c0_36, %c3_37] : memref<1x16x12xf32, #tpu.memory_space<vmem>>, vector<1x16x6xf32>
    %36 = vector.shape_cast %35 : vector<1x16x6xf32> to vector<16x6xf32>
    %c6 = arith.constant 6 : index
    %c0_38 = arith.constant 0 : index
    %c0_39 = arith.constant 0 : index
    %37 = vector.load %arg5[%c6, %c0_38, %c0_39] : memref<9x32x16xf32, #tpu.memory_space<vmem>>, vector<1x32x16xf32>
    %38 = vector.shape_cast %37 : vector<1x32x16xf32> to vector<32x16xf32>
    %cst_40 = arith.constant dense<0.000000e+00> : vector<32x6xf32>
    %39 = tpu.matmul %38, %36, %cst_40 {dimension_numbers = #tpu.dot_dimension_numbers<[1], [0], [0], [1], [0, 0, 1, 1], [], []>} : vector<32x16xf32>, vector<16x6xf32>, vector<32x6xf32> -> vector<32x6xf32>
    %40 = arith.addf %34, %39 : vector<32x6xf32>
    %c0_41 = arith.constant 0 : index
    %c0_42 = arith.constant 0 : index
    %c3_43 = arith.constant 3 : index
    %41 = vector.load %arg2[%c0_41, %c0_42, %c3_43] : memref<1x16x12xf32, #tpu.memory_space<vmem>>, vector<1x16x6xf32>
    %42 = vector.shape_cast %41 : vector<1x16x6xf32> to vector<16x6xf32>
    %c7 = arith.constant 7 : index
    %c0_44 = arith.constant 0 : index
    %c0_45 = arith.constant 0 : index
    %43 = vector.load %arg5[%c7, %c0_44, %c0_45] : memref<9x32x16xf32, #tpu.memory_space<vmem>>, vector<1x32x16xf32>
    %44 = vector.shape_cast %43 : vector<1x32x16xf32> to vector<32x16xf32>
    %cst_46 = arith.constant dense<0.000000e+00> : vector<32x6xf32>
    %45 = tpu.matmul %44, %42, %cst_46 {dimension_numbers = #tpu.dot_dimension_numbers<[1], [0], [0], [1], [0, 0, 1, 1], [], []>} : vector<32x16xf32>, vector<16x6xf32>, vector<32x6xf32> -> vector<32x6xf32>
    %46 = arith.addf %40, %45 : vector<32x6xf32>
    %c0_47 = arith.constant 0 : index
    %c0_48 = arith.constant 0 : index
    %c4_49 = arith.constant 4 : index
    %47 = vector.load %arg1[%c0_47, %c0_48, %c4_49] : memref<1x16x12xf32, #tpu.memory_space<vmem>>, vector<1x16x6xf32>
    %48 = vector.shape_cast %47 : vector<1x16x6xf32> to vector<16x6xf32>
    %c8 = arith.constant 8 : index
    %c0_50 = arith.constant 0 : index
    %c0_51 = arith.constant 0 : index
    %49 = vector.load %arg5[%c8, %c0_50, %c0_51] : memref<9x32x16xf32, #tpu.memory_space<vmem>>, vector<1x32x16xf32>
    %50 = vector.shape_cast %49 : vector<1x32x16xf32> to vector<32x16xf32>
    %cst_52 = arith.constant dense<0.000000e+00> : vector<32x6xf32>
    %51 = tpu.matmul %50, %48, %cst_52 {dimension_numbers = #tpu.dot_dimension_numbers<[1], [0], [0], [1], [0, 0, 1, 1], [], []>} : vector<32x16xf32>, vector<16x6xf32>, vector<32x6xf32> -> vector<32x6xf32>
    %52 = arith.addf %46, %51 : vector<32x6xf32>
    %c0_53 = arith.constant 0 : index
    %c0_54 = arith.constant 0 : index
    %53 = vector.load %arg6[%c0_53, %c0_54] : memref<32x1xf32, #tpu.memory_space<vmem>>, vector<32x1xf32>
    %54 = vector.broadcast %53 : vector<32x1xf32> to vector<32x6xf32>
    %55 = arith.addf %52, %54 : vector<32x6xf32>
    %cst_55 = arith.constant 0.000000e+00 : f32
    %56 = vector.broadcast %cst_55 : f32 to vector<32x6xf32>
    %57 = arith.cmpf oge, %55, %56 : vector<32x6xf32>
    %cst_56 = arith.constant 1.000000e-01 : f32
    %58 = vector.broadcast %cst_56 : f32 to vector<32x6xf32>
    %59 = arith.mulf %58, %55 : vector<32x6xf32>
    %60 = arith.select %57, %55, %59 : vector<32x6xi1>, vector<32x6xf32>
    %c0_57 = arith.constant 0 : index
    %c0_58 = arith.constant 0 : index
    %c0_59 = arith.constant 0 : index
    %61 = vector.load %arg7[%c0_57, %c0_58, %c0_59] : memref<1x32x6xf32, #tpu.memory_space<vmem>>, vector<1x32x6xf32>
    %62 = vector.shape_cast %61 : vector<1x32x6xf32> to vector<32x6xf32>
    %63 = vector.shape_cast %60 : vector<32x6xf32> to vector<1x32x6xf32>
    tpu.vector_store %arg7[%c0_57, %c0_58, %c0_59], %63 {strides = array<i32>} : memref<1x32x6xf32, #tpu.memory_space<vmem>>, vector<1x32x6xf32>,
    return
  }
  func.func @transform_0(%arg0: i32) -> (i32, i32, i32) {
    %c0_i32 = arith.constant 0 : i32
    %c0_i32_0 = arith.constant 0 : i32
    %c0_i32_1 = arith.constant 0 : i32
    return %arg0, %c0_i32, %c0_i32_0 : i32, i32, i32
  }
  func.func @transform_1(%arg0: i32) -> (i32, i32, i32) {
    %c0_i32 = arith.constant 0 : i32
    %c0_i32_0 = arith.constant 0 : i32
    %c0_i32_1 = arith.constant 0 : i32
    return %arg0, %c0_i32, %c0_i32_0 : i32, i32, i32
  }
  func.func @transform_2(%arg0: i32) -> (i32, i32, i32) {
    %c0_i32 = arith.constant 0 : i32
    %c0_i32_0 = arith.constant 0 : i32
    %c0_i32_1 = arith.constant 0 : i32
    return %arg0, %c0_i32, %c0_i32_0 : i32, i32, i32
  }
  func.func @transform_3(%arg0: i32) -> (i32, i32, i32) {
    %c0_i32 = arith.constant 0 : i32
    %c0_i32_0 = arith.constant 0 : i32
    %c0_i32_1 = arith.constant 0 : i32
    return %arg0, %c0_i32, %c0_i32_0 : i32, i32, i32
  }
  func.func @transform_4(%arg0: i32) -> (i32, i32, i32) {
    %c0_i32 = arith.constant 0 : i32
    %c0_i32_0 = arith.constant 0 : i32
    %c0_i32_1 = arith.constant 0 : i32
    %c0_i32_2 = arith.constant 0 : i32
    return %c0_i32, %c0_i32_0, %c0_i32_1 : i32, i32, i32
  }
  func.func @transform_5(%arg0: i32) -> (i32, i32) {
    %c0_i32 = arith.constant 0 : i32
    %c0_i32_0 = arith.constant 0 : i32
    %c0_i32_1 = arith.constant 0 : i32
    return %c0_i32, %c0_i32_0 : i32, i32
  }
  func.func @transform_6(%arg0: i32) -> (i32, i32, i32) {
    %c0_i32 = arith.constant 0 : i32
    %c0_i32_0 = arith.constant 0 : i32
    %c0_i32_1 = arith.constant 0 : i32
    return %arg0, %c0_i32, %c0_i32_0 : i32, i32, i32
  }
}

module attributes {stable_mosaic.version = 11 : i64} {
  func.func @kernel(%arg0: i32, %arg1: memref<1x32x20xf32, #tpu.memory_space<vmem>>, %arg2: memref<9x32x32xf32, #tpu.memory_space<vmem>>, %arg3: memref<32x1xf32, #tpu.memory_space<vmem>>, %arg4: memref<1x32x8xf32, #tpu.memory_space<vmem>>) attributes {dimension_semantics = [#tpu.dimension_semantics<parallel>], iteration_bounds = array<i64: 2>, scalar_prefetch = 0 : i64, scratch_operands = 0 : i64, tpu.core_type = #tpu.core_type<tc>, window_params = [{transform_indices = @transform_0, window_bounds = array<i64: 1, 32, 20>}, {pipeline_mode = #tpu.pipeline_mode<synchronous>, transform_indices = @transform_1, window_bounds = array<i64: 9, 32, 32>}, {pipeline_mode = #tpu.pipeline_mode<synchronous>, transform_indices = @transform_2, window_bounds = array<i64: 32, 1>}, {transform_indices = @transform_3, window_bounds = array<i64: 1, 32, 8>}]} {
    %c0 = arith.constant 0 : index
    %c0_0 = arith.constant 0 : index
    %c0_1 = arith.constant 0 : index
    %0 = vector.load %arg1[%c0, %c0_0, %c0_1] : memref<1x32x20xf32, #tpu.memory_space<vmem>>, vector<1x32x8xf32>
    %1 = vector.shape_cast %0 : vector<1x32x8xf32> to vector<32x8xf32>
    %c0_2 = arith.constant 0 : index
    %c0_3 = arith.constant 0 : index
    %c0_4 = arith.constant 0 : index
    %2 = vector.load %arg2[%c0_2, %c0_3, %c0_4] : memref<9x32x32xf32, #tpu.memory_space<vmem>>, vector<1x32x32xf32>
    %3 = vector.shape_cast %2 : vector<1x32x32xf32> to vector<32x32xf32>
    %cst = arith.constant dense<0.000000e+00> : vector<32x8xf32>
    %4 = tpu.matmul %3, %1, %cst {dimension_numbers = #tpu.dot_dimension_numbers<[1], [0], [0], [1], [0, 0, 1, 1], [], []>} : vector<32x32xf32>, vector<32x8xf32>, vector<32x8xf32> -> vector<32x8xf32>
    %c0_5 = arith.constant 0 : index
    %c0_6 = arith.constant 0 : index
    %c1 = arith.constant 1 : index
    %5 = vector.load %arg1[%c0_5, %c0_6, %c1] : memref<1x32x20xf32, #tpu.memory_space<vmem>>, vector<1x32x8xf32>
    %6 = vector.shape_cast %5 : vector<1x32x8xf32> to vector<32x8xf32>
    %c1_7 = arith.constant 1 : index
    %c0_8 = arith.constant 0 : index
    %c0_9 = arith.constant 0 : index
    %7 = vector.load %arg2[%c1_7, %c0_8, %c0_9] : memref<9x32x32xf32, #tpu.memory_space<vmem>>, vector<1x32x32xf32>
    %8 = vector.shape_cast %7 : vector<1x32x32xf32> to vector<32x32xf32>
    %cst_10 = arith.constant dense<0.000000e+00> : vector<32x8xf32>
    %9 = tpu.matmul %8, %6, %cst_10 {dimension_numbers = #tpu.dot_dimension_numbers<[1], [0], [0], [1], [0, 0, 1, 1], [], []>} : vector<32x32xf32>, vector<32x8xf32>, vector<32x8xf32> -> vector<32x8xf32>
    %10 = arith.addf %4, %9 : vector<32x8xf32>
    %c0_11 = arith.constant 0 : index
    %c0_12 = arith.constant 0 : index
    %c2 = arith.constant 2 : index
    %11 = vector.load %arg1[%c0_11, %c0_12, %c2] : memref<1x32x20xf32, #tpu.memory_space<vmem>>, vector<1x32x8xf32>
    %12 = vector.shape_cast %11 : vector<1x32x8xf32> to vector<32x8xf32>
    %c2_13 = arith.constant 2 : index
    %c0_14 = arith.constant 0 : index
    %c0_15 = arith.constant 0 : index
    %13 = vector.load %arg2[%c2_13, %c0_14, %c0_15] : memref<9x32x32xf32, #tpu.memory_space<vmem>>, vector<1x32x32xf32>
    %14 = vector.shape_cast %13 : vector<1x32x32xf32> to vector<32x32xf32>
    %cst_16 = arith.constant dense<0.000000e+00> : vector<32x8xf32>
    %15 = tpu.matmul %14, %12, %cst_16 {dimension_numbers = #tpu.dot_dimension_numbers<[1], [0], [0], [1], [0, 0, 1, 1], [], []>} : vector<32x32xf32>, vector<32x8xf32>, vector<32x8xf32> -> vector<32x8xf32>
    %16 = arith.addf %10, %15 : vector<32x8xf32>
    %c0_17 = arith.constant 0 : index
    %c0_18 = arith.constant 0 : index
    %c4 = arith.constant 4 : index
    %17 = vector.load %arg1[%c0_17, %c0_18, %c4] : memref<1x32x20xf32, #tpu.memory_space<vmem>>, vector<1x32x8xf32>
    %18 = vector.shape_cast %17 : vector<1x32x8xf32> to vector<32x8xf32>
    %c3 = arith.constant 3 : index
    %c0_19 = arith.constant 0 : index
    %c0_20 = arith.constant 0 : index
    %19 = vector.load %arg2[%c3, %c0_19, %c0_20] : memref<9x32x32xf32, #tpu.memory_space<vmem>>, vector<1x32x32xf32>
    %20 = vector.shape_cast %19 : vector<1x32x32xf32> to vector<32x32xf32>
    %cst_21 = arith.constant dense<0.000000e+00> : vector<32x8xf32>
    %21 = tpu.matmul %20, %18, %cst_21 {dimension_numbers = #tpu.dot_dimension_numbers<[1], [0], [0], [1], [0, 0, 1, 1], [], []>} : vector<32x32xf32>, vector<32x8xf32>, vector<32x8xf32> -> vector<32x8xf32>
    %22 = arith.addf %16, %21 : vector<32x8xf32>
    %c0_22 = arith.constant 0 : index
    %c0_23 = arith.constant 0 : index
    %c5 = arith.constant 5 : index
    %23 = vector.load %arg1[%c0_22, %c0_23, %c5] : memref<1x32x20xf32, #tpu.memory_space<vmem>>, vector<1x32x8xf32>
    %24 = vector.shape_cast %23 : vector<1x32x8xf32> to vector<32x8xf32>
    %c4_24 = arith.constant 4 : index
    %c0_25 = arith.constant 0 : index
    %c0_26 = arith.constant 0 : index
    %25 = vector.load %arg2[%c4_24, %c0_25, %c0_26] : memref<9x32x32xf32, #tpu.memory_space<vmem>>, vector<1x32x32xf32>
    %26 = vector.shape_cast %25 : vector<1x32x32xf32> to vector<32x32xf32>
    %cst_27 = arith.constant dense<0.000000e+00> : vector<32x8xf32>
    %27 = tpu.matmul %26, %24, %cst_27 {dimension_numbers = #tpu.dot_dimension_numbers<[1], [0], [0], [1], [0, 0, 1, 1], [], []>} : vector<32x32xf32>, vector<32x8xf32>, vector<32x8xf32> -> vector<32x8xf32>
    %28 = arith.addf %22, %27 : vector<32x8xf32>
    %c0_28 = arith.constant 0 : index
    %c0_29 = arith.constant 0 : index
    %c6 = arith.constant 6 : index
    %29 = vector.load %arg1[%c0_28, %c0_29, %c6] : memref<1x32x20xf32, #tpu.memory_space<vmem>>, vector<1x32x8xf32>
    %30 = vector.shape_cast %29 : vector<1x32x8xf32> to vector<32x8xf32>
    %c5_30 = arith.constant 5 : index
    %c0_31 = arith.constant 0 : index
    %c0_32 = arith.constant 0 : index
    %31 = vector.load %arg2[%c5_30, %c0_31, %c0_32] : memref<9x32x32xf32, #tpu.memory_space<vmem>>, vector<1x32x32xf32>
    %32 = vector.shape_cast %31 : vector<1x32x32xf32> to vector<32x32xf32>
    %cst_33 = arith.constant dense<0.000000e+00> : vector<32x8xf32>
    %33 = tpu.matmul %32, %30, %cst_33 {dimension_numbers = #tpu.dot_dimension_numbers<[1], [0], [0], [1], [0, 0, 1, 1], [], []>} : vector<32x32xf32>, vector<32x8xf32>, vector<32x8xf32> -> vector<32x8xf32>
    %34 = arith.addf %28, %33 : vector<32x8xf32>
    %c0_34 = arith.constant 0 : index
    %c0_35 = arith.constant 0 : index
    %c8 = arith.constant 8 : index
    %35 = vector.load %arg1[%c0_34, %c0_35, %c8] : memref<1x32x20xf32, #tpu.memory_space<vmem>>, vector<1x32x8xf32>
    %36 = vector.shape_cast %35 : vector<1x32x8xf32> to vector<32x8xf32>
    %c6_36 = arith.constant 6 : index
    %c0_37 = arith.constant 0 : index
    %c0_38 = arith.constant 0 : index
    %37 = vector.load %arg2[%c6_36, %c0_37, %c0_38] : memref<9x32x32xf32, #tpu.memory_space<vmem>>, vector<1x32x32xf32>
    %38 = vector.shape_cast %37 : vector<1x32x32xf32> to vector<32x32xf32>
    %cst_39 = arith.constant dense<0.000000e+00> : vector<32x8xf32>
    %39 = tpu.matmul %38, %36, %cst_39 {dimension_numbers = #tpu.dot_dimension_numbers<[1], [0], [0], [1], [0, 0, 1, 1], [], []>} : vector<32x32xf32>, vector<32x8xf32>, vector<32x8xf32> -> vector<32x8xf32>
    %40 = arith.addf %34, %39 : vector<32x8xf32>
    %c0_40 = arith.constant 0 : index
    %c0_41 = arith.constant 0 : index
    %c9 = arith.constant 9 : index
    %41 = vector.load %arg1[%c0_40, %c0_41, %c9] : memref<1x32x20xf32, #tpu.memory_space<vmem>>, vector<1x32x8xf32>
    %42 = vector.shape_cast %41 : vector<1x32x8xf32> to vector<32x8xf32>
    %c7 = arith.constant 7 : index
    %c0_42 = arith.constant 0 : index
    %c0_43 = arith.constant 0 : index
    %43 = vector.load %arg2[%c7, %c0_42, %c0_43] : memref<9x32x32xf32, #tpu.memory_space<vmem>>, vector<1x32x32xf32>
    %44 = vector.shape_cast %43 : vector<1x32x32xf32> to vector<32x32xf32>
    %cst_44 = arith.constant dense<0.000000e+00> : vector<32x8xf32>
    %45 = tpu.matmul %44, %42, %cst_44 {dimension_numbers = #tpu.dot_dimension_numbers<[1], [0], [0], [1], [0, 0, 1, 1], [], []>} : vector<32x32xf32>, vector<32x8xf32>, vector<32x8xf32> -> vector<32x8xf32>
    %46 = arith.addf %40, %45 : vector<32x8xf32>
    %c0_45 = arith.constant 0 : index
    %c0_46 = arith.constant 0 : index
    %c10 = arith.constant 10 : index
    %47 = vector.load %arg1[%c0_45, %c0_46, %c10] : memref<1x32x20xf32, #tpu.memory_space<vmem>>, vector<1x32x8xf32>
    %48 = vector.shape_cast %47 : vector<1x32x8xf32> to vector<32x8xf32>
    %c8_47 = arith.constant 8 : index
    %c0_48 = arith.constant 0 : index
    %c0_49 = arith.constant 0 : index
    %49 = vector.load %arg2[%c8_47, %c0_48, %c0_49] : memref<9x32x32xf32, #tpu.memory_space<vmem>>, vector<1x32x32xf32>
    %50 = vector.shape_cast %49 : vector<1x32x32xf32> to vector<32x32xf32>
    %cst_50 = arith.constant dense<0.000000e+00> : vector<32x8xf32>
    %51 = tpu.matmul %50, %48, %cst_50 {dimension_numbers = #tpu.dot_dimension_numbers<[1], [0], [0], [1], [0, 0, 1, 1], [], []>} : vector<32x32xf32>, vector<32x8xf32>, vector<32x8xf32> -> vector<32x8xf32>
    %52 = arith.addf %46, %51 : vector<32x8xf32>
    %c0_51 = arith.constant 0 : index
    %c0_52 = arith.constant 0 : index
    %53 = vector.load %arg3[%c0_51, %c0_52] : memref<32x1xf32, #tpu.memory_space<vmem>>, vector<32x1xf32>
    %54 = vector.broadcast %53 : vector<32x1xf32> to vector<32x8xf32>
    %55 = arith.addf %52, %54 : vector<32x8xf32>
    %cst_53 = arith.constant 0.000000e+00 : f32
    %56 = vector.broadcast %cst_53 : f32 to vector<32x8xf32>
    %57 = arith.cmpf oge, %55, %56 : vector<32x8xf32>
    %cst_54 = arith.constant 1.000000e-01 : f32
    %58 = vector.broadcast %cst_54 : f32 to vector<32x8xf32>
    %59 = arith.mulf %58, %55 : vector<32x8xf32>
    %60 = arith.select %57, %55, %59 : vector<32x8xi1>, vector<32x8xf32>
    %c0_55 = arith.constant 0 : index
    %c0_56 = arith.constant 0 : index
    %c0_57 = arith.constant 0 : index
    %61 = vector.load %arg4[%c0_55, %c0_56, %c0_57] : memref<1x32x8xf32, #tpu.memory_space<vmem>>, vector<1x32x8xf32>
    %62 = vector.shape_cast %61 : vector<1x32x8xf32> to vector<32x8xf32>
    %63 = vector.shape_cast %60 : vector<32x8xf32> to vector<1x32x8xf32>
    tpu.vector_store %arg4[%c0_55, %c0_56, %c0_57], %63 {strides = array<i32>} : memref<1x32x8xf32, #tpu.memory_space<vmem>>, vector<1x32x8xf32>,
    return
  }
  func.func @transform_0(%arg0: i32) -> (i32, i32, i32) {
    %c0_i32 = arith.constant 0 : i32
    %c0_i32_0 = arith.constant 0 : i32
    %c0_i32_1 = arith.constant 0 : i32
    return %arg0, %c0_i32, %c0_i32_0 : i32, i32, i32
  }
  func.func @transform_1(%arg0: i32) -> (i32, i32, i32) {
    %c0_i32 = arith.constant 0 : i32
    %c0_i32_0 = arith.constant 0 : i32
    %c0_i32_1 = arith.constant 0 : i32
    %c0_i32_2 = arith.constant 0 : i32
    return %c0_i32, %c0_i32_0, %c0_i32_1 : i32, i32, i32
  }
  func.func @transform_2(%arg0: i32) -> (i32, i32) {
    %c0_i32 = arith.constant 0 : i32
    %c0_i32_0 = arith.constant 0 : i32
    %c0_i32_1 = arith.constant 0 : i32
    return %c0_i32, %c0_i32_0 : i32, i32
  }
  func.func @transform_3(%arg0: i32) -> (i32, i32, i32) {
    %c0_i32 = arith.constant 0 : i32
    %c0_i32_0 = arith.constant 0 : i32
    %c0_i32_1 = arith.constant 0 : i32
    return %arg0, %c0_i32, %c0_i32_0 : i32, i32, i32
  }
}

</mosaic_0001>

<llo_original>
// kernel: _lambda_.7
$region0: #{_lambda_.7}
  #allocation0 [shape = 'u32[]', space=smem, size = 0x4, offset = 0x4, fixed_abs, tag = 'smem constant byte address 0x4 - core index']
  #allocation1 [shape = 'u32[144,128]{1,0:T(1,128)}', space=vmem, size = 0x12000, scoped, tag = 'internal scratch']
  %s0 = inlined_call_operand.vmem [shape: f32[2,8,110], index: 0, kind: input, shape index: {}]
  %s1 = inlined_call_operand.vmem [shape: f32[9,8,8], index: 1, kind: input, shape index: {}]
  %s2 = inlined_call_operand.vmem [shape: f32[8,1], index: 2, kind: input, shape index: {}]
  %s3 = inlined_call_operand.vmem [shape: f32[2,8,80], index: 3, kind: output, shape index: {}]
  %s4 = sld [smem:[#allocation0]]
  $region45: #{_lambda_.7} parent=0
    _
  %s6 = ssub.s32 1, %s4
  %s7 = scalar_select 0, %s6, %s4
  loop: start=0, step=1, limit=4
  $region2: #{_lambda_.7} parent=0 // loop_pre_header
    _
  $region3: #{_lambda_.7} parent=0 // loop_header
    %s9 = sphi 0, %s13
    %p10 = scmp.ge.s32.totalorder %s9, 4
    %s19 = sphi 0, %s21
    %s22 = sphi 0, %s19
    %s23 = sphi 0, %s22
    %s39 = sphi 0, %s23
    %s43 = sphi 0, %s43
    %s45 = sphi 0, %s43
    %s46 = sphi 0, %s45
    %s60 = sphi 0, %s46
    %s64 = sphi 0, %s64
    %s66 = sphi 0, %s64
    %s67 = sphi 0, %s66
    %s81 = sphi 0, %s67
    %s87 = sphi 0, %s89
    %s90 = sphi 0, %s87
    %s91 = sphi 0, %s90
    %s107 = sphi 0, %s91
  $region4: #{_lambda_.7} parent=0 // loop_header_branch
    %12 = sbr.rel (%p10) target = $region8
  $region5: #{_lambda_.7} parent=0 // loop_body
    %s14 = ssub.s32 %s9, 1
    %s15 = ssub.s32 %s9, 2
    %s16 = sadd.s32 %s9, 1
    %s17 = ssub.s32 %s9, %s16
    %p18 = scmp.eq.s32.totalorder %s17, 0
    %s20 = sadd.s32 %s19, 1
    %s21 = scalar_select %p18, %s19, %s20
    %p24 = pneg %p18
    %p25 = scmp.eq.s32.totalorder %s9, 1
    %p26 = por %p24, %p25
    %p27 = scmp.ne.s32.totalorder %s19, %s22
    %p28 = scmp.eq.s32.totalorder %s9, 0
    %p29 = por %p27, %p28
    %p30 = scmp.ne.s32.totalorder %s19, %s22
    %p31 = scmp.eq.s32.totalorder %s14, 1
    %p32 = por %p30, %p31
    %p33 = scmp.ne.s32.totalorder %s22, %s23
    %p34 = scmp.eq.s32.totalorder %s14, 0
    %p35 = por %p33, %p34
    %p36 = scmp.ne.s32.totalorder %s22, %s23
    %p37 = scmp.eq.s32.totalorder %s15, 1
    %p38 = por %p36, %p37
    %p40 = scmp.ne.s32.totalorder %s23, %s39
    %p41 = scmp.eq.s32.totalorder %s15, 0
    %p42 = por %p40, %p41
    %s44 = sadd.s32 %s43, 1
    %p47 = scmp.eq.s32.totalorder %s9, 1
    %p48 = scmp.ne.s32.totalorder %s43, %s45
    %p49 = scmp.eq.s32.totalorder %s9, 0
    %p50 = por %p48, %p49
    %p51 = scmp.ne.s32.totalorder %s43, %s45
    %p52 = scmp.eq.s32.totalorder %s14, 1
    %p53 = por %p51, %p52
    %p54 = scmp.ne.s32.totalorder %s45, %s46
    %p55 = scmp.eq.s32.totalorder %s14, 0
    %p56 = por %p54, %p55
    %p57 = scmp.ne.s32.totalorder %s45, %s46
    %p58 = scmp.eq.s32.totalorder %s15, 1
    %p59 = por %p57, %p58
    %p61 = scmp.ne.s32.totalorder %s46, %s60
    %p62 = scmp.eq.s32.totalorder %s15, 0
    %p63 = por %p61, %p62
    %s65 = sadd.s32 %s64, 1
    %p68 = scmp.eq.s32.totalorder %s9, 1
    %p69 = scmp.ne.s32.totalorder %s64, %s66
    %p70 = scmp.eq.s32.totalorder %s9, 0
    %p71 = por %p69, %p70
    %p72 = scmp.ne.s32.totalorder %s64, %s66
    %p73 = scmp.eq.s32.totalorder %s14, 1
    %p74 = por %p72, %p73
    %p75 = scmp.ne.s32.totalorder %s66, %s67
    %p76 = scmp.eq.s32.totalorder %s14, 0
    %p77 = por %p75, %p76
    %p78 = scmp.ne.s32.totalorder %s66, %s67
    %p79 = scmp.eq.s32.totalorder %s15, 1
    %p80 = por %p78, %p79
    %p82 = scmp.ne.s32.totalorder %s67, %s81
    %p83 = scmp.eq.s32.totalorder %s15, 0
    %p84 = por %p82, %p83
    %s85 = ssub.s32 %s9, %s16
    %p86 = scmp.eq.s32.totalorder %s85, 0
    %s88 = sadd.s32 %s87, 1
    %s89 = scalar_select %p86, %s87, %s88
    %p92 = pneg %p86
    %p93 = scmp.eq.s32.totalorder %s9, 1
    %p94 = por %p92, %p93
    %p95 = scmp.ne.s32.totalorder %s87, %s90
    %p96 = scmp.eq.s32.totalorder %s9, 0
    %p97 = por %p95, %p96
    %p98 = scmp.ne.s32.totalorder %s87, %s90
    %p99 = scmp.eq.s32.totalorder %s14, 1
    %p100 = por %p98, %p99
    %p101 = scmp.ne.s32.totalorder %s90, %s91
    %p102 = scmp.eq.s32.totalorder %s14, 0
    %p103 = por %p101, %p102
    %p104 = scmp.ne.s32.totalorder %s90, %s91
    %p105 = scmp.eq.s32.totalorder %s15, 1
    %p106 = por %p104, %p105
    %p108 = scmp.ne.s32.totalorder %s91, %s107
    %p109 = scmp.eq.s32.totalorder %s15, 0
    %p110 = por %p108, %p109
    %p111 = scmp.le.s32.totalorder 1, %s9
    %p112 = scmp.lt.s32.totalorder %s9, 3
    %p113 = pnand %p111, %p112
    %p114 = pneg %p113
    // Predicated region
    $region9: #{_lambda_.7} parent=5 // pred_check
      _
    $region10: #{_lambda_.7} parent=5 // pred_check_branch
      %116 = sbr.rel (%p113) target = $region12
    $region11: #{_lambda_.7} parent=5 // pred_region
      %s117 = ssub.s32 %s9, 1
      // Predicated region
      $region13: #{_lambda_.7} parent=11 // pred_check
        %p118 = pneg %p56
      $region14: #{_lambda_.7} parent=11 // pred_check_branch
        %120 = sbr.rel (%p118) target = $region16
      $region15: #{_lambda_.7} parent=11 // pred_region
        _
      $region16: #{_lambda_.7} parent=11 // pred_fallthru
        _
      // Predicated region
      $region17: #{_lambda_.7} parent=11 // pred_check
        %p121 = pneg %p77
      $region18: #{_lambda_.7} parent=11 // pred_check_branch
        %123 = sbr.rel (%p121) target = $region20
      $region19: #{_lambda_.7} parent=11 // pred_region
        _
      $region20: #{_lambda_.7} parent=11 // pred_fallthru
        _
    $region12: #{_lambda_.7} parent=5 // pred_fallthru
      _
    %p124 = scmp.lt.s32.totalorder %s9, 2
    // Predicated region
    $region21: #{_lambda_.7} parent=5 // pred_check
      %p125 = pneg %p124
    $region22: #{_lambda_.7} parent=5 // pred_check_branch
      %127 = sbr.rel (%p125) target = $region24
    $region23: #{_lambda_.7} parent=5 // pred_region
      // Predicated region
      $region25: #{_lambda_.7} parent=23 // pred_check
        %p128 = pneg %p29
      $region26: #{_lambda_.7} parent=23 // pred_check_branch
        %130 = sbr.rel (%p128) target = $region28
      $region27: #{_lambda_.7} parent=23 // pred_region
        %p131 = scmp.lt.s32.totalorder %s9, 1
        %s132 = scalar_select %p131, %s9, 1
        %s133 = smul.addr %s132, 8
        %s134 = scalar_lea.vmem %s0, %s133
      $region28: #{_lambda_.7} parent=23 // pred_fallthru
        _
    $region24: #{_lambda_.7} parent=5 // pred_fallthru
      _
    %p135 = scmp.le.s32.totalorder 1, %s9
    %p136 = scmp.lt.s32.totalorder %s9, 3
    %p137 = pnand %p135, %p136
    %p138 = pneg %p137
    // Predicated region
    $region29: #{_lambda_.7} parent=5 // pred_check
      _
    $region30: #{_lambda_.7} parent=5 // pred_check_branch
      %140 = sbr.rel (%p137) target = $region32
    $region31: #{_lambda_.7} parent=5 // pred_region
      %s141 = ssub.s32 %s9, 1
      %p142 = scmp.lt.s32.totalorder %s14, 1
      %s143 = scalar_select %p142, %s14, 1
      %s144 = smul.addr %s143, 8
      %s145 = scalar_lea.vmem %s0, %s144
      %p146 = pneg %p35
      %p147 = pneg %p32
      %p148 = pneg %p56
      %p149 = pneg %p53
      %p150 = pneg %p77
      %p151 = pneg %p74
      %p152 = pneg %p103
      %p153 = pneg %p100
      %p154 = scmp.lt.s32.totalorder %s14, 1
      %s155 = scalar_select %p154, %s14, 1
      %s156 = smul.addr %s155, 8
      %s157 = scalar_lea.vmem %s3, %s156
      %p158 = scmp.lt.s32.totalorder %s14, 1
      %s159 = scalar_select %p158, %s14, 1
      %s160 = smul.addr %s159, 8
      %s161 = scalar_lea.vmem %s0, %s160
      %p162 = scmp.lt.s32.totalorder %s14, 1
      %s163 = scalar_select %p162, %s14, 1
      %s164 = smul.addr %s163, 8
      %s165 = scalar_lea.vmem %s3, %s164
      %v166 = vld [vmem:[%s161] sm:$0xff]
      %v167 = vld [vmem:[%s1] sm:$0xff]
      %s168 = scalar_lea.vmem %s1, 8
      %v169 = vld [vmem:[%s168] sm:$0xff]
      %171 = vrot.lane.b32.xlu0 %v166, 127
      %v172 = vpop.permute.xlu0 %171
      %vm174 = vcmask 64512
      %v176 = vsel %vm174, %v169, 0
      %178 = vmatprep.subr.mxu0 0.0
      %179 = vmatpush1.msra.mxu0 %v172
      %180 = vmatprep.subr.mxu0 0.0
      %181 = vmatpush1.msra.mxu0 0.0
      %182 = vmatprep.subr.mxu0 0.0
      %183 = vmatpush1.msra.mxu0 0.0
      %184 = vmatprep.subr.mxu0 0.0
      %185 = vmatpush1.msra.mxu0 0.0
      %186 = vmatprep.subr.mxu0 0.0
      %187 = vmatpush1.msra.mxu0 0.0
      %188 = vmatprep.subr.mxu0 0.0
      %189 = vmatpush1.msra.mxu0 0.0
      %190 = vmatprep.subr.mxu0 0.0
      %191 = vmatpush1.msra.mxu0 0.0
      %192 = vmatprep.subr.mxu0 0.0
      %193 = vmatpush1.msra.mxu0 0.0
      %194 = vmatprep.subr.mxu0 0.0
      %195 = vmatpush1.msra.mxu0 0.0
      %196 = vmatprep.subr.mxu0 0.0
      %197 = vmatpush1.msra.mxu0 0.0
      %198 = vmatprep.subr.mxu0 0.0
      %199 = vmatpush1.msra.mxu0 0.0
      %200 = vmatprep.subr.mxu0 0.0
      %201 = vmatpush1.msra.mxu0 0.0
      %202 = vmatprep.subr.mxu0 0.0
      %203 = vmatpush1.msra.mxu0 0.0
      %204 = vmatprep.subr.mxu0 0.0
      %205 = vmatpush1.msra.mxu0 0.0
      %206 = vmatprep.subr.mxu0 0.0
      %207 = vmatpush1.msra.mxu0 0.0
      %208 = vmatprep.subr.mxu0 0.0
      %209 = vmatpush1.msra.mxu0 0.0
      %210 = vmatprep.subr.mxu0 0.0
      %211 = vmatpush1.msra.mxu0 0.0
      %212 = vmatprep.subr.mxu0 0.0
      %213 = vmatpush1.msra.mxu0 0.0
      %214 = vmatprep.subr.mxu0 0.0
      %215 = vmatpush1.msra.mxu0 0.0
      %216 = vmatprep.subr.mxu0 0.0
      %217 = vmatpush1.msra.mxu0 0.0
      %218 = vmatprep.subr.mxu0 0.0
      %219 = vmatpush1.msra.mxu0 0.0
      %220 = vmatprep.subr.mxu0 0.0
      %221 = vmatpush1.msra.mxu0 0.0
      %222 = vmatprep.subr.mxu0 0.0
      %223 = vmatpush1.msra.mxu0 0.0
      %224 = vmatprep.subr.mxu0 0.0
      %225 = vmatpush1.msra.mxu0 0.0
      %226 = vmatprep.subr.mxu0 0.0
      %227 = vmatpush1.msra.mxu0 0.0
      %228 = vmatprep.subr.mxu0 0.0
      %229 = vmatpush1.msra.mxu0 0.0
      %230 = vmatprep.subr.mxu0 0.0
      %231 = vmatpush1.msra.mxu0 0.0
      %232 = vmatprep.subr.mxu0 0.0
      %233 = vmatpush1.msra.mxu0 0.0
      %234 = vmatprep.subr.mxu0 0.0
      %235 = vmatpush1.msra.mxu0 0.0
      %236 = vmatprep.subr.mxu0 0.0
      %237 = vmatpush1.msra.mxu0 0.0
      %238 = vmatprep.subr.mxu0 0.0
      %239 = vmatpush1.msra.mxu0 0.0
      %240 = vmatprep.subr.mxu0 0.0
      %241 = vmatpush1.msra.mxu0 0.0
      %242 = vmatprep.mubr.f32.mxu0 0.0
      %243 = vmatmul.mubr.f32.gmra.mrb[0].mxu0 %v176
      %v244 = vpop.f32.mrb[0].mxu0
      %v245 = vadd.f32 0.0, %v244
      %v246 = vpop.f32.mrb[0].mxu0
      %247 = vdwg.mxu0
      %v249 = vsel %vm174, %v167, 0
      %251 = vmatprep.subr.mxu0 0.0
      %252 = vmatpush1.msra.mxu0 %v166
      %253 = vmatprep.subr.mxu0 0.0
      %254 = vmatpush1.msra.mxu0 0.0
      %255 = vmatprep.subr.mxu0 0.0
      %256 = vmatpush1.msra.mxu0 0.0
      %257 = vmatprep.subr.mxu0 0.0
      %258 = vmatpush1.msra.mxu0 0.0
      %259 = vmatprep.subr.mxu0 0.0
      %260 = vmatpush1.msra.mxu0 0.0
      %261 = vmatprep.subr.mxu0 0.0
      %262 = vmatpush1.msra.mxu0 0.0
      %263 = vmatprep.subr.mxu0 0.0
      %264 = vmatpush1.msra.mxu0 0.0
      %265 = vmatprep.subr.mxu0 0.0
      %266 = vmatpush1.msra.mxu0 0.0
      %267 = vmatprep.subr.mxu0 0.0
      %268 = vmatpush1.msra.mxu0 0.0
      %269 = vmatprep.subr.mxu0 0.0
      %270 = vmatpush1.msra.mxu0 0.0
      %271 = vmatprep.subr.mxu0 0.0
      %272 = vmatpush1.msra.mxu0 0.0
      %273 = vmatprep.subr.mxu0 0.0
      %274 = vmatpush1.msra.mxu0 0.0
      %275 = vmatprep.subr.mxu0 0.0
      %276 = vmatpush1.msra.mxu0 0.0
      %277 = vmatprep.subr.mxu0 0.0
      %278 = vmatpush1.msra.mxu0 0.0
      %279 = vmatprep.subr.mxu0 0.0
      %280 = vmatpush1.msra.mxu0 0.0
      %281 = vmatprep.subr.mxu0 0.0
      %282 = vmatpush1.msra.mxu0 0.0
      %283 = vmatprep.subr.mxu0 0.0
      %284 = vmatpush1.msra.mxu0 0.0
      %285 = vmatprep.subr.mxu0 0.0
      %286 = vmatpush1.msra.mxu0 0.0
      %287 = vmatprep.subr.mxu0 0.0
      %288 = vmatpush1.msra.mxu0 0.0
      %289 = vmatprep.subr.mxu0 0.0
      %290 = vmatpush1.msra.mxu0 0.0
      %291 = vmatprep.subr.mxu0 0.0
      %292 = vmatpush1.msra.mxu0 0.0
      %293 = vmatprep.subr.mxu0 0.0
      %294 = vmatpush1.msra.mxu0 0.0
      %295 = vmatprep.subr.mxu0 0.0
      %296 = vmatpush1.msra.mxu0 0.0
      %297 = vmatprep.subr.mxu0 0.0
      %298 = vmatpush1.msra.mxu0 0.0
      %299 = vmatprep.subr.mxu0 0.0
      %300 = vmatpush1.msra.mxu0 0.0
      %301 = vmatprep.subr.mxu0 0.0
      %302 = vmatpush1.msra.mxu0 0.0
      %303 = vmatprep.subr.mxu0 0.0
      %304 = vmatpush1.msra.mxu0 0.0
      %305 = vmatprep.subr.mxu0 0.0
      %306 = vmatpush1.msra.mxu0 0.0
      %307 = vmatprep.subr.mxu0 0.0
      %308 = vmatpush1.msra.mxu0 0.0
      %309 = vmatprep.subr.mxu0 0.0
      %310 = vmatpush1.msra.mxu0 0.0
      %311 = vmatprep.subr.mxu0 0.0
      %312 = vmatpush1.msra.mxu0 0.0
      %313 = vmatprep.subr.mxu0 0.0
      %314 = vmatpush1.msra.mxu0 0.0
      %315 = vmatprep.mubr.f32.mxu0 0.0
      %316 = vmatmul.mubr.f32.gmra.mrb[0].mxu0 %v249
      %v317 = vpop.f32.mrb[0].mxu0
      %v318 = vadd.f32 %v245, %v317
      %v319 = vpop.f32.mrb[0].mxu0
      %320 = vdwg.mxu0
      %s321 = scalar_lea.vmem %s1, 16
      %v322 = vld [vmem:[%s321] sm:$0xff]
      %323 = vrot.lane.b32.xlu0 %v166, 126
      %v324 = vpop.permute.xlu0 %323
      %v327 = vsel %vm174, %v322, 0
      %329 = vmatprep.subr.mxu0 0.0
      %330 = vmatpush1.msra.mxu0 %v324
      %331 = vmatprep.subr.mxu0 0.0
      %332 = vmatpush1.msra.mxu0 0.0
      %333 = vmatprep.subr.mxu0 0.0
      %334 = vmatpush1.msra.mxu0 0.0
      %335 = vmatprep.subr.mxu0 0.0
      %336 = vmatpush1.msra.mxu0 0.0
      %337 = vmatprep.subr.mxu0 0.0
      %338 = vmatpush1.msra.mxu0 0.0
      %339 = vmatprep.subr.mxu0 0.0
      %340 = vmatpush1.msra.mxu0 0.0
      %341 = vmatprep.subr.mxu0 0.0
      %342 = vmatpush1.msra.mxu0 0.0
      %343 = vmatprep.subr.mxu0 0.0
      %344 = vmatpush1.msra.mxu0 0.0
      %345 = vmatprep.subr.mxu0 0.0
      %346 = vmatpush1.msra.mxu0 0.0
      %347 = vmatprep.subr.mxu0 0.0
      %348 = vmatpush1.msra.mxu0 0.0
      %349 = vmatprep.subr.mxu0 0.0
      %350 = vmatpush1.msra.mxu0 0.0
      %351 = vmatprep.subr.mxu0 0.0
      %352 = vmatpush1.msra.mxu0 0.0
      %353 = vmatprep.subr.mxu0 0.0
      %354 = vmatpush1.msra.mxu0 0.0
      %355 = vmatprep.subr.mxu0 0.0
      %356 = vmatpush1.msra.mxu0 0.0
      %357 = vmatprep.subr.mxu0 0.0
      %358 = vmatpush1.msra.mxu0 0.0
      %359 = vmatprep.subr.mxu0 0.0
      %360 = vmatpush1.msra.mxu0 0.0
      %361 = vmatprep.subr.mxu0 0.0
      %362 = vmatpush1.msra.mxu0 0.0
      %363 = vmatprep.subr.mxu0 0.0
      %364 = vmatpush1.msra.mxu0 0.0
      %365 = vmatprep.subr.mxu0 0.0
      %366 = vmatpush1.msra.mxu0 0.0
      %367 = vmatprep.subr.mxu0 0.0
      %368 = vmatpush1.msra.mxu0 0.0
      %369 = vmatprep.subr.mxu0 0.0
      %370 = vmatpush1.msra.mxu0 0.0
      %371 = vmatprep.subr.mxu0 0.0
      %372 = vmatpush1.msra.mxu0 0.0
      %373 = vmatprep.subr.mxu0 0.0
      %374 = vmatpush1.msra.mxu0 0.0
      %375 = vmatprep.subr.mxu0 0.0
      %376 = vmatpush1.msra.mxu0 0.0
      %377 = vmatprep.subr.mxu0 0.0
      %378 = vmatpush1.msra.mxu0 0.0
      %379 = vmatprep.subr.mxu0 0.0
      %380 = vmatpush1.msra.mxu0 0.0
      %381 = vmatprep.subr.mxu0 0.0
      %382 = vmatpush1.msra.mxu0 0.0
      %383 = vmatprep.subr.mxu0 0.0
      %384 = vmatpush1.msra.mxu0 0.0
      %385 = vmatprep.subr.mxu0 0.0
      %386 = vmatpush1.msra.mxu0 0.0
      %387 = vmatprep.subr.mxu0 0.0
      %388 = vmatpush1.msra.mxu0 0.0
      %389 = vmatprep.subr.mxu0 0.0
      %390 = vmatpush1.msra.mxu0 0.0
      %391 = vmatprep.subr.mxu0 0.0
      %392 = vmatpush1.msra.mxu0 0.0
      %393 = vmatprep.mubr.f32.mxu0 0.0
      %394 = vmatmul.mubr.f32.gmra.mrb[0].mxu0 %v327
      %v395 = vpop.f32.mrb[0].mxu0
      %v396 = vadd.f32 0.0, %v395
      %v397 = vpop.f32.mrb[0].mxu0
      %398 = vdwg.mxu0
      %v399 = vadd.f32 %v318, %v396
      %s400 = scalar_lea.vmem %s1, 24
      %v401 = vld [vmem:[%s400] sm:$0xff]
      %402 = vrot.lane.b32.xlu0 %v166, 118
      %v403 = vpop.permute.xlu0 %402
      %v406 = vsel %vm174, %v401, 0
      %408 = vmatprep.subr.mxu0 0.0
      %409 = vmatpush1.msra.mxu0 %v403
      %410 = vmatprep.subr.mxu0 0.0
      %411 = vmatpush1.msra.mxu0 0.0
      %412 = vmatprep.subr.mxu0 0.0
      %413 = vmatpush1.msra.mxu0 0.0
      %414 = vmatprep.subr.mxu0 0.0
      %415 = vmatpush1.msra.mxu0 0.0
      %416 = vmatprep.subr.mxu0 0.0
      %417 = vmatpush1.msra.mxu0 0.0
      %418 = vmatprep.subr.mxu0 0.0
      %419 = vmatpush1.msra.mxu0 0.0
      %420 = vmatprep.subr.mxu0 0.0
      %421 = vmatpush1.msra.mxu0 0.0
      %422 = vmatprep.subr.mxu0 0.0
      %423 = vmatpush1.msra.mxu0 0.0
      %424 = vmatprep.subr.mxu0 0.0
      %425 = vmatpush1.msra.mxu0 0.0
      %426 = vmatprep.subr.mxu0 0.0
      %427 = vmatpush1.msra.mxu0 0.0
      %428 = vmatprep.subr.mxu0 0.0
      %429 = vmatpush1.msra.mxu0 0.0
      %430 = vmatprep.subr.mxu0 0.0
      %431 = vmatpush1.msra.mxu0 0.0
      %432 = vmatprep.subr.mxu0 0.0
      %433 = vmatpush1.msra.mxu0 0.0
      %434 = vmatprep.subr.mxu0 0.0
      %435 = vmatpush1.msra.mxu0 0.0
      %436 = vmatprep.subr.mxu0 0.0
      %437 = vmatpush1.msra.mxu0 0.0
      %438 = vmatprep.subr.mxu0 0.0
      %439 = vmatpush1.msra.mxu0 0.0
      %440 = vmatprep.subr.mxu0 0.0
      %441 = vmatpush1.msra.mxu0 0.0
      %442 = vmatprep.subr.mxu0 0.0
      %443 = vmatpush1.msra.mxu0 0.0
      %444 = vmatprep.subr.mxu0 0.0
      %445 = vmatpush1.msra.mxu0 0.0
      %446 = vmatprep.subr.mxu0 0.0
      %447 = vmatpush1.msra.mxu0 0.0
      %448 = vmatprep.subr.mxu0 0.0
      %449 = vmatpush1.msra.mxu0 0.0
      %450 = vmatprep.subr.mxu0 0.0
      %451 = vmatpush1.msra.mxu0 0.0
      %452 = vmatprep.subr.mxu0 0.0
      %453 = vmatpush1.msra.mxu0 0.0
      %454 = vmatprep.subr.mxu0 0.0
      %455 = vmatpush1.msra.mxu0 0.0
      %456 = vmatprep.subr.mxu0 0.0
      %457 = vmatpush1.msra.mxu0 0.0
      %458 = vmatprep.subr.mxu0 0.0
      %459 = vmatpush1.msra.mxu0 0.0
      %460 = vmatprep.subr.mxu0 0.0
      %461 = vmatpush1.msra.mxu0 0.0
      %462 = vmatprep.subr.mxu0 0.0
      %463 = vmatpush1.msra.mxu0 0.0
      %464 = vmatprep.subr.mxu0 0.0
      %465 = vmatpush1.msra.mxu0 0.0
      %466 = vmatprep.subr.mxu0 0.0
      %467 = vmatpush1.msra.mxu0 0.0
      %468 = vmatprep.subr.mxu0 0.0
      %469 = vmatpush1.msra.mxu0 0.0
      %470 = vmatprep.subr.mxu0 0.0
      %471 = vmatpush1.msra.mxu0 0.0
      %472 = vmatprep.mubr.f32.mxu0 0.0
      %473 = vmatmul.mubr.f32.gmra.mrb[0].mxu0 %v406
      %v474 = vpop.f32.mrb[0].mxu0
      %v475 = vadd.f32 0.0, %v474
      %v476 = vpop.f32.mrb[0].mxu0
      %477 = vdwg.mxu0
      %v478 = vadd.f32 %v399, %v475
      %s479 = scalar_lea.vmem %s1, 32
      %v480 = vld [vmem:[%s479] sm:$0xff]
      %481 = vrot.lane.b32.xlu0 %v166, 117
      %v482 = vpop.permute.xlu0 %481
      %v485 = vsel %vm174, %v480, 0
      %487 = vmatprep.subr.mxu0 0.0
      %488 = vmatpush1.msra.mxu0 %v482
      %489 = vmatprep.subr.mxu0 0.0
      %490 = vmatpush1.msra.mxu0 0.0
      %491 = vmatprep.subr.mxu0 0.0
      %492 = vmatpush1.msra.mxu0 0.0
      %493 = vmatprep.subr.mxu0 0.0
      %494 = vmatpush1.msra.mxu0 0.0
      %495 = vmatprep.subr.mxu0 0.0
      %496 = vmatpush1.msra.mxu0 0.0
      %497 = vmatprep.subr.mxu0 0.0
      %498 = vmatpush1.msra.mxu0 0.0
      %499 = vmatprep.subr.mxu0 0.0
      %500 = vmatpush1.msra.mxu0 0.0
      %501 = vmatprep.subr.mxu0 0.0
      %502 = vmatpush1.msra.mxu0 0.0
      %503 = vmatprep.subr.mxu0 0.0
      %504 = vmatpush1.msra.mxu0 0.0
      %505 = vmatprep.subr.mxu0 0.0
      %506 = vmatpush1.msra.mxu0 0.0
      %507 = vmatprep.subr.mxu0 0.0
      %508 = vmatpush1.msra.mxu0 0.0
      %509 = vmatprep.subr.mxu0 0.0
      %510 = vmatpush1.msra.mxu0 0.0
      %511 = vmatprep.subr.mxu0 0.0
      %512 = vmatpush1.msra.mxu0 0.0
      %513 = vmatprep.subr.mxu0 0.0
      %514 = vmatpush1.msra.mxu0 0.0
      %515 = vmatprep.subr.mxu0 0.0
      %516 = vmatpush1.msra.mxu0 0.0
      %517 = vmatprep.subr.mxu0 0.0
      %518 = vmatpush1.msra.mxu0 0.0
      %519 = vmatprep.subr.mxu0 0.0
      %520 = vmatpush1.msra.mxu0 0.0
      %521 = vmatprep.subr.mxu0 0.0
      %522 = vmatpush1.msra.mxu0 0.0
      %523 = vmatprep.subr.mxu0 0.0
      %524 = vmatpush1.msra.mxu0 0.0
      %525 = vmatprep.subr.mxu0 0.0
      %526 = vmatpush1.msra.mxu0 0.0
      %527 = vmatprep.subr.mxu0 0.0
      %528 = vmatpush1.msra.mxu0 0.0
      %529 = vmatprep.subr.mxu0 0.0
      %530 = vmatpush1.msra.mxu0 0.0
      %531 = vmatprep.subr.mxu0 0.0
      %532 = vmatpush1.msra.mxu0 0.0
      %533 = vmatprep.subr.mxu0 0.0
      %534 = vmatpush1.msra.mxu0 0.0
      %535 = vmatprep.subr.mxu0 0.0
      %536 = vmatpush1.msra.mxu0 0.0
      %537 = vmatprep.subr.mxu0 0.0
      %538 = vmatpush1.msra.mxu0 0.0
      %539 = vmatprep.subr.mxu0 0.0
      %540 = vmatpush1.msra.mxu0 0.0
      %541 = vmatprep.subr.mxu0 0.0
      %542 = vmatpush1.msra.mxu0 0.0
      %543 = vmatprep.subr.mxu0 0.0
      %544 = vmatpush1.msra.mxu0 0.0
      %545 = vmatprep.subr.mxu0 0.0
      %546 = vmatpush1.msra.mxu0 0.0
      %547 = vmatprep.subr.mxu0 0.0
      %548 = vmatpush1.msra.mxu0 0.0
      %549 = vmatprep.subr.mxu0 0.0
      %550 = vmatpush1.msra.mxu0 0.0
      %551 = vmatprep.mubr.f32.mxu0 0.0
      %552 = vmatmul.mubr.f32.gmra.mrb[0].mxu0 %v485
      %v553 = vpop.f32.mrb[0].mxu0
      %v554 = vadd.f32 0.0, %v553
      %v555 = vpop.f32.mrb[0].mxu0
      %556 = vdwg.mxu0
      %v557 = vadd.f32 %v478, %v554
      %s558 = scalar_lea.vmem %s1, 40
      %v559 = vld [vmem:[%s558] sm:$0xff]
      %560 = vrot.lane.b32.xlu0 %v166, 116
      %v561 = vpop.permute.xlu0 %560
      %v564 = vsel %vm174, %v559, 0
      %566 = vmatprep.subr.mxu0 0.0
      %567 = vmatpush1.msra.mxu0 %v561
      %568 = vmatprep.subr.mxu0 0.0
      %569 = vmatpush1.msra.mxu0 0.0
      %570 = vmatprep.subr.mxu0 0.0
      %571 = vmatpush1.msra.mxu0 0.0
      %572 = vmatprep.subr.mxu0 0.0
      %573 = vmatpush1.msra.mxu0 0.0
      %574 = vmatprep.subr.mxu0 0.0
      %575 = vmatpush1.msra.mxu0 0.0
      %576 = vmatprep.subr.mxu0 0.0
      %577 = vmatpush1.msra.mxu0 0.0
      %578 = vmatprep.subr.mxu0 0.0
      %579 = vmatpush1.msra.mxu0 0.0
      %580 = vmatprep.subr.mxu0 0.0
      %581 = vmatpush1.msra.mxu0 0.0
      %582 = vmatprep.subr.mxu0 0.0
      %583 = vmatpush1.msra.mxu0 0.0
      %584 = vmatprep.subr.mxu0 0.0
      %585 = vmatpush1.msra.mxu0 0.0
      %586 = vmatprep.subr.mxu0 0.0
      %587 = vmatpush1.msra.mxu0 0.0
      %588 = vmatprep.subr.mxu0 0.0
      %589 = vmatpush1.msra.mxu0 0.0
      %590 = vmatprep.subr.mxu0 0.0
      %591 = vmatpush1.msra.mxu0 0.0
      %592 = vmatprep.subr.mxu0 0.0
      %593 = vmatpush1.msra.mxu0 0.0
      %594 = vmatprep.subr.mxu0 0.0
      %595 = vmatpush1.msra.mxu0 0.0
      %596 = vmatprep.subr.mxu0 0.0
      %597 = vmatpush1.msra.mxu0 0.0
      %598 = vmatprep.subr.mxu0 0.0
      %599 = vmatpush1.msra.mxu0 0.0
      %600 = vmatprep.subr.mxu0 0.0
      %601 = vmatpush1.msra.mxu0 0.0
      %602 = vmatprep.subr.mxu0 0.0
      %603 = vmatpush1.msra.mxu0 0.0
      %604 = vmatprep.subr.mxu0 0.0
      %605 = vmatpush1.msra.mxu0 0.0
      %606 = vmatprep.subr.mxu0 0.0
      %607 = vmatpush1.msra.mxu0 0.0
      %608 = vmatprep.subr.mxu0 0.0
      %609 = vmatpush1.msra.mxu0 0.0
      %610 = vmatprep.subr.mxu0 0.0
      %611 = vmatpush1.msra.mxu0 0.0
      %612 = vmatprep.subr.mxu0 0.0
      %613 = vmatpush1.msra.mxu0 0.0
      %614 = vmatprep.subr.mxu0 0.0
      %615 = vmatpush1.msra.mxu0 0.0
      %616 = vmatprep.subr.mxu0 0.0
      %617 = vmatpush1.msra.mxu0 0.0
      %618 = vmatprep.subr.mxu0 0.0
      %619 = vmatpush1.msra.mxu0 0.0
      %620 = vmatprep.subr.mxu0 0.0
      %621 = vmatpush1.msra.mxu0 0.0
      %622 = vmatprep.subr.mxu0 0.0
      %623 = vmatpush1.msra.mxu0 0.0
      %624 = vmatprep.subr.mxu0 0.0
      %625 = vmatpush1.msra.mxu0 0.0
      %626 = vmatprep.subr.mxu0 0.0
      %627 = vmatpush1.msra.mxu0 0.0
      %628 = vmatprep.subr.mxu0 0.0
      %629 = vmatpush1.msra.mxu0 0.0
      %630 = vmatprep.mubr.f32.mxu0 0.0
      %631 = vmatmul.mubr.f32.gmra.mrb[0].mxu0 %v564
      %v632 = vpop.f32.mrb[0].mxu0
      %v633 = vadd.f32 0.0, %v632
      %v634 = vpop.f32.mrb[0].mxu0
      %635 = vdwg.mxu0
      %v636 = vadd.f32 %v557, %v633
      %s637 = scalar_lea.vmem %s1, 48
      %v638 = vld [vmem:[%s637] sm:$0xff]
      %639 = vrot.lane.b32.xlu0 %v166, 108
      %v640 = vpop.permute.xlu0 %639
      %v643 = vsel %vm174, %v638, 0
      %645 = vmatprep.subr.mxu0 0.0
      %646 = vmatpush1.msra.mxu0 %v640
      %647 = vmatprep.subr.mxu0 0.0
      %648 = vmatpush1.msra.mxu0 0.0
      %649 = vmatprep.subr.mxu0 0.0
      %650 = vmatpush1.msra.mxu0 0.0
      %651 = vmatprep.subr.mxu0 0.0
      %652 = vmatpush1.msra.mxu0 0.0
      %653 = vmatprep.subr.mxu0 0.0
      %654 = vmatpush1.msra.mxu0 0.0
      %655 = vmatprep.subr.mxu0 0.0
      %656 = vmatpush1.msra.mxu0 0.0
      %657 = vmatprep.subr.mxu0 0.0
      %658 = vmatpush1.msra.mxu0 0.0
      %659 = vmatprep.subr.mxu0 0.0
      %660 = vmatpush1.msra.mxu0 0.0
      %661 = vmatprep.subr.mxu0 0.0
      %662 = vmatpush1.msra.mxu0 0.0
      %663 = vmatprep.subr.mxu0 0.0
      %664 = vmatpush1.msra.mxu0 0.0
      %665 = vmatprep.subr.mxu0 0.0
      %666 = vmatpush1.msra.mxu0 0.0
      %667 = vmatprep.subr.mxu0 0.0
      %668 = vmatpush1.msra.mxu0 0.0
      %669 = vmatprep.subr.mxu0 0.0
      %670 = vmatpush1.msra.mxu0 0.0
      %671 = vmatprep.subr.mxu0 0.0
      %672 = vmatpush1.msra.mxu0 0.0
      %673 = vmatprep.subr.mxu0 0.0
      %674 = vmatpush1.msra.mxu0 0.0
      %675 = vmatprep.subr.mxu0 0.0
      %676 = vmatpush1.msra.mxu0 0.0
      %677 = vmatprep.subr.mxu0 0.0
      %678 = vmatpush1.msra.mxu0 0.0
      %679 = vmatprep.subr.mxu0 0.0
      %680 = vmatpush1.msra.mxu0 0.0
      %681 = vmatprep.subr.mxu0 0.0
      %682 = vmatpush1.msra.mxu0 0.0
      %683 = vmatprep.subr.mxu0 0.0
      %684 = vmatpush1.msra.mxu0 0.0
      %685 = vmatprep.subr.mxu0 0.0
      %686 = vmatpush1.msra.mxu0 0.0
      %687 = vmatprep.subr.mxu0 0.0
      %688 = vmatpush1.msra.mxu0 0.0
      %689 = vmatprep.subr.mxu0 0.0
      %690 = vmatpush1.msra.mxu0 0.0
      %691 = vmatprep.subr.mxu0 0.0
      %692 = vmatpush1.msra.mxu0 0.0
      %693 = vmatprep.subr.mxu0 0.0
      %694 = vmatpush1.msra.mxu0 0.0
      %695 = vmatprep.subr.mxu0 0.0
      %696 = vmatpush1.msra.mxu0 0.0
      %697 = vmatprep.subr.mxu0 0.0
      %698 = vmatpush1.msra.mxu0 0.0
      %699 = vmatprep.subr.mxu0 0.0
      %700 = vmatpush1.msra.mxu0 0.0
      %701 = vmatprep.subr.mxu0 0.0
      %702 = vmatpush1.msra.mxu0 0.0
      %703 = vmatprep.subr.mxu0 0.0
      %704 = vmatpush1.msra.mxu0 0.0
      %705 = vmatprep.subr.mxu0 0.0
      %706 = vmatpush1.msra.mxu0 0.0
      %707 = vmatprep.subr.mxu0 0.0
      %708 = vmatpush1.msra.mxu0 0.0
      %709 = vmatprep.mubr.f32.mxu0 0.0
      %710 = vmatmul.mubr.f32.gmra.mrb[0].mxu0 %v643
      %v711 = vpop.f32.mrb[0].mxu0
      %v712 = vadd.f32 0.0, %v711
      %v713 = vpop.f32.mrb[0].mxu0
      %714 = vdwg.mxu0
      %v715 = vadd.f32 %v636, %v712
      %s716 = scalar_lea.vmem %s1, 56
      %v717 = vld [vmem:[%s716] sm:$0xff]
      %718 = vrot.lane.b32.xlu0 %v166, 107
      %v719 = vpop.permute.xlu0 %718
      %v722 = vsel %vm174, %v717, 0
      %724 = vmatprep.subr.mxu0 0.0
      %725 = vmatpush1.msra.mxu0 %v719
      %726 = vmatprep.subr.mxu0 0.0
      %727 = vmatpush1.msra.mxu0 0.0
      %728 = vmatprep.subr.mxu0 0.0
      %729 = vmatpush1.msra.mxu0 0.0
      %730 = vmatprep.subr.mxu0 0.0
      %731 = vmatpush1.msra.mxu0 0.0
      %732 = vmatprep.subr.mxu0 0.0
      %733 = vmatpush1.msra.mxu0 0.0
      %734 = vmatprep.subr.mxu0 0.0
      %735 = vmatpush1.msra.mxu0 0.0
      %736 = vmatprep.subr.mxu0 0.0
      %737 = vmatpush1.msra.mxu0 0.0
      %738 = vmatprep.subr.mxu0 0.0
      %739 = vmatpush1.msra.mxu0 0.0
      %740 = vmatprep.subr.mxu0 0.0
      %741 = vmatpush1.msra.mxu0 0.0
      %742 = vmatprep.subr.mxu0 0.0
      %743 = vmatpush1.msra.mxu0 0.0
      %744 = vmatprep.subr.mxu0 0.0
      %745 = vmatpush1.msra.mxu0 0.0
      %746 = vmatprep.subr.mxu0 0.0
      %747 = vmatpush1.msra.mxu0 0.0
      %748 = vmatprep.subr.mxu0 0.0
      %749 = vmatpush1.msra.mxu0 0.0
      %750 = vmatprep.subr.mxu0 0.0
      %751 = vmatpush1.msra.mxu0 0.0
      %752 = vmatprep.subr.mxu0 0.0
      %753 = vmatpush1.msra.mxu0 0.0
      %754 = vmatprep.subr.mxu0 0.0
      %755 = vmatpush1.msra.mxu0 0.0
      %756 = vmatprep.subr.mxu0 0.0
      %757 = vmatpush1.msra.mxu0 0.0
      %758 = vmatprep.subr.mxu0 0.0
      %759 = vmatpush1.msra.mxu0 0.0
      %760 = vmatprep.subr.mxu0 0.0
      %761 = vmatpush1.msra.mxu0 0.0
      %762 = vmatprep.subr.mxu0 0.0
      %763 = vmatpush1.msra.mxu0 0.0
      %764 = vmatprep.subr.mxu0 0.0
      %765 = vmatpush1.msra.mxu0 0.0
      %766 = vmatprep.subr.mxu0 0.0
      %767 = vmatpush1.msra.mxu0 0.0
      %768 = vmatprep.subr.mxu0 0.0
      %769 = vmatpush1.msra.mxu0 0.0
      %770 = vmatprep.subr.mxu0 0.0
      %771 = vmatpush1.msra.mxu0 0.0
      %772 = vmatprep.subr.mxu0 0.0
      %773 = vmatpush1.msra.mxu0 0.0
      %774 = vmatprep.subr.mxu0 0.0
      %775 = vmatpush1.msra.mxu0 0.0
      %776 = vmatprep.subr.mxu0 0.0
      %777 = vmatpush1.msra.mxu0 0.0
      %778 = vmatprep.subr.mxu0 0.0
      %779 = vmatpush1.msra.mxu0 0.0
      %780 = vmatprep.subr.mxu0 0.0
      %781 = vmatpush1.msra.mxu0 0.0
      %782 = vmatprep.subr.mxu0 0.0
      %783 = vmatpush1.msra.mxu0 0.0
      %784 = vmatprep.subr.mxu0 0.0
      %785 = vmatpush1.msra.mxu0 0.0
      %786 = vmatprep.subr.mxu0 0.0
      %787 = vmatpush1.msra.mxu0 0.0
      %788 = vmatprep.mubr.f32.mxu0 0.0
      %789 = vmatmul.mubr.f32.gmra.mrb[0].mxu0 %v722
      %v790 = vpop.f32.mrb[0].mxu0
      %v791 = vadd.f32 0.0, %v790
      %v792 = vpop.f32.mrb[0].mxu0
      %793 = vdwg.mxu0
      %v794 = vadd.f32 %v715, %v791
      %s795 = scalar_lea.vmem %s1, 64
      %v796 = vld [vmem:[%s795] sm:$0xff]
      %797 = vrot.lane.b32.xlu0 %v166, 106
      %v798 = vpop.permute.xlu0 %797
      %v801 = vsel %vm174, %v796, 0
      %803 = vmatprep.subr.mxu0 0.0
      %804 = vmatpush1.msra.mxu0 %v798
      %805 = vmatprep.subr.mxu0 0.0
      %806 = vmatpush1.msra.mxu0 0.0
      %807 = vmatprep.subr.mxu0 0.0
      %808 = vmatpush1.msra.mxu0 0.0
      %809 = vmatprep.subr.mxu0 0.0
      %810 = vmatpush1.msra.mxu0 0.0
      %811 = vmatprep.subr.mxu0 0.0
      %812 = vmatpush1.msra.mxu0 0.0
      %813 = vmatprep.subr.mxu0 0.0
      %814 = vmatpush1.msra.mxu0 0.0
      %815 = vmatprep.subr.mxu0 0.0
      %816 = vmatpush1.msra.mxu0 0.0
      %817 = vmatprep.subr.mxu0 0.0
      %818 = vmatpush1.msra.mxu0 0.0
      %819 = vmatprep.subr.mxu0 0.0
      %820 = vmatpush1.msra.mxu0 0.0
      %821 = vmatprep.subr.mxu0 0.0
      %822 = vmatpush1.msra.mxu0 0.0
      %823 = vmatprep.subr.mxu0 0.0
      %824 = vmatpush1.msra.mxu0 0.0
      %825 = vmatprep.subr.mxu0 0.0
      %826 = vmatpush1.msra.mxu0 0.0
      %827 = vmatprep.subr.mxu0 0.0
      %828 = vmatpush1.msra.mxu0 0.0
      %829 = vmatprep.subr.mxu0 0.0
      %830 = vmatpush1.msra.mxu0 0.0
      %831 = vmatprep.subr.mxu0 0.0
      %832 = vmatpush1.msra.mxu0 0.0
      %833 = vmatprep.subr.mxu0 0.0
      %834 = vmatpush1.msra.mxu0 0.0
      %835 = vmatprep.subr.mxu0 0.0
      %836 = vmatpush1.msra.mxu0 0.0
      %837 = vmatprep.subr.mxu0 0.0
      %838 = vmatpush1.msra.mxu0 0.0
      %839 = vmatprep.subr.mxu0 0.0
      %840 = vmatpush1.msra.mxu0 0.0
      %841 = vmatprep.subr.mxu0 0.0
      %842 = vmatpush1.msra.mxu0 0.0
      %843 = vmatprep.subr.mxu0 0.0
      %844 = vmatpush1.msra.mxu0 0.0
      %845 = vmatprep.subr.mxu0 0.0
      %846 = vmatpush1.msra.mxu0 0.0
      %847 = vmatprep.subr.mxu0 0.0
      %848 = vmatpush1.msra.mxu0 0.0
      %849 = vmatprep.subr.mxu0 0.0
      %850 = vmatpush1.msra.mxu0 0.0
      %851 = vmatprep.subr.mxu0 0.0
      %852 = vmatpush1.msra.mxu0 0.0
      %853 = vmatprep.subr.mxu0 0.0
      %854 = vmatpush1.msra.mxu0 0.0
      %855 = vmatprep.subr.mxu0 0.0
      %856 = vmatpush1.msra.mxu0 0.0
      %857 = vmatprep.subr.mxu0 0.0
      %858 = vmatpush1.msra.mxu0 0.0
      %859 = vmatprep.subr.mxu0 0.0
      %860 = vmatpush1.msra.mxu0 0.0
      %861 = vmatprep.subr.mxu0 0.0
      %862 = vmatpush1.msra.mxu0 0.0
      %863 = vmatprep.subr.mxu0 0.0
      %864 = vmatpush1.msra.mxu0 0.0
      %865 = vmatprep.subr.mxu0 0.0
      %866 = vmatpush1.msra.mxu0 0.0
      %867 = vmatprep.mubr.f32.mxu0 0.0
      %868 = vmatmul.mubr.f32.gmra.mrb[0].mxu0 %v801
      %v869 = vpop.f32.mrb[0].mxu0
      %v870 = vadd.f32 0.0, %v869
      %v871 = vpop.f32.mrb[0].mxu0
      %872 = vdwg.mxu0
      %v873 = vadd.f32 %v794, %v870
      %v874 = vld [vmem:[%s2] sm:$0xff]
      %876 = vset.pattern.permute.xlu0 0
      %877 = vperm.xlu0 %876, %v874
      %v878 = vpop.permute.xlu0 %877
      %v880 = vadd.f32 %v873, %v878
      %vm881 = vcmp.ge.f32.partialorder %v880, 0.0
      %v882 = vmul.f32 %v880, 0.1
      %v883 = vsel %vm881, %v880, %v882
      %vm884 = vcmask 654336
      %885 = vst.msk [vmem:[%s165] sm:$0xff] %vm884, %v883
      %p886 = scmp.lt.s32.totalorder %s14, 1
      %s887 = scalar_select %p886, %s14, 1
      %s888 = smul.addr %s887, 8
      %s889 = scalar_lea.vmem %s3, %s888
      // Predicated region
      $region33: #{_lambda_.7} parent=31 // pred_check
        %p890 = pneg %p100
      $region34: #{_lambda_.7} parent=31 // pred_check_branch
        %892 = sbr.rel (%p890) target = $region36
      $region35: #{_lambda_.7} parent=31 // pred_region
        _
      $region36: #{_lambda_.7} parent=31 // pred_fallthru
        _
    $region32: #{_lambda_.7} parent=5 // pred_fallthru
      _
    %p893 = scmp.le.s32.totalorder 2, %s9
    // Predicated region
    $region37: #{_lambda_.7} parent=5 // pred_check
      %p894 = pneg %p893
    $region38: #{_lambda_.7} parent=5 // pred_check_branch
      %896 = sbr.rel (%p894) target = $region40
    $region39: #{_lambda_.7} parent=5 // pred_region
      %s897 = ssub.s32 %s9, 2
      // Predicated region
      $region41: #{_lambda_.7} parent=39 // pred_check
        %p898 = pneg %p106
      $region42: #{_lambda_.7} parent=39 // pred_check_branch
        %900 = sbr.rel (%p898) target = $region44
      $region43: #{_lambda_.7} parent=39 // pred_region
        %p901 = scmp.lt.s32.totalorder %s15, 1
        %s902 = scalar_select %p901, %s15, 1
        %s903 = smul.addr %s902, 8
        %s904 = scalar_lea.vmem %s3, %s903
      $region44: #{_lambda_.7} parent=39 // pred_fallthru
        _
    $region40: #{_lambda_.7} parent=5 // pred_fallthru
      _
  $region6: #{_lambda_.7} parent=0 // loop_footer
    %s13 = sadd.s32 1, %s9
  $region7: #{_lambda_.7} parent=0 // loop_footer_branch
    %8 = sbr.rel target = $region3
  $region8: #{_lambda_.7} parent=0 // loop_exit
    _

// kernel: _lambda_.6
$region0: #{_lambda_.6}
  #allocation0 [shape = 'u32[]', space=smem, size = 0x4, offset = 0x4, fixed_abs, tag = 'smem constant byte address 0x4 - core index']
  #allocation1 [shape = 'u32[144,128]{1,0:T(1,128)}', space=vmem, size = 0x12000, scoped, tag = 'internal scratch']
  %s0 = inlined_call_operand.vmem [shape: f32[2,8,90], index: 0, kind: input, shape index: {}]
  %s1 = inlined_call_operand.vmem [shape: f32[2,8,90], index: 1, kind: input, shape index: {}]
  %s2 = inlined_call_operand.vmem [shape: f32[2,8,90], index: 2, kind: input, shape index: {}]
  %s3 = inlined_call_operand.vmem [shape: f32[2,8,90], index: 3, kind: input, shape index: {}]
  %s4 = inlined_call_operand.vmem [shape: f32[9,8,8], index: 4, kind: input, shape index: {}]
  %s5 = inlined_call_operand.vmem [shape: f32[8,1], index: 5, kind: input, shape index: {}]
  %s6 = inlined_call_operand.vmem [shape: f32[2,8,72], index: 6, kind: output, shape index: {}]
  %s7 = sld [smem:[#allocation0]]
  $region57: #{_lambda_.6} parent=0
    _
  %s9 = ssub.s32 1, %s7
  %s10 = scalar_select 0, %s9, %s7
  loop: start=0, step=1, limit=4
  $region2: #{_lambda_.6} parent=0 // loop_pre_header
    _
  $region3: #{_lambda_.6} parent=0 // loop_header
    %s12 = sphi 0, %s16
    %p13 = scmp.ge.s32.totalorder %s12, 4
    %s22 = sphi 0, %s24
    %s25 = sphi 0, %s22
    %s26 = sphi 0, %s25
    %s42 = sphi 0, %s26
    %s48 = sphi 0, %s50
    %s51 = sphi 0, %s48
    %s52 = sphi 0, %s51
    %s68 = sphi 0, %s52
    %s74 = sphi 0, %s76
    %s77 = sphi 0, %s74
    %s78 = sphi 0, %s77
    %s94 = sphi 0, %s78
    %s100 = sphi 0, %s102
    %s103 = sphi 0, %s100
    %s104 = sphi 0, %s103
    %s120 = sphi 0, %s104
    %s124 = sphi 0, %s124
    %s126 = sphi 0, %s124
    %s127 = sphi 0, %s126
    %s141 = sphi 0, %s127
    %s145 = sphi 0, %s145
    %s147 = sphi 0, %s145
    %s148 = sphi 0, %s147
    %s162 = sphi 0, %s148
    %s168 = sphi 0, %s170
    %s171 = sphi 0, %s168
    %s172 = sphi 0, %s171
    %s188 = sphi 0, %s172
  $region4: #{_lambda_.6} parent=0 // loop_header_branch
    %15 = sbr.rel (%p13) target = $region8
  $region5: #{_lambda_.6} parent=0 // loop_body
    %s17 = ssub.s32 %s12, 1
    %s18 = ssub.s32 %s12, 2
    %s19 = sadd.s32 %s12, 1
    %s20 = ssub.s32 %s12, %s19
    %p21 = scmp.eq.s32.totalorder %s20, 0
    %s23 = sadd.s32 %s22, 1
    %s24 = scalar_select %p21, %s22, %s23
    %p27 = pneg %p21
    %p28 = scmp.eq.s32.totalorder %s12, 1
    %p29 = por %p27, %p28
    %p30 = scmp.ne.s32.totalorder %s22, %s25
    %p31 = scmp.eq.s32.totalorder %s12, 0
    %p32 = por %p30, %p31
    %p33 = scmp.ne.s32.totalorder %s22, %s25
    %p34 = scmp.eq.s32.totalorder %s17, 1
    %p35 = por %p33, %p34
    %p36 = scmp.ne.s32.totalorder %s25, %s26
    %p37 = scmp.eq.s32.totalorder %s17, 0
    %p38 = por %p36, %p37
    %p39 = scmp.ne.s32.totalorder %s25, %s26
    %p40 = scmp.eq.s32.totalorder %s18, 1
    %p41 = por %p39, %p40
    %p43 = scmp.ne.s32.totalorder %s26, %s42
    %p44 = scmp.eq.s32.totalorder %s18, 0
    %p45 = por %p43, %p44
    %s46 = ssub.s32 %s12, %s19
    %p47 = scmp.eq.s32.totalorder %s46, 0
    %s49 = sadd.s32 %s48, 1
    %s50 = scalar_select %p47, %s48, %s49
    %p53 = pneg %p47
    %p54 = scmp.eq.s32.totalorder %s12, 1
    %p55 = por %p53, %p54
    %p56 = scmp.ne.s32.totalorder %s48, %s51
    %p57 = scmp.eq.s32.totalorder %s12, 0
    %p58 = por %p56, %p57
    %p59 = scmp.ne.s32.totalorder %s48, %s51
    %p60 = scmp.eq.s32.totalorder %s17, 1
    %p61 = por %p59, %p60
    %p62 = scmp.ne.s32.totalorder %s51, %s52
    %p63 = scmp.eq.s32.totalorder %s17, 0
    %p64 = por %p62, %p63
    %p65 = scmp.ne.s32.totalorder %s51, %s52
    %p66 = scmp.eq.s32.totalorder %s18, 1
    %p67 = por %p65, %p66
    %p69 = scmp.ne.s32.totalorder %s52, %s68
    %p70 = scmp.eq.s32.totalorder %s18, 0
    %p71 = por %p69, %p70
    %s72 = ssub.s32 %s12, %s19
    %p73 = scmp.eq.s32.totalorder %s72, 0
    %s75 = sadd.s32 %s74, 1
    %s76 = scalar_select %p73, %s74, %s75
    %p79 = pneg %p73
    %p80 = scmp.eq.s32.totalorder %s12, 1
    %p81 = por %p79, %p80
    %p82 = scmp.ne.s32.totalorder %s74, %s77
    %p83 = scmp.eq.s32.totalorder %s12, 0
    %p84 = por %p82, %p83
    %p85 = scmp.ne.s32.totalorder %s74, %s77
    %p86 = scmp.eq.s32.totalorder %s17, 1
    %p87 = por %p85, %p86
    %p88 = scmp.ne.s32.totalorder %s77, %s78
    %p89 = scmp.eq.s32.totalorder %s17, 0
    %p90 = por %p88, %p89
    %p91 = scmp.ne.s32.totalorder %s77, %s78
    %p92 = scmp.eq.s32.totalorder %s18, 1
    %p93 = por %p91, %p92
    %p95 = scmp.ne.s32.totalorder %s78, %s94
    %p96 = scmp.eq.s32.totalorder %s18, 0
    %p97 = por %p95, %p96
    %s98 = ssub.s32 %s12, %s19
    %p99 = scmp.eq.s32.totalorder %s98, 0
    %s101 = sadd.s32 %s100, 1
    %s102 = scalar_select %p99, %s100, %s101
    %p105 = pneg %p99
    %p106 = scmp.eq.s32.totalorder %s12, 1
    %p107 = por %p105, %p106
    %p108 = scmp.ne.s32.totalorder %s100, %s103
    %p109 = scmp.eq.s32.totalorder %s12, 0
    %p110 = por %p108, %p109
    %p111 = scmp.ne.s32.totalorder %s100, %s103
    %p112 = scmp.eq.s32.totalorder %s17, 1
    %p113 = por %p111, %p112
    %p114 = scmp.ne.s32.totalorder %s103, %s104
    %p115 = scmp.eq.s32.totalorder %s17, 0
    %p116 = por %p114, %p115
    %p117 = scmp.ne.s32.totalorder %s103, %s104
    %p118 = scmp.eq.s32.totalorder %s18, 1
    %p119 = por %p117, %p118
    %p121 = scmp.ne.s32.totalorder %s104, %s120
    %p122 = scmp.eq.s32.totalorder %s18, 0
    %p123 = por %p121, %p122
    %s125 = sadd.s32 %s124, 1
    %p128 = scmp.eq.s32.totalorder %s12, 1
    %p129 = scmp.ne.s32.totalorder %s124, %s126
    %p130 = scmp.eq.s32.totalorder %s12, 0
    %p131 = por %p129, %p130
    %p132 = scmp.ne.s32.totalorder %s124, %s126
    %p133 = scmp.eq.s32.totalorder %s17, 1
    %p134 = por %p132, %p133
    %p135 = scmp.ne.s32.totalorder %s126, %s127
    %p136 = scmp.eq.s32.totalorder %s17, 0
    %p137 = por %p135, %p136
    %p138 = scmp.ne.s32.totalorder %s126, %s127
    %p139 = scmp.eq.s32.totalorder %s18, 1
    %p140 = por %p138, %p139
    %p142 = scmp.ne.s32.totalorder %s127, %s141
    %p143 = scmp.eq.s32.totalorder %s18, 0
    %p144 = por %p142, %p143
    %s146 = sadd.s32 %s145, 1
    %p149 = scmp.eq.s32.totalorder %s12, 1
    %p150 = scmp.ne.s32.totalorder %s145, %s147
    %p151 = scmp.eq.s32.totalorder %s12, 0
    %p152 = por %p150, %p151
    %p153 = scmp.ne.s32.totalorder %s145, %s147
    %p154 = scmp.eq.s32.totalorder %s17, 1
    %p155 = por %p153, %p154
    %p156 = scmp.ne.s32.totalorder %s147, %s148
    %p157 = scmp.eq.s32.totalorder %s17, 0
    %p158 = por %p156, %p157
    %p159 = scmp.ne.s32.totalorder %s147, %s148
    %p160 = scmp.eq.s32.totalorder %s18, 1
    %p161 = por %p159, %p160
    %p163 = scmp.ne.s32.totalorder %s148, %s162
    %p164 = scmp.eq.s32.totalorder %s18, 0
    %p165 = por %p163, %p164
    %s166 = ssub.s32 %s12, %s19
    %p167 = scmp.eq.s32.totalorder %s166, 0
    %s169 = sadd.s32 %s168, 1
    %s170 = scalar_select %p167, %s168, %s169
    %p173 = pneg %p167
    %p174 = scmp.eq.s32.totalorder %s12, 1
    %p175 = por %p173, %p174
    %p176 = scmp.ne.s32.totalorder %s168, %s171
    %p177 = scmp.eq.s32.totalorder %s12, 0
    %p178 = por %p176, %p177
    %p179 = scmp.ne.s32.totalorder %s168, %s171
    %p180 = scmp.eq.s32.totalorder %s17, 1
    %p181 = por %p179, %p180
    %p182 = scmp.ne.s32.totalorder %s171, %s172
    %p183 = scmp.eq.s32.totalorder %s17, 0
    %p184 = por %p182, %p183
    %p185 = scmp.ne.s32.totalorder %s171, %s172
    %p186 = scmp.eq.s32.totalorder %s18, 1
    %p187 = por %p185, %p186
    %p189 = scmp.ne.s32.totalorder %s172, %s188
    %p190 = scmp.eq.s32.totalorder %s18, 0
    %p191 = por %p189, %p190
    %p192 = scmp.le.s32.totalorder 1, %s12
    %p193 = scmp.lt.s32.totalorder %s12, 3
    %p194 = pnand %p192, %p193
    %p195 = pneg %p194
    // Predicated region
    $region9: #{_lambda_.6} parent=5 // pred_check
      _
    $region10: #{_lambda_.6} parent=5 // pred_check_branch
      %197 = sbr.rel (%p194) target = $region12
    $region11: #{_lambda_.6} parent=5 // pred_region
      %s198 = ssub.s32 %s12, 1
      // Predicated region
      $region13: #{_lambda_.6} parent=11 // pred_check
        %p199 = pneg %p137
      $region14: #{_lambda_.6} parent=11 // pred_check_branch
        %201 = sbr.rel (%p199) target = $region16
      $region15: #{_lambda_.6} parent=11 // pred_region
        _
      $region16: #{_lambda_.6} parent=11 // pred_fallthru
        _
      // Predicated region
      $region17: #{_lambda_.6} parent=11 // pred_check
        %p202 = pneg %p158
      $region18: #{_lambda_.6} parent=11 // pred_check_branch
        %204 = sbr.rel (%p202) target = $region20
      $region19: #{_lambda_.6} parent=11 // pred_region
        _
      $region20: #{_lambda_.6} parent=11 // pred_fallthru
        _
    $region12: #{_lambda_.6} parent=5 // pred_fallthru
      _
    %p205 = scmp.lt.s32.totalorder %s12, 2
    // Predicated region
    $region21: #{_lambda_.6} parent=5 // pred_check
      %p206 = pneg %p205
    $region22: #{_lambda_.6} parent=5 // pred_check_branch
      %208 = sbr.rel (%p206) target = $region24
    $region23: #{_lambda_.6} parent=5 // pred_region
      // Predicated region
      $region25: #{_lambda_.6} parent=23 // pred_check
        %p209 = pneg %p32
      $region26: #{_lambda_.6} parent=23 // pred_check_branch
        %211 = sbr.rel (%p209) target = $region28
      $region27: #{_lambda_.6} parent=23 // pred_region
        %p212 = scmp.lt.s32.totalorder %s12, 1
        %s213 = scalar_select %p212, %s12, 1
        %s214 = smul.addr %s213, 8
        %s215 = scalar_lea.vmem %s0, %s214
      $region28: #{_lambda_.6} parent=23 // pred_fallthru
        _
      // Predicated region
      $region29: #{_lambda_.6} parent=23 // pred_check
        %p216 = pneg %p58
      $region30: #{_lambda_.6} parent=23 // pred_check_branch
        %218 = sbr.rel (%p216) target = $region32
      $region31: #{_lambda_.6} parent=23 // pred_region
        %p219 = scmp.lt.s32.totalorder %s12, 1
        %s220 = scalar_select %p219, %s12, 1
        %s221 = smul.addr %s220, 8
        %s222 = scalar_lea.vmem %s1, %s221
      $region32: #{_lambda_.6} parent=23 // pred_fallthru
        _
      // Predicated region
      $region33: #{_lambda_.6} parent=23 // pred_check
        %p223 = pneg %p84
      $region34: #{_lambda_.6} parent=23 // pred_check_branch
        %225 = sbr.rel (%p223) target = $region36
      $region35: #{_lambda_.6} parent=23 // pred_region
        %p226 = scmp.lt.s32.totalorder %s12, 1
        %s227 = scalar_select %p226, %s12, 1
        %s228 = smul.addr %s227, 8
        %s229 = scalar_lea.vmem %s2, %s228
      $region36: #{_lambda_.6} parent=23 // pred_fallthru
        _
      // Predicated region
      $region37: #{_lambda_.6} parent=23 // pred_check
        %p230 = pneg %p110
      $region38: #{_lambda_.6} parent=23 // pred_check_branch
        %232 = sbr.rel (%p230) target = $region40
      $region39: #{_lambda_.6} parent=23 // pred_region
        %p233 = scmp.lt.s32.totalorder %s12, 1
        %s234 = scalar_select %p233, %s12, 1
        %s235 = smul.addr %s234, 8
        %s236 = scalar_lea.vmem %s3, %s235
      $region40: #{_lambda_.6} parent=23 // pred_fallthru
        _
    $region24: #{_lambda_.6} parent=5 // pred_fallthru
      _
    %p237 = scmp.le.s32.totalorder 1, %s12
    %p238 = scmp.lt.s32.totalorder %s12, 3
    %p239 = pnand %p237, %p238
    %p240 = pneg %p239
    // Predicated region
    $region41: #{_lambda_.6} parent=5 // pred_check
      _
    $region42: #{_lambda_.6} parent=5 // pred_check_branch
      %242 = sbr.rel (%p239) target = $region44
    $region43: #{_lambda_.6} parent=5 // pred_region
      %s243 = ssub.s32 %s12, 1
      %p244 = scmp.lt.s32.totalorder %s17, 1
      %s245 = scalar_select %p244, %s17, 1
      %s246 = smul.addr %s245, 8
      %s247 = scalar_lea.vmem %s0, %s246
      %p248 = pneg %p38
      %p249 = pneg %p35
      %p250 = scmp.lt.s32.totalorder %s17, 1
      %s251 = scalar_select %p250, %s17, 1
      %s252 = smul.addr %s251, 8
      %s253 = scalar_lea.vmem %s1, %s252
      %p254 = pneg %p64
      %p255 = pneg %p61
      %p256 = scmp.lt.s32.totalorder %s17, 1
      %s257 = scalar_select %p256, %s17, 1
      %s258 = smul.addr %s257, 8
      %s259 = scalar_lea.vmem %s2, %s258
      %p260 = pneg %p90
      %p261 = pneg %p87
      %p262 = scmp.lt.s32.totalorder %s17, 1
      %s263 = scalar_select %p262, %s17, 1
      %s264 = smul.addr %s263, 8
      %s265 = scalar_lea.vmem %s3, %s264
      %p266 = pneg %p116
      %p267 = pneg %p113
      %p268 = pneg %p137
      %p269 = pneg %p134
      %p270 = pneg %p158
      %p271 = pneg %p155
      %p272 = pneg %p184
      %p273 = pneg %p181
      %p274 = scmp.lt.s32.totalorder %s17, 1
      %s275 = scalar_select %p274, %s17, 1
      %s276 = smul.addr %s275, 8
      %s277 = scalar_lea.vmem %s6, %s276
      %p278 = scmp.lt.s32.totalorder %s17, 1
      %s279 = scalar_select %p278, %s17, 1
      %s280 = smul.addr %s279, 8
      %s281 = scalar_lea.vmem %s0, %s280
      %p282 = scmp.lt.s32.totalorder %s17, 1
      %s283 = scalar_select %p282, %s17, 1
      %s284 = smul.addr %s283, 8
      %s285 = scalar_lea.vmem %s1, %s284
      %p286 = scmp.lt.s32.totalorder %s17, 1
      %s287 = scalar_select %p286, %s17, 1
      %s288 = smul.addr %s287, 8
      %s289 = scalar_lea.vmem %s2, %s288
      %p290 = scmp.lt.s32.totalorder %s17, 1
      %s291 = scalar_select %p290, %s17, 1
      %s292 = smul.addr %s291, 8
      %s293 = scalar_lea.vmem %s3, %s292
      %p294 = scmp.lt.s32.totalorder %s17, 1
      %s295 = scalar_select %p294, %s17, 1
      %s296 = smul.addr %s295, 8
      %s297 = scalar_lea.vmem %s6, %s296
      %v298 = vld [vmem:[%s281] sm:$0xff]
      %v299 = vld [vmem:[%s4] sm:$0xff]
      %v300 = vld [vmem:[%s285] sm:$0xff]
      %s301 = scalar_lea.vmem %s4, 8
      %v302 = vld [vmem:[%s301] sm:$0xff]
      %vm303 = vcmask 64512
      %v305 = vsel %vm303, %v302, 0
      %307 = vmatprep.subr.mxu0 0.0
      %308 = vmatpush1.msra.mxu0 %v300
      %309 = vmatprep.subr.mxu0 0.0
      %310 = vmatpush1.msra.mxu0 0.0
      %311 = vmatprep.subr.mxu0 0.0
      %312 = vmatpush1.msra.mxu0 0.0
      %313 = vmatprep.subr.mxu0 0.0
      %314 = vmatpush1.msra.mxu0 0.0
      %315 = vmatprep.subr.mxu0 0.0
      %316 = vmatpush1.msra.mxu0 0.0
      %317 = vmatprep.subr.mxu0 0.0
      %318 = vmatpush1.msra.mxu0 0.0
      %319 = vmatprep.subr.mxu0 0.0
      %320 = vmatpush1.msra.mxu0 0.0
      %321 = vmatprep.subr.mxu0 0.0
      %322 = vmatpush1.msra.mxu0 0.0
      %323 = vmatprep.subr.mxu0 0.0
      %324 = vmatpush1.msra.mxu0 0.0
      %325 = vmatprep.subr.mxu0 0.0
      %326 = vmatpush1.msra.mxu0 0.0
      %327 = vmatprep.subr.mxu0 0.0
      %328 = vmatpush1.msra.mxu0 0.0
      %329 = vmatprep.subr.mxu0 0.0
      %330 = vmatpush1.msra.mxu0 0.0
      %331 = vmatprep.subr.mxu0 0.0
      %332 = vmatpush1.msra.mxu0 0.0
      %333 = vmatprep.subr.mxu0 0.0
      %334 = vmatpush1.msra.mxu0 0.0
      %335 = vmatprep.subr.mxu0 0.0
      %336 = vmatpush1.msra.mxu0 0.0
      %337 = vmatprep.subr.mxu0 0.0
      %338 = vmatpush1.msra.mxu0 0.0
      %339 = vmatprep.subr.mxu0 0.0
      %340 = vmatpush1.msra.mxu0 0.0
      %341 = vmatprep.subr.mxu0 0.0
      %342 = vmatpush1.msra.mxu0 0.0
      %343 = vmatprep.subr.mxu0 0.0
      %344 = vmatpush1.msra.mxu0 0.0
      %345 = vmatprep.subr.mxu0 0.0
      %346 = vmatpush1.msra.mxu0 0.0
      %347 = vmatprep.subr.mxu0 0.0
      %348 = vmatpush1.msra.mxu0 0.0
      %349 = vmatprep.subr.mxu0 0.0
      %350 = vmatpush1.msra.mxu0 0.0
      %351 = vmatprep.subr.mxu0 0.0
      %352 = vmatpush1.msra.mxu0 0.0
      %353 = vmatprep.subr.mxu0 0.0
      %354 = vmatpush1.msra.mxu0 0.0
      %355 = vmatprep.subr.mxu0 0.0
      %356 = vmatpush1.msra.mxu0 0.0
      %357 = vmatprep.subr.mxu0 0.0
      %358 = vmatpush1.msra.mxu0 0.0
      %359 = vmatprep.subr.mxu0 0.0
      %360 = vmatpush1.msra.mxu0 0.0
      %361 = vmatprep.subr.mxu0 0.0
      %362 = vmatpush1.msra.mxu0 0.0
      %363 = vmatprep.subr.mxu0 0.0
      %364 = vmatpush1.msra.mxu0 0.0
      %365 = vmatprep.subr.mxu0 0.0
      %366 = vmatpush1.msra.mxu0 0.0
      %367 = vmatprep.subr.mxu0 0.0
      %368 = vmatpush1.msra.mxu0 0.0
      %369 = vmatprep.subr.mxu0 0.0
      %370 = vmatpush1.msra.mxu0 0.0
      %371 = vmatprep.mubr.f32.mxu0 0.0
      %372 = vmatmul.mubr.f32.gmra.mrb[0].mxu0 %v305
      %v373 = vpop.f32.mrb[0].mxu0
      %v374 = vadd.f32 0.0, %v373
      %v375 = vpop.f32.mrb[0].mxu0
      %376 = vdwg.mxu0
      %v378 = vsel %vm303, %v299, 0
      %380 = vmatprep.subr.mxu0 0.0
      %381 = vmatpush1.msra.mxu0 %v298
      %382 = vmatprep.subr.mxu0 0.0
      %383 = vmatpush1.msra.mxu0 0.0
      %384 = vmatprep.subr.mxu0 0.0
      %385 = vmatpush1.msra.mxu0 0.0
      %386 = vmatprep.subr.mxu0 0.0
      %387 = vmatpush1.msra.mxu0 0.0
      %388 = vmatprep.subr.mxu0 0.0
      %389 = vmatpush1.msra.mxu0 0.0
      %390 = vmatprep.subr.mxu0 0.0
      %391 = vmatpush1.msra.mxu0 0.0
      %392 = vmatprep.subr.mxu0 0.0
      %393 = vmatpush1.msra.mxu0 0.0
      %394 = vmatprep.subr.mxu0 0.0
      %395 = vmatpush1.msra.mxu0 0.0
      %396 = vmatprep.subr.mxu0 0.0
      %397 = vmatpush1.msra.mxu0 0.0
      %398 = vmatprep.subr.mxu0 0.0
      %399 = vmatpush1.msra.mxu0 0.0
      %400 = vmatprep.subr.mxu0 0.0
      %401 = vmatpush1.msra.mxu0 0.0
      %402 = vmatprep.subr.mxu0 0.0
      %403 = vmatpush1.msra.mxu0 0.0
      %404 = vmatprep.subr.mxu0 0.0
      %405 = vmatpush1.msra.mxu0 0.0
      %406 = vmatprep.subr.mxu0 0.0
      %407 = vmatpush1.msra.mxu0 0.0
      %408 = vmatprep.subr.mxu0 0.0
      %409 = vmatpush1.msra.mxu0 0.0
      %410 = vmatprep.subr.mxu0 0.0
      %411 = vmatpush1.msra.mxu0 0.0
      %412 = vmatprep.subr.mxu0 0.0
      %413 = vmatpush1.msra.mxu0 0.0
      %414 = vmatprep.subr.mxu0 0.0
      %415 = vmatpush1.msra.mxu0 0.0
      %416 = vmatprep.subr.mxu0 0.0
      %417 = vmatpush1.msra.mxu0 0.0
      %418 = vmatprep.subr.mxu0 0.0
      %419 = vmatpush1.msra.mxu0 0.0
      %420 = vmatprep.subr.mxu0 0.0
      %421 = vmatpush1.msra.mxu0 0.0
      %422 = vmatprep.subr.mxu0 0.0
      %423 = vmatpush1.msra.mxu0 0.0
      %424 = vmatprep.subr.mxu0 0.0
      %425 = vmatpush1.msra.mxu0 0.0
      %426 = vmatprep.subr.mxu0 0.0
      %427 = vmatpush1.msra.mxu0 0.0
      %428 = vmatprep.subr.mxu0 0.0
      %429 = vmatpush1.msra.mxu0 0.0
      %430 = vmatprep.subr.mxu0 0.0
      %431 = vmatpush1.msra.mxu0 0.0
      %432 = vmatprep.subr.mxu0 0.0
      %433 = vmatpush1.msra.mxu0 0.0
      %434 = vmatprep.subr.mxu0 0.0
      %435 = vmatpush1.msra.mxu0 0.0
      %436 = vmatprep.subr.mxu0 0.0
      %437 = vmatpush1.msra.mxu0 0.0
      %438 = vmatprep.subr.mxu0 0.0
      %439 = vmatpush1.msra.mxu0 0.0
      %440 = vmatprep.subr.mxu0 0.0
      %441 = vmatpush1.msra.mxu0 0.0
      %442 = vmatprep.subr.mxu0 0.0
      %443 = vmatpush1.msra.mxu0 0.0
      %444 = vmatprep.mubr.f32.mxu0 0.0
      %445 = vmatmul.mubr.f32.gmra.mrb[0].mxu0 %v378
      %v446 = vpop.f32.mrb[0].mxu0
      %v447 = vadd.f32 %v374, %v446
      %v448 = vpop.f32.mrb[0].mxu0
      %449 = vdwg.mxu0
      %s450 = scalar_lea.vmem %s4, 16
      %v451 = vld [vmem:[%s450] sm:$0xff]
      %453 = vrot.lane.b32.xlu0 %v298, 127
      %v454 = vpop.permute.xlu0 %453
      %v457 = vsel %vm303, %v451, 0
      %459 = vmatprep.subr.mxu0 0.0
      %460 = vmatpush1.msra.mxu0 %v454
      %461 = vmatprep.subr.mxu0 0.0
      %462 = vmatpush1.msra.mxu0 0.0
      %463 = vmatprep.subr.mxu0 0.0
      %464 = vmatpush1.msra.mxu0 0.0
      %465 = vmatprep.subr.mxu0 0.0
      %466 = vmatpush1.msra.mxu0 0.0
      %467 = vmatprep.subr.mxu0 0.0
      %468 = vmatpush1.msra.mxu0 0.0
      %469 = vmatprep.subr.mxu0 0.0
      %470 = vmatpush1.msra.mxu0 0.0
      %471 = vmatprep.subr.mxu0 0.0
      %472 = vmatpush1.msra.mxu0 0.0
      %473 = vmatprep.subr.mxu0 0.0
      %474 = vmatpush1.msra.mxu0 0.0
      %475 = vmatprep.subr.mxu0 0.0
      %476 = vmatpush1.msra.mxu0 0.0
      %477 = vmatprep.subr.mxu0 0.0
      %478 = vmatpush1.msra.mxu0 0.0
      %479 = vmatprep.subr.mxu0 0.0
      %480 = vmatpush1.msra.mxu0 0.0
      %481 = vmatprep.subr.mxu0 0.0
      %482 = vmatpush1.msra.mxu0 0.0
      %483 = vmatprep.subr.mxu0 0.0
      %484 = vmatpush1.msra.mxu0 0.0
      %485 = vmatprep.subr.mxu0 0.0
      %486 = vmatpush1.msra.mxu0 0.0
      %487 = vmatprep.subr.mxu0 0.0
      %488 = vmatpush1.msra.mxu0 0.0
      %489 = vmatprep.subr.mxu0 0.0
      %490 = vmatpush1.msra.mxu0 0.0
      %491 = vmatprep.subr.mxu0 0.0
      %492 = vmatpush1.msra.mxu0 0.0
      %493 = vmatprep.subr.mxu0 0.0
      %494 = vmatpush1.msra.mxu0 0.0
      %495 = vmatprep.subr.mxu0 0.0
      %496 = vmatpush1.msra.mxu0 0.0
      %497 = vmatprep.subr.mxu0 0.0
      %498 = vmatpush1.msra.mxu0 0.0
      %499 = vmatprep.subr.mxu0 0.0
      %500 = vmatpush1.msra.mxu0 0.0
      %501 = vmatprep.subr.mxu0 0.0
      %502 = vmatpush1.msra.mxu0 0.0
      %503 = vmatprep.subr.mxu0 0.0
      %504 = vmatpush1.msra.mxu0 0.0
      %505 = vmatprep.subr.mxu0 0.0
      %506 = vmatpush1.msra.mxu0 0.0
      %507 = vmatprep.subr.mxu0 0.0
      %508 = vmatpush1.msra.mxu0 0.0
      %509 = vmatprep.subr.mxu0 0.0
      %510 = vmatpush1.msra.mxu0 0.0
      %511 = vmatprep.subr.mxu0 0.0
      %512 = vmatpush1.msra.mxu0 0.0
      %513 = vmatprep.subr.mxu0 0.0
      %514 = vmatpush1.msra.mxu0 0.0
      %515 = vmatprep.subr.mxu0 0.0
      %516 = vmatpush1.msra.mxu0 0.0
      %517 = vmatprep.subr.mxu0 0.0
      %518 = vmatpush1.msra.mxu0 0.0
      %519 = vmatprep.subr.mxu0 0.0
      %520 = vmatpush1.msra.mxu0 0.0
      %521 = vmatprep.subr.mxu0 0.0
      %522 = vmatpush1.msra.mxu0 0.0
      %523 = vmatprep.mubr.f32.mxu0 0.0
      %524 = vmatmul.mubr.f32.gmra.mrb[0].mxu0 %v457
      %v525 = vpop.f32.mrb[0].mxu0
      %v526 = vadd.f32 0.0, %v525
      %v527 = vpop.f32.mrb[0].mxu0
      %528 = vdwg.mxu0
      %v529 = vadd.f32 %v447, %v526
      %v530 = vld [vmem:[%s289] sm:$0xff]
      %s531 = scalar_lea.vmem %s4, 24
      %v532 = vld [vmem:[%s531] sm:$0xff]
      %v534 = vsel %vm303, %v532, 0
      %536 = vmatprep.subr.mxu0 0.0
      %537 = vmatpush1.msra.mxu0 %v530
      %538 = vmatprep.subr.mxu0 0.0
      %539 = vmatpush1.msra.mxu0 0.0
      %540 = vmatprep.subr.mxu0 0.0
      %541 = vmatpush1.msra.mxu0 0.0
      %542 = vmatprep.subr.mxu0 0.0
      %543 = vmatpush1.msra.mxu0 0.0
      %544 = vmatprep.subr.mxu0 0.0
      %545 = vmatpush1.msra.mxu0 0.0
      %546 = vmatprep.subr.mxu0 0.0
      %547 = vmatpush1.msra.mxu0 0.0
      %548 = vmatprep.subr.mxu0 0.0
      %549 = vmatpush1.msra.mxu0 0.0
      %550 = vmatprep.subr.mxu0 0.0
      %551 = vmatpush1.msra.mxu0 0.0
      %552 = vmatprep.subr.mxu0 0.0
      %553 = vmatpush1.msra.mxu0 0.0
      %554 = vmatprep.subr.mxu0 0.0
      %555 = vmatpush1.msra.mxu0 0.0
      %556 = vmatprep.subr.mxu0 0.0
      %557 = vmatpush1.msra.mxu0 0.0
      %558 = vmatprep.subr.mxu0 0.0
      %559 = vmatpush1.msra.mxu0 0.0
      %560 = vmatprep.subr.mxu0 0.0
      %561 = vmatpush1.msra.mxu0 0.0
      %562 = vmatprep.subr.mxu0 0.0
      %563 = vmatpush1.msra.mxu0 0.0
      %564 = vmatprep.subr.mxu0 0.0
      %565 = vmatpush1.msra.mxu0 0.0
      %566 = vmatprep.subr.mxu0 0.0
      %567 = vmatpush1.msra.mxu0 0.0
      %568 = vmatprep.subr.mxu0 0.0
      %569 = vmatpush1.msra.mxu0 0.0
      %570 = vmatprep.subr.mxu0 0.0
      %571 = vmatpush1.msra.mxu0 0.0
      %572 = vmatprep.subr.mxu0 0.0
      %573 = vmatpush1.msra.mxu0 0.0
      %574 = vmatprep.subr.mxu0 0.0
      %575 = vmatpush1.msra.mxu0 0.0
      %576 = vmatprep.subr.mxu0 0.0
      %577 = vmatpush1.msra.mxu0 0.0
      %578 = vmatprep.subr.mxu0 0.0
      %579 = vmatpush1.msra.mxu0 0.0
      %580 = vmatprep.subr.mxu0 0.0
      %581 = vmatpush1.msra.mxu0 0.0
      %582 = vmatprep.subr.mxu0 0.0
      %583 = vmatpush1.msra.mxu0 0.0
      %584 = vmatprep.subr.mxu0 0.0
      %585 = vmatpush1.msra.mxu0 0.0
      %586 = vmatprep.subr.mxu0 0.0
      %587 = vmatpush1.msra.mxu0 0.0
      %588 = vmatprep.subr.mxu0 0.0
      %589 = vmatpush1.msra.mxu0 0.0
      %590 = vmatprep.subr.mxu0 0.0
      %591 = vmatpush1.msra.mxu0 0.0
      %592 = vmatprep.subr.mxu0 0.0
      %593 = vmatpush1.msra.mxu0 0.0
      %594 = vmatprep.subr.mxu0 0.0
      %595 = vmatpush1.msra.mxu0 0.0
      %596 = vmatprep.subr.mxu0 0.0
      %597 = vmatpush1.msra.mxu0 0.0
      %598 = vmatprep.subr.mxu0 0.0
      %599 = vmatpush1.msra.mxu0 0.0
      %600 = vmatprep.mubr.f32.mxu0 0.0
      %601 = vmatmul.mubr.f32.gmra.mrb[0].mxu0 %v534
      %v602 = vpop.f32.mrb[0].mxu0
      %v603 = vadd.f32 0.0, %v602
      %v604 = vpop.f32.mrb[0].mxu0
      %605 = vdwg.mxu0
      %v606 = vadd.f32 %v529, %v603
      %v607 = vld [vmem:[%s293] sm:$0xff]
      %s608 = scalar_lea.vmem %s4, 32
      %v609 = vld [vmem:[%s608] sm:$0xff]
      %v611 = vsel %vm303, %v609, 0
      %613 = vmatprep.subr.mxu0 0.0
      %614 = vmatpush1.msra.mxu0 %v607
      %615 = vmatprep.subr.mxu0 0.0
      %616 = vmatpush1.msra.mxu0 0.0
      %617 = vmatprep.subr.mxu0 0.0
      %618 = vmatpush1.msra.mxu0 0.0
      %619 = vmatprep.subr.mxu0 0.0
      %620 = vmatpush1.msra.mxu0 0.0
      %621 = vmatprep.subr.mxu0 0.0
      %622 = vmatpush1.msra.mxu0 0.0
      %623 = vmatprep.subr.mxu0 0.0
      %624 = vmatpush1.msra.mxu0 0.0
      %625 = vmatprep.subr.mxu0 0.0
      %626 = vmatpush1.msra.mxu0 0.0
      %627 = vmatprep.subr.mxu0 0.0
      %628 = vmatpush1.msra.mxu0 0.0
      %629 = vmatprep.subr.mxu0 0.0
      %630 = vmatpush1.msra.mxu0 0.0
      %631 = vmatprep.subr.mxu0 0.0
      %632 = vmatpush1.msra.mxu0 0.0
      %633 = vmatprep.subr.mxu0 0.0
      %634 = vmatpush1.msra.mxu0 0.0
      %635 = vmatprep.subr.mxu0 0.0
      %636 = vmatpush1.msra.mxu0 0.0
      %637 = vmatprep.subr.mxu0 0.0
      %638 = vmatpush1.msra.mxu0 0.0
      %639 = vmatprep.subr.mxu0 0.0
      %640 = vmatpush1.msra.mxu0 0.0
      %641 = vmatprep.subr.mxu0 0.0
      %642 = vmatpush1.msra.mxu0 0.0
      %643 = vmatprep.subr.mxu0 0.0
      %644 = vmatpush1.msra.mxu0 0.0
      %645 = vmatprep.subr.mxu0 0.0
      %646 = vmatpush1.msra.mxu0 0.0
      %647 = vmatprep.subr.mxu0 0.0
      %648 = vmatpush1.msra.mxu0 0.0
      %649 = vmatprep.subr.mxu0 0.0
      %650 = vmatpush1.msra.mxu0 0.0
      %651 = vmatprep.subr.mxu0 0.0
      %652 = vmatpush1.msra.mxu0 0.0
      %653 = vmatprep.subr.mxu0 0.0
      %654 = vmatpush1.msra.mxu0 0.0
      %655 = vmatprep.subr.mxu0 0.0
      %656 = vmatpush1.msra.mxu0 0.0
      %657 = vmatprep.subr.mxu0 0.0
      %658 = vmatpush1.msra.mxu0 0.0
      %659 = vmatprep.subr.mxu0 0.0
      %660 = vmatpush1.msra.mxu0 0.0
      %661 = vmatprep.subr.mxu0 0.0
      %662 = vmatpush1.msra.mxu0 0.0
      %663 = vmatprep.subr.mxu0 0.0
      %664 = vmatpush1.msra.mxu0 0.0
      %665 = vmatprep.subr.mxu0 0.0
      %666 = vmatpush1.msra.mxu0 0.0
      %667 = vmatprep.subr.mxu0 0.0
      %668 = vmatpush1.msra.mxu0 0.0
      %669 = vmatprep.subr.mxu0 0.0
      %670 = vmatpush1.msra.mxu0 0.0
      %671 = vmatprep.subr.mxu0 0.0
      %672 = vmatpush1.msra.mxu0 0.0
      %673 = vmatprep.subr.mxu0 0.0
      %674 = vmatpush1.msra.mxu0 0.0
      %675 = vmatprep.subr.mxu0 0.0
      %676 = vmatpush1.msra.mxu0 0.0
      %677 = vmatprep.mubr.f32.mxu0 0.0
      %678 = vmatmul.mubr.f32.gmra.mrb[0].mxu0 %v611
      %v679 = vpop.f32.mrb[0].mxu0
      %v680 = vadd.f32 0.0, %v679
      %v681 = vpop.f32.mrb[0].mxu0
      %682 = vdwg.mxu0
      %v683 = vadd.f32 %v606, %v680
      %s684 = scalar_lea.vmem %s4, 40
      %v685 = vld [vmem:[%s684] sm:$0xff]
      %687 = vrot.lane.b32.xlu0 %v530, 127
      %v688 = vpop.permute.xlu0 %687
      %v691 = vsel %vm303, %v685, 0
      %693 = vmatprep.subr.mxu0 0.0
      %694 = vmatpush1.msra.mxu0 %v688
      %695 = vmatprep.subr.mxu0 0.0
      %696 = vmatpush1.msra.mxu0 0.0
      %697 = vmatprep.subr.mxu0 0.0
      %698 = vmatpush1.msra.mxu0 0.0
      %699 = vmatprep.subr.mxu0 0.0
      %700 = vmatpush1.msra.mxu0 0.0
      %701 = vmatprep.subr.mxu0 0.0
      %702 = vmatpush1.msra.mxu0 0.0
      %703 = vmatprep.subr.mxu0 0.0
      %704 = vmatpush1.msra.mxu0 0.0
      %705 = vmatprep.subr.mxu0 0.0
      %706 = vmatpush1.msra.mxu0 0.0
      %707 = vmatprep.subr.mxu0 0.0
      %708 = vmatpush1.msra.mxu0 0.0
      %709 = vmatprep.subr.mxu0 0.0
      %710 = vmatpush1.msra.mxu0 0.0
      %711 = vmatprep.subr.mxu0 0.0
      %712 = vmatpush1.msra.mxu0 0.0
      %713 = vmatprep.subr.mxu0 0.0
      %714 = vmatpush1.msra.mxu0 0.0
      %715 = vmatprep.subr.mxu0 0.0
      %716 = vmatpush1.msra.mxu0 0.0
      %717 = vmatprep.subr.mxu0 0.0
      %718 = vmatpush1.msra.mxu0 0.0
      %719 = vmatprep.subr.mxu0 0.0
      %720 = vmatpush1.msra.mxu0 0.0
      %721 = vmatprep.subr.mxu0 0.0
      %722 = vmatpush1.msra.mxu0 0.0
      %723 = vmatprep.subr.mxu0 0.0
      %724 = vmatpush1.msra.mxu0 0.0
      %725 = vmatprep.subr.mxu0 0.0
      %726 = vmatpush1.msra.mxu0 0.0
      %727 = vmatprep.subr.mxu0 0.0
      %728 = vmatpush1.msra.mxu0 0.0
      %729 = vmatprep.subr.mxu0 0.0
      %730 = vmatpush1.msra.mxu0 0.0
      %731 = vmatprep.subr.mxu0 0.0
      %732 = vmatpush1.msra.mxu0 0.0
      %733 = vmatprep.subr.mxu0 0.0
      %734 = vmatpush1.msra.mxu0 0.0
      %735 = vmatprep.subr.mxu0 0.0
      %736 = vmatpush1.msra.mxu0 0.0
      %737 = vmatprep.subr.mxu0 0.0
      %738 = vmatpush1.msra.mxu0 0.0
      %739 = vmatprep.subr.mxu0 0.0
      %740 = vmatpush1.msra.mxu0 0.0
      %741 = vmatprep.subr.mxu0 0.0
      %742 = vmatpush1.msra.mxu0 0.0
      %743 = vmatprep.subr.mxu0 0.0
      %744 = vmatpush1.msra.mxu0 0.0
      %745 = vmatprep.subr.mxu0 0.0
      %746 = vmatpush1.msra.mxu0 0.0
      %747 = vmatprep.subr.mxu0 0.0
      %748 = vmatpush1.msra.mxu0 0.0
      %749 = vmatprep.subr.mxu0 0.0
      %750 = vmatpush1.msra.mxu0 0.0
      %751 = vmatprep.subr.mxu0 0.0
      %752 = vmatpush1.msra.mxu0 0.0
      %753 = vmatprep.subr.mxu0 0.0
      %754 = vmatpush1.msra.mxu0 0.0
      %755 = vmatprep.subr.mxu0 0.0
      %756 = vmatpush1.msra.mxu0 0.0
      %757 = vmatprep.mubr.f32.mxu0 0.0
      %758 = vmatmul.mubr.f32.gmra.mrb[0].mxu0 %v691
      %v759 = vpop.f32.mrb[0].mxu0
      %v760 = vadd.f32 0.0, %v759
      %v761 = vpop.f32.mrb[0].mxu0
      %762 = vdwg.mxu0
      %v763 = vadd.f32 %v683, %v760
      %s764 = scalar_lea.vmem %s4, 48
      %v765 = vld [vmem:[%s764] sm:$0xff]
      %766 = vrot.lane.b32.xlu0 %v298, 119
      %v767 = vpop.permute.xlu0 %766
      %v770 = vsel %vm303, %v765, 0
      %772 = vmatprep.subr.mxu0 0.0
      %773 = vmatpush1.msra.mxu0 %v767
      %774 = vmatprep.subr.mxu0 0.0
      %775 = vmatpush1.msra.mxu0 0.0
      %776 = vmatprep.subr.mxu0 0.0
      %777 = vmatpush1.msra.mxu0 0.0
      %778 = vmatprep.subr.mxu0 0.0
      %779 = vmatpush1.msra.mxu0 0.0
      %780 = vmatprep.subr.mxu0 0.0
      %781 = vmatpush1.msra.mxu0 0.0
      %782 = vmatprep.subr.mxu0 0.0
      %783 = vmatpush1.msra.mxu0 0.0
      %784 = vmatprep.subr.mxu0 0.0
      %785 = vmatpush1.msra.mxu0 0.0
      %786 = vmatprep.subr.mxu0 0.0
      %787 = vmatpush1.msra.mxu0 0.0
      %788 = vmatprep.subr.mxu0 0.0
      %789 = vmatpush1.msra.mxu0 0.0
      %790 = vmatprep.subr.mxu0 0.0
      %791 = vmatpush1.msra.mxu0 0.0
      %792 = vmatprep.subr.mxu0 0.0
      %793 = vmatpush1.msra.mxu0 0.0
      %794 = vmatprep.subr.mxu0 0.0
      %795 = vmatpush1.msra.mxu0 0.0
      %796 = vmatprep.subr.mxu0 0.0
      %797 = vmatpush1.msra.mxu0 0.0
      %798 = vmatprep.subr.mxu0 0.0
      %799 = vmatpush1.msra.mxu0 0.0
      %800 = vmatprep.subr.mxu0 0.0
      %801 = vmatpush1.msra.mxu0 0.0
      %802 = vmatprep.subr.mxu0 0.0
      %803 = vmatpush1.msra.mxu0 0.0
      %804 = vmatprep.subr.mxu0 0.0
      %805 = vmatpush1.msra.mxu0 0.0
      %806 = vmatprep.subr.mxu0 0.0
      %807 = vmatpush1.msra.mxu0 0.0
      %808 = vmatprep.subr.mxu0 0.0
      %809 = vmatpush1.msra.mxu0 0.0
      %810 = vmatprep.subr.mxu0 0.0
      %811 = vmatpush1.msra.mxu0 0.0
      %812 = vmatprep.subr.mxu0 0.0
      %813 = vmatpush1.msra.mxu0 0.0
      %814 = vmatprep.subr.mxu0 0.0
      %815 = vmatpush1.msra.mxu0 0.0
      %816 = vmatprep.subr.mxu0 0.0
      %817 = vmatpush1.msra.mxu0 0.0
      %818 = vmatprep.subr.mxu0 0.0
      %819 = vmatpush1.msra.mxu0 0.0
      %820 = vmatprep.subr.mxu0 0.0
      %821 = vmatpush1.msra.mxu0 0.0
      %822 = vmatprep.subr.mxu0 0.0
      %823 = vmatpush1.msra.mxu0 0.0
      %824 = vmatprep.subr.mxu0 0.0
      %825 = vmatpush1.msra.mxu0 0.0
      %826 = vmatprep.subr.mxu0 0.0
      %827 = vmatpush1.msra.mxu0 0.0
      %828 = vmatprep.subr.mxu0 0.0
      %829 = vmatpush1.msra.mxu0 0.0
      %830 = vmatprep.subr.mxu0 0.0
      %831 = vmatpush1.msra.mxu0 0.0
      %832 = vmatprep.subr.mxu0 0.0
      %833 = vmatpush1.msra.mxu0 0.0
      %834 = vmatprep.subr.mxu0 0.0
      %835 = vmatpush1.msra.mxu0 0.0
      %836 = vmatprep.mubr.f32.mxu0 0.0
      %837 = vmatmul.mubr.f32.gmra.mrb[0].mxu0 %v770
      %v838 = vpop.f32.mrb[0].mxu0
      %v839 = vadd.f32 0.0, %v838
      %v840 = vpop.f32.mrb[0].mxu0
      %841 = vdwg.mxu0
      %v842 = vadd.f32 %v763, %v839
      %s843 = scalar_lea.vmem %s4, 56
      %v844 = vld [vmem:[%s843] sm:$0xff]
      %846 = vrot.lane.b32.xlu0 %v300, 119
      %v847 = vpop.permute.xlu0 %846
      %v850 = vsel %vm303, %v844, 0
      %852 = vmatprep.subr.mxu0 0.0
      %853 = vmatpush1.msra.mxu0 %v847
      %854 = vmatprep.subr.mxu0 0.0
      %855 = vmatpush1.msra.mxu0 0.0
      %856 = vmatprep.subr.mxu0 0.0
      %857 = vmatpush1.msra.mxu0 0.0
      %858 = vmatprep.subr.mxu0 0.0
      %859 = vmatpush1.msra.mxu0 0.0
      %860 = vmatprep.subr.mxu0 0.0
      %861 = vmatpush1.msra.mxu0 0.0
      %862 = vmatprep.subr.mxu0 0.0
      %863 = vmatpush1.msra.mxu0 0.0
      %864 = vmatprep.subr.mxu0 0.0
      %865 = vmatpush1.msra.mxu0 0.0
      %866 = vmatprep.subr.mxu0 0.0
      %867 = vmatpush1.msra.mxu0 0.0
      %868 = vmatprep.subr.mxu0 0.0
      %869 = vmatpush1.msra.mxu0 0.0
      %870 = vmatprep.subr.mxu0 0.0
      %871 = vmatpush1.msra.mxu0 0.0
      %872 = vmatprep.subr.mxu0 0.0
      %873 = vmatpush1.msra.mxu0 0.0
      %874 = vmatprep.subr.mxu0 0.0
      %875 = vmatpush1.msra.mxu0 0.0
      %876 = vmatprep.subr.mxu0 0.0
      %877 = vmatpush1.msra.mxu0 0.0
      %878 = vmatprep.subr.mxu0 0.0
      %879 = vmatpush1.msra.mxu0 0.0
      %880 = vmatprep.subr.mxu0 0.0
      %881 = vmatpush1.msra.mxu0 0.0
      %882 = vmatprep.subr.mxu0 0.0
      %883 = vmatpush1.msra.mxu0 0.0
      %884 = vmatprep.subr.mxu0 0.0
      %885 = vmatpush1.msra.mxu0 0.0
      %886 = vmatprep.subr.mxu0 0.0
      %887 = vmatpush1.msra.mxu0 0.0
      %888 = vmatprep.subr.mxu0 0.0
      %889 = vmatpush1.msra.mxu0 0.0
      %890 = vmatprep.subr.mxu0 0.0
      %891 = vmatpush1.msra.mxu0 0.0
      %892 = vmatprep.subr.mxu0 0.0
      %893 = vmatpush1.msra.mxu0 0.0
      %894 = vmatprep.subr.mxu0 0.0
      %895 = vmatpush1.msra.mxu0 0.0
      %896 = vmatprep.subr.mxu0 0.0
      %897 = vmatpush1.msra.mxu0 0.0
      %898 = vmatprep.subr.mxu0 0.0
      %899 = vmatpush1.msra.mxu0 0.0
      %900 = vmatprep.subr.mxu0 0.0
      %901 = vmatpush1.msra.mxu0 0.0
      %902 = vmatprep.subr.mxu0 0.0
      %903 = vmatpush1.msra.mxu0 0.0
      %904 = vmatprep.subr.mxu0 0.0
      %905 = vmatpush1.msra.mxu0 0.0
      %906 = vmatprep.subr.mxu0 0.0
      %907 = vmatpush1.msra.mxu0 0.0
      %908 = vmatprep.subr.mxu0 0.0
      %909 = vmatpush1.msra.mxu0 0.0
      %910 = vmatprep.subr.mxu0 0.0
      %911 = vmatpush1.msra.mxu0 0.0
      %912 = vmatprep.subr.mxu0 0.0
      %913 = vmatpush1.msra.mxu0 0.0
      %914 = vmatprep.subr.mxu0 0.0
      %915 = vmatpush1.msra.mxu0 0.0
      %916 = vmatprep.mubr.f32.mxu0 0.0
      %917 = vmatmul.mubr.f32.gmra.mrb[0].mxu0 %v850
      %v918 = vpop.f32.mrb[0].mxu0
      %v919 = vadd.f32 0.0, %v918
      %v920 = vpop.f32.mrb[0].mxu0
      %921 = vdwg.mxu0
      %v922 = vadd.f32 %v842, %v919
      %s923 = scalar_lea.vmem %s4, 64
      %v924 = vld [vmem:[%s923] sm:$0xff]
      %925 = vrot.lane.b32.xlu0 %v298, 118
      %v926 = vpop.permute.xlu0 %925
      %v929 = vsel %vm303, %v924, 0
      %931 = vmatprep.subr.mxu0 0.0
      %932 = vmatpush1.msra.mxu0 %v926
      %933 = vmatprep.subr.mxu0 0.0
      %934 = vmatpush1.msra.mxu0 0.0
      %935 = vmatprep.subr.mxu0 0.0
      %936 = vmatpush1.msra.mxu0 0.0
      %937 = vmatprep.subr.mxu0 0.0
      %938 = vmatpush1.msra.mxu0 0.0
      %939 = vmatprep.subr.mxu0 0.0
      %940 = vmatpush1.msra.mxu0 0.0
      %941 = vmatprep.subr.mxu0 0.0
      %942 = vmatpush1.msra.mxu0 0.0
      %943 = vmatprep.subr.mxu0 0.0
      %944 = vmatpush1.msra.mxu0 0.0
      %945 = vmatprep.subr.mxu0 0.0
      %946 = vmatpush1.msra.mxu0 0.0
      %947 = vmatprep.subr.mxu0 0.0
      %948 = vmatpush1.msra.mxu0 0.0
      %949 = vmatprep.subr.mxu0 0.0
      %950 = vmatpush1.msra.mxu0 0.0
      %951 = vmatprep.subr.mxu0 0.0
      %952 = vmatpush1.msra.mxu0 0.0
      %953 = vmatprep.subr.mxu0 0.0
      %954 = vmatpush1.msra.mxu0 0.0
      %955 = vmatprep.subr.mxu0 0.0
      %956 = vmatpush1.msra.mxu0 0.0
      %957 = vmatprep.subr.mxu0 0.0
      %958 = vmatpush1.msra.mxu0 0.0
      %959 = vmatprep.subr.mxu0 0.0
      %960 = vmatpush1.msra.mxu0 0.0
      %961 = vmatprep.subr.mxu0 0.0
      %962 = vmatpush1.msra.mxu0 0.0
      %963 = vmatprep.subr.mxu0 0.0
      %964 = vmatpush1.msra.mxu0 0.0
      %965 = vmatprep.subr.mxu0 0.0
      %966 = vmatpush1.msra.mxu0 0.0
      %967 = vmatprep.subr.mxu0 0.0
      %968 = vmatpush1.msra.mxu0 0.0
      %969 = vmatprep.subr.mxu0 0.0
      %970 = vmatpush1.msra.mxu0 0.0
      %971 = vmatprep.subr.mxu0 0.0
      %972 = vmatpush1.msra.mxu0 0.0
      %973 = vmatprep.subr.mxu0 0.0
      %974 = vmatpush1.msra.mxu0 0.0
      %975 = vmatprep.subr.mxu0 0.0
      %976 = vmatpush1.msra.mxu0 0.0
      %977 = vmatprep.subr.mxu0 0.0
      %978 = vmatpush1.msra.mxu0 0.0
      %979 = vmatprep.subr.mxu0 0.0
      %980 = vmatpush1.msra.mxu0 0.0
      %981 = vmatprep.subr.mxu0 0.0
      %982 = vmatpush1.msra.mxu0 0.0
      %983 = vmatprep.subr.mxu0 0.0
      %984 = vmatpush1.msra.mxu0 0.0
      %985 = vmatprep.subr.mxu0 0.0
      %986 = vmatpush1.msra.mxu0 0.0
      %987 = vmatprep.subr.mxu0 0.0
      %988 = vmatpush1.msra.mxu0 0.0
      %989 = vmatprep.subr.mxu0 0.0
      %990 = vmatpush1.msra.mxu0 0.0
      %991 = vmatprep.subr.mxu0 0.0
      %992 = vmatpush1.msra.mxu0 0.0
      %993 = vmatprep.subr.mxu0 0.0
      %994 = vmatpush1.msra.mxu0 0.0
      %995 = vmatprep.mubr.f32.mxu0 0.0
      %996 = vmatmul.mubr.f32.gmra.mrb[0].mxu0 %v929
      %v997 = vpop.f32.mrb[0].mxu0
      %v998 = vadd.f32 0.0, %v997
      %v999 = vpop.f32.mrb[0].mxu0
      %1000 = vdwg.mxu0
      %v1001 = vadd.f32 %v922, %v998
      %v1002 = vld [vmem:[%s5] sm:$0xff]
      %1004 = vset.pattern.permute.xlu0 0
      %1005 = vperm.xlu0 %1004, %v1002
      %v1006 = vpop.permute.xlu0 %1005
      %v1008 = vadd.f32 %v1001, %v1006
      %vm1009 = vcmp.ge.f32.partialorder %v1008, 0.0
      %v1010 = vmul.f32 %v1008, 0.1
      %v1011 = vsel %vm1009, %v1008, %v1010
      %vm1012 = vcmask 588800
      %1013 = vst.msk [vmem:[%s297] sm:$0xff] %vm1012, %v1011
      %p1014 = scmp.lt.s32.totalorder %s17, 1
      %s1015 = scalar_select %p1014, %s17, 1
      %s1016 = smul.addr %s1015, 8
      %s1017 = scalar_lea.vmem %s6, %s1016
      // Predicated region
      $region45: #{_lambda_.6} parent=43 // pred_check
        %p1018 = pneg %p181
      $region46: #{_lambda_.6} parent=43 // pred_check_branch
        %1020 = sbr.rel (%p1018) target = $region48
      $region47: #{_lambda_.6} parent=43 // pred_region
        _
      $region48: #{_lambda_.6} parent=43 // pred_fallthru
        _
    $region44: #{_lambda_.6} parent=5 // pred_fallthru
      _
    %p1021 = scmp.le.s32.totalorder 2, %s12
    // Predicated region
    $region49: #{_lambda_.6} parent=5 // pred_check
      %p1022 = pneg %p1021
    $region50: #{_lambda_.6} parent=5 // pred_check_branch
      %1024 = sbr.rel (%p1022) target = $region52
    $region51: #{_lambda_.6} parent=5 // pred_region
      %s1025 = ssub.s32 %s12, 2
      // Predicated region
      $region53: #{_lambda_.6} parent=51 // pred_check
        %p1026 = pneg %p187
      $region54: #{_lambda_.6} parent=51 // pred_check_branch
        %1028 = sbr.rel (%p1026) target = $region56
      $region55: #{_lambda_.6} parent=51 // pred_region
        %p1029 = scmp.lt.s32.totalorder %s18, 1
        %s1030 = scalar_select %p1029, %s18, 1
        %s1031 = smul.addr %s1030, 8
        %s1032 = scalar_lea.vmem %s6, %s1031
      $region56: #{_lambda_.6} parent=51 // pred_fallthru
        _
    $region52: #{_lambda_.6} parent=5 // pred_fallthru
      _
  $region6: #{_lambda_.6} parent=0 // loop_footer
    %s16 = sadd.s32 1, %s12
  $region7: #{_lambda_.6} parent=0 // loop_footer_branch
    %11 = sbr.rel target = $region3
  $region8: #{_lambda_.6} parent=0 // loop_exit
    _

// kernel: _lambda_.8
$region0: #{_lambda_.8}
  #allocation0 [shape = 'u32[]', space=smem, size = 0x4, offset = 0x4, fixed_abs, tag = 'smem constant byte address 0x4 - core index']
  #allocation1 [shape = 'u32[144,128]{1,0:T(1,128)}', space=vmem, size = 0x12000, scoped, tag = 'internal scratch']
  %s0 = inlined_call_operand.vmem [shape: f32[2,8,30], index: 0, kind: input, shape index: {}]
  %s1 = inlined_call_operand.vmem [shape: f32[2,8,30], index: 1, kind: input, shape index: {}]
  %s2 = inlined_call_operand.vmem [shape: f32[2,8,30], index: 2, kind: input, shape index: {}]
  %s3 = inlined_call_operand.vmem [shape: f32[2,8,30], index: 3, kind: input, shape index: {}]
  %s4 = inlined_call_operand.vmem [shape: f32[9,16,8], index: 4, kind: input, shape index: {}]
  %s5 = inlined_call_operand.vmem [shape: f32[16,1], index: 5, kind: input, shape index: {}]
  %s6 = inlined_call_operand.vmem [shape: f32[2,16,20], index: 6, kind: output, shape index: {}]
  %s7 = sld [smem:[#allocation0]]
  $region57: #{_lambda_.8} parent=0
    _
  %s9 = ssub.s32 1, %s7
  %s10 = scalar_select 0, %s9, %s7
  loop: start=0, step=1, limit=4
  $region2: #{_lambda_.8} parent=0 // loop_pre_header
    _
  $region3: #{_lambda_.8} parent=0 // loop_header
    %s12 = sphi 0, %s16
    %p13 = scmp.ge.s32.totalorder %s12, 4
    %s22 = sphi 0, %s24
    %s25 = sphi 0, %s22
    %s26 = sphi 0, %s25
    %s42 = sphi 0, %s26
    %s48 = sphi 0, %s50
    %s51 = sphi 0, %s48
    %s52 = sphi 0, %s51
    %s68 = sphi 0, %s52
    %s74 = sphi 0, %s76
    %s77 = sphi 0, %s74
    %s78 = sphi 0, %s77
    %s94 = sphi 0, %s78
    %s100 = sphi 0, %s102
    %s103 = sphi 0, %s100
    %s104 = sphi 0, %s103
    %s120 = sphi 0, %s104
    %s124 = sphi 0, %s124
    %s126 = sphi 0, %s124
    %s127 = sphi 0, %s126
    %s141 = sphi 0, %s127
    %s145 = sphi 0, %s145
    %s147 = sphi 0, %s145
    %s148 = sphi 0, %s147
    %s162 = sphi 0, %s148
    %s168 = sphi 0, %s170
    %s171 = sphi 0, %s168
    %s172 = sphi 0, %s171
    %s188 = sphi 0, %s172
  $region4: #{_lambda_.8} parent=0 // loop_header_branch
    %15 = sbr.rel (%p13) target = $region8
  $region5: #{_lambda_.8} parent=0 // loop_body
    %s17 = ssub.s32 %s12, 1
    %s18 = ssub.s32 %s12, 2
    %s19 = sadd.s32 %s12, 1
    %s20 = ssub.s32 %s12, %s19
    %p21 = scmp.eq.s32.totalorder %s20, 0
    %s23 = sadd.s32 %s22, 1
    %s24 = scalar_select %p21, %s22, %s23
    %p27 = pneg %p21
    %p28 = scmp.eq.s32.totalorder %s12, 1
    %p29 = por %p27, %p28
    %p30 = scmp.ne.s32.totalorder %s22, %s25
    %p31 = scmp.eq.s32.totalorder %s12, 0
    %p32 = por %p30, %p31
    %p33 = scmp.ne.s32.totalorder %s22, %s25
    %p34 = scmp.eq.s32.totalorder %s17, 1
    %p35 = por %p33, %p34
    %p36 = scmp.ne.s32.totalorder %s25, %s26
    %p37 = scmp.eq.s32.totalorder %s17, 0
    %p38 = por %p36, %p37
    %p39 = scmp.ne.s32.totalorder %s25, %s26
    %p40 = scmp.eq.s32.totalorder %s18, 1
    %p41 = por %p39, %p40
    %p43 = scmp.ne.s32.totalorder %s26, %s42
    %p44 = scmp.eq.s32.totalorder %s18, 0
    %p45 = por %p43, %p44
    %s46 = ssub.s32 %s12, %s19
    %p47 = scmp.eq.s32.totalorder %s46, 0
    %s49 = sadd.s32 %s48, 1
    %s50 = scalar_select %p47, %s48, %s49
    %p53 = pneg %p47
    %p54 = scmp.eq.s32.totalorder %s12, 1
    %p55 = por %p53, %p54
    %p56 = scmp.ne.s32.totalorder %s48, %s51
    %p57 = scmp.eq.s32.totalorder %s12, 0
    %p58 = por %p56, %p57
    %p59 = scmp.ne.s32.totalorder %s48, %s51
    %p60 = scmp.eq.s32.totalorder %s17, 1
    %p61 = por %p59, %p60
    %p62 = scmp.ne.s32.totalorder %s51, %s52
    %p63 = scmp.eq.s32.totalorder %s17, 0
    %p64 = por %p62, %p63
    %p65 = scmp.ne.s32.totalorder %s51, %s52
    %p66 = scmp.eq.s32.totalorder %s18, 1
    %p67 = por %p65, %p66
    %p69 = scmp.ne.s32.totalorder %s52, %s68
    %p70 = scmp.eq.s32.totalorder %s18, 0
    %p71 = por %p69, %p70
    %s72 = ssub.s32 %s12, %s19
    %p73 = scmp.eq.s32.totalorder %s72, 0
    %s75 = sadd.s32 %s74, 1
    %s76 = scalar_select %p73, %s74, %s75
    %p79 = pneg %p73
    %p80 = scmp.eq.s32.totalorder %s12, 1
    %p81 = por %p79, %p80
    %p82 = scmp.ne.s32.totalorder %s74, %s77
    %p83 = scmp.eq.s32.totalorder %s12, 0
    %p84 = por %p82, %p83
    %p85 = scmp.ne.s32.totalorder %s74, %s77
    %p86 = scmp.eq.s32.totalorder %s17, 1
    %p87 = por %p85, %p86
    %p88 = scmp.ne.s32.totalorder %s77, %s78
    %p89 = scmp.eq.s32.totalorder %s17, 0
    %p90 = por %p88, %p89
    %p91 = scmp.ne.s32.totalorder %s77, %s78
    %p92 = scmp.eq.s32.totalorder %s18, 1
    %p93 = por %p91, %p92
    %p95 = scmp.ne.s32.totalorder %s78, %s94
    %p96 = scmp.eq.s32.totalorder %s18, 0
    %p97 = por %p95, %p96
    %s98 = ssub.s32 %s12, %s19
    %p99 = scmp.eq.s32.totalorder %s98, 0
    %s101 = sadd.s32 %s100, 1
    %s102 = scalar_select %p99, %s100, %s101
    %p105 = pneg %p99
    %p106 = scmp.eq.s32.totalorder %s12, 1
    %p107 = por %p105, %p106
    %p108 = scmp.ne.s32.totalorder %s100, %s103
    %p109 = scmp.eq.s32.totalorder %s12, 0
    %p110 = por %p108, %p109
    %p111 = scmp.ne.s32.totalorder %s100, %s103
    %p112 = scmp.eq.s32.totalorder %s17, 1
    %p113 = por %p111, %p112
    %p114 = scmp.ne.s32.totalorder %s103, %s104
    %p115 = scmp.eq.s32.totalorder %s17, 0
    %p116 = por %p114, %p115
    %p117 = scmp.ne.s32.totalorder %s103, %s104
    %p118 = scmp.eq.s32.totalorder %s18, 1
    %p119 = por %p117, %p118
    %p121 = scmp.ne.s32.totalorder %s104, %s120
    %p122 = scmp.eq.s32.totalorder %s18, 0
    %p123 = por %p121, %p122
    %s125 = sadd.s32 %s124, 1
    %p128 = scmp.eq.s32.totalorder %s12, 1
    %p129 = scmp.ne.s32.totalorder %s124, %s126
    %p130 = scmp.eq.s32.totalorder %s12, 0
    %p131 = por %p129, %p130
    %p132 = scmp.ne.s32.totalorder %s124, %s126
    %p133 = scmp.eq.s32.totalorder %s17, 1
    %p134 = por %p132, %p133
    %p135 = scmp.ne.s32.totalorder %s126, %s127
    %p136 = scmp.eq.s32.totalorder %s17, 0
    %p137 = por %p135, %p136
    %p138 = scmp.ne.s32.totalorder %s126, %s127
    %p139 = scmp.eq.s32.totalorder %s18, 1
    %p140 = por %p138, %p139
    %p142 = scmp.ne.s32.totalorder %s127, %s141
    %p143 = scmp.eq.s32.totalorder %s18, 0
    %p144 = por %p142, %p143
    %s146 = sadd.s32 %s145, 1
    %p149 = scmp.eq.s32.totalorder %s12, 1
    %p150 = scmp.ne.s32.totalorder %s145, %s147
    %p151 = scmp.eq.s32.totalorder %s12, 0
    %p152 = por %p150, %p151
    %p153 = scmp.ne.s32.totalorder %s145, %s147
    %p154 = scmp.eq.s32.totalorder %s17, 1
    %p155 = por %p153, %p154
    %p156 = scmp.ne.s32.totalorder %s147, %s148
    %p157 = scmp.eq.s32.totalorder %s17, 0
    %p158 = por %p156, %p157
    %p159 = scmp.ne.s32.totalorder %s147, %s148
    %p160 = scmp.eq.s32.totalorder %s18, 1
    %p161 = por %p159, %p160
    %p163 = scmp.ne.s32.totalorder %s148, %s162
    %p164 = scmp.eq.s32.totalorder %s18, 0
    %p165 = por %p163, %p164
    %s166 = ssub.s32 %s12, %s19
    %p167 = scmp.eq.s32.totalorder %s166, 0
    %s169 = sadd.s32 %s168, 1
    %s170 = scalar_select %p167, %s168, %s169
    %p173 = pneg %p167
    %p174 = scmp.eq.s32.totalorder %s12, 1
    %p175 = por %p173, %p174
    %p176 = scmp.ne.s32.totalorder %s168, %s171
    %p177 = scmp.eq.s32.totalorder %s12, 0
    %p178 = por %p176, %p177
    %p179 = scmp.ne.s32.totalorder %s168, %s171
    %p180 = scmp.eq.s32.totalorder %s17, 1
    %p181 = por %p179, %p180
    %p182 = scmp.ne.s32.totalorder %s171, %s172
    %p183 = scmp.eq.s32.totalorder %s17, 0
    %p184 = por %p182, %p183
    %p185 = scmp.ne.s32.totalorder %s171, %s172
    %p186 = scmp.eq.s32.totalorder %s18, 1
    %p187 = por %p185, %p186
    %p189 = scmp.ne.s32.totalorder %s172, %s188
    %p190 = scmp.eq.s32.totalorder %s18, 0
    %p191 = por %p189, %p190
    %p192 = scmp.le.s32.totalorder 1, %s12
    %p193 = scmp.lt.s32.totalorder %s12, 3
    %p194 = pnand %p192, %p193
    %p195 = pneg %p194
    // Predicated region
    $region9: #{_lambda_.8} parent=5 // pred_check
      _
    $region10: #{_lambda_.8} parent=5 // pred_check_branch
      %197 = sbr.rel (%p194) target = $region12
    $region11: #{_lambda_.8} parent=5 // pred_region
      %s198 = ssub.s32 %s12, 1
      // Predicated region
      $region13: #{_lambda_.8} parent=11 // pred_check
        %p199 = pneg %p137
      $region14: #{_lambda_.8} parent=11 // pred_check_branch
        %201 = sbr.rel (%p199) target = $region16
      $region15: #{_lambda_.8} parent=11 // pred_region
        _
      $region16: #{_lambda_.8} parent=11 // pred_fallthru
        _
      // Predicated region
      $region17: #{_lambda_.8} parent=11 // pred_check
        %p202 = pneg %p158
      $region18: #{_lambda_.8} parent=11 // pred_check_branch
        %204 = sbr.rel (%p202) target = $region20
      $region19: #{_lambda_.8} parent=11 // pred_region
        _
      $region20: #{_lambda_.8} parent=11 // pred_fallthru
        _
    $region12: #{_lambda_.8} parent=5 // pred_fallthru
      _
    %p205 = scmp.lt.s32.totalorder %s12, 2
    // Predicated region
    $region21: #{_lambda_.8} parent=5 // pred_check
      %p206 = pneg %p205
    $region22: #{_lambda_.8} parent=5 // pred_check_branch
      %208 = sbr.rel (%p206) target = $region24
    $region23: #{_lambda_.8} parent=5 // pred_region
      // Predicated region
      $region25: #{_lambda_.8} parent=23 // pred_check
        %p209 = pneg %p32
      $region26: #{_lambda_.8} parent=23 // pred_check_branch
        %211 = sbr.rel (%p209) target = $region28
      $region27: #{_lambda_.8} parent=23 // pred_region
        %p212 = scmp.lt.s32.totalorder %s12, 1
        %s213 = scalar_select %p212, %s12, 1
        %s214 = smul.addr %s213, 8
        %s215 = scalar_lea.vmem %s0, %s214
      $region28: #{_lambda_.8} parent=23 // pred_fallthru
        _
      // Predicated region
      $region29: #{_lambda_.8} parent=23 // pred_check
        %p216 = pneg %p58
      $region30: #{_lambda_.8} parent=23 // pred_check_branch
        %218 = sbr.rel (%p216) target = $region32
      $region31: #{_lambda_.8} parent=23 // pred_region
        %p219 = scmp.lt.s32.totalorder %s12, 1
        %s220 = scalar_select %p219, %s12, 1
        %s221 = smul.addr %s220, 8
        %s222 = scalar_lea.vmem %s1, %s221
      $region32: #{_lambda_.8} parent=23 // pred_fallthru
        _
      // Predicated region
      $region33: #{_lambda_.8} parent=23 // pred_check
        %p223 = pneg %p84
      $region34: #{_lambda_.8} parent=23 // pred_check_branch
        %225 = sbr.rel (%p223) target = $region36
      $region35: #{_lambda_.8} parent=23 // pred_region
        %p226 = scmp.lt.s32.totalorder %s12, 1
        %s227 = scalar_select %p226, %s12, 1
        %s228 = smul.addr %s227, 8
        %s229 = scalar_lea.vmem %s2, %s228
      $region36: #{_lambda_.8} parent=23 // pred_fallthru
        _
      // Predicated region
      $region37: #{_lambda_.8} parent=23 // pred_check
        %p230 = pneg %p110
      $region38: #{_lambda_.8} parent=23 // pred_check_branch
        %232 = sbr.rel (%p230) target = $region40
      $region39: #{_lambda_.8} parent=23 // pred_region
        %p233 = scmp.lt.s32.totalorder %s12, 1
        %s234 = scalar_select %p233, %s12, 1
        %s235 = smul.addr %s234, 8
        %s236 = scalar_lea.vmem %s3, %s235
      $region40: #{_lambda_.8} parent=23 // pred_fallthru
        _
    $region24: #{_lambda_.8} parent=5 // pred_fallthru
      _
    %p237 = scmp.le.s32.totalorder 1, %s12
    %p238 = scmp.lt.s32.totalorder %s12, 3
    %p239 = pnand %p237, %p238
    %p240 = pneg %p239
    // Predicated region
    $region41: #{_lambda_.8} parent=5 // pred_check
      _
    $region42: #{_lambda_.8} parent=5 // pred_check_branch
      %242 = sbr.rel (%p239) target = $region44
    $region43: #{_lambda_.8} parent=5 // pred_region
      %s243 = ssub.s32 %s12, 1
      %p244 = scmp.lt.s32.totalorder %s17, 1
      %s245 = scalar_select %p244, %s17, 1
      %s246 = smul.addr %s245, 8
      %s247 = scalar_lea.vmem %s0, %s246
      %p248 = pneg %p38
      %p249 = pneg %p35
      %p250 = scmp.lt.s32.totalorder %s17, 1
      %s251 = scalar_select %p250, %s17, 1
      %s252 = smul.addr %s251, 8
      %s253 = scalar_lea.vmem %s1, %s252
      %p254 = pneg %p64
      %p255 = pneg %p61
      %p256 = scmp.lt.s32.totalorder %s17, 1
      %s257 = scalar_select %p256, %s17, 1
      %s258 = smul.addr %s257, 8
      %s259 = scalar_lea.vmem %s2, %s258
      %p260 = pneg %p90
      %p261 = pneg %p87
      %p262 = scmp.lt.s32.totalorder %s17, 1
      %s263 = scalar_select %p262, %s17, 1
      %s264 = smul.addr %s263, 8
      %s265 = scalar_lea.vmem %s3, %s264
      %p266 = pneg %p116
      %p267 = pneg %p113
      %p268 = pneg %p137
      %p269 = pneg %p134
      %p270 = pneg %p158
      %p271 = pneg %p155
      %p272 = pneg %p184
      %p273 = pneg %p181
      %p274 = scmp.lt.s32.totalorder %s17, 1
      %s275 = scalar_select %p274, %s17, 1
      %s276 = smul.addr %s275, 2
      %s277 = smul.addr %s276, 8
      %s278 = scalar_lea.vmem %s6, %s277
      %p279 = scmp.lt.s32.totalorder %s17, 1
      %s280 = scalar_select %p279, %s17, 1
      %s281 = smul.addr %s280, 8
      %s282 = scalar_lea.vmem %s0, %s281
      %p283 = scmp.lt.s32.totalorder %s17, 1
      %s284 = scalar_select %p283, %s17, 1
      %s285 = smul.addr %s284, 8
      %s286 = scalar_lea.vmem %s1, %s285
      %p287 = scmp.lt.s32.totalorder %s17, 1
      %s288 = scalar_select %p287, %s17, 1
      %s289 = smul.addr %s288, 8
      %s290 = scalar_lea.vmem %s2, %s289
      %p291 = scmp.lt.s32.totalorder %s17, 1
      %s292 = scalar_select %p291, %s17, 1
      %s293 = smul.addr %s292, 8
      %s294 = scalar_lea.vmem %s3, %s293
      %p295 = scmp.lt.s32.totalorder %s17, 1
      %s296 = scalar_select %p295, %s17, 1
      %s297 = smul.addr %s296, 2
      %s298 = smul.addr %s297, 8
      %s299 = scalar_lea.vmem %s6, %s298
      %v300 = vld [vmem:[%s282] sm:$0xff]
      %v301 = vld [vmem:[%s4] sm:$0xff]
      %v302 = vld [vmem:[%s4 + $0x8] sm:$0xff]
      %v303 = vld [vmem:[%s286] sm:$0xff]
      %s304 = scalar_lea.vmem %s4, 16
      %v305 = vld [vmem:[%s304] sm:$0xff]
      %v306 = vld [vmem:[%s304 + $0x8] sm:$0xff]
      %vm307 = vcmask 64512
      %v309 = vsel %vm307, %v305, 0
      %v312 = vsel %vm307, %v306, 0
      %314 = vmatprep.subr.mxu0 0.0
      %315 = vmatpush1.msra.mxu0 %v303
      %316 = vmatprep.subr.mxu0 0.0
      %317 = vmatpush1.msra.mxu0 0.0
      %318 = vmatprep.subr.mxu0 0.0
      %319 = vmatpush1.msra.mxu0 0.0
      %320 = vmatprep.subr.mxu0 0.0
      %321 = vmatpush1.msra.mxu0 0.0
      %322 = vmatprep.subr.mxu0 0.0
      %323 = vmatpush1.msra.mxu0 0.0
      %324 = vmatprep.subr.mxu0 0.0
      %325 = vmatpush1.msra.mxu0 0.0
      %326 = vmatprep.subr.mxu0 0.0
      %327 = vmatpush1.msra.mxu0 0.0
      %328 = vmatprep.subr.mxu0 0.0
      %329 = vmatpush1.msra.mxu0 0.0
      %330 = vmatprep.subr.mxu0 0.0
      %331 = vmatpush1.msra.mxu0 0.0
      %332 = vmatprep.subr.mxu0 0.0
      %333 = vmatpush1.msra.mxu0 0.0
      %334 = vmatprep.subr.mxu0 0.0
      %335 = vmatpush1.msra.mxu0 0.0
      %336 = vmatprep.subr.mxu0 0.0
      %337 = vmatpush1.msra.mxu0 0.0
      %338 = vmatprep.subr.mxu0 0.0
      %339 = vmatpush1.msra.mxu0 0.0
      %340 = vmatprep.subr.mxu0 0.0
      %341 = vmatpush1.msra.mxu0 0.0
      %342 = vmatprep.subr.mxu0 0.0
      %343 = vmatpush1.msra.mxu0 0.0
      %344 = vmatprep.subr.mxu0 0.0
      %345 = vmatpush1.msra.mxu0 0.0
      %346 = vmatprep.subr.mxu0 0.0
      %347 = vmatpush1.msra.mxu0 0.0
      %348 = vmatprep.subr.mxu0 0.0
      %349 = vmatpush1.msra.mxu0 0.0
      %350 = vmatprep.subr.mxu0 0.0
      %351 = vmatpush1.msra.mxu0 0.0
      %352 = vmatprep.subr.mxu0 0.0
      %353 = vmatpush1.msra.mxu0 0.0
      %354 = vmatprep.subr.mxu0 0.0
      %355 = vmatpush1.msra.mxu0 0.0
      %356 = vmatprep.subr.mxu0 0.0
      %357 = vmatpush1.msra.mxu0 0.0
      %358 = vmatprep.subr.mxu0 0.0
      %359 = vmatpush1.msra.mxu0 0.0
      %360 = vmatprep.subr.mxu0 0.0
      %361 = vmatpush1.msra.mxu0 0.0
      %362 = vmatprep.subr.mxu0 0.0
      %363 = vmatpush1.msra.mxu0 0.0
      %364 = vmatprep.subr.mxu0 0.0
      %365 = vmatpush1.msra.mxu0 0.0
      %366 = vmatprep.subr.mxu0 0.0
      %367 = vmatpush1.msra.mxu0 0.0
      %368 = vmatprep.subr.mxu0 0.0
      %369 = vmatpush1.msra.mxu0 0.0
      %370 = vmatprep.subr.mxu0 0.0
      %371 = vmatpush1.msra.mxu0 0.0
      %372 = vmatprep.subr.mxu0 0.0
      %373 = vmatpush1.msra.mxu0 0.0
      %374 = vmatprep.subr.mxu0 0.0
      %375 = vmatpush1.msra.mxu0 0.0
      %376 = vmatprep.subr.mxu0 0.0
      %377 = vmatpush1.msra.mxu0 0.0
      %378 = vmatprep.mubr.f32.mxu0 0.0
      %379 = vmatmul.mubr.f32.gmra.mrb[0].mxu0 %v309
      %v380 = vpop.f32.mrb[0].mxu0
      %v381 = vadd.f32 0.0, %v380
      %v382 = vpop.f32.mrb[0].mxu0
      %383 = vmatprep.mubr.f32.mxu0 0.0
      %384 = vmatmul.mubr.f32.gmra.mrb[0].mxu0 %v312
      %v385 = vpop.f32.mrb[0].mxu0
      %v386 = vadd.f32 0.0, %v385
      %v387 = vpop.f32.mrb[0].mxu0
      %388 = vdwg.mxu0
      %v390 = vsel %vm307, %v301, 0
      %v393 = vsel %vm307, %v302, 0
      %395 = vmatprep.subr.mxu0 0.0
      %396 = vmatpush1.msra.mxu0 %v300
      %397 = vmatprep.subr.mxu0 0.0
      %398 = vmatpush1.msra.mxu0 0.0
      %399 = vmatprep.subr.mxu0 0.0
      %400 = vmatpush1.msra.mxu0 0.0
      %401 = vmatprep.subr.mxu0 0.0
      %402 = vmatpush1.msra.mxu0 0.0
      %403 = vmatprep.subr.mxu0 0.0
      %404 = vmatpush1.msra.mxu0 0.0
      %405 = vmatprep.subr.mxu0 0.0
      %406 = vmatpush1.msra.mxu0 0.0
      %407 = vmatprep.subr.mxu0 0.0
      %408 = vmatpush1.msra.mxu0 0.0
      %409 = vmatprep.subr.mxu0 0.0
      %410 = vmatpush1.msra.mxu0 0.0
      %411 = vmatprep.subr.mxu0 0.0
      %412 = vmatpush1.msra.mxu0 0.0
      %413 = vmatprep.subr.mxu0 0.0
      %414 = vmatpush1.msra.mxu0 0.0
      %415 = vmatprep.subr.mxu0 0.0
      %416 = vmatpush1.msra.mxu0 0.0
      %417 = vmatprep.subr.mxu0 0.0
      %418 = vmatpush1.msra.mxu0 0.0
      %419 = vmatprep.subr.mxu0 0.0
      %420 = vmatpush1.msra.mxu0 0.0
      %421 = vmatprep.subr.mxu0 0.0
      %422 = vmatpush1.msra.mxu0 0.0
      %423 = vmatprep.subr.mxu0 0.0
      %424 = vmatpush1.msra.mxu0 0.0
      %425 = vmatprep.subr.mxu0 0.0
      %426 = vmatpush1.msra.mxu0 0.0
      %427 = vmatprep.subr.mxu0 0.0
      %428 = vmatpush1.msra.mxu0 0.0
      %429 = vmatprep.subr.mxu0 0.0
      %430 = vmatpush1.msra.mxu0 0.0
      %431 = vmatprep.subr.mxu0 0.0
      %432 = vmatpush1.msra.mxu0 0.0
      %433 = vmatprep.subr.mxu0 0.0
      %434 = vmatpush1.msra.mxu0 0.0
      %435 = vmatprep.subr.mxu0 0.0
      %436 = vmatpush1.msra.mxu0 0.0
      %437 = vmatprep.subr.mxu0 0.0
      %438 = vmatpush1.msra.mxu0 0.0
      %439 = vmatprep.subr.mxu0 0.0
      %440 = vmatpush1.msra.mxu0 0.0
      %441 = vmatprep.subr.mxu0 0.0
      %442 = vmatpush1.msra.mxu0 0.0
      %443 = vmatprep.subr.mxu0 0.0
      %444 = vmatpush1.msra.mxu0 0.0
      %445 = vmatprep.subr.mxu0 0.0
      %446 = vmatpush1.msra.mxu0 0.0
      %447 = vmatprep.subr.mxu0 0.0
      %448 = vmatpush1.msra.mxu0 0.0
      %449 = vmatprep.subr.mxu0 0.0
      %450 = vmatpush1.msra.mxu0 0.0
      %451 = vmatprep.subr.mxu0 0.0
      %452 = vmatpush1.msra.mxu0 0.0
      %453 = vmatprep.subr.mxu0 0.0
      %454 = vmatpush1.msra.mxu0 0.0
      %455 = vmatprep.subr.mxu0 0.0
      %456 = vmatpush1.msra.mxu0 0.0
      %457 = vmatprep.subr.mxu0 0.0
      %458 = vmatpush1.msra.mxu0 0.0
      %459 = vmatprep.mubr.f32.mxu0 0.0
      %460 = vmatmul.mubr.f32.gmra.mrb[0].mxu0 %v390
      %v461 = vpop.f32.mrb[0].mxu0
      %v462 = vadd.f32 %v381, %v461
      %v463 = vpop.f32.mrb[0].mxu0
      %464 = vmatprep.mubr.f32.mxu0 0.0
      %465 = vmatmul.mubr.f32.gmra.mrb[0].mxu0 %v393
      %v466 = vpop.f32.mrb[0].mxu0
      %v467 = vadd.f32 %v386, %v466
      %v468 = vpop.f32.mrb[0].mxu0
      %469 = vdwg.mxu0
      %s470 = scalar_lea.vmem %s4, 32
      %v471 = vld [vmem:[%s470] sm:$0xff]
      %v472 = vld [vmem:[%s470 + $0x8] sm:$0xff]
      %474 = vrot.lane.b32.xlu0 %v300, 127
      %v475 = vpop.permute.xlu0 %474
      %v478 = vsel %vm307, %v471, 0
      %v481 = vsel %vm307, %v472, 0
      %483 = vmatprep.subr.mxu0 0.0
      %484 = vmatpush1.msra.mxu0 %v475
      %485 = vmatprep.subr.mxu0 0.0
      %486 = vmatpush1.msra.mxu0 0.0
      %487 = vmatprep.subr.mxu0 0.0
      %488 = vmatpush1.msra.mxu0 0.0
      %489 = vmatprep.subr.mxu0 0.0
      %490 = vmatpush1.msra.mxu0 0.0
      %491 = vmatprep.subr.mxu0 0.0
      %492 = vmatpush1.msra.mxu0 0.0
      %493 = vmatprep.subr.mxu0 0.0
      %494 = vmatpush1.msra.mxu0 0.0
      %495 = vmatprep.subr.mxu0 0.0
      %496 = vmatpush1.msra.mxu0 0.0
      %497 = vmatprep.subr.mxu0 0.0
      %498 = vmatpush1.msra.mxu0 0.0
      %499 = vmatprep.subr.mxu0 0.0
      %500 = vmatpush1.msra.mxu0 0.0
      %501 = vmatprep.subr.mxu0 0.0
      %502 = vmatpush1.msra.mxu0 0.0
      %503 = vmatprep.subr.mxu0 0.0
      %504 = vmatpush1.msra.mxu0 0.0
      %505 = vmatprep.subr.mxu0 0.0
      %506 = vmatpush1.msra.mxu0 0.0
      %507 = vmatprep.subr.mxu0 0.0
      %508 = vmatpush1.msra.mxu0 0.0
      %509 = vmatprep.subr.mxu0 0.0
      %510 = vmatpush1.msra.mxu0 0.0
      %511 = vmatprep.subr.mxu0 0.0
      %512 = vmatpush1.msra.mxu0 0.0
      %513 = vmatprep.subr.mxu0 0.0
      %514 = vmatpush1.msra.mxu0 0.0
      %515 = vmatprep.subr.mxu0 0.0
      %516 = vmatpush1.msra.mxu0 0.0
      %517 = vmatprep.subr.mxu0 0.0
      %518 = vmatpush1.msra.mxu0 0.0
      %519 = vmatprep.subr.mxu0 0.0
      %520 = vmatpush1.msra.mxu0 0.0
      %521 = vmatprep.subr.mxu0 0.0
      %522 = vmatpush1.msra.mxu0 0.0
      %523 = vmatprep.subr.mxu0 0.0
      %524 = vmatpush1.msra.mxu0 0.0
      %525 = vmatprep.subr.mxu0 0.0
      %526 = vmatpush1.msra.mxu0 0.0
      %527 = vmatprep.subr.mxu0 0.0
      %528 = vmatpush1.msra.mxu0 0.0
      %529 = vmatprep.subr.mxu0 0.0
      %530 = vmatpush1.msra.mxu0 0.0
      %531 = vmatprep.subr.mxu0 0.0
      %532 = vmatpush1.msra.mxu0 0.0
      %533 = vmatprep.subr.mxu0 0.0
      %534 = vmatpush1.msra.mxu0 0.0
      %535 = vmatprep.subr.mxu0 0.0
      %536 = vmatpush1.msra.mxu0 0.0
      %537 = vmatprep.subr.mxu0 0.0
      %538 = vmatpush1.msra.mxu0 0.0
      %539 = vmatprep.subr.mxu0 0.0
      %540 = vmatpush1.msra.mxu0 0.0
      %541 = vmatprep.subr.mxu0 0.0
      %542 = vmatpush1.msra.mxu0 0.0
      %543 = vmatprep.subr.mxu0 0.0
      %544 = vmatpush1.msra.mxu0 0.0
      %545 = vmatprep.subr.mxu0 0.0
      %546 = vmatpush1.msra.mxu0 0.0
      %547 = vmatprep.mubr.f32.mxu0 0.0
      %548 = vmatmul.mubr.f32.gmra.mrb[0].mxu0 %v478
      %v549 = vpop.f32.mrb[0].mxu0
      %v550 = vadd.f32 0.0, %v549
      %v551 = vpop.f32.mrb[0].mxu0
      %552 = vmatprep.mubr.f32.mxu0 0.0
      %553 = vmatmul.mubr.f32.gmra.mrb[0].mxu0 %v481
      %v554 = vpop.f32.mrb[0].mxu0
      %v555 = vadd.f32 0.0, %v554
      %v556 = vpop.f32.mrb[0].mxu0
      %557 = vdwg.mxu0
      %v558 = vadd.f32 %v462, %v550
      %v559 = vadd.f32 %v467, %v555
      %v560 = vld [vmem:[%s290] sm:$0xff]
      %s561 = scalar_lea.vmem %s4, 48
      %v562 = vld [vmem:[%s561] sm:$0xff]
      %v563 = vld [vmem:[%s561 + $0x8] sm:$0xff]
      %v565 = vsel %vm307, %v562, 0
      %v568 = vsel %vm307, %v563, 0
      %570 = vmatprep.subr.mxu0 0.0
      %571 = vmatpush1.msra.mxu0 %v560
      %572 = vmatprep.subr.mxu0 0.0
      %573 = vmatpush1.msra.mxu0 0.0
      %574 = vmatprep.subr.mxu0 0.0
      %575 = vmatpush1.msra.mxu0 0.0
      %576 = vmatprep.subr.mxu0 0.0
      %577 = vmatpush1.msra.mxu0 0.0
      %578 = vmatprep.subr.mxu0 0.0
      %579 = vmatpush1.msra.mxu0 0.0
      %580 = vmatprep.subr.mxu0 0.0
      %581 = vmatpush1.msra.mxu0 0.0
      %582 = vmatprep.subr.mxu0 0.0
      %583 = vmatpush1.msra.mxu0 0.0
      %584 = vmatprep.subr.mxu0 0.0
      %585 = vmatpush1.msra.mxu0 0.0
      %586 = vmatprep.subr.mxu0 0.0
      %587 = vmatpush1.msra.mxu0 0.0
      %588 = vmatprep.subr.mxu0 0.0
      %589 = vmatpush1.msra.mxu0 0.0
      %590 = vmatprep.subr.mxu0 0.0
      %591 = vmatpush1.msra.mxu0 0.0
      %592 = vmatprep.subr.mxu0 0.0
      %593 = vmatpush1.msra.mxu0 0.0
      %594 = vmatprep.subr.mxu0 0.0
      %595 = vmatpush1.msra.mxu0 0.0
      %596 = vmatprep.subr.mxu0 0.0
      %597 = vmatpush1.msra.mxu0 0.0
      %598 = vmatprep.subr.mxu0 0.0
      %599 = vmatpush1.msra.mxu0 0.0
      %600 = vmatprep.subr.mxu0 0.0
      %601 = vmatpush1.msra.mxu0 0.0
      %602 = vmatprep.subr.mxu0 0.0
      %603 = vmatpush1.msra.mxu0 0.0
      %604 = vmatprep.subr.mxu0 0.0
      %605 = vmatpush1.msra.mxu0 0.0
      %606 = vmatprep.subr.mxu0 0.0
      %607 = vmatpush1.msra.mxu0 0.0
      %608 = vmatprep.subr.mxu0 0.0
      %609 = vmatpush1.msra.mxu0 0.0
      %610 = vmatprep.subr.mxu0 0.0
      %611 = vmatpush1.msra.mxu0 0.0
      %612 = vmatprep.subr.mxu0 0.0
      %613 = vmatpush1.msra.mxu0 0.0
      %614 = vmatprep.subr.mxu0 0.0
      %615 = vmatpush1.msra.mxu0 0.0
      %616 = vmatprep.subr.mxu0 0.0
      %617 = vmatpush1.msra.mxu0 0.0
      %618 = vmatprep.subr.mxu0 0.0
      %619 = vmatpush1.msra.mxu0 0.0
      %620 = vmatprep.subr.mxu0 0.0
      %621 = vmatpush1.msra.mxu0 0.0
      %622 = vmatprep.subr.mxu0 0.0
      %623 = vmatpush1.msra.mxu0 0.0
      %624 = vmatprep.subr.mxu0 0.0
      %625 = vmatpush1.msra.mxu0 0.0
      %626 = vmatprep.subr.mxu0 0.0
      %627 = vmatpush1.msra.mxu0 0.0
      %628 = vmatprep.subr.mxu0 0.0
      %629 = vmatpush1.msra.mxu0 0.0
      %630 = vmatprep.subr.mxu0 0.0
      %631 = vmatpush1.msra.mxu0 0.0
      %632 = vmatprep.subr.mxu0 0.0
      %633 = vmatpush1.msra.mxu0 0.0
      %634 = vmatprep.mubr.f32.mxu0 0.0
      %635 = vmatmul.mubr.f32.gmra.mrb[0].mxu0 %v565
      %v636 = vpop.f32.mrb[0].mxu0
      %v637 = vadd.f32 0.0, %v636
      %v638 = vpop.f32.mrb[0].mxu0
      %639 = vmatprep.mubr.f32.mxu0 0.0
      %640 = vmatmul.mubr.f32.gmra.mrb[0].mxu0 %v568
      %v641 = vpop.f32.mrb[0].mxu0
      %v642 = vadd.f32 0.0, %v641
      %v643 = vpop.f32.mrb[0].mxu0
      %644 = vdwg.mxu0
      %v645 = vadd.f32 %v558, %v637
      %v646 = vadd.f32 %v559, %v642
      %v647 = vld [vmem:[%s294] sm:$0xff]
      %s648 = scalar_lea.vmem %s4, 64
      %v649 = vld [vmem:[%s648] sm:$0xff]
      %v650 = vld [vmem:[%s648 + $0x8] sm:$0xff]
      %v652 = vsel %vm307, %v649, 0
      %v655 = vsel %vm307, %v650, 0
      %657 = vmatprep.subr.mxu0 0.0
      %658 = vmatpush1.msra.mxu0 %v647
      %659 = vmatprep.subr.mxu0 0.0
      %660 = vmatpush1.msra.mxu0 0.0
      %661 = vmatprep.subr.mxu0 0.0
      %662 = vmatpush1.msra.mxu0 0.0
      %663 = vmatprep.subr.mxu0 0.0
      %664 = vmatpush1.msra.mxu0 0.0
      %665 = vmatprep.subr.mxu0 0.0
      %666 = vmatpush1.msra.mxu0 0.0
      %667 = vmatprep.subr.mxu0 0.0
      %668 = vmatpush1.msra.mxu0 0.0
      %669 = vmatprep.subr.mxu0 0.0
      %670 = vmatpush1.msra.mxu0 0.0
      %671 = vmatprep.subr.mxu0 0.0
      %672 = vmatpush1.msra.mxu0 0.0
      %673 = vmatprep.subr.mxu0 0.0
      %674 = vmatpush1.msra.mxu0 0.0
      %675 = vmatprep.subr.mxu0 0.0
      %676 = vmatpush1.msra.mxu0 0.0
      %677 = vmatprep.subr.mxu0 0.0
      %678 = vmatpush1.msra.mxu0 0.0
      %679 = vmatprep.subr.mxu0 0.0
      %680 = vmatpush1.msra.mxu0 0.0
      %681 = vmatprep.subr.mxu0 0.0
      %682 = vmatpush1.msra.mxu0 0.0
      %683 = vmatprep.subr.mxu0 0.0
      %684 = vmatpush1.msra.mxu0 0.0
      %685 = vmatprep.subr.mxu0 0.0
      %686 = vmatpush1.msra.mxu0 0.0
      %687 = vmatprep.subr.mxu0 0.0
      %688 = vmatpush1.msra.mxu0 0.0
      %689 = vmatprep.subr.mxu0 0.0
      %690 = vmatpush1.msra.mxu0 0.0
      %691 = vmatprep.subr.mxu0 0.0
      %692 = vmatpush1.msra.mxu0 0.0
      %693 = vmatprep.subr.mxu0 0.0
      %694 = vmatpush1.msra.mxu0 0.0
      %695 = vmatprep.subr.mxu0 0.0
      %696 = vmatpush1.msra.mxu0 0.0
      %697 = vmatprep.subr.mxu0 0.0
      %698 = vmatpush1.msra.mxu0 0.0
      %699 = vmatprep.subr.mxu0 0.0
      %700 = vmatpush1.msra.mxu0 0.0
      %701 = vmatprep.subr.mxu0 0.0
      %702 = vmatpush1.msra.mxu0 0.0
      %703 = vmatprep.subr.mxu0 0.0
      %704 = vmatpush1.msra.mxu0 0.0
      %705 = vmatprep.subr.mxu0 0.0
      %706 = vmatpush1.msra.mxu0 0.0
      %707 = vmatprep.subr.mxu0 0.0
      %708 = vmatpush1.msra.mxu0 0.0
      %709 = vmatprep.subr.mxu0 0.0
      %710 = vmatpush1.msra.mxu0 0.0
      %711 = vmatprep.subr.mxu0 0.0
      %712 = vmatpush1.msra.mxu0 0.0
      %713 = vmatprep.subr.mxu0 0.0
      %714 = vmatpush1.msra.mxu0 0.0
      %715 = vmatprep.subr.mxu0 0.0
      %716 = vmatpush1.msra.mxu0 0.0
      %717 = vmatprep.subr.mxu0 0.0
      %718 = vmatpush1.msra.mxu0 0.0
      %719 = vmatprep.subr.mxu0 0.0
      %720 = vmatpush1.msra.mxu0 0.0
      %721 = vmatprep.mubr.f32.mxu0 0.0
      %722 = vmatmul.mubr.f32.gmra.mrb[0].mxu0 %v652
      %v723 = vpop.f32.mrb[0].mxu0
      %v724 = vadd.f32 0.0, %v723
      %v725 = vpop.f32.mrb[0].mxu0
      %726 = vmatprep.mubr.f32.mxu0 0.0
      %727 = vmatmul.mubr.f32.gmra.mrb[0].mxu0 %v655
      %v728 = vpop.f32.mrb[0].mxu0
      %v729 = vadd.f32 0.0, %v728
      %v730 = vpop.f32.mrb[0].mxu0
      %731 = vdwg.mxu0
      %v732 = vadd.f32 %v645, %v724
      %v733 = vadd.f32 %v646, %v729
      %s734 = scalar_lea.vmem %s4, 80
      %v735 = vld [vmem:[%s734] sm:$0xff]
      %v736 = vld [vmem:[%s734 + $0x8] sm:$0xff]
      %738 = vrot.lane.b32.xlu0 %v560, 127
      %v739 = vpop.permute.xlu0 %738
      %v742 = vsel %vm307, %v735, 0
      %v745 = vsel %vm307, %v736, 0
      %747 = vmatprep.subr.mxu0 0.0
      %748 = vmatpush1.msra.mxu0 %v739
      %749 = vmatprep.subr.mxu0 0.0
      %750 = vmatpush1.msra.mxu0 0.0
      %751 = vmatprep.subr.mxu0 0.0
      %752 = vmatpush1.msra.mxu0 0.0
      %753 = vmatprep.subr.mxu0 0.0
      %754 = vmatpush1.msra.mxu0 0.0
      %755 = vmatprep.subr.mxu0 0.0
      %756 = vmatpush1.msra.mxu0 0.0
      %757 = vmatprep.subr.mxu0 0.0
      %758 = vmatpush1.msra.mxu0 0.0
      %759 = vmatprep.subr.mxu0 0.0
      %760 = vmatpush1.msra.mxu0 0.0
      %761 = vmatprep.subr.mxu0 0.0
      %762 = vmatpush1.msra.mxu0 0.0
      %763 = vmatprep.subr.mxu0 0.0
      %764 = vmatpush1.msra.mxu0 0.0
      %765 = vmatprep.subr.mxu0 0.0
      %766 = vmatpush1.msra.mxu0 0.0
      %767 = vmatprep.subr.mxu0 0.0
      %768 = vmatpush1.msra.mxu0 0.0
      %769 = vmatprep.subr.mxu0 0.0
      %770 = vmatpush1.msra.mxu0 0.0
      %771 = vmatprep.subr.mxu0 0.0
      %772 = vmatpush1.msra.mxu0 0.0
      %773 = vmatprep.subr.mxu0 0.0
      %774 = vmatpush1.msra.mxu0 0.0
      %775 = vmatprep.subr.mxu0 0.0
      %776 = vmatpush1.msra.mxu0 0.0
      %777 = vmatprep.subr.mxu0 0.0
      %778 = vmatpush1.msra.mxu0 0.0
      %779 = vmatprep.subr.mxu0 0.0
      %780 = vmatpush1.msra.mxu0 0.0
      %781 = vmatprep.subr.mxu0 0.0
      %782 = vmatpush1.msra.mxu0 0.0
      %783 = vmatprep.subr.mxu0 0.0
      %784 = vmatpush1.msra.mxu0 0.0
      %785 = vmatprep.subr.mxu0 0.0
      %786 = vmatpush1.msra.mxu0 0.0
      %787 = vmatprep.subr.mxu0 0.0
      %788 = vmatpush1.msra.mxu0 0.0
      %789 = vmatprep.subr.mxu0 0.0
      %790 = vmatpush1.msra.mxu0 0.0
      %791 = vmatprep.subr.mxu0 0.0
      %792 = vmatpush1.msra.mxu0 0.0
      %793 = vmatprep.subr.mxu0 0.0
      %794 = vmatpush1.msra.mxu0 0.0
      %795 = vmatprep.subr.mxu0 0.0
      %796 = vmatpush1.msra.mxu0 0.0
      %797 = vmatprep.subr.mxu0 0.0
      %798 = vmatpush1.msra.mxu0 0.0
      %799 = vmatprep.subr.mxu0 0.0
      %800 = vmatpush1.msra.mxu0 0.0
      %801 = vmatprep.subr.mxu0 0.0
      %802 = vmatpush1.msra.mxu0 0.0
      %803 = vmatprep.subr.mxu0 0.0
      %804 = vmatpush1.msra.mxu0 0.0
      %805 = vmatprep.subr.mxu0 0.0
      %806 = vmatpush1.msra.mxu0 0.0
      %807 = vmatprep.subr.mxu0 0.0
      %808 = vmatpush1.msra.mxu0 0.0
      %809 = vmatprep.subr.mxu0 0.0
      %810 = vmatpush1.msra.mxu0 0.0
      %811 = vmatprep.mubr.f32.mxu0 0.0
      %812 = vmatmul.mubr.f32.gmra.mrb[0].mxu0 %v742
      %v813 = vpop.f32.mrb[0].mxu0
      %v814 = vadd.f32 0.0, %v813
      %v815 = vpop.f32.mrb[0].mxu0
      %816 = vmatprep.mubr.f32.mxu0 0.0
      %817 = vmatmul.mubr.f32.gmra.mrb[0].mxu0 %v745
      %v818 = vpop.f32.mrb[0].mxu0
      %v819 = vadd.f32 0.0, %v818
      %v820 = vpop.f32.mrb[0].mxu0
      %821 = vdwg.mxu0
      %v822 = vadd.f32 %v732, %v814
      %v823 = vadd.f32 %v733, %v819
      %s824 = scalar_lea.vmem %s4, 96
      %v825 = vld [vmem:[%s824] sm:$0xff]
      %v826 = vld [vmem:[%s824 + $0x8] sm:$0xff]
      %827 = vrot.lane.b32.xlu0 %v300, 123
      %v828 = vpop.permute.xlu0 %827
      %v831 = vsel %vm307, %v825, 0
      %v834 = vsel %vm307, %v826, 0
      %836 = vmatprep.subr.mxu0 0.0
      %837 = vmatpush1.msra.mxu0 %v828
      %838 = vmatprep.subr.mxu0 0.0
      %839 = vmatpush1.msra.mxu0 0.0
      %840 = vmatprep.subr.mxu0 0.0
      %841 = vmatpush1.msra.mxu0 0.0
      %842 = vmatprep.subr.mxu0 0.0
      %843 = vmatpush1.msra.mxu0 0.0
      %844 = vmatprep.subr.mxu0 0.0
      %845 = vmatpush1.msra.mxu0 0.0
      %846 = vmatprep.subr.mxu0 0.0
      %847 = vmatpush1.msra.mxu0 0.0
      %848 = vmatprep.subr.mxu0 0.0
      %849 = vmatpush1.msra.mxu0 0.0
      %850 = vmatprep.subr.mxu0 0.0
      %851 = vmatpush1.msra.mxu0 0.0
      %852 = vmatprep.subr.mxu0 0.0
      %853 = vmatpush1.msra.mxu0 0.0
      %854 = vmatprep.subr.mxu0 0.0
      %855 = vmatpush1.msra.mxu0 0.0
      %856 = vmatprep.subr.mxu0 0.0
      %857 = vmatpush1.msra.mxu0 0.0
      %858 = vmatprep.subr.mxu0 0.0
      %859 = vmatpush1.msra.mxu0 0.0
      %860 = vmatprep.subr.mxu0 0.0
      %861 = vmatpush1.msra.mxu0 0.0
      %862 = vmatprep.subr.mxu0 0.0
      %863 = vmatpush1.msra.mxu0 0.0
      %864 = vmatprep.subr.mxu0 0.0
      %865 = vmatpush1.msra.mxu0 0.0
      %866 = vmatprep.subr.mxu0 0.0
      %867 = vmatpush1.msra.mxu0 0.0
      %868 = vmatprep.subr.mxu0 0.0
      %869 = vmatpush1.msra.mxu0 0.0
      %870 = vmatprep.subr.mxu0 0.0
      %871 = vmatpush1.msra.mxu0 0.0
      %872 = vmatprep.subr.mxu0 0.0
      %873 = vmatpush1.msra.mxu0 0.0
      %874 = vmatprep.subr.mxu0 0.0
      %875 = vmatpush1.msra.mxu0 0.0
      %876 = vmatprep.subr.mxu0 0.0
      %877 = vmatpush1.msra.mxu0 0.0
      %878 = vmatprep.subr.mxu0 0.0
      %879 = vmatpush1.msra.mxu0 0.0
      %880 = vmatprep.subr.mxu0 0.0
      %881 = vmatpush1.msra.mxu0 0.0
      %882 = vmatprep.subr.mxu0 0.0
      %883 = vmatpush1.msra.mxu0 0.0
      %884 = vmatprep.subr.mxu0 0.0
      %885 = vmatpush1.msra.mxu0 0.0
      %886 = vmatprep.subr.mxu0 0.0
      %887 = vmatpush1.msra.mxu0 0.0
      %888 = vmatprep.subr.mxu0 0.0
      %889 = vmatpush1.msra.mxu0 0.0
      %890 = vmatprep.subr.mxu0 0.0
      %891 = vmatpush1.msra.mxu0 0.0
      %892 = vmatprep.subr.mxu0 0.0
      %893 = vmatpush1.msra.mxu0 0.0
      %894 = vmatprep.subr.mxu0 0.0
      %895 = vmatpush1.msra.mxu0 0.0
      %896 = vmatprep.subr.mxu0 0.0
      %897 = vmatpush1.msra.mxu0 0.0
      %898 = vmatprep.subr.mxu0 0.0
      %899 = vmatpush1.msra.mxu0 0.0
      %900 = vmatprep.mubr.f32.mxu0 0.0
      %901 = vmatmul.mubr.f32.gmra.mrb[0].mxu0 %v831
      %v902 = vpop.f32.mrb[0].mxu0
      %v903 = vadd.f32 0.0, %v902
      %v904 = vpop.f32.mrb[0].mxu0
      %905 = vmatprep.mubr.f32.mxu0 0.0
      %906 = vmatmul.mubr.f32.gmra.mrb[0].mxu0 %v834
      %v907 = vpop.f32.mrb[0].mxu0
      %v908 = vadd.f32 0.0, %v907
      %v909 = vpop.f32.mrb[0].mxu0
      %910 = vdwg.mxu0
      %v911 = vadd.f32 %v822, %v903
      %v912 = vadd.f32 %v823, %v908
      %s913 = scalar_lea.vmem %s4, 112
      %v914 = vld [vmem:[%s913] sm:$0xff]
      %v915 = vld [vmem:[%s913 + $0x8] sm:$0xff]
      %917 = vrot.lane.b32.xlu0 %v303, 123
      %v918 = vpop.permute.xlu0 %917
      %v921 = vsel %vm307, %v914, 0
      %v924 = vsel %vm307, %v915, 0
      %926 = vmatprep.subr.mxu0 0.0
      %927 = vmatpush1.msra.mxu0 %v918
      %928 = vmatprep.subr.mxu0 0.0
      %929 = vmatpush1.msra.mxu0 0.0
      %930 = vmatprep.subr.mxu0 0.0
      %931 = vmatpush1.msra.mxu0 0.0
      %932 = vmatprep.subr.mxu0 0.0
      %933 = vmatpush1.msra.mxu0 0.0
      %934 = vmatprep.subr.mxu0 0.0
      %935 = vmatpush1.msra.mxu0 0.0
      %936 = vmatprep.subr.mxu0 0.0
      %937 = vmatpush1.msra.mxu0 0.0
      %938 = vmatprep.subr.mxu0 0.0
      %939 = vmatpush1.msra.mxu0 0.0
      %940 = vmatprep.subr.mxu0 0.0
      %941 = vmatpush1.msra.mxu0 0.0
      %942 = vmatprep.subr.mxu0 0.0
      %943 = vmatpush1.msra.mxu0 0.0
      %944 = vmatprep.subr.mxu0 0.0
      %945 = vmatpush1.msra.mxu0 0.0
      %946 = vmatprep.subr.mxu0 0.0
      %947 = vmatpush1.msra.mxu0 0.0
      %948 = vmatprep.subr.mxu0 0.0
      %949 = vmatpush1.msra.mxu0 0.0
      %950 = vmatprep.subr.mxu0 0.0
      %951 = vmatpush1.msra.mxu0 0.0
      %952 = vmatprep.subr.mxu0 0.0
      %953 = vmatpush1.msra.mxu0 0.0
      %954 = vmatprep.subr.mxu0 0.0
      %955 = vmatpush1.msra.mxu0 0.0
      %956 = vmatprep.subr.mxu0 0.0
      %957 = vmatpush1.msra.mxu0 0.0
      %958 = vmatprep.subr.mxu0 0.0
      %959 = vmatpush1.msra.mxu0 0.0
      %960 = vmatprep.subr.mxu0 0.0
      %961 = vmatpush1.msra.mxu0 0.0
      %962 = vmatprep.subr.mxu0 0.0
      %963 = vmatpush1.msra.mxu0 0.0
      %964 = vmatprep.subr.mxu0 0.0
      %965 = vmatpush1.msra.mxu0 0.0
      %966 = vmatprep.subr.mxu0 0.0
      %967 = vmatpush1.msra.mxu0 0.0
      %968 = vmatprep.subr.mxu0 0.0
      %969 = vmatpush1.msra.mxu0 0.0
      %970 = vmatprep.subr.mxu0 0.0
      %971 = vmatpush1.msra.mxu0 0.0
      %972 = vmatprep.subr.mxu0 0.0
      %973 = vmatpush1.msra.mxu0 0.0
      %974 = vmatprep.subr.mxu0 0.0
      %975 = vmatpush1.msra.mxu0 0.0
      %976 = vmatprep.subr.mxu0 0.0
      %977 = vmatpush1.msra.mxu0 0.0
      %978 = vmatprep.subr.mxu0 0.0
      %979 = vmatpush1.msra.mxu0 0.0
      %980 = vmatprep.subr.mxu0 0.0
      %981 = vmatpush1.msra.mxu0 0.0
      %982 = vmatprep.subr.mxu0 0.0
      %983 = vmatpush1.msra.mxu0 0.0
      %984 = vmatprep.subr.mxu0 0.0
      %985 = vmatpush1.msra.mxu0 0.0
      %986 = vmatprep.subr.mxu0 0.0
      %987 = vmatpush1.msra.mxu0 0.0
      %988 = vmatprep.subr.mxu0 0.0
      %989 = vmatpush1.msra.mxu0 0.0
      %990 = vmatprep.mubr.f32.mxu0 0.0
      %991 = vmatmul.mubr.f32.gmra.mrb[0].mxu0 %v921
      %v992 = vpop.f32.mrb[0].mxu0
      %v993 = vadd.f32 0.0, %v992
      %v994 = vpop.f32.mrb[0].mxu0
      %995 = vmatprep.mubr.f32.mxu0 0.0
      %996 = vmatmul.mubr.f32.gmra.mrb[0].mxu0 %v924
      %v997 = vpop.f32.mrb[0].mxu0
      %v998 = vadd.f32 0.0, %v997
      %v999 = vpop.f32.mrb[0].mxu0
      %1000 = vdwg.mxu0
      %v1001 = vadd.f32 %v911, %v993
      %v1002 = vadd.f32 %v912, %v998
      %s1003 = scalar_lea.vmem %s4, 128
      %v1004 = vld [vmem:[%s1003] sm:$0xff]
      %v1005 = vld [vmem:[%s1003 + $0x8] sm:$0xff]
      %1006 = vrot.lane.b32.xlu0 %v300, 122
      %v1007 = vpop.permute.xlu0 %1006
      %v1010 = vsel %vm307, %v1004, 0
      %v1013 = vsel %vm307, %v1005, 0
      %1015 = vmatprep.subr.mxu0 0.0
      %1016 = vmatpush1.msra.mxu0 %v1007
      %1017 = vmatprep.subr.mxu0 0.0
      %1018 = vmatpush1.msra.mxu0 0.0
      %1019 = vmatprep.subr.mxu0 0.0
      %1020 = vmatpush1.msra.mxu0 0.0
      %1021 = vmatprep.subr.mxu0 0.0
      %1022 = vmatpush1.msra.mxu0 0.0
      %1023 = vmatprep.subr.mxu0 0.0
      %1024 = vmatpush1.msra.mxu0 0.0
      %1025 = vmatprep.subr.mxu0 0.0
      %1026 = vmatpush1.msra.mxu0 0.0
      %1027 = vmatprep.subr.mxu0 0.0
      %1028 = vmatpush1.msra.mxu0 0.0
      %1029 = vmatprep.subr.mxu0 0.0
      %1030 = vmatpush1.msra.mxu0 0.0
      %1031 = vmatprep.subr.mxu0 0.0
      %1032 = vmatpush1.msra.mxu0 0.0
      %1033 = vmatprep.subr.mxu0 0.0
      %1034 = vmatpush1.msra.mxu0 0.0
      %1035 = vmatprep.subr.mxu0 0.0
      %1036 = vmatpush1.msra.mxu0 0.0
      %1037 = vmatprep.subr.mxu0 0.0
      %1038 = vmatpush1.msra.mxu0 0.0
      %1039 = vmatprep.subr.mxu0 0.0
      %1040 = vmatpush1.msra.mxu0 0.0
      %1041 = vmatprep.subr.mxu0 0.0
      %1042 = vmatpush1.msra.mxu0 0.0
      %1043 = vmatprep.subr.mxu0 0.0
      %1044 = vmatpush1.msra.mxu0 0.0
      %1045 = vmatprep.subr.mxu0 0.0
      %1046 = vmatpush1.msra.mxu0 0.0
      %1047 = vmatprep.subr.mxu0 0.0
      %1048 = vmatpush1.msra.mxu0 0.0
      %1049 = vmatprep.subr.mxu0 0.0
      %1050 = vmatpush1.msra.mxu0 0.0
      %1051 = vmatprep.subr.mxu0 0.0
      %1052 = vmatpush1.msra.mxu0 0.0
      %1053 = vmatprep.subr.mxu0 0.0
      %1054 = vmatpush1.msra.mxu0 0.0
      %1055 = vmatprep.subr.mxu0 0.0
      %1056 = vmatpush1.msra.mxu0 0.0
      %1057 = vmatprep.subr.mxu0 0.0
      %1058 = vmatpush1.msra.mxu0 0.0
      %1059 = vmatprep.subr.mxu0 0.0
      %1060 = vmatpush1.msra.mxu0 0.0
      %1061 = vmatprep.subr.mxu0 0.0
      %1062 = vmatpush1.msra.mxu0 0.0
      %1063 = vmatprep.subr.mxu0 0.0
      %1064 = vmatpush1.msra.mxu0 0.0
      %1065 = vmatprep.subr.mxu0 0.0
      %1066 = vmatpush1.msra.mxu0 0.0
      %1067 = vmatprep.subr.mxu0 0.0
      %1068 = vmatpush1.msra.mxu0 0.0
      %1069 = vmatprep.subr.mxu0 0.0
      %1070 = vmatpush1.msra.mxu0 0.0
      %1071 = vmatprep.subr.mxu0 0.0
      %1072 = vmatpush1.msra.mxu0 0.0
      %1073 = vmatprep.subr.mxu0 0.0
      %1074 = vmatpush1.msra.mxu0 0.0
      %1075 = vmatprep.subr.mxu0 0.0
      %1076 = vmatpush1.msra.mxu0 0.0
      %1077 = vmatprep.subr.mxu0 0.0
      %1078 = vmatpush1.msra.mxu0 0.0
      %1079 = vmatprep.mubr.f32.mxu0 0.0
      %1080 = vmatmul.mubr.f32.gmra.mrb[0].mxu0 %v1010
      %v1081 = vpop.f32.mrb[0].mxu0
      %v1082 = vadd.f32 0.0, %v1081
      %v1083 = vpop.f32.mrb[0].mxu0
      %1084 = vmatprep.mubr.f32.mxu0 0.0
      %1085 = vmatmul.mubr.f32.gmra.mrb[0].mxu0 %v1013
      %v1086 = vpop.f32.mrb[0].mxu0
      %v1087 = vadd.f32 0.0, %v1086
      %v1088 = vpop.f32.mrb[0].mxu0
      %1089 = vdwg.mxu0
      %v1090 = vadd.f32 %v1001, %v1082
      %v1091 = vadd.f32 %v1002, %v1087
      %v1092 = vld [vmem:[%s5] sm:$0xff]
      %v1093 = vld [vmem:[%s5 + $0x8] sm:$0xff]
      %1095 = vset.pattern.permute.xlu0 0
      %1096 = vperm.xlu0 %1095, %v1092
      %v1097 = vpop.permute.xlu0 %1096
      %1100 = vset.pattern.permute.xlu0 0
      %1101 = vperm.xlu0 %1100, %v1093
      %v1102 = vpop.permute.xlu0 %1101
      %v1104 = vadd.f32 %v1090, %v1097
      %v1105 = vadd.f32 %v1091, %v1102
      %vm1106 = vcmp.ge.f32.partialorder %v1104, 0.0
      %vm1107 = vcmp.ge.f32.partialorder %v1105, 0.0
      %v1108 = vmul.f32 %v1104, 0.1
      %v1109 = vmul.f32 %v1105, 0.1
      %v1110 = vsel %vm1106, %v1104, %v1108
      %v1111 = vsel %vm1107, %v1105, %v1109
      %vm1112 = vcmask 162816
      %1113 = vst.msk [vmem:[%s299] sm:$0xff] %vm1112, %v1110
      %1114 = vst.msk [vmem:[%s299 + $0x8] sm:$0xff] %vm1112, %v1111
      %p1115 = scmp.lt.s32.totalorder %s17, 1
      %s1116 = scalar_select %p1115, %s17, 1
      %s1117 = smul.addr %s1116, 2
      %s1118 = smul.addr %s1117, 8
      %s1119 = scalar_lea.vmem %s6, %s1118
      // Predicated region
      $region45: #{_lambda_.8} parent=43 // pred_check
        %p1120 = pneg %p181
      $region46: #{_lambda_.8} parent=43 // pred_check_branch
        %1122 = sbr.rel (%p1120) target = $region48
      $region47: #{_lambda_.8} parent=43 // pred_region
        _
      $region48: #{_lambda_.8} parent=43 // pred_fallthru
        _
    $region44: #{_lambda_.8} parent=5 // pred_fallthru
      _
    %p1123 = scmp.le.s32.totalorder 2, %s12
    // Predicated region
    $region49: #{_lambda_.8} parent=5 // pred_check
      %p1124 = pneg %p1123
    $region50: #{_lambda_.8} parent=5 // pred_check_branch
      %1126 = sbr.rel (%p1124) target = $region52
    $region51: #{_lambda_.8} parent=5 // pred_region
      %s1127 = ssub.s32 %s12, 2
      // Predicated region
      $region53: #{_lambda_.8} parent=51 // pred_check
        %p1128 = pneg %p187
      $region54: #{_lambda_.8} parent=51 // pred_check_branch
        %1130 = sbr.rel (%p1128) target = $region56
      $region55: #{_lambda_.8} parent=51 // pred_region
        %p1131 = scmp.lt.s32.totalorder %s18, 1
        %s1132 = scalar_select %p1131, %s18, 1
        %s1133 = smul.addr %s1132, 2
        %s1134 = smul.addr %s1133, 8
        %s1135 = scalar_lea.vmem %s6, %s1134
      $region56: #{_lambda_.8} parent=51 // pred_fallthru
        _
    $region52: #{_lambda_.8} parent=5 // pred_fallthru
      _
  $region6: #{_lambda_.8} parent=0 // loop_footer
    %s16 = sadd.s32 1, %s12
  $region7: #{_lambda_.8} parent=0 // loop_footer_branch
    %11 = sbr.rel target = $region3
  $region8: #{_lambda_.8} parent=0 // loop_exit
    _

// kernel: _lambda_.9
$region0: #{_lambda_.9}
  #allocation0 [shape = 'u32[]', space=smem, size = 0x4, offset = 0x4, fixed_abs, tag = 'smem constant byte address 0x4 - core index']
  #allocation1 [shape = 'u32[144,128]{1,0:T(1,128)}', space=vmem, size = 0x12000, scoped, tag = 'internal scratch']
  %s0 = inlined_call_operand.vmem [shape: f32[2,16,42], index: 0, kind: input, shape index: {}]
  %s1 = inlined_call_operand.vmem [shape: f32[9,16,16], index: 1, kind: input, shape index: {}]
  %s2 = inlined_call_operand.vmem [shape: f32[16,1], index: 2, kind: input, shape index: {}]
  %s3 = inlined_call_operand.vmem [shape: f32[2,16,24], index: 3, kind: output, shape index: {}]
  %s4 = sld [smem:[#allocation0]]
  $region45: #{_lambda_.9} parent=0
    _
  %s6 = ssub.s32 1, %s4
  %s7 = scalar_select 0, %s6, %s4
  loop: start=0, step=1, limit=4
  $region2: #{_lambda_.9} parent=0 // loop_pre_header
    _
  $region3: #{_lambda_.9} parent=0 // loop_header
    %s9 = sphi 0, %s13
    %p10 = scmp.ge.s32.totalorder %s9, 4
    %s19 = sphi 0, %s21
    %s22 = sphi 0, %s19
    %s23 = sphi 0, %s22
    %s39 = sphi 0, %s23
    %s43 = sphi 0, %s43
    %s45 = sphi 0, %s43
    %s46 = sphi 0, %s45
    %s60 = sphi 0, %s46
    %s64 = sphi 0, %s64
    %s66 = sphi 0, %s64
    %s67 = sphi 0, %s66
    %s81 = sphi 0, %s67
    %s87 = sphi 0, %s89
    %s90 = sphi 0, %s87
    %s91 = sphi 0, %s90
    %s107 = sphi 0, %s91
  $region4: #{_lambda_.9} parent=0 // loop_header_branch
    %12 = sbr.rel (%p10) target = $region8
  $region5: #{_lambda_.9} parent=0 // loop_body
    %s14 = ssub.s32 %s9, 1
    %s15 = ssub.s32 %s9, 2
    %s16 = sadd.s32 %s9, 1
    %s17 = ssub.s32 %s9, %s16
    %p18 = scmp.eq.s32.totalorder %s17, 0
    %s20 = sadd.s32 %s19, 1
    %s21 = scalar_select %p18, %s19, %s20
    %p24 = pneg %p18
    %p25 = scmp.eq.s32.totalorder %s9, 1
    %p26 = por %p24, %p25
    %p27 = scmp.ne.s32.totalorder %s19, %s22
    %p28 = scmp.eq.s32.totalorder %s9, 0
    %p29 = por %p27, %p28
    %p30 = scmp.ne.s32.totalorder %s19, %s22
    %p31 = scmp.eq.s32.totalorder %s14, 1
    %p32 = por %p30, %p31
    %p33 = scmp.ne.s32.totalorder %s22, %s23
    %p34 = scmp.eq.s32.totalorder %s14, 0
    %p35 = por %p33, %p34
    %p36 = scmp.ne.s32.totalorder %s22, %s23
    %p37 = scmp.eq.s32.totalorder %s15, 1
    %p38 = por %p36, %p37
    %p40 = scmp.ne.s32.totalorder %s23, %s39
    %p41 = scmp.eq.s32.totalorder %s15, 0
    %p42 = por %p40, %p41
    %s44 = sadd.s32 %s43, 1
    %p47 = scmp.eq.s32.totalorder %s9, 1
    %p48 = scmp.ne.s32.totalorder %s43, %s45
    %p49 = scmp.eq.s32.totalorder %s9, 0
    %p50 = por %p48, %p49
    %p51 = scmp.ne.s32.totalorder %s43, %s45
    %p52 = scmp.eq.s32.totalorder %s14, 1
    %p53 = por %p51, %p52
    %p54 = scmp.ne.s32.totalorder %s45, %s46
    %p55 = scmp.eq.s32.totalorder %s14, 0
    %p56 = por %p54, %p55
    %p57 = scmp.ne.s32.totalorder %s45, %s46
    %p58 = scmp.eq.s32.totalorder %s15, 1
    %p59 = por %p57, %p58
    %p61 = scmp.ne.s32.totalorder %s46, %s60
    %p62 = scmp.eq.s32.totalorder %s15, 0
    %p63 = por %p61, %p62
    %s65 = sadd.s32 %s64, 1
    %p68 = scmp.eq.s32.totalorder %s9, 1
    %p69 = scmp.ne.s32.totalorder %s64, %s66
    %p70 = scmp.eq.s32.totalorder %s9, 0
    %p71 = por %p69, %p70
    %p72 = scmp.ne.s32.totalorder %s64, %s66
    %p73 = scmp.eq.s32.totalorder %s14, 1
    %p74 = por %p72, %p73
    %p75 = scmp.ne.s32.totalorder %s66, %s67
    %p76 = scmp.eq.s32.totalorder %s14, 0
    %p77 = por %p75, %p76
    %p78 = scmp.ne.s32.totalorder %s66, %s67
    %p79 = scmp.eq.s32.totalorder %s15, 1
    %p80 = por %p78, %p79
    %p82 = scmp.ne.s32.totalorder %s67, %s81
    %p83 = scmp.eq.s32.totalorder %s15, 0
    %p84 = por %p82, %p83
    %s85 = ssub.s32 %s9, %s16
    %p86 = scmp.eq.s32.totalorder %s85, 0
    %s88 = sadd.s32 %s87, 1
    %s89 = scalar_select %p86, %s87, %s88
    %p92 = pneg %p86
    %p93 = scmp.eq.s32.totalorder %s9, 1
    %p94 = por %p92, %p93
    %p95 = scmp.ne.s32.totalorder %s87, %s90
    %p96 = scmp.eq.s32.totalorder %s9, 0
    %p97 = por %p95, %p96
    %p98 = scmp.ne.s32.totalorder %s87, %s90
    %p99 = scmp.eq.s32.totalorder %s14, 1
    %p100 = por %p98, %p99
    %p101 = scmp.ne.s32.totalorder %s90, %s91
    %p102 = scmp.eq.s32.totalorder %s14, 0
    %p103 = por %p101, %p102
    %p104 = scmp.ne.s32.totalorder %s90, %s91
    %p105 = scmp.eq.s32.totalorder %s15, 1
    %p106 = por %p104, %p105
    %p108 = scmp.ne.s32.totalorder %s91, %s107
    %p109 = scmp.eq.s32.totalorder %s15, 0
    %p110 = por %p108, %p109
    %p111 = scmp.le.s32.totalorder 1, %s9
    %p112 = scmp.lt.s32.totalorder %s9, 3
    %p113 = pnand %p111, %p112
    %p114 = pneg %p113
    // Predicated region
    $region9: #{_lambda_.9} parent=5 // pred_check
      _
    $region10: #{_lambda_.9} parent=5 // pred_check_branch
      %116 = sbr.rel (%p113) target = $region12
    $region11: #{_lambda_.9} parent=5 // pred_region
      %s117 = ssub.s32 %s9, 1
      // Predicated region
      $region13: #{_lambda_.9} parent=11 // pred_check
        %p118 = pneg %p56
      $region14: #{_lambda_.9} parent=11 // pred_check_branch
        %120 = sbr.rel (%p118) target = $region16
      $region15: #{_lambda_.9} parent=11 // pred_region
        _
      $region16: #{_lambda_.9} parent=11 // pred_fallthru
        _
      // Predicated region
      $region17: #{_lambda_.9} parent=11 // pred_check
        %p121 = pneg %p77
      $region18: #{_lambda_.9} parent=11 // pred_check_branch
        %123 = sbr.rel (%p121) target = $region20
      $region19: #{_lambda_.9} parent=11 // pred_region
        _
      $region20: #{_lambda_.9} parent=11 // pred_fallthru
        _
    $region12: #{_lambda_.9} parent=5 // pred_fallthru
      _
    %p124 = scmp.lt.s32.totalorder %s9, 2
    // Predicated region
    $region21: #{_lambda_.9} parent=5 // pred_check
      %p125 = pneg %p124
    $region22: #{_lambda_.9} parent=5 // pred_check_branch
      %127 = sbr.rel (%p125) target = $region24
    $region23: #{_lambda_.9} parent=5 // pred_region
      // Predicated region
      $region25: #{_lambda_.9} parent=23 // pred_check
        %p128 = pneg %p29
      $region26: #{_lambda_.9} parent=23 // pred_check_branch
        %130 = sbr.rel (%p128) target = $region28
      $region27: #{_lambda_.9} parent=23 // pred_region
        %p131 = scmp.lt.s32.totalorder %s9, 1
        %s132 = scalar_select %p131, %s9, 1
        %s133 = smul.addr %s132, 2
        %s134 = smul.addr %s133, 8
        %s135 = scalar_lea.vmem %s0, %s134
      $region28: #{_lambda_.9} parent=23 // pred_fallthru
        _
    $region24: #{_lambda_.9} parent=5 // pred_fallthru
      _
    %p136 = scmp.le.s32.totalorder 1, %s9
    %p137 = scmp.lt.s32.totalorder %s9, 3
    %p138 = pnand %p136, %p137
    %p139 = pneg %p138
    // Predicated region
    $region29: #{_lambda_.9} parent=5 // pred_check
      _
    $region30: #{_lambda_.9} parent=5 // pred_check_branch
      %141 = sbr.rel (%p138) target = $region32
    $region31: #{_lambda_.9} parent=5 // pred_region
      %s142 = ssub.s32 %s9, 1
      %p143 = scmp.lt.s32.totalorder %s14, 1
      %s144 = scalar_select %p143, %s14, 1
      %s145 = smul.addr %s144, 2
      %s146 = smul.addr %s145, 8
      %s147 = scalar_lea.vmem %s0, %s146
      %p148 = pneg %p35
      %p149 = pneg %p32
      %p150 = pneg %p56
      %p151 = pneg %p53
      %p152 = pneg %p77
      %p153 = pneg %p74
      %p154 = pneg %p103
      %p155 = pneg %p100
      %p156 = scmp.lt.s32.totalorder %s14, 1
      %s157 = scalar_select %p156, %s14, 1
      %s158 = smul.addr %s157, 2
      %s159 = smul.addr %s158, 8
      %s160 = scalar_lea.vmem %s3, %s159
      %p161 = scmp.lt.s32.totalorder %s14, 1
      %s162 = scalar_select %p161, %s14, 1
      %s163 = smul.addr %s162, 2
      %s164 = smul.addr %s163, 8
      %s165 = scalar_lea.vmem %s0, %s164
      %p166 = scmp.lt.s32.totalorder %s14, 1
      %s167 = scalar_select %p166, %s14, 1
      %s168 = smul.addr %s167, 2
      %s169 = smul.addr %s168, 8
      %s170 = scalar_lea.vmem %s3, %s169
      %v171 = vld [vmem:[%s165] sm:$0xff]
      %v172 = vld [vmem:[%s165 + $0x8] sm:$0xff]
      %v173 = vld [vmem:[%s1] sm:$0xff]
      %v174 = vld [vmem:[%s1 + $0x8] sm:$0xff]
      %s175 = scalar_lea.vmem %s1, 16
      %v176 = vld [vmem:[%s175] sm:$0xff]
      %v177 = vld [vmem:[%s175 + $0x8] sm:$0xff]
      %180 = vrot.lane.b32.xlu0 %v171, 127
      %v181 = vpop.permute.xlu0 %180
      %182 = vrot.lane.b32.xlu0 %v172, 127
      %v183 = vpop.permute.xlu0 %182
      %vm186 = vcmask 130048
      %v188 = vsel %vm186, %v176, 0
      %v191 = vsel %vm186, %v177, 0
      %193 = vmatprep.subr.mxu0 0.0
      %194 = vmatpush1.msra.mxu0 %v181
      %195 = vmatprep.subr.mxu0 0.0
      %196 = vmatpush1.msra.mxu0 %v183
      %197 = vmatprep.subr.mxu0 0.0
      %198 = vmatpush1.msra.mxu0 0.0
      %199 = vmatprep.subr.mxu0 0.0
      %200 = vmatpush1.msra.mxu0 0.0
      %201 = vmatprep.subr.mxu0 0.0
      %202 = vmatpush1.msra.mxu0 0.0
      %203 = vmatprep.subr.mxu0 0.0
      %204 = vmatpush1.msra.mxu0 0.0
      %205 = vmatprep.subr.mxu0 0.0
      %206 = vmatpush1.msra.mxu0 0.0
      %207 = vmatprep.subr.mxu0 0.0
      %208 = vmatpush1.msra.mxu0 0.0
      %209 = vmatprep.subr.mxu0 0.0
      %210 = vmatpush1.msra.mxu0 0.0
      %211 = vmatprep.subr.mxu0 0.0
      %212 = vmatpush1.msra.mxu0 0.0
      %213 = vmatprep.subr.mxu0 0.0
      %214 = vmatpush1.msra.mxu0 0.0
      %215 = vmatprep.subr.mxu0 0.0
      %216 = vmatpush1.msra.mxu0 0.0
      %217 = vmatprep.subr.mxu0 0.0
      %218 = vmatpush1.msra.mxu0 0.0
      %219 = vmatprep.subr.mxu0 0.0
      %220 = vmatpush1.msra.mxu0 0.0
      %221 = vmatprep.subr.mxu0 0.0
      %222 = vmatpush1.msra.mxu0 0.0
      %223 = vmatprep.subr.mxu0 0.0
      %224 = vmatpush1.msra.mxu0 0.0
      %225 = vmatprep.subr.mxu0 0.0
      %226 = vmatpush1.msra.mxu0 0.0
      %227 = vmatprep.subr.mxu0 0.0
      %228 = vmatpush1.msra.mxu0 0.0
      %229 = vmatprep.subr.mxu0 0.0
      %230 = vmatpush1.msra.mxu0 0.0
      %231 = vmatprep.subr.mxu0 0.0
      %232 = vmatpush1.msra.mxu0 0.0
      %233 = vmatprep.subr.mxu0 0.0
      %234 = vmatpush1.msra.mxu0 0.0
      %235 = vmatprep.subr.mxu0 0.0
      %236 = vmatpush1.msra.mxu0 0.0
      %237 = vmatprep.subr.mxu0 0.0
      %238 = vmatpush1.msra.mxu0 0.0
      %239 = vmatprep.subr.mxu0 0.0
      %240 = vmatpush1.msra.mxu0 0.0
      %241 = vmatprep.subr.mxu0 0.0
      %242 = vmatpush1.msra.mxu0 0.0
      %243 = vmatprep.subr.mxu0 0.0
      %244 = vmatpush1.msra.mxu0 0.0
      %245 = vmatprep.subr.mxu0 0.0
      %246 = vmatpush1.msra.mxu0 0.0
      %247 = vmatprep.subr.mxu0 0.0
      %248 = vmatpush1.msra.mxu0 0.0
      %249 = vmatprep.subr.mxu0 0.0
      %250 = vmatpush1.msra.mxu0 0.0
      %251 = vmatprep.subr.mxu0 0.0
      %252 = vmatpush1.msra.mxu0 0.0
      %253 = vmatprep.subr.mxu0 0.0
      %254 = vmatpush1.msra.mxu0 0.0
      %255 = vmatprep.subr.mxu0 0.0
      %256 = vmatpush1.msra.mxu0 0.0
      %257 = vmatprep.mubr.f32.mxu0 0.0
      %258 = vmatmul.mubr.f32.gmra.mrb[0].mxu0 %v188
      %v259 = vpop.f32.mrb[0].mxu0
      %v260 = vadd.f32 0.0, %v259
      %v261 = vpop.f32.mrb[0].mxu0
      %262 = vmatprep.mubr.f32.mxu0 0.0
      %263 = vmatmul.mubr.f32.gmra.mrb[0].mxu0 %v191
      %v264 = vpop.f32.mrb[0].mxu0
      %v265 = vadd.f32 0.0, %v264
      %v266 = vpop.f32.mrb[0].mxu0
      %267 = vdwg.mxu0
      %v269 = vsel %vm186, %v173, 0
      %v272 = vsel %vm186, %v174, 0
      %274 = vmatprep.subr.mxu0 0.0
      %275 = vmatpush1.msra.mxu0 %v171
      %276 = vmatprep.subr.mxu0 0.0
      %277 = vmatpush1.msra.mxu0 %v172
      %278 = vmatprep.subr.mxu0 0.0
      %279 = vmatpush1.msra.mxu0 0.0
      %280 = vmatprep.subr.mxu0 0.0
      %281 = vmatpush1.msra.mxu0 0.0
      %282 = vmatprep.subr.mxu0 0.0
      %283 = vmatpush1.msra.mxu0 0.0
      %284 = vmatprep.subr.mxu0 0.0
      %285 = vmatpush1.msra.mxu0 0.0
      %286 = vmatprep.subr.mxu0 0.0
      %287 = vmatpush1.msra.mxu0 0.0
      %288 = vmatprep.subr.mxu0 0.0
      %289 = vmatpush1.msra.mxu0 0.0
      %290 = vmatprep.subr.mxu0 0.0
      %291 = vmatpush1.msra.mxu0 0.0
      %292 = vmatprep.subr.mxu0 0.0
      %293 = vmatpush1.msra.mxu0 0.0
      %294 = vmatprep.subr.mxu0 0.0
      %295 = vmatpush1.msra.mxu0 0.0
      %296 = vmatprep.subr.mxu0 0.0
      %297 = vmatpush1.msra.mxu0 0.0
      %298 = vmatprep.subr.mxu0 0.0
      %299 = vmatpush1.msra.mxu0 0.0
      %300 = vmatprep.subr.mxu0 0.0
      %301 = vmatpush1.msra.mxu0 0.0
      %302 = vmatprep.subr.mxu0 0.0
      %303 = vmatpush1.msra.mxu0 0.0
      %304 = vmatprep.subr.mxu0 0.0
      %305 = vmatpush1.msra.mxu0 0.0
      %306 = vmatprep.subr.mxu0 0.0
      %307 = vmatpush1.msra.mxu0 0.0
      %308 = vmatprep.subr.mxu0 0.0
      %309 = vmatpush1.msra.mxu0 0.0
      %310 = vmatprep.subr.mxu0 0.0
      %311 = vmatpush1.msra.mxu0 0.0
      %312 = vmatprep.subr.mxu0 0.0
      %313 = vmatpush1.msra.mxu0 0.0
      %314 = vmatprep.subr.mxu0 0.0
      %315 = vmatpush1.msra.mxu0 0.0
      %316 = vmatprep.subr.mxu0 0.0
      %317 = vmatpush1.msra.mxu0 0.0
      %318 = vmatprep.subr.mxu0 0.0
      %319 = vmatpush1.msra.mxu0 0.0
      %320 = vmatprep.subr.mxu0 0.0
      %321 = vmatpush1.msra.mxu0 0.0
      %322 = vmatprep.subr.mxu0 0.0
      %323 = vmatpush1.msra.mxu0 0.0
      %324 = vmatprep.subr.mxu0 0.0
      %325 = vmatpush1.msra.mxu0 0.0
      %326 = vmatprep.subr.mxu0 0.0
      %327 = vmatpush1.msra.mxu0 0.0
      %328 = vmatprep.subr.mxu0 0.0
      %329 = vmatpush1.msra.mxu0 0.0
      %330 = vmatprep.subr.mxu0 0.0
      %331 = vmatpush1.msra.mxu0 0.0
      %332 = vmatprep.subr.mxu0 0.0
      %333 = vmatpush1.msra.mxu0 0.0
      %334 = vmatprep.subr.mxu0 0.0
      %335 = vmatpush1.msra.mxu0 0.0
      %336 = vmatprep.subr.mxu0 0.0
      %337 = vmatpush1.msra.mxu0 0.0
      %338 = vmatprep.mubr.f32.mxu0 0.0
      %339 = vmatmul.mubr.f32.gmra.mrb[0].mxu0 %v269
      %v340 = vpop.f32.mrb[0].mxu0
      %v341 = vadd.f32 %v260, %v340
      %v342 = vpop.f32.mrb[0].mxu0
      %343 = vmatprep.mubr.f32.mxu0 0.0
      %344 = vmatmul.mubr.f32.gmra.mrb[0].mxu0 %v272
      %v345 = vpop.f32.mrb[0].mxu0
      %v346 = vadd.f32 %v265, %v345
      %v347 = vpop.f32.mrb[0].mxu0
      %348 = vdwg.mxu0
      %s349 = scalar_lea.vmem %s1, 32
      %v350 = vld [vmem:[%s349] sm:$0xff]
      %v351 = vld [vmem:[%s349 + $0x8] sm:$0xff]
      %352 = vrot.lane.b32.xlu0 %v171, 126
      %v353 = vpop.permute.xlu0 %352
      %354 = vrot.lane.b32.xlu0 %v172, 126
      %v355 = vpop.permute.xlu0 %354
      %v359 = vsel %vm186, %v350, 0
      %v362 = vsel %vm186, %v351, 0
      %364 = vmatprep.subr.mxu0 0.0
      %365 = vmatpush1.msra.mxu0 %v353
      %366 = vmatprep.subr.mxu0 0.0
      %367 = vmatpush1.msra.mxu0 %v355
      %368 = vmatprep.subr.mxu0 0.0
      %369 = vmatpush1.msra.mxu0 0.0
      %370 = vmatprep.subr.mxu0 0.0
      %371 = vmatpush1.msra.mxu0 0.0
      %372 = vmatprep.subr.mxu0 0.0
      %373 = vmatpush1.msra.mxu0 0.0
      %374 = vmatprep.subr.mxu0 0.0
      %375 = vmatpush1.msra.mxu0 0.0
      %376 = vmatprep.subr.mxu0 0.0
      %377 = vmatpush1.msra.mxu0 0.0
      %378 = vmatprep.subr.mxu0 0.0
      %379 = vmatpush1.msra.mxu0 0.0
      %380 = vmatprep.subr.mxu0 0.0
      %381 = vmatpush1.msra.mxu0 0.0
      %382 = vmatprep.subr.mxu0 0.0
      %383 = vmatpush1.msra.mxu0 0.0
      %384 = vmatprep.subr.mxu0 0.0
      %385 = vmatpush1.msra.mxu0 0.0
      %386 = vmatprep.subr.mxu0 0.0
      %387 = vmatpush1.msra.mxu0 0.0
      %388 = vmatprep.subr.mxu0 0.0
      %389 = vmatpush1.msra.mxu0 0.0
      %390 = vmatprep.subr.mxu0 0.0
      %391 = vmatpush1.msra.mxu0 0.0
      %392 = vmatprep.subr.mxu0 0.0
      %393 = vmatpush1.msra.mxu0 0.0
      %394 = vmatprep.subr.mxu0 0.0
      %395 = vmatpush1.msra.mxu0 0.0
      %396 = vmatprep.subr.mxu0 0.0
      %397 = vmatpush1.msra.mxu0 0.0
      %398 = vmatprep.subr.mxu0 0.0
      %399 = vmatpush1.msra.mxu0 0.0
      %400 = vmatprep.subr.mxu0 0.0
      %401 = vmatpush1.msra.mxu0 0.0
      %402 = vmatprep.subr.mxu0 0.0
      %403 = vmatpush1.msra.mxu0 0.0
      %404 = vmatprep.subr.mxu0 0.0
      %405 = vmatpush1.msra.mxu0 0.0
      %406 = vmatprep.subr.mxu0 0.0
      %407 = vmatpush1.msra.mxu0 0.0
      %408 = vmatprep.subr.mxu0 0.0
      %409 = vmatpush1.msra.mxu0 0.0
      %410 = vmatprep.subr.mxu0 0.0
      %411 = vmatpush1.msra.mxu0 0.0
      %412 = vmatprep.subr.mxu0 0.0
      %413 = vmatpush1.msra.mxu0 0.0
      %414 = vmatprep.subr.mxu0 0.0
      %415 = vmatpush1.msra.mxu0 0.0
      %416 = vmatprep.subr.mxu0 0.0
      %417 = vmatpush1.msra.mxu0 0.0
      %418 = vmatprep.subr.mxu0 0.0
      %419 = vmatpush1.msra.mxu0 0.0
      %420 = vmatprep.subr.mxu0 0.0
      %421 = vmatpush1.msra.mxu0 0.0
      %422 = vmatprep.subr.mxu0 0.0
      %423 = vmatpush1.msra.mxu0 0.0
      %424 = vmatprep.subr.mxu0 0.0
      %425 = vmatpush1.msra.mxu0 0.0
      %426 = vmatprep.subr.mxu0 0.0
      %427 = vmatpush1.msra.mxu0 0.0
      %428 = vmatprep.mubr.f32.mxu0 0.0
      %429 = vmatmul.mubr.f32.gmra.mrb[0].mxu0 %v359
      %v430 = vpop.f32.mrb[0].mxu0
      %v431 = vadd.f32 0.0, %v430
      %v432 = vpop.f32.mrb[0].mxu0
      %433 = vmatprep.mubr.f32.mxu0 0.0
      %434 = vmatmul.mubr.f32.gmra.mrb[0].mxu0 %v362
      %v435 = vpop.f32.mrb[0].mxu0
      %v436 = vadd.f32 0.0, %v435
      %v437 = vpop.f32.mrb[0].mxu0
      %438 = vdwg.mxu0
      %v439 = vadd.f32 %v341, %v431
      %v440 = vadd.f32 %v346, %v436
      %s441 = scalar_lea.vmem %s1, 48
      %v442 = vld [vmem:[%s441] sm:$0xff]
      %v443 = vld [vmem:[%s441 + $0x8] sm:$0xff]
      %444 = vrot.lane.b32.xlu0 %v171, 122
      %v445 = vpop.permute.xlu0 %444
      %446 = vrot.lane.b32.xlu0 %v172, 122
      %v447 = vpop.permute.xlu0 %446
      %v451 = vsel %vm186, %v442, 0
      %v454 = vsel %vm186, %v443, 0
      %456 = vmatprep.subr.mxu0 0.0
      %457 = vmatpush1.msra.mxu0 %v445
      %458 = vmatprep.subr.mxu0 0.0
      %459 = vmatpush1.msra.mxu0 %v447
      %460 = vmatprep.subr.mxu0 0.0
      %461 = vmatpush1.msra.mxu0 0.0
      %462 = vmatprep.subr.mxu0 0.0
      %463 = vmatpush1.msra.mxu0 0.0
      %464 = vmatprep.subr.mxu0 0.0
      %465 = vmatpush1.msra.mxu0 0.0
      %466 = vmatprep.subr.mxu0 0.0
      %467 = vmatpush1.msra.mxu0 0.0
      %468 = vmatprep.subr.mxu0 0.0
      %469 = vmatpush1.msra.mxu0 0.0
      %470 = vmatprep.subr.mxu0 0.0
      %471 = vmatpush1.msra.mxu0 0.0
      %472 = vmatprep.subr.mxu0 0.0
      %473 = vmatpush1.msra.mxu0 0.0
      %474 = vmatprep.subr.mxu0 0.0
      %475 = vmatpush1.msra.mxu0 0.0
      %476 = vmatprep.subr.mxu0 0.0
      %477 = vmatpush1.msra.mxu0 0.0
      %478 = vmatprep.subr.mxu0 0.0
      %479 = vmatpush1.msra.mxu0 0.0
      %480 = vmatprep.subr.mxu0 0.0
      %481 = vmatpush1.msra.mxu0 0.0
      %482 = vmatprep.subr.mxu0 0.0
      %483 = vmatpush1.msra.mxu0 0.0
      %484 = vmatprep.subr.mxu0 0.0
      %485 = vmatpush1.msra.mxu0 0.0
      %486 = vmatprep.subr.mxu0 0.0
      %487 = vmatpush1.msra.mxu0 0.0
      %488 = vmatprep.subr.mxu0 0.0
      %489 = vmatpush1.msra.mxu0 0.0
      %490 = vmatprep.subr.mxu0 0.0
      %491 = vmatpush1.msra.mxu0 0.0
      %492 = vmatprep.subr.mxu0 0.0
      %493 = vmatpush1.msra.mxu0 0.0
      %494 = vmatprep.subr.mxu0 0.0
      %495 = vmatpush1.msra.mxu0 0.0
      %496 = vmatprep.subr.mxu0 0.0
      %497 = vmatpush1.msra.mxu0 0.0
      %498 = vmatprep.subr.mxu0 0.0
      %499 = vmatpush1.msra.mxu0 0.0
      %500 = vmatprep.subr.mxu0 0.0
      %501 = vmatpush1.msra.mxu0 0.0
      %502 = vmatprep.subr.mxu0 0.0
      %503 = vmatpush1.msra.mxu0 0.0
      %504 = vmatprep.subr.mxu0 0.0
      %505 = vmatpush1.msra.mxu0 0.0
      %506 = vmatprep.subr.mxu0 0.0
      %507 = vmatpush1.msra.mxu0 0.0
      %508 = vmatprep.subr.mxu0 0.0
      %509 = vmatpush1.msra.mxu0 0.0
      %510 = vmatprep.subr.mxu0 0.0
      %511 = vmatpush1.msra.mxu0 0.0
      %512 = vmatprep.subr.mxu0 0.0
      %513 = vmatpush1.msra.mxu0 0.0
      %514 = vmatprep.subr.mxu0 0.0
      %515 = vmatpush1.msra.mxu0 0.0
      %516 = vmatprep.subr.mxu0 0.0
      %517 = vmatpush1.msra.mxu0 0.0
      %518 = vmatprep.subr.mxu0 0.0
      %519 = vmatpush1.msra.mxu0 0.0
      %520 = vmatprep.mubr.f32.mxu0 0.0
      %521 = vmatmul.mubr.f32.gmra.mrb[0].mxu0 %v451
      %v522 = vpop.f32.mrb[0].mxu0
      %v523 = vadd.f32 0.0, %v522
      %v524 = vpop.f32.mrb[0].mxu0
      %525 = vmatprep.mubr.f32.mxu0 0.0
      %526 = vmatmul.mubr.f32.gmra.mrb[0].mxu0 %v454
      %v527 = vpop.f32.mrb[0].mxu0
      %v528 = vadd.f32 0.0, %v527
      %v529 = vpop.f32.mrb[0].mxu0
      %530 = vdwg.mxu0
      %v531 = vadd.f32 %v439, %v523
      %v532 = vadd.f32 %v440, %v528
      %s533 = scalar_lea.vmem %s1, 64
      %v534 = vld [vmem:[%s533] sm:$0xff]
      %v535 = vld [vmem:[%s533 + $0x8] sm:$0xff]
      %536 = vrot.lane.b32.xlu0 %v171, 121
      %v537 = vpop.permute.xlu0 %536
      %538 = vrot.lane.b32.xlu0 %v172, 121
      %v539 = vpop.permute.xlu0 %538
      %v543 = vsel %vm186, %v534, 0
      %v546 = vsel %vm186, %v535, 0
      %548 = vmatprep.subr.mxu0 0.0
      %549 = vmatpush1.msra.mxu0 %v537
      %550 = vmatprep.subr.mxu0 0.0
      %551 = vmatpush1.msra.mxu0 %v539
      %552 = vmatprep.subr.mxu0 0.0
      %553 = vmatpush1.msra.mxu0 0.0
      %554 = vmatprep.subr.mxu0 0.0
      %555 = vmatpush1.msra.mxu0 0.0
      %556 = vmatprep.subr.mxu0 0.0
      %557 = vmatpush1.msra.mxu0 0.0
      %558 = vmatprep.subr.mxu0 0.0
      %559 = vmatpush1.msra.mxu0 0.0
      %560 = vmatprep.subr.mxu0 0.0
      %561 = vmatpush1.msra.mxu0 0.0
      %562 = vmatprep.subr.mxu0 0.0
      %563 = vmatpush1.msra.mxu0 0.0
      %564 = vmatprep.subr.mxu0 0.0
      %565 = vmatpush1.msra.mxu0 0.0
      %566 = vmatprep.subr.mxu0 0.0
      %567 = vmatpush1.msra.mxu0 0.0
      %568 = vmatprep.subr.mxu0 0.0
      %569 = vmatpush1.msra.mxu0 0.0
      %570 = vmatprep.subr.mxu0 0.0
      %571 = vmatpush1.msra.mxu0 0.0
      %572 = vmatprep.subr.mxu0 0.0
      %573 = vmatpush1.msra.mxu0 0.0
      %574 = vmatprep.subr.mxu0 0.0
      %575 = vmatpush1.msra.mxu0 0.0
      %576 = vmatprep.subr.mxu0 0.0
      %577 = vmatpush1.msra.mxu0 0.0
      %578 = vmatprep.subr.mxu0 0.0
      %579 = vmatpush1.msra.mxu0 0.0
      %580 = vmatprep.subr.mxu0 0.0
      %581 = vmatpush1.msra.mxu0 0.0
      %582 = vmatprep.subr.mxu0 0.0
      %583 = vmatpush1.msra.mxu0 0.0
      %584 = vmatprep.subr.mxu0 0.0
      %585 = vmatpush1.msra.mxu0 0.0
      %586 = vmatprep.subr.mxu0 0.0
      %587 = vmatpush1.msra.mxu0 0.0
      %588 = vmatprep.subr.mxu0 0.0
      %589 = vmatpush1.msra.mxu0 0.0
      %590 = vmatprep.subr.mxu0 0.0
      %591 = vmatpush1.msra.mxu0 0.0
      %592 = vmatprep.subr.mxu0 0.0
      %593 = vmatpush1.msra.mxu0 0.0
      %594 = vmatprep.subr.mxu0 0.0
      %595 = vmatpush1.msra.mxu0 0.0
      %596 = vmatprep.subr.mxu0 0.0
      %597 = vmatpush1.msra.mxu0 0.0
      %598 = vmatprep.subr.mxu0 0.0
      %599 = vmatpush1.msra.mxu0 0.0
      %600 = vmatprep.subr.mxu0 0.0
      %601 = vmatpush1.msra.mxu0 0.0
      %602 = vmatprep.subr.mxu0 0.0
      %603 = vmatpush1.msra.mxu0 0.0
      %604 = vmatprep.subr.mxu0 0.0
      %605 = vmatpush1.msra.mxu0 0.0
      %606 = vmatprep.subr.mxu0 0.0
      %607 = vmatpush1.msra.mxu0 0.0
      %608 = vmatprep.subr.mxu0 0.0
      %609 = vmatpush1.msra.mxu0 0.0
      %610 = vmatprep.subr.mxu0 0.0
      %611 = vmatpush1.msra.mxu0 0.0
      %612 = vmatprep.mubr.f32.mxu0 0.0
      %613 = vmatmul.mubr.f32.gmra.mrb[0].mxu0 %v543
      %v614 = vpop.f32.mrb[0].mxu0
      %v615 = vadd.f32 0.0, %v614
      %v616 = vpop.f32.mrb[0].mxu0
      %617 = vmatprep.mubr.f32.mxu0 0.0
      %618 = vmatmul.mubr.f32.gmra.mrb[0].mxu0 %v546
      %v619 = vpop.f32.mrb[0].mxu0
      %v620 = vadd.f32 0.0, %v619
      %v621 = vpop.f32.mrb[0].mxu0
      %622 = vdwg.mxu0
      %v623 = vadd.f32 %v531, %v615
      %v624 = vadd.f32 %v532, %v620
      %s625 = scalar_lea.vmem %s1, 80
      %v626 = vld [vmem:[%s625] sm:$0xff]
      %v627 = vld [vmem:[%s625 + $0x8] sm:$0xff]
      %628 = vrot.lane.b32.xlu0 %v171, 120
      %v629 = vpop.permute.xlu0 %628
      %630 = vrot.lane.b32.xlu0 %v172, 120
      %v631 = vpop.permute.xlu0 %630
      %v635 = vsel %vm186, %v626, 0
      %v638 = vsel %vm186, %v627, 0
      %640 = vmatprep.subr.mxu0 0.0
      %641 = vmatpush1.msra.mxu0 %v629
      %642 = vmatprep.subr.mxu0 0.0
      %643 = vmatpush1.msra.mxu0 %v631
      %644 = vmatprep.subr.mxu0 0.0
      %645 = vmatpush1.msra.mxu0 0.0
      %646 = vmatprep.subr.mxu0 0.0
      %647 = vmatpush1.msra.mxu0 0.0
      %648 = vmatprep.subr.mxu0 0.0
      %649 = vmatpush1.msra.mxu0 0.0
      %650 = vmatprep.subr.mxu0 0.0
      %651 = vmatpush1.msra.mxu0 0.0
      %652 = vmatprep.subr.mxu0 0.0
      %653 = vmatpush1.msra.mxu0 0.0
      %654 = vmatprep.subr.mxu0 0.0
      %655 = vmatpush1.msra.mxu0 0.0
      %656 = vmatprep.subr.mxu0 0.0
      %657 = vmatpush1.msra.mxu0 0.0
      %658 = vmatprep.subr.mxu0 0.0
      %659 = vmatpush1.msra.mxu0 0.0
      %660 = vmatprep.subr.mxu0 0.0
      %661 = vmatpush1.msra.mxu0 0.0
      %662 = vmatprep.subr.mxu0 0.0
      %663 = vmatpush1.msra.mxu0 0.0
      %664 = vmatprep.subr.mxu0 0.0
      %665 = vmatpush1.msra.mxu0 0.0
      %666 = vmatprep.subr.mxu0 0.0
      %667 = vmatpush1.msra.mxu0 0.0
      %668 = vmatprep.subr.mxu0 0.0
      %669 = vmatpush1.msra.mxu0 0.0
      %670 = vmatprep.subr.mxu0 0.0
      %671 = vmatpush1.msra.mxu0 0.0
      %672 = vmatprep.subr.mxu0 0.0
      %673 = vmatpush1.msra.mxu0 0.0
      %674 = vmatprep.subr.mxu0 0.0
      %675 = vmatpush1.msra.mxu0 0.0
      %676 = vmatprep.subr.mxu0 0.0
      %677 = vmatpush1.msra.mxu0 0.0
      %678 = vmatprep.subr.mxu0 0.0
      %679 = vmatpush1.msra.mxu0 0.0
      %680 = vmatprep.subr.mxu0 0.0
      %681 = vmatpush1.msra.mxu0 0.0
      %682 = vmatprep.subr.mxu0 0.0
      %683 = vmatpush1.msra.mxu0 0.0
      %684 = vmatprep.subr.mxu0 0.0
      %685 = vmatpush1.msra.mxu0 0.0
      %686 = vmatprep.subr.mxu0 0.0
      %687 = vmatpush1.msra.mxu0 0.0
      %688 = vmatprep.subr.mxu0 0.0
      %689 = vmatpush1.msra.mxu0 0.0
      %690 = vmatprep.subr.mxu0 0.0
      %691 = vmatpush1.msra.mxu0 0.0
      %692 = vmatprep.subr.mxu0 0.0
      %693 = vmatpush1.msra.mxu0 0.0
      %694 = vmatprep.subr.mxu0 0.0
      %695 = vmatpush1.msra.mxu0 0.0
      %696 = vmatprep.subr.mxu0 0.0
      %697 = vmatpush1.msra.mxu0 0.0
      %698 = vmatprep.subr.mxu0 0.0
      %699 = vmatpush1.msra.mxu0 0.0
      %700 = vmatprep.subr.mxu0 0.0
      %701 = vmatpush1.msra.mxu0 0.0
      %702 = vmatprep.subr.mxu0 0.0
      %703 = vmatpush1.msra.mxu0 0.0
      %704 = vmatprep.mubr.f32.mxu0 0.0
      %705 = vmatmul.mubr.f32.gmra.mrb[0].mxu0 %v635
      %v706 = vpop.f32.mrb[0].mxu0
      %v707 = vadd.f32 0.0, %v706
      %v708 = vpop.f32.mrb[0].mxu0
      %709 = vmatprep.mubr.f32.mxu0 0.0
      %710 = vmatmul.mubr.f32.gmra.mrb[0].mxu0 %v638
      %v711 = vpop.f32.mrb[0].mxu0
      %v712 = vadd.f32 0.0, %v711
      %v713 = vpop.f32.mrb[0].mxu0
      %714 = vdwg.mxu0
      %v715 = vadd.f32 %v623, %v707
      %v716 = vadd.f32 %v624, %v712
      %s717 = scalar_lea.vmem %s1, 96
      %v718 = vld [vmem:[%s717] sm:$0xff]
      %v719 = vld [vmem:[%s717 + $0x8] sm:$0xff]
      %720 = vrot.lane.b32.xlu0 %v171, 116
      %v721 = vpop.permute.xlu0 %720
      %722 = vrot.lane.b32.xlu0 %v172, 116
      %v723 = vpop.permute.xlu0 %722
      %v727 = vsel %vm186, %v718, 0
      %v730 = vsel %vm186, %v719, 0
      %732 = vmatprep.subr.mxu0 0.0
      %733 = vmatpush1.msra.mxu0 %v721
      %734 = vmatprep.subr.mxu0 0.0
      %735 = vmatpush1.msra.mxu0 %v723
      %736 = vmatprep.subr.mxu0 0.0
      %737 = vmatpush1.msra.mxu0 0.0
      %738 = vmatprep.subr.mxu0 0.0
      %739 = vmatpush1.msra.mxu0 0.0
      %740 = vmatprep.subr.mxu0 0.0
      %741 = vmatpush1.msra.mxu0 0.0
      %742 = vmatprep.subr.mxu0 0.0
      %743 = vmatpush1.msra.mxu0 0.0
      %744 = vmatprep.subr.mxu0 0.0
      %745 = vmatpush1.msra.mxu0 0.0
      %746 = vmatprep.subr.mxu0 0.0
      %747 = vmatpush1.msra.mxu0 0.0
      %748 = vmatprep.subr.mxu0 0.0
      %749 = vmatpush1.msra.mxu0 0.0
      %750 = vmatprep.subr.mxu0 0.0
      %751 = vmatpush1.msra.mxu0 0.0
      %752 = vmatprep.subr.mxu0 0.0
      %753 = vmatpush1.msra.mxu0 0.0
      %754 = vmatprep.subr.mxu0 0.0
      %755 = vmatpush1.msra.mxu0 0.0
      %756 = vmatprep.subr.mxu0 0.0
      %757 = vmatpush1.msra.mxu0 0.0
      %758 = vmatprep.subr.mxu0 0.0
      %759 = vmatpush1.msra.mxu0 0.0
      %760 = vmatprep.subr.mxu0 0.0
      %761 = vmatpush1.msra.mxu0 0.0
      %762 = vmatprep.subr.mxu0 0.0
      %763 = vmatpush1.msra.mxu0 0.0
      %764 = vmatprep.subr.mxu0 0.0
      %765 = vmatpush1.msra.mxu0 0.0
      %766 = vmatprep.subr.mxu0 0.0
      %767 = vmatpush1.msra.mxu0 0.0
      %768 = vmatprep.subr.mxu0 0.0
      %769 = vmatpush1.msra.mxu0 0.0
      %770 = vmatprep.subr.mxu0 0.0
      %771 = vmatpush1.msra.mxu0 0.0
      %772 = vmatprep.subr.mxu0 0.0
      %773 = vmatpush1.msra.mxu0 0.0
      %774 = vmatprep.subr.mxu0 0.0
      %775 = vmatpush1.msra.mxu0 0.0
      %776 = vmatprep.subr.mxu0 0.0
      %777 = vmatpush1.msra.mxu0 0.0
      %778 = vmatprep.subr.mxu0 0.0
      %779 = vmatpush1.msra.mxu0 0.0
      %780 = vmatprep.subr.mxu0 0.0
      %781 = vmatpush1.msra.mxu0 0.0
      %782 = vmatprep.subr.mxu0 0.0
      %783 = vmatpush1.msra.mxu0 0.0
      %784 = vmatprep.subr.mxu0 0.0
      %785 = vmatpush1.msra.mxu0 0.0
      %786 = vmatprep.subr.mxu0 0.0
      %787 = vmatpush1.msra.mxu0 0.0
      %788 = vmatprep.subr.mxu0 0.0
      %789 = vmatpush1.msra.mxu0 0.0
      %790 = vmatprep.subr.mxu0 0.0
      %791 = vmatpush1.msra.mxu0 0.0
      %792 = vmatprep.subr.mxu0 0.0
      %793 = vmatpush1.msra.mxu0 0.0
      %794 = vmatprep.subr.mxu0 0.0
      %795 = vmatpush1.msra.mxu0 0.0
      %796 = vmatprep.mubr.f32.mxu0 0.0
      %797 = vmatmul.mubr.f32.gmra.mrb[0].mxu0 %v727
      %v798 = vpop.f32.mrb[0].mxu0
      %v799 = vadd.f32 0.0, %v798
      %v800 = vpop.f32.mrb[0].mxu0
      %801 = vmatprep.mubr.f32.mxu0 0.0
      %802 = vmatmul.mubr.f32.gmra.mrb[0].mxu0 %v730
      %v803 = vpop.f32.mrb[0].mxu0
      %v804 = vadd.f32 0.0, %v803
      %v805 = vpop.f32.mrb[0].mxu0
      %806 = vdwg.mxu0
      %v807 = vadd.f32 %v715, %v799
      %v808 = vadd.f32 %v716, %v804
      %s809 = scalar_lea.vmem %s1, 112
      %v810 = vld [vmem:[%s809] sm:$0xff]
      %v811 = vld [vmem:[%s809 + $0x8] sm:$0xff]
      %812 = vrot.lane.b32.xlu0 %v171, 115
      %v813 = vpop.permute.xlu0 %812
      %814 = vrot.lane.b32.xlu0 %v172, 115
      %v815 = vpop.permute.xlu0 %814
      %v819 = vsel %vm186, %v810, 0
      %v822 = vsel %vm186, %v811, 0
      %824 = vmatprep.subr.mxu0 0.0
      %825 = vmatpush1.msra.mxu0 %v813
      %826 = vmatprep.subr.mxu0 0.0
      %827 = vmatpush1.msra.mxu0 %v815
      %828 = vmatprep.subr.mxu0 0.0
      %829 = vmatpush1.msra.mxu0 0.0
      %830 = vmatprep.subr.mxu0 0.0
      %831 = vmatpush1.msra.mxu0 0.0
      %832 = vmatprep.subr.mxu0 0.0
      %833 = vmatpush1.msra.mxu0 0.0
      %834 = vmatprep.subr.mxu0 0.0
      %835 = vmatpush1.msra.mxu0 0.0
      %836 = vmatprep.subr.mxu0 0.0
      %837 = vmatpush1.msra.mxu0 0.0
      %838 = vmatprep.subr.mxu0 0.0
      %839 = vmatpush1.msra.mxu0 0.0
      %840 = vmatprep.subr.mxu0 0.0
      %841 = vmatpush1.msra.mxu0 0.0
      %842 = vmatprep.subr.mxu0 0.0
      %843 = vmatpush1.msra.mxu0 0.0
      %844 = vmatprep.subr.mxu0 0.0
      %845 = vmatpush1.msra.mxu0 0.0
      %846 = vmatprep.subr.mxu0 0.0
      %847 = vmatpush1.msra.mxu0 0.0
      %848 = vmatprep.subr.mxu0 0.0
      %849 = vmatpush1.msra.mxu0 0.0
      %850 = vmatprep.subr.mxu0 0.0
      %851 = vmatpush1.msra.mxu0 0.0
      %852 = vmatprep.subr.mxu0 0.0
      %853 = vmatpush1.msra.mxu0 0.0
      %854 = vmatprep.subr.mxu0 0.0
      %855 = vmatpush1.msra.mxu0 0.0
      %856 = vmatprep.subr.mxu0 0.0
      %857 = vmatpush1.msra.mxu0 0.0
      %858 = vmatprep.subr.mxu0 0.0
      %859 = vmatpush1.msra.mxu0 0.0
      %860 = vmatprep.subr.mxu0 0.0
      %861 = vmatpush1.msra.mxu0 0.0
      %862 = vmatprep.subr.mxu0 0.0
      %863 = vmatpush1.msra.mxu0 0.0
      %864 = vmatprep.subr.mxu0 0.0
      %865 = vmatpush1.msra.mxu0 0.0
      %866 = vmatprep.subr.mxu0 0.0
      %867 = vmatpush1.msra.mxu0 0.0
      %868 = vmatprep.subr.mxu0 0.0
      %869 = vmatpush1.msra.mxu0 0.0
      %870 = vmatprep.subr.mxu0 0.0
      %871 = vmatpush1.msra.mxu0 0.0
      %872 = vmatprep.subr.mxu0 0.0
      %873 = vmatpush1.msra.mxu0 0.0
      %874 = vmatprep.subr.mxu0 0.0
      %875 = vmatpush1.msra.mxu0 0.0
      %876 = vmatprep.subr.mxu0 0.0
      %877 = vmatpush1.msra.mxu0 0.0
      %878 = vmatprep.subr.mxu0 0.0
      %879 = vmatpush1.msra.mxu0 0.0
      %880 = vmatprep.subr.mxu0 0.0
      %881 = vmatpush1.msra.mxu0 0.0
      %882 = vmatprep.subr.mxu0 0.0
      %883 = vmatpush1.msra.mxu0 0.0
      %884 = vmatprep.subr.mxu0 0.0
      %885 = vmatpush1.msra.mxu0 0.0
      %886 = vmatprep.subr.mxu0 0.0
      %887 = vmatpush1.msra.mxu0 0.0
      %888 = vmatprep.mubr.f32.mxu0 0.0
      %889 = vmatmul.mubr.f32.gmra.mrb[0].mxu0 %v819
      %v890 = vpop.f32.mrb[0].mxu0
      %v891 = vadd.f32 0.0, %v890
      %v892 = vpop.f32.mrb[0].mxu0
      %893 = vmatprep.mubr.f32.mxu0 0.0
      %894 = vmatmul.mubr.f32.gmra.mrb[0].mxu0 %v822
      %v895 = vpop.f32.mrb[0].mxu0
      %v896 = vadd.f32 0.0, %v895
      %v897 = vpop.f32.mrb[0].mxu0
      %898 = vdwg.mxu0
      %v899 = vadd.f32 %v807, %v891
      %v900 = vadd.f32 %v808, %v896
      %s901 = scalar_lea.vmem %s1, 128
      %v902 = vld [vmem:[%s901] sm:$0xff]
      %v903 = vld [vmem:[%s901 + $0x8] sm:$0xff]
      %904 = vrot.lane.b32.xlu0 %v171, 114
      %v905 = vpop.permute.xlu0 %904
      %906 = vrot.lane.b32.xlu0 %v172, 114
      %v907 = vpop.permute.xlu0 %906
      %v911 = vsel %vm186, %v902, 0
      %v914 = vsel %vm186, %v903, 0
      %916 = vmatprep.subr.mxu0 0.0
      %917 = vmatpush1.msra.mxu0 %v905
      %918 = vmatprep.subr.mxu0 0.0
      %919 = vmatpush1.msra.mxu0 %v907
      %920 = vmatprep.subr.mxu0 0.0
      %921 = vmatpush1.msra.mxu0 0.0
      %922 = vmatprep.subr.mxu0 0.0
      %923 = vmatpush1.msra.mxu0 0.0
      %924 = vmatprep.subr.mxu0 0.0
      %925 = vmatpush1.msra.mxu0 0.0
      %926 = vmatprep.subr.mxu0 0.0
      %927 = vmatpush1.msra.mxu0 0.0
      %928 = vmatprep.subr.mxu0 0.0
      %929 = vmatpush1.msra.mxu0 0.0
      %930 = vmatprep.subr.mxu0 0.0
      %931 = vmatpush1.msra.mxu0 0.0
      %932 = vmatprep.subr.mxu0 0.0
      %933 = vmatpush1.msra.mxu0 0.0
      %934 = vmatprep.subr.mxu0 0.0
      %935 = vmatpush1.msra.mxu0 0.0
      %936 = vmatprep.subr.mxu0 0.0
      %937 = vmatpush1.msra.mxu0 0.0
      %938 = vmatprep.subr.mxu0 0.0
      %939 = vmatpush1.msra.mxu0 0.0
      %940 = vmatprep.subr.mxu0 0.0
      %941 = vmatpush1.msra.mxu0 0.0
      %942 = vmatprep.subr.mxu0 0.0
      %943 = vmatpush1.msra.mxu0 0.0
      %944 = vmatprep.subr.mxu0 0.0
      %945 = vmatpush1.msra.mxu0 0.0
      %946 = vmatprep.subr.mxu0 0.0
      %947 = vmatpush1.msra.mxu0 0.0
      %948 = vmatprep.subr.mxu0 0.0
      %949 = vmatpush1.msra.mxu0 0.0
      %950 = vmatprep.subr.mxu0 0.0
      %951 = vmatpush1.msra.mxu0 0.0
      %952 = vmatprep.subr.mxu0 0.0
      %953 = vmatpush1.msra.mxu0 0.0
      %954 = vmatprep.subr.mxu0 0.0
      %955 = vmatpush1.msra.mxu0 0.0
      %956 = vmatprep.subr.mxu0 0.0
      %957 = vmatpush1.msra.mxu0 0.0
      %958 = vmatprep.subr.mxu0 0.0
      %959 = vmatpush1.msra.mxu0 0.0
      %960 = vmatprep.subr.mxu0 0.0
      %961 = vmatpush1.msra.mxu0 0.0
      %962 = vmatprep.subr.mxu0 0.0
      %963 = vmatpush1.msra.mxu0 0.0
      %964 = vmatprep.subr.mxu0 0.0
      %965 = vmatpush1.msra.mxu0 0.0
      %966 = vmatprep.subr.mxu0 0.0
      %967 = vmatpush1.msra.mxu0 0.0
      %968 = vmatprep.subr.mxu0 0.0
      %969 = vmatpush1.msra.mxu0 0.0
      %970 = vmatprep.subr.mxu0 0.0
      %971 = vmatpush1.msra.mxu0 0.0
      %972 = vmatprep.subr.mxu0 0.0
      %973 = vmatpush1.msra.mxu0 0.0
      %974 = vmatprep.subr.mxu0 0.0
      %975 = vmatpush1.msra.mxu0 0.0
      %976 = vmatprep.subr.mxu0 0.0
      %977 = vmatpush1.msra.mxu0 0.0
      %978 = vmatprep.subr.mxu0 0.0
      %979 = vmatpush1.msra.mxu0 0.0
      %980 = vmatprep.mubr.f32.mxu0 0.0
      %981 = vmatmul.mubr.f32.gmra.mrb[0].mxu0 %v911
      %v982 = vpop.f32.mrb[0].mxu0
      %v983 = vadd.f32 0.0, %v982
      %v984 = vpop.f32.mrb[0].mxu0
      %985 = vmatprep.mubr.f32.mxu0 0.0
      %986 = vmatmul.mubr.f32.gmra.mrb[0].mxu0 %v914
      %v987 = vpop.f32.mrb[0].mxu0
      %v988 = vadd.f32 0.0, %v987
      %v989 = vpop.f32.mrb[0].mxu0
      %990 = vdwg.mxu0
      %v991 = vadd.f32 %v899, %v983
      %v992 = vadd.f32 %v900, %v988
      %v993 = vld [vmem:[%s2] sm:$0xff]
      %v994 = vld [vmem:[%s2 + $0x8] sm:$0xff]
      %996 = vset.pattern.permute.xlu0 0
      %997 = vperm.xlu0 %996, %v993
      %v998 = vpop.permute.xlu0 %997
      %1001 = vset.pattern.permute.xlu0 0
      %1002 = vperm.xlu0 %1001, %v994
      %v1003 = vpop.permute.xlu0 %1002
      %v1005 = vadd.f32 %v991, %v998
      %v1006 = vadd.f32 %v992, %v1003
      %vm1007 = vcmp.ge.f32.partialorder %v1005, 0.0
      %vm1008 = vcmp.ge.f32.partialorder %v1006, 0.0
      %v1009 = vmul.f32 %v1005, 0.1
      %v1010 = vmul.f32 %v1006, 0.1
      %v1011 = vsel %vm1007, %v1005, %v1009
      %v1012 = vsel %vm1008, %v1006, %v1010
      %vm1013 = vcmask 195584
      %1014 = vst.msk [vmem:[%s170] sm:$0xff] %vm1013, %v1011
      %1015 = vst.msk [vmem:[%s170 + $0x8] sm:$0xff] %vm1013, %v1012
      %p1016 = scmp.lt.s32.totalorder %s14, 1
      %s1017 = scalar_select %p1016, %s14, 1
      %s1018 = smul.addr %s1017, 2
      %s1019 = smul.addr %s1018, 8
      %s1020 = scalar_lea.vmem %s3, %s1019
      // Predicated region
      $region33: #{_lambda_.9} parent=31 // pred_check
        %p1021 = pneg %p100
      $region34: #{_lambda_.9} parent=31 // pred_check_branch
        %1023 = sbr.rel (%p1021) target = $region36
      $region35: #{_lambda_.9} parent=31 // pred_region
        _
      $region36: #{_lambda_.9} parent=31 // pred_fallthru
        _
    $region32: #{_lambda_.9} parent=5 // pred_fallthru
      _
    %p1024 = scmp.le.s32.totalorder 2, %s9
    // Predicated region
    $region37: #{_lambda_.9} parent=5 // pred_check
      %p1025 = pneg %p1024
    $region38: #{_lambda_.9} parent=5 // pred_check_branch
      %1027 = sbr.rel (%p1025) target = $region40
    $region39: #{_lambda_.9} parent=5 // pred_region
      %s1028 = ssub.s32 %s9, 2
      // Predicated region
      $region41: #{_lambda_.9} parent=39 // pred_check
        %p1029 = pneg %p106
      $region42: #{_lambda_.9} parent=39 // pred_check_branch
        %1031 = sbr.rel (%p1029) target = $region44
      $region43: #{_lambda_.9} parent=39 // pred_region
        %p1032 = scmp.lt.s32.totalorder %s15, 1
        %s1033 = scalar_select %p1032, %s15, 1
        %s1034 = smul.addr %s1033, 2
        %s1035 = smul.addr %s1034, 8
        %s1036 = scalar_lea.vmem %s3, %s1035
      $region44: #{_lambda_.9} parent=39 // pred_fallthru
        _
    $region40: #{_lambda_.9} parent=5 // pred_fallthru
      _
  $region6: #{_lambda_.9} parent=0 // loop_footer
    %s13 = sadd.s32 1, %s9
  $region7: #{_lambda_.9} parent=0 // loop_footer_branch
    %8 = sbr.rel target = $region3
  $region8: #{_lambda_.9} parent=0 // loop_exit
    _

// kernel: _lambda_.10
$region0: #{_lambda_.10}
  #allocation0 [shape = 'u32[]', space=smem, size = 0x4, offset = 0x4, fixed_abs, tag = 'smem constant byte address 0x4 - core index']
  #allocation1 [shape = 'u32[144,128]{1,0:T(1,128)}', space=vmem, size = 0x12000, scoped, tag = 'internal scratch']
  %s0 = inlined_call_operand.vmem [shape: f32[2,16,12], index: 0, kind: input, shape index: {}]
  %s1 = inlined_call_operand.vmem [shape: f32[2,16,12], index: 1, kind: input, shape index: {}]
  %s2 = inlined_call_operand.vmem [shape: f32[2,16,12], index: 2, kind: input, shape index: {}]
  %s3 = inlined_call_operand.vmem [shape: f32[2,16,12], index: 3, kind: input, shape index: {}]
  %s4 = inlined_call_operand.vmem [shape: f32[9,32,16], index: 4, kind: input, shape index: {}]
  %s5 = inlined_call_operand.vmem [shape: f32[32,1], index: 5, kind: input, shape index: {}]
  %s6 = inlined_call_operand.vmem [shape: f32[2,32,6], index: 6, kind: output, shape index: {}]
  %s7 = sld [smem:[#allocation0]]
  $region57: #{_lambda_.10} parent=0
    _
  %s9 = ssub.s32 1, %s7
  %s10 = scalar_select 0, %s9, %s7
  loop: start=0, step=1, limit=4
  $region2: #{_lambda_.10} parent=0 // loop_pre_header
    _
  $region3: #{_lambda_.10} parent=0 // loop_header
    %s12 = sphi 0, %s16
    %p13 = scmp.ge.s32.totalorder %s12, 4
    %s22 = sphi 0, %s24
    %s25 = sphi 0, %s22
    %s26 = sphi 0, %s25
    %s42 = sphi 0, %s26
    %s48 = sphi 0, %s50
    %s51 = sphi 0, %s48
    %s52 = sphi 0, %s51
    %s68 = sphi 0, %s52
    %s74 = sphi 0, %s76
    %s77 = sphi 0, %s74
    %s78 = sphi 0, %s77
    %s94 = sphi 0, %s78
    %s100 = sphi 0, %s102
    %s103 = sphi 0, %s100
    %s104 = sphi 0, %s103
    %s120 = sphi 0, %s104
    %s124 = sphi 0, %s124
    %s126 = sphi 0, %s124
    %s127 = sphi 0, %s126
    %s141 = sphi 0, %s127
    %s145 = sphi 0, %s145
    %s147 = sphi 0, %s145
    %s148 = sphi 0, %s147
    %s162 = sphi 0, %s148
    %s168 = sphi 0, %s170
    %s171 = sphi 0, %s168
    %s172 = sphi 0, %s171
    %s188 = sphi 0, %s172
  $region4: #{_lambda_.10} parent=0 // loop_header_branch
    %15 = sbr.rel (%p13) target = $region8
  $region5: #{_lambda_.10} parent=0 // loop_body
    %s17 = ssub.s32 %s12, 1
    %s18 = ssub.s32 %s12, 2
    %s19 = sadd.s32 %s12, 1
    %s20 = ssub.s32 %s12, %s19
    %p21 = scmp.eq.s32.totalorder %s20, 0
    %s23 = sadd.s32 %s22, 1
    %s24 = scalar_select %p21, %s22, %s23
    %p27 = pneg %p21
    %p28 = scmp.eq.s32.totalorder %s12, 1
    %p29 = por %p27, %p28
    %p30 = scmp.ne.s32.totalorder %s22, %s25
    %p31 = scmp.eq.s32.totalorder %s12, 0
    %p32 = por %p30, %p31
    %p33 = scmp.ne.s32.totalorder %s22, %s25
    %p34 = scmp.eq.s32.totalorder %s17, 1
    %p35 = por %p33, %p34
    %p36 = scmp.ne.s32.totalorder %s25, %s26
    %p37 = scmp.eq.s32.totalorder %s17, 0
    %p38 = por %p36, %p37
    %p39 = scmp.ne.s32.totalorder %s25, %s26
    %p40 = scmp.eq.s32.totalorder %s18, 1
    %p41 = por %p39, %p40
    %p43 = scmp.ne.s32.totalorder %s26, %s42
    %p44 = scmp.eq.s32.totalorder %s18, 0
    %p45 = por %p43, %p44
    %s46 = ssub.s32 %s12, %s19
    %p47 = scmp.eq.s32.totalorder %s46, 0
    %s49 = sadd.s32 %s48, 1
    %s50 = scalar_select %p47, %s48, %s49
    %p53 = pneg %p47
    %p54 = scmp.eq.s32.totalorder %s12, 1
    %p55 = por %p53, %p54
    %p56 = scmp.ne.s32.totalorder %s48, %s51
    %p57 = scmp.eq.s32.totalorder %s12, 0
    %p58 = por %p56, %p57
    %p59 = scmp.ne.s32.totalorder %s48, %s51
    %p60 = scmp.eq.s32.totalorder %s17, 1
    %p61 = por %p59, %p60
    %p62 = scmp.ne.s32.totalorder %s51, %s52
    %p63 = scmp.eq.s32.totalorder %s17, 0
    %p64 = por %p62, %p63
    %p65 = scmp.ne.s32.totalorder %s51, %s52
    %p66 = scmp.eq.s32.totalorder %s18, 1
    %p67 = por %p65, %p66
    %p69 = scmp.ne.s32.totalorder %s52, %s68
    %p70 = scmp.eq.s32.totalorder %s18, 0
    %p71 = por %p69, %p70
    %s72 = ssub.s32 %s12, %s19
    %p73 = scmp.eq.s32.totalorder %s72, 0
    %s75 = sadd.s32 %s74, 1
    %s76 = scalar_select %p73, %s74, %s75
    %p79 = pneg %p73
    %p80 = scmp.eq.s32.totalorder %s12, 1
    %p81 = por %p79, %p80
    %p82 = scmp.ne.s32.totalorder %s74, %s77
    %p83 = scmp.eq.s32.totalorder %s12, 0
    %p84 = por %p82, %p83
    %p85 = scmp.ne.s32.totalorder %s74, %s77
    %p86 = scmp.eq.s32.totalorder %s17, 1
    %p87 = por %p85, %p86
    %p88 = scmp.ne.s32.totalorder %s77, %s78
    %p89 = scmp.eq.s32.totalorder %s17, 0
    %p90 = por %p88, %p89
    %p91 = scmp.ne.s32.totalorder %s77, %s78
    %p92 = scmp.eq.s32.totalorder %s18, 1
    %p93 = por %p91, %p92
    %p95 = scmp.ne.s32.totalorder %s78, %s94
    %p96 = scmp.eq.s32.totalorder %s18, 0
    %p97 = por %p95, %p96
    %s98 = ssub.s32 %s12, %s19
    %p99 = scmp.eq.s32.totalorder %s98, 0
    %s101 = sadd.s32 %s100, 1
    %s102 = scalar_select %p99, %s100, %s101
    %p105 = pneg %p99
    %p106 = scmp.eq.s32.totalorder %s12, 1
    %p107 = por %p105, %p106
    %p108 = scmp.ne.s32.totalorder %s100, %s103
    %p109 = scmp.eq.s32.totalorder %s12, 0
    %p110 = por %p108, %p109
    %p111 = scmp.ne.s32.totalorder %s100, %s103
    %p112 = scmp.eq.s32.totalorder %s17, 1
    %p113 = por %p111, %p112
    %p114 = scmp.ne.s32.totalorder %s103, %s104
    %p115 = scmp.eq.s32.totalorder %s17, 0
    %p116 = por %p114, %p115
    %p117 = scmp.ne.s32.totalorder %s103, %s104
    %p118 = scmp.eq.s32.totalorder %s18, 1
    %p119 = por %p117, %p118
    %p121 = scmp.ne.s32.totalorder %s104, %s120
    %p122 = scmp.eq.s32.totalorder %s18, 0
    %p123 = por %p121, %p122
    %s125 = sadd.s32 %s124, 1
    %p128 = scmp.eq.s32.totalorder %s12, 1
    %p129 = scmp.ne.s32.totalorder %s124, %s126
    %p130 = scmp.eq.s32.totalorder %s12, 0
    %p131 = por %p129, %p130
    %p132 = scmp.ne.s32.totalorder %s124, %s126
    %p133 = scmp.eq.s32.totalorder %s17, 1
    %p134 = por %p132, %p133
    %p135 = scmp.ne.s32.totalorder %s126, %s127
    %p136 = scmp.eq.s32.totalorder %s17, 0
    %p137 = por %p135, %p136
    %p138 = scmp.ne.s32.totalorder %s126, %s127
    %p139 = scmp.eq.s32.totalorder %s18, 1
    %p140 = por %p138, %p139
    %p142 = scmp.ne.s32.totalorder %s127, %s141
    %p143 = scmp.eq.s32.totalorder %s18, 0
    %p144 = por %p142, %p143
    %s146 = sadd.s32 %s145, 1
    %p149 = scmp.eq.s32.totalorder %s12, 1
    %p150 = scmp.ne.s32.totalorder %s145, %s147
    %p151 = scmp.eq.s32.totalorder %s12, 0
    %p152 = por %p150, %p151
    %p153 = scmp.ne.s32.totalorder %s145, %s147
    %p154 = scmp.eq.s32.totalorder %s17, 1
    %p155 = por %p153, %p154
    %p156 = scmp.ne.s32.totalorder %s147, %s148
    %p157 = scmp.eq.s32.totalorder %s17, 0
    %p158 = por %p156, %p157
    %p159 = scmp.ne.s32.totalorder %s147, %s148
    %p160 = scmp.eq.s32.totalorder %s18, 1
    %p161 = por %p159, %p160
    %p163 = scmp.ne.s32.totalorder %s148, %s162
    %p164 = scmp.eq.s32.totalorder %s18, 0
    %p165 = por %p163, %p164
    %s166 = ssub.s32 %s12, %s19
    %p167 = scmp.eq.s32.totalorder %s166, 0
    %s169 = sadd.s32 %s168, 1
    %s170 = scalar_select %p167, %s168, %s169
    %p173 = pneg %p167
    %p174 = scmp.eq.s32.totalorder %s12, 1
    %p175 = por %p173, %p174
    %p176 = scmp.ne.s32.totalorder %s168, %s171
    %p177 = scmp.eq.s32.totalorder %s12, 0
    %p178 = por %p176, %p177
    %p179 = scmp.ne.s32.totalorder %s168, %s171
    %p180 = scmp.eq.s32.totalorder %s17, 1
    %p181 = por %p179, %p180
    %p182 = scmp.ne.s32.totalorder %s171, %s172
    %p183 = scmp.eq.s32.totalorder %s17, 0
    %p184 = por %p182, %p183
    %p185 = scmp.ne.s32.totalorder %s171, %s172
    %p186 = scmp.eq.s32.totalorder %s18, 1
    %p187 = por %p185, %p186
    %p189 = scmp.ne.s32.totalorder %s172, %s188
    %p190 = scmp.eq.s32.totalorder %s18, 0
    %p191 = por %p189, %p190
    %p192 = scmp.le.s32.totalorder 1, %s12
    %p193 = scmp.lt.s32.totalorder %s12, 3
    %p194 = pnand %p192, %p193
    %p195 = pneg %p194
    // Predicated region
    $region9: #{_lambda_.10} parent=5 // pred_check
      _
    $region10: #{_lambda_.10} parent=5 // pred_check_branch
      %197 = sbr.rel (%p194) target = $region12
    $region11: #{_lambda_.10} parent=5 // pred_region
      %s198 = ssub.s32 %s12, 1
      // Predicated region
      $region13: #{_lambda_.10} parent=11 // pred_check
        %p199 = pneg %p137
      $region14: #{_lambda_.10} parent=11 // pred_check_branch
        %201 = sbr.rel (%p199) target = $region16
      $region15: #{_lambda_.10} parent=11 // pred_region
        _
      $region16: #{_lambda_.10} parent=11 // pred_fallthru
        _
      // Predicated region
      $region17: #{_lambda_.10} parent=11 // pred_check
        %p202 = pneg %p158
      $region18: #{_lambda_.10} parent=11 // pred_check_branch
        %204 = sbr.rel (%p202) target = $region20
      $region19: #{_lambda_.10} parent=11 // pred_region
        _
      $region20: #{_lambda_.10} parent=11 // pred_fallthru
        _
    $region12: #{_lambda_.10} parent=5 // pred_fallthru
      _
    %p205 = scmp.lt.s32.totalorder %s12, 2
    // Predicated region
    $region21: #{_lambda_.10} parent=5 // pred_check
      %p206 = pneg %p205
    $region22: #{_lambda_.10} parent=5 // pred_check_branch
      %208 = sbr.rel (%p206) target = $region24
    $region23: #{_lambda_.10} parent=5 // pred_region
      // Predicated region
      $region25: #{_lambda_.10} parent=23 // pred_check
        %p209 = pneg %p32
      $region26: #{_lambda_.10} parent=23 // pred_check_branch
        %211 = sbr.rel (%p209) target = $region28
      $region27: #{_lambda_.10} parent=23 // pred_region
        %p212 = scmp.lt.s32.totalorder %s12, 1
        %s213 = scalar_select %p212, %s12, 1
        %s214 = smul.addr %s213, 2
        %s215 = smul.addr %s214, 8
        %s216 = scalar_lea.vmem %s0, %s215
      $region28: #{_lambda_.10} parent=23 // pred_fallthru
        _
      // Predicated region
      $region29: #{_lambda_.10} parent=23 // pred_check
        %p217 = pneg %p58
      $region30: #{_lambda_.10} parent=23 // pred_check_branch
        %219 = sbr.rel (%p217) target = $region32
      $region31: #{_lambda_.10} parent=23 // pred_region
        %p220 = scmp.lt.s32.totalorder %s12, 1
        %s221 = scalar_select %p220, %s12, 1
        %s222 = smul.addr %s221, 2
        %s223 = smul.addr %s222, 8
        %s224 = scalar_lea.vmem %s1, %s223
      $region32: #{_lambda_.10} parent=23 // pred_fallthru
        _
      // Predicated region
      $region33: #{_lambda_.10} parent=23 // pred_check
        %p225 = pneg %p84
      $region34: #{_lambda_.10} parent=23 // pred_check_branch
        %227 = sbr.rel (%p225) target = $region36
      $region35: #{_lambda_.10} parent=23 // pred_region
        %p228 = scmp.lt.s32.totalorder %s12, 1
        %s229 = scalar_select %p228, %s12, 1
        %s230 = smul.addr %s229, 2
        %s231 = smul.addr %s230, 8
        %s232 = scalar_lea.vmem %s2, %s231
      $region36: #{_lambda_.10} parent=23 // pred_fallthru
        _
      // Predicated region
      $region37: #{_lambda_.10} parent=23 // pred_check
        %p233 = pneg %p110
      $region38: #{_lambda_.10} parent=23 // pred_check_branch
        %235 = sbr.rel (%p233) target = $region40
      $region39: #{_lambda_.10} parent=23 // pred_region
        %p236 = scmp.lt.s32.totalorder %s12, 1
        %s237 = scalar_select %p236, %s12, 1
        %s238 = smul.addr %s237, 2
        %s239 = smul.addr %s238, 8
        %s240 = scalar_lea.vmem %s3, %s239
      $region40: #{_lambda_.10} parent=23 // pred_fallthru
        _
    $region24: #{_lambda_.10} parent=5 // pred_fallthru
      _
    %p241 = scmp.le.s32.totalorder 1, %s12
    %p242 = scmp.lt.s32.totalorder %s12, 3
    %p243 = pnand %p241, %p242
    %p244 = pneg %p243
    // Predicated region
    $region41: #{_lambda_.10} parent=5 // pred_check
      _
    $region42: #{_lambda_.10} parent=5 // pred_check_branch
      %246 = sbr.rel (%p243) target = $region44
    $region43: #{_lambda_.10} parent=5 // pred_region
      %s247 = ssub.s32 %s12, 1
      %p248 = scmp.lt.s32.totalorder %s17, 1
      %s249 = scalar_select %p248, %s17, 1
      %s250 = smul.addr %s249, 2
      %s251 = smul.addr %s250, 8
      %s252 = scalar_lea.vmem %s0, %s251
      %p253 = pneg %p38
      %p254 = pneg %p35
      %p255 = scmp.lt.s32.totalorder %s17, 1
      %s256 = scalar_select %p255, %s17, 1
      %s257 = smul.addr %s256, 2
      %s258 = smul.addr %s257, 8
      %s259 = scalar_lea.vmem %s1, %s258
      %p260 = pneg %p64
      %p261 = pneg %p61
      %p262 = scmp.lt.s32.totalorder %s17, 1
      %s263 = scalar_select %p262, %s17, 1
      %s264 = smul.addr %s263, 2
      %s265 = smul.addr %s264, 8
      %s266 = scalar_lea.vmem %s2, %s265
      %p267 = pneg %p90
      %p268 = pneg %p87
      %p269 = scmp.lt.s32.totalorder %s17, 1
      %s270 = scalar_select %p269, %s17, 1
      %s271 = smul.addr %s270, 2
      %s272 = smul.addr %s271, 8
      %s273 = scalar_lea.vmem %s3, %s272
      %p274 = pneg %p116
      %p275 = pneg %p113
      %p276 = pneg %p137
      %p277 = pneg %p134
      %p278 = pneg %p158
      %p279 = pneg %p155
      %p280 = pneg %p184
      %p281 = pneg %p181
      %p282 = scmp.lt.s32.totalorder %s17, 1
      %s283 = scalar_select %p282, %s17, 1
      %s284 = smul.addr %s283, 4
      %s285 = smul.addr %s284, 8
      %s286 = scalar_lea.vmem %s6, %s285
      %p287 = scmp.lt.s32.totalorder %s17, 1
      %s288 = scalar_select %p287, %s17, 1
      %s289 = smul.addr %s288, 2
      %s290 = smul.addr %s289, 8
      %s291 = scalar_lea.vmem %s0, %s290
      %p292 = scmp.lt.s32.totalorder %s17, 1
      %s293 = scalar_select %p292, %s17, 1
      %s294 = smul.addr %s293, 2
      %s295 = smul.addr %s294, 8
      %s296 = scalar_lea.vmem %s1, %s295
      %p297 = scmp.lt.s32.totalorder %s17, 1
      %s298 = scalar_select %p297, %s17, 1
      %s299 = smul.addr %s298, 2
      %s300 = smul.addr %s299, 8
      %s301 = scalar_lea.vmem %s2, %s300
      %p302 = scmp.lt.s32.totalorder %s17, 1
      %s303 = scalar_select %p302, %s17, 1
      %s304 = smul.addr %s303, 2
      %s305 = smul.addr %s304, 8
      %s306 = scalar_lea.vmem %s3, %s305
      %p307 = scmp.lt.s32.totalorder %s17, 1
      %s308 = scalar_select %p307, %s17, 1
      %s309 = smul.addr %s308, 4
      %s310 = smul.addr %s309, 8
      %s311 = scalar_lea.vmem %s6, %s310
      %v312 = vld [vmem:[%s291] sm:$0xff]
      %v313 = vld [vmem:[%s291 + $0x8] sm:$0xff]
      %v314 = vld [vmem:[%s4] sm:$0xff]
      %v315 = vld [vmem:[%s4 + $0x8] sm:$0xff]
      %v316 = vld [vmem:[%s4 + $0x10] sm:$0xff]
      %v317 = vld [vmem:[%s4 + $0x18] sm:$0xff]
      %v318 = vld [vmem:[%s296] sm:$0xff]
      %v319 = vld [vmem:[%s296 + $0x8] sm:$0xff]
      %s320 = scalar_lea.vmem %s4, 32
      %v321 = vld [vmem:[%s320] sm:$0xff]
      %v322 = vld [vmem:[%s320 + $0x8] sm:$0xff]
      %v323 = vld [vmem:[%s320 + $0x10] sm:$0xff]
      %v324 = vld [vmem:[%s320 + $0x18] sm:$0xff]
      %vm325 = vcmask 130048
      %v327 = vsel %vm325, %v321, 0
      %v330 = vsel %vm325, %v322, 0
      %v333 = vsel %vm325, %v323, 0
      %v336 = vsel %vm325, %v324, 0
      %338 = vmatprep.subr.mxu0 0.0
      %339 = vmatpush1.msra.mxu0 %v318
      %340 = vmatprep.subr.mxu0 0.0
      %341 = vmatpush1.msra.mxu0 %v319
      %342 = vmatprep.subr.mxu0 0.0
      %343 = vmatpush1.msra.mxu0 0.0
      %344 = vmatprep.subr.mxu0 0.0
      %345 = vmatpush1.msra.mxu0 0.0
      %346 = vmatprep.subr.mxu0 0.0
      %347 = vmatpush1.msra.mxu0 0.0
      %348 = vmatprep.subr.mxu0 0.0
      %349 = vmatpush1.msra.mxu0 0.0
      %350 = vmatprep.subr.mxu0 0.0
      %351 = vmatpush1.msra.mxu0 0.0
      %352 = vmatprep.subr.mxu0 0.0
      %353 = vmatpush1.msra.mxu0 0.0
      %354 = vmatprep.subr.mxu0 0.0
      %355 = vmatpush1.msra.mxu0 0.0
      %356 = vmatprep.subr.mxu0 0.0
      %357 = vmatpush1.msra.mxu0 0.0
      %358 = vmatprep.subr.mxu0 0.0
      %359 = vmatpush1.msra.mxu0 0.0
      %360 = vmatprep.subr.mxu0 0.0
      %361 = vmatpush1.msra.mxu0 0.0
      %362 = vmatprep.subr.mxu0 0.0
      %363 = vmatpush1.msra.mxu0 0.0
      %364 = vmatprep.subr.mxu0 0.0
      %365 = vmatpush1.msra.mxu0 0.0
      %366 = vmatprep.subr.mxu0 0.0
      %367 = vmatpush1.msra.mxu0 0.0
      %368 = vmatprep.subr.mxu0 0.0
      %369 = vmatpush1.msra.mxu0 0.0
      %370 = vmatprep.subr.mxu0 0.0
      %371 = vmatpush1.msra.mxu0 0.0
      %372 = vmatprep.subr.mxu0 0.0
      %373 = vmatpush1.msra.mxu0 0.0
      %374 = vmatprep.subr.mxu0 0.0
      %375 = vmatpush1.msra.mxu0 0.0
      %376 = vmatprep.subr.mxu0 0.0
      %377 = vmatpush1.msra.mxu0 0.0
      %378 = vmatprep.subr.mxu0 0.0
      %379 = vmatpush1.msra.mxu0 0.0
      %380 = vmatprep.subr.mxu0 0.0
      %381 = vmatpush1.msra.mxu0 0.0
      %382 = vmatprep.subr.mxu0 0.0
      %383 = vmatpush1.msra.mxu0 0.0
      %384 = vmatprep.subr.mxu0 0.0
      %385 = vmatpush1.msra.mxu0 0.0
      %386 = vmatprep.subr.mxu0 0.0
      %387 = vmatpush1.msra.mxu0 0.0
      %388 = vmatprep.subr.mxu0 0.0
      %389 = vmatpush1.msra.mxu0 0.0
      %390 = vmatprep.subr.mxu0 0.0
      %391 = vmatpush1.msra.mxu0 0.0
      %392 = vmatprep.subr.mxu0 0.0
      %393 = vmatpush1.msra.mxu0 0.0
      %394 = vmatprep.subr.mxu0 0.0
      %395 = vmatpush1.msra.mxu0 0.0
      %396 = vmatprep.subr.mxu0 0.0
      %397 = vmatpush1.msra.mxu0 0.0
      %398 = vmatprep.subr.mxu0 0.0
      %399 = vmatpush1.msra.mxu0 0.0
      %400 = vmatprep.subr.mxu0 0.0
      %401 = vmatpush1.msra.mxu0 0.0
      %402 = vmatprep.mubr.f32.mxu0 0.0
      %403 = vmatmul.mubr.f32.gmra.mrb[0].mxu0 %v327
      %v404 = vpop.f32.mrb[0].mxu0
      %v405 = vadd.f32 0.0, %v404
      %v406 = vpop.f32.mrb[0].mxu0
      %407 = vmatprep.mubr.f32.mxu0 0.0
      %408 = vmatmul.mubr.f32.gmra.mrb[0].mxu0 %v330
      %v409 = vpop.f32.mrb[0].mxu0
      %v410 = vadd.f32 0.0, %v409
      %v411 = vpop.f32.mrb[0].mxu0
      %412 = vmatprep.mubr.f32.mxu0 0.0
      %413 = vmatmul.mubr.f32.gmra.mrb[0].mxu0 %v333
      %v414 = vpop.f32.mrb[0].mxu0
      %v415 = vadd.f32 0.0, %v414
      %v416 = vpop.f32.mrb[0].mxu0
      %417 = vmatprep.mubr.f32.mxu0 0.0
      %418 = vmatmul.mubr.f32.gmra.mrb[0].mxu0 %v336
      %v419 = vpop.f32.mrb[0].mxu0
      %v420 = vadd.f32 0.0, %v419
      %v421 = vpop.f32.mrb[0].mxu0
      %422 = vdwg.mxu0
      %v424 = vsel %vm325, %v314, 0
      %v427 = vsel %vm325, %v315, 0
      %v430 = vsel %vm325, %v316, 0
      %v433 = vsel %vm325, %v317, 0
      %435 = vmatprep.subr.mxu0 0.0
      %436 = vmatpush1.msra.mxu0 %v312
      %437 = vmatprep.subr.mxu0 0.0
      %438 = vmatpush1.msra.mxu0 %v313
      %439 = vmatprep.subr.mxu0 0.0
      %440 = vmatpush1.msra.mxu0 0.0
      %441 = vmatprep.subr.mxu0 0.0
      %442 = vmatpush1.msra.mxu0 0.0
      %443 = vmatprep.subr.mxu0 0.0
      %444 = vmatpush1.msra.mxu0 0.0
      %445 = vmatprep.subr.mxu0 0.0
      %446 = vmatpush1.msra.mxu0 0.0
      %447 = vmatprep.subr.mxu0 0.0
      %448 = vmatpush1.msra.mxu0 0.0
      %449 = vmatprep.subr.mxu0 0.0
      %450 = vmatpush1.msra.mxu0 0.0
      %451 = vmatprep.subr.mxu0 0.0
      %452 = vmatpush1.msra.mxu0 0.0
      %453 = vmatprep.subr.mxu0 0.0
      %454 = vmatpush1.msra.mxu0 0.0
      %455 = vmatprep.subr.mxu0 0.0
      %456 = vmatpush1.msra.mxu0 0.0
      %457 = vmatprep.subr.mxu0 0.0
      %458 = vmatpush1.msra.mxu0 0.0
      %459 = vmatprep.subr.mxu0 0.0
      %460 = vmatpush1.msra.mxu0 0.0
      %461 = vmatprep.subr.mxu0 0.0
      %462 = vmatpush1.msra.mxu0 0.0
      %463 = vmatprep.subr.mxu0 0.0
      %464 = vmatpush1.msra.mxu0 0.0
      %465 = vmatprep.subr.mxu0 0.0
      %466 = vmatpush1.msra.mxu0 0.0
      %467 = vmatprep.subr.mxu0 0.0
      %468 = vmatpush1.msra.mxu0 0.0
      %469 = vmatprep.subr.mxu0 0.0
      %470 = vmatpush1.msra.mxu0 0.0
      %471 = vmatprep.subr.mxu0 0.0
      %472 = vmatpush1.msra.mxu0 0.0
      %473 = vmatprep.subr.mxu0 0.0
      %474 = vmatpush1.msra.mxu0 0.0
      %475 = vmatprep.subr.mxu0 0.0
      %476 = vmatpush1.msra.mxu0 0.0
      %477 = vmatprep.subr.mxu0 0.0
      %478 = vmatpush1.msra.mxu0 0.0
      %479 = vmatprep.subr.mxu0 0.0
      %480 = vmatpush1.msra.mxu0 0.0
      %481 = vmatprep.subr.mxu0 0.0
      %482 = vmatpush1.msra.mxu0 0.0
      %483 = vmatprep.subr.mxu0 0.0
      %484 = vmatpush1.msra.mxu0 0.0
      %485 = vmatprep.subr.mxu0 0.0
      %486 = vmatpush1.msra.mxu0 0.0
      %487 = vmatprep.subr.mxu0 0.0
      %488 = vmatpush1.msra.mxu0 0.0
      %489 = vmatprep.subr.mxu0 0.0
      %490 = vmatpush1.msra.mxu0 0.0
      %491 = vmatprep.subr.mxu0 0.0
      %492 = vmatpush1.msra.mxu0 0.0
      %493 = vmatprep.subr.mxu0 0.0
      %494 = vmatpush1.msra.mxu0 0.0
      %495 = vmatprep.subr.mxu0 0.0
      %496 = vmatpush1.msra.mxu0 0.0
      %497 = vmatprep.subr.mxu0 0.0
      %498 = vmatpush1.msra.mxu0 0.0
      %499 = vmatprep.mubr.f32.mxu0 0.0
      %500 = vmatmul.mubr.f32.gmra.mrb[0].mxu0 %v424
      %v501 = vpop.f32.mrb[0].mxu0
      %v502 = vadd.f32 %v405, %v501
      %v503 = vpop.f32.mrb[0].mxu0
      %504 = vmatprep.mubr.f32.mxu0 0.0
      %505 = vmatmul.mubr.f32.gmra.mrb[0].mxu0 %v427
      %v506 = vpop.f32.mrb[0].mxu0
      %v507 = vadd.f32 %v410, %v506
      %v508 = vpop.f32.mrb[0].mxu0
      %509 = vmatprep.mubr.f32.mxu0 0.0
      %510 = vmatmul.mubr.f32.gmra.mrb[0].mxu0 %v430
      %v511 = vpop.f32.mrb[0].mxu0
      %v512 = vadd.f32 %v415, %v511
      %v513 = vpop.f32.mrb[0].mxu0
      %514 = vmatprep.mubr.f32.mxu0 0.0
      %515 = vmatmul.mubr.f32.gmra.mrb[0].mxu0 %v433
      %v516 = vpop.f32.mrb[0].mxu0
      %v517 = vadd.f32 %v420, %v516
      %v518 = vpop.f32.mrb[0].mxu0
      %519 = vdwg.mxu0
      %s520 = scalar_lea.vmem %s4, 64
      %v521 = vld [vmem:[%s520] sm:$0xff]
      %v522 = vld [vmem:[%s520 + $0x8] sm:$0xff]
      %v523 = vld [vmem:[%s520 + $0x10] sm:$0xff]
      %v524 = vld [vmem:[%s520 + $0x18] sm:$0xff]
      %527 = vrot.lane.b32.xlu0 %v312, 127
      %v528 = vpop.permute.xlu0 %527
      %529 = vrot.lane.b32.xlu0 %v313, 127
      %v530 = vpop.permute.xlu0 %529
      %v534 = vsel %vm325, %v521, 0
      %v537 = vsel %vm325, %v522, 0
      %v540 = vsel %vm325, %v523, 0
      %v543 = vsel %vm325, %v524, 0
      %545 = vmatprep.subr.mxu0 0.0
      %546 = vmatpush1.msra.mxu0 %v528
      %547 = vmatprep.subr.mxu0 0.0
      %548 = vmatpush1.msra.mxu0 %v530
      %549 = vmatprep.subr.mxu0 0.0
      %550 = vmatpush1.msra.mxu0 0.0
      %551 = vmatprep.subr.mxu0 0.0
      %552 = vmatpush1.msra.mxu0 0.0
      %553 = vmatprep.subr.mxu0 0.0
      %554 = vmatpush1.msra.mxu0 0.0
      %555 = vmatprep.subr.mxu0 0.0
      %556 = vmatpush1.msra.mxu0 0.0
      %557 = vmatprep.subr.mxu0 0.0
      %558 = vmatpush1.msra.mxu0 0.0
      %559 = vmatprep.subr.mxu0 0.0
      %560 = vmatpush1.msra.mxu0 0.0
      %561 = vmatprep.subr.mxu0 0.0
      %562 = vmatpush1.msra.mxu0 0.0
      %563 = vmatprep.subr.mxu0 0.0
      %564 = vmatpush1.msra.mxu0 0.0
      %565 = vmatprep.subr.mxu0 0.0
      %566 = vmatpush1.msra.mxu0 0.0
      %567 = vmatprep.subr.mxu0 0.0
      %568 = vmatpush1.msra.mxu0 0.0
      %569 = vmatprep.subr.mxu0 0.0
      %570 = vmatpush1.msra.mxu0 0.0
      %571 = vmatprep.subr.mxu0 0.0
      %572 = vmatpush1.msra.mxu0 0.0
      %573 = vmatprep.subr.mxu0 0.0
      %574 = vmatpush1.msra.mxu0 0.0
      %575 = vmatprep.subr.mxu0 0.0
      %576 = vmatpush1.msra.mxu0 0.0
      %577 = vmatprep.subr.mxu0 0.0
      %578 = vmatpush1.msra.mxu0 0.0
      %579 = vmatprep.subr.mxu0 0.0
      %580 = vmatpush1.msra.mxu0 0.0
      %581 = vmatprep.subr.mxu0 0.0
      %582 = vmatpush1.msra.mxu0 0.0
      %583 = vmatprep.subr.mxu0 0.0
      %584 = vmatpush1.msra.mxu0 0.0
      %585 = vmatprep.subr.mxu0 0.0
      %586 = vmatpush1.msra.mxu0 0.0
      %587 = vmatprep.subr.mxu0 0.0
      %588 = vmatpush1.msra.mxu0 0.0
      %589 = vmatprep.subr.mxu0 0.0
      %590 = vmatpush1.msra.mxu0 0.0
      %591 = vmatprep.subr.mxu0 0.0
      %592 = vmatpush1.msra.mxu0 0.0
      %593 = vmatprep.subr.mxu0 0.0
      %594 = vmatpush1.msra.mxu0 0.0
      %595 = vmatprep.subr.mxu0 0.0
      %596 = vmatpush1.msra.mxu0 0.0
      %597 = vmatprep.subr.mxu0 0.0
      %598 = vmatpush1.msra.mxu0 0.0
      %599 = vmatprep.subr.mxu0 0.0
      %600 = vmatpush1.msra.mxu0 0.0
      %601 = vmatprep.subr.mxu0 0.0
      %602 = vmatpush1.msra.mxu0 0.0
      %603 = vmatprep.subr.mxu0 0.0
      %604 = vmatpush1.msra.mxu0 0.0
      %605 = vmatprep.subr.mxu0 0.0
      %606 = vmatpush1.msra.mxu0 0.0
      %607 = vmatprep.subr.mxu0 0.0
      %608 = vmatpush1.msra.mxu0 0.0
      %609 = vmatprep.mubr.f32.mxu0 0.0
      %610 = vmatmul.mubr.f32.gmra.mrb[0].mxu0 %v534
      %v611 = vpop.f32.mrb[0].mxu0
      %v612 = vadd.f32 0.0, %v611
      %v613 = vpop.f32.mrb[0].mxu0
      %614 = vmatprep.mubr.f32.mxu0 0.0
      %615 = vmatmul.mubr.f32.gmra.mrb[0].mxu0 %v537
      %v616 = vpop.f32.mrb[0].mxu0
      %v617 = vadd.f32 0.0, %v616
      %v618 = vpop.f32.mrb[0].mxu0
      %619 = vmatprep.mubr.f32.mxu0 0.0
      %620 = vmatmul.mubr.f32.gmra.mrb[0].mxu0 %v540
      %v621 = vpop.f32.mrb[0].mxu0
      %v622 = vadd.f32 0.0, %v621
      %v623 = vpop.f32.mrb[0].mxu0
      %624 = vmatprep.mubr.f32.mxu0 0.0
      %625 = vmatmul.mubr.f32.gmra.mrb[0].mxu0 %v543
      %v626 = vpop.f32.mrb[0].mxu0
      %v627 = vadd.f32 0.0, %v626
      %v628 = vpop.f32.mrb[0].mxu0
      %629 = vdwg.mxu0
      %v630 = vadd.f32 %v502, %v612
      %v631 = vadd.f32 %v507, %v617
      %v632 = vadd.f32 %v512, %v622
      %v633 = vadd.f32 %v517, %v627
      %v634 = vld [vmem:[%s301] sm:$0xff]
      %v635 = vld [vmem:[%s301 + $0x8] sm:$0xff]
      %s636 = scalar_lea.vmem %s4, 96
      %v637 = vld [vmem:[%s636] sm:$0xff]
      %v638 = vld [vmem:[%s636 + $0x8] sm:$0xff]
      %v639 = vld [vmem:[%s636 + $0x10] sm:$0xff]
      %v640 = vld [vmem:[%s636 + $0x18] sm:$0xff]
      %v642 = vsel %vm325, %v637, 0
      %v645 = vsel %vm325, %v638, 0
      %v648 = vsel %vm325, %v639, 0
      %v651 = vsel %vm325, %v640, 0
      %653 = vmatprep.subr.mxu0 0.0
      %654 = vmatpush1.msra.mxu0 %v634
      %655 = vmatprep.subr.mxu0 0.0
      %656 = vmatpush1.msra.mxu0 %v635
      %657 = vmatprep.subr.mxu0 0.0
      %658 = vmatpush1.msra.mxu0 0.0
      %659 = vmatprep.subr.mxu0 0.0
      %660 = vmatpush1.msra.mxu0 0.0
      %661 = vmatprep.subr.mxu0 0.0
      %662 = vmatpush1.msra.mxu0 0.0
      %663 = vmatprep.subr.mxu0 0.0
      %664 = vmatpush1.msra.mxu0 0.0
      %665 = vmatprep.subr.mxu0 0.0
      %666 = vmatpush1.msra.mxu0 0.0
      %667 = vmatprep.subr.mxu0 0.0
      %668 = vmatpush1.msra.mxu0 0.0
      %669 = vmatprep.subr.mxu0 0.0
      %670 = vmatpush1.msra.mxu0 0.0
      %671 = vmatprep.subr.mxu0 0.0
      %672 = vmatpush1.msra.mxu0 0.0
      %673 = vmatprep.subr.mxu0 0.0
      %674 = vmatpush1.msra.mxu0 0.0
      %675 = vmatprep.subr.mxu0 0.0
      %676 = vmatpush1.msra.mxu0 0.0
      %677 = vmatprep.subr.mxu0 0.0
      %678 = vmatpush1.msra.mxu0 0.0
      %679 = vmatprep.subr.mxu0 0.0
      %680 = vmatpush1.msra.mxu0 0.0
      %681 = vmatprep.subr.mxu0 0.0
      %682 = vmatpush1.msra.mxu0 0.0
      %683 = vmatprep.subr.mxu0 0.0
      %684 = vmatpush1.msra.mxu0 0.0
      %685 = vmatprep.subr.mxu0 0.0
      %686 = vmatpush1.msra.mxu0 0.0
      %687 = vmatprep.subr.mxu0 0.0
      %688 = vmatpush1.msra.mxu0 0.0
      %689 = vmatprep.subr.mxu0 0.0
      %690 = vmatpush1.msra.mxu0 0.0
      %691 = vmatprep.subr.mxu0 0.0
      %692 = vmatpush1.msra.mxu0 0.0
      %693 = vmatprep.subr.mxu0 0.0
      %694 = vmatpush1.msra.mxu0 0.0
      %695 = vmatprep.subr.mxu0 0.0
      %696 = vmatpush1.msra.mxu0 0.0
      %697 = vmatprep.subr.mxu0 0.0
      %698 = vmatpush1.msra.mxu0 0.0
      %699 = vmatprep.subr.mxu0 0.0
      %700 = vmatpush1.msra.mxu0 0.0
      %701 = vmatprep.subr.mxu0 0.0
      %702 = vmatpush1.msra.mxu0 0.0
      %703 = vmatprep.subr.mxu0 0.0
      %704 = vmatpush1.msra.mxu0 0.0
      %705 = vmatprep.subr.mxu0 0.0
      %706 = vmatpush1.msra.mxu0 0.0
      %707 = vmatprep.subr.mxu0 0.0
      %708 = vmatpush1.msra.mxu0 0.0
      %709 = vmatprep.subr.mxu0 0.0
      %710 = vmatpush1.msra.mxu0 0.0
      %711 = vmatprep.subr.mxu0 0.0
      %712 = vmatpush1.msra.mxu0 0.0
      %713 = vmatprep.subr.mxu0 0.0
      %714 = vmatpush1.msra.mxu0 0.0
      %715 = vmatprep.subr.mxu0 0.0
      %716 = vmatpush1.msra.mxu0 0.0
      %717 = vmatprep.mubr.f32.mxu0 0.0
      %718 = vmatmul.mubr.f32.gmra.mrb[0].mxu0 %v642
      %v719 = vpop.f32.mrb[0].mxu0
      %v720 = vadd.f32 0.0, %v719
      %v721 = vpop.f32.mrb[0].mxu0
      %722 = vmatprep.mubr.f32.mxu0 0.0
      %723 = vmatmul.mubr.f32.gmra.mrb[0].mxu0 %v645
      %v724 = vpop.f32.mrb[0].mxu0
      %v725 = vadd.f32 0.0, %v724
      %v726 = vpop.f32.mrb[0].mxu0
      %727 = vmatprep.mubr.f32.mxu0 0.0
      %728 = vmatmul.mubr.f32.gmra.mrb[0].mxu0 %v648
      %v729 = vpop.f32.mrb[0].mxu0
      %v730 = vadd.f32 0.0, %v729
      %v731 = vpop.f32.mrb[0].mxu0
      %732 = vmatprep.mubr.f32.mxu0 0.0
      %733 = vmatmul.mubr.f32.gmra.mrb[0].mxu0 %v651
      %v734 = vpop.f32.mrb[0].mxu0
      %v735 = vadd.f32 0.0, %v734
      %v736 = vpop.f32.mrb[0].mxu0
      %737 = vdwg.mxu0
      %v738 = vadd.f32 %v630, %v720
      %v739 = vadd.f32 %v631, %v725
      %v740 = vadd.f32 %v632, %v730
      %v741 = vadd.f32 %v633, %v735
      %v742 = vld [vmem:[%s306] sm:$0xff]
      %v743 = vld [vmem:[%s306 + $0x8] sm:$0xff]
      %s744 = scalar_lea.vmem %s4, 128
      %v745 = vld [vmem:[%s744] sm:$0xff]
      %v746 = vld [vmem:[%s744 + $0x8] sm:$0xff]
      %v747 = vld [vmem:[%s744 + $0x10] sm:$0xff]
      %v748 = vld [vmem:[%s744 + $0x18] sm:$0xff]
      %v750 = vsel %vm325, %v745, 0
      %v753 = vsel %vm325, %v746, 0
      %v756 = vsel %vm325, %v747, 0
      %v759 = vsel %vm325, %v748, 0
      %761 = vmatprep.subr.mxu0 0.0
      %762 = vmatpush1.msra.mxu0 %v742
      %763 = vmatprep.subr.mxu0 0.0
      %764 = vmatpush1.msra.mxu0 %v743
      %765 = vmatprep.subr.mxu0 0.0
      %766 = vmatpush1.msra.mxu0 0.0
      %767 = vmatprep.subr.mxu0 0.0
      %768 = vmatpush1.msra.mxu0 0.0
      %769 = vmatprep.subr.mxu0 0.0
      %770 = vmatpush1.msra.mxu0 0.0
      %771 = vmatprep.subr.mxu0 0.0
      %772 = vmatpush1.msra.mxu0 0.0
      %773 = vmatprep.subr.mxu0 0.0
      %774 = vmatpush1.msra.mxu0 0.0
      %775 = vmatprep.subr.mxu0 0.0
      %776 = vmatpush1.msra.mxu0 0.0
      %777 = vmatprep.subr.mxu0 0.0
      %778 = vmatpush1.msra.mxu0 0.0
      %779 = vmatprep.subr.mxu0 0.0
      %780 = vmatpush1.msra.mxu0 0.0
      %781 = vmatprep.subr.mxu0 0.0
      %782 = vmatpush1.msra.mxu0 0.0
      %783 = vmatprep.subr.mxu0 0.0
      %784 = vmatpush1.msra.mxu0 0.0
      %785 = vmatprep.subr.mxu0 0.0
      %786 = vmatpush1.msra.mxu0 0.0
      %787 = vmatprep.subr.mxu0 0.0
      %788 = vmatpush1.msra.mxu0 0.0
      %789 = vmatprep.subr.mxu0 0.0
      %790 = vmatpush1.msra.mxu0 0.0
      %791 = vmatprep.subr.mxu0 0.0
      %792 = vmatpush1.msra.mxu0 0.0
      %793 = vmatprep.subr.mxu0 0.0
      %794 = vmatpush1.msra.mxu0 0.0
      %795 = vmatprep.subr.mxu0 0.0
      %796 = vmatpush1.msra.mxu0 0.0
      %797 = vmatprep.subr.mxu0 0.0
      %798 = vmatpush1.msra.mxu0 0.0
      %799 = vmatprep.subr.mxu0 0.0
      %800 = vmatpush1.msra.mxu0 0.0
      %801 = vmatprep.subr.mxu0 0.0
      %802 = vmatpush1.msra.mxu0 0.0
      %803 = vmatprep.subr.mxu0 0.0
      %804 = vmatpush1.msra.mxu0 0.0
      %805 = vmatprep.subr.mxu0 0.0
      %806 = vmatpush1.msra.mxu0 0.0
      %807 = vmatprep.subr.mxu0 0.0
      %808 = vmatpush1.msra.mxu0 0.0
      %809 = vmatprep.subr.mxu0 0.0
      %810 = vmatpush1.msra.mxu0 0.0
      %811 = vmatprep.subr.mxu0 0.0
      %812 = vmatpush1.msra.mxu0 0.0
      %813 = vmatprep.subr.mxu0 0.0
      %814 = vmatpush1.msra.mxu0 0.0
      %815 = vmatprep.subr.mxu0 0.0
      %816 = vmatpush1.msra.mxu0 0.0
      %817 = vmatprep.subr.mxu0 0.0
      %818 = vmatpush1.msra.mxu0 0.0
      %819 = vmatprep.subr.mxu0 0.0
      %820 = vmatpush1.msra.mxu0 0.0
      %821 = vmatprep.subr.mxu0 0.0
      %822 = vmatpush1.msra.mxu0 0.0
      %823 = vmatprep.subr.mxu0 0.0
      %824 = vmatpush1.msra.mxu0 0.0
      %825 = vmatprep.mubr.f32.mxu0 0.0
      %826 = vmatmul.mubr.f32.gmra.mrb[0].mxu0 %v750
      %v827 = vpop.f32.mrb[0].mxu0
      %v828 = vadd.f32 0.0, %v827
      %v829 = vpop.f32.mrb[0].mxu0
      %830 = vmatprep.mubr.f32.mxu0 0.0
      %831 = vmatmul.mubr.f32.gmra.mrb[0].mxu0 %v753
      %v832 = vpop.f32.mrb[0].mxu0
      %v833 = vadd.f32 0.0, %v832
      %v834 = vpop.f32.mrb[0].mxu0
      %835 = vmatprep.mubr.f32.mxu0 0.0
      %836 = vmatmul.mubr.f32.gmra.mrb[0].mxu0 %v756
      %v837 = vpop.f32.mrb[0].mxu0
      %v838 = vadd.f32 0.0, %v837
      %v839 = vpop.f32.mrb[0].mxu0
      %840 = vmatprep.mubr.f32.mxu0 0.0
      %841 = vmatmul.mubr.f32.gmra.mrb[0].mxu0 %v759
      %v842 = vpop.f32.mrb[0].mxu0
      %v843 = vadd.f32 0.0, %v842
      %v844 = vpop.f32.mrb[0].mxu0
      %845 = vdwg.mxu0
      %v846 = vadd.f32 %v738, %v828
      %v847 = vadd.f32 %v739, %v833
      %v848 = vadd.f32 %v740, %v838
      %v849 = vadd.f32 %v741, %v843
      %s850 = scalar_lea.vmem %s4, 160
      %v851 = vld [vmem:[%s850] sm:$0xff]
      %v852 = vld [vmem:[%s850 + $0x8] sm:$0xff]
      %v853 = vld [vmem:[%s850 + $0x10] sm:$0xff]
      %v854 = vld [vmem:[%s850 + $0x18] sm:$0xff]
      %857 = vrot.lane.b32.xlu0 %v634, 127
      %v858 = vpop.permute.xlu0 %857
      %859 = vrot.lane.b32.xlu0 %v635, 127
      %v860 = vpop.permute.xlu0 %859
      %v864 = vsel %vm325, %v851, 0
      %v867 = vsel %vm325, %v852, 0
      %v870 = vsel %vm325, %v853, 0
      %v873 = vsel %vm325, %v854, 0
      %875 = vmatprep.subr.mxu0 0.0
      %876 = vmatpush1.msra.mxu0 %v858
      %877 = vmatprep.subr.mxu0 0.0
      %878 = vmatpush1.msra.mxu0 %v860
      %879 = vmatprep.subr.mxu0 0.0
      %880 = vmatpush1.msra.mxu0 0.0
      %881 = vmatprep.subr.mxu0 0.0
      %882 = vmatpush1.msra.mxu0 0.0
      %883 = vmatprep.subr.mxu0 0.0
      %884 = vmatpush1.msra.mxu0 0.0
      %885 = vmatprep.subr.mxu0 0.0
      %886 = vmatpush1.msra.mxu0 0.0
      %887 = vmatprep.subr.mxu0 0.0
      %888 = vmatpush1.msra.mxu0 0.0
      %889 = vmatprep.subr.mxu0 0.0
      %890 = vmatpush1.msra.mxu0 0.0
      %891 = vmatprep.subr.mxu0 0.0
      %892 = vmatpush1.msra.mxu0 0.0
      %893 = vmatprep.subr.mxu0 0.0
      %894 = vmatpush1.msra.mxu0 0.0
      %895 = vmatprep.subr.mxu0 0.0
      %896 = vmatpush1.msra.mxu0 0.0
      %897 = vmatprep.subr.mxu0 0.0
      %898 = vmatpush1.msra.mxu0 0.0
      %899 = vmatprep.subr.mxu0 0.0
      %900 = vmatpush1.msra.mxu0 0.0
      %901 = vmatprep.subr.mxu0 0.0
      %902 = vmatpush1.msra.mxu0 0.0
      %903 = vmatprep.subr.mxu0 0.0
      %904 = vmatpush1.msra.mxu0 0.0
      %905 = vmatprep.subr.mxu0 0.0
      %906 = vmatpush1.msra.mxu0 0.0
      %907 = vmatprep.subr.mxu0 0.0
      %908 = vmatpush1.msra.mxu0 0.0
      %909 = vmatprep.subr.mxu0 0.0
      %910 = vmatpush1.msra.mxu0 0.0
      %911 = vmatprep.subr.mxu0 0.0
      %912 = vmatpush1.msra.mxu0 0.0
      %913 = vmatprep.subr.mxu0 0.0
      %914 = vmatpush1.msra.mxu0 0.0
      %915 = vmatprep.subr.mxu0 0.0
      %916 = vmatpush1.msra.mxu0 0.0
      %917 = vmatprep.subr.mxu0 0.0
      %918 = vmatpush1.msra.mxu0 0.0
      %919 = vmatprep.subr.mxu0 0.0
      %920 = vmatpush1.msra.mxu0 0.0
      %921 = vmatprep.subr.mxu0 0.0
      %922 = vmatpush1.msra.mxu0 0.0
      %923 = vmatprep.subr.mxu0 0.0
      %924 = vmatpush1.msra.mxu0 0.0
      %925 = vmatprep.subr.mxu0 0.0
      %926 = vmatpush1.msra.mxu0 0.0
      %927 = vmatprep.subr.mxu0 0.0
      %928 = vmatpush1.msra.mxu0 0.0
      %929 = vmatprep.subr.mxu0 0.0
      %930 = vmatpush1.msra.mxu0 0.0
      %931 = vmatprep.subr.mxu0 0.0
      %932 = vmatpush1.msra.mxu0 0.0
      %933 = vmatprep.subr.mxu0 0.0
      %934 = vmatpush1.msra.mxu0 0.0
      %935 = vmatprep.subr.mxu0 0.0
      %936 = vmatpush1.msra.mxu0 0.0
      %937 = vmatprep.subr.mxu0 0.0
      %938 = vmatpush1.msra.mxu0 0.0
      %939 = vmatprep.mubr.f32.mxu0 0.0
      %940 = vmatmul.mubr.f32.gmra.mrb[0].mxu0 %v864
      %v941 = vpop.f32.mrb[0].mxu0
      %v942 = vadd.f32 0.0, %v941
      %v943 = vpop.f32.mrb[0].mxu0
      %944 = vmatprep.mubr.f32.mxu0 0.0
      %945 = vmatmul.mubr.f32.gmra.mrb[0].mxu0 %v867
      %v946 = vpop.f32.mrb[0].mxu0
      %v947 = vadd.f32 0.0, %v946
      %v948 = vpop.f32.mrb[0].mxu0
      %949 = vmatprep.mubr.f32.mxu0 0.0
      %950 = vmatmul.mubr.f32.gmra.mrb[0].mxu0 %v870
      %v951 = vpop.f32.mrb[0].mxu0
      %v952 = vadd.f32 0.0, %v951
      %v953 = vpop.f32.mrb[0].mxu0
      %954 = vmatprep.mubr.f32.mxu0 0.0
      %955 = vmatmul.mubr.f32.gmra.mrb[0].mxu0 %v873
      %v956 = vpop.f32.mrb[0].mxu0
      %v957 = vadd.f32 0.0, %v956
      %v958 = vpop.f32.mrb[0].mxu0
      %959 = vdwg.mxu0
      %v960 = vadd.f32 %v846, %v942
      %v961 = vadd.f32 %v847, %v947
      %v962 = vadd.f32 %v848, %v952
      %v963 = vadd.f32 %v849, %v957
      %s964 = scalar_lea.vmem %s4, 192
      %v965 = vld [vmem:[%s964] sm:$0xff]
      %v966 = vld [vmem:[%s964 + $0x8] sm:$0xff]
      %v967 = vld [vmem:[%s964 + $0x10] sm:$0xff]
      %v968 = vld [vmem:[%s964 + $0x18] sm:$0xff]
      %969 = vrot.lane.b32.xlu0 %v312, 125
      %v970 = vpop.permute.xlu0 %969
      %971 = vrot.lane.b32.xlu0 %v313, 125
      %v972 = vpop.permute.xlu0 %971
      %v976 = vsel %vm325, %v965, 0
      %v979 = vsel %vm325, %v966, 0
      %v982 = vsel %vm325, %v967, 0
      %v985 = vsel %vm325, %v968, 0
      %987 = vmatprep.subr.mxu0 0.0
      %988 = vmatpush1.msra.mxu0 %v970
      %989 = vmatprep.subr.mxu0 0.0
      %990 = vmatpush1.msra.mxu0 %v972
      %991 = vmatprep.subr.mxu0 0.0
      %992 = vmatpush1.msra.mxu0 0.0
      %993 = vmatprep.subr.mxu0 0.0
      %994 = vmatpush1.msra.mxu0 0.0
      %995 = vmatprep.subr.mxu0 0.0
      %996 = vmatpush1.msra.mxu0 0.0
      %997 = vmatprep.subr.mxu0 0.0
      %998 = vmatpush1.msra.mxu0 0.0
      %999 = vmatprep.subr.mxu0 0.0
      %1000 = vmatpush1.msra.mxu0 0.0
      %1001 = vmatprep.subr.mxu0 0.0
      %1002 = vmatpush1.msra.mxu0 0.0
      %1003 = vmatprep.subr.mxu0 0.0
      %1004 = vmatpush1.msra.mxu0 0.0
      %1005 = vmatprep.subr.mxu0 0.0
      %1006 = vmatpush1.msra.mxu0 0.0
      %1007 = vmatprep.subr.mxu0 0.0
      %1008 = vmatpush1.msra.mxu0 0.0
      %1009 = vmatprep.subr.mxu0 0.0
      %1010 = vmatpush1.msra.mxu0 0.0
      %1011 = vmatprep.subr.mxu0 0.0
      %1012 = vmatpush1.msra.mxu0 0.0
      %1013 = vmatprep.subr.mxu0 0.0
      %1014 = vmatpush1.msra.mxu0 0.0
      %1015 = vmatprep.subr.mxu0 0.0
      %1016 = vmatpush1.msra.mxu0 0.0
      %1017 = vmatprep.subr.mxu0 0.0
      %1018 = vmatpush1.msra.mxu0 0.0
      %1019 = vmatprep.subr.mxu0 0.0
      %1020 = vmatpush1.msra.mxu0 0.0
      %1021 = vmatprep.subr.mxu0 0.0
      %1022 = vmatpush1.msra.mxu0 0.0
      %1023 = vmatprep.subr.mxu0 0.0
      %1024 = vmatpush1.msra.mxu0 0.0
      %1025 = vmatprep.subr.mxu0 0.0
      %1026 = vmatpush1.msra.mxu0 0.0
      %1027 = vmatprep.subr.mxu0 0.0
      %1028 = vmatpush1.msra.mxu0 0.0
      %1029 = vmatprep.subr.mxu0 0.0
      %1030 = vmatpush1.msra.mxu0 0.0
      %1031 = vmatprep.subr.mxu0 0.0
      %1032 = vmatpush1.msra.mxu0 0.0
      %1033 = vmatprep.subr.mxu0 0.0
      %1034 = vmatpush1.msra.mxu0 0.0
      %1035 = vmatprep.subr.mxu0 0.0
      %1036 = vmatpush1.msra.mxu0 0.0
      %1037 = vmatprep.subr.mxu0 0.0
      %1038 = vmatpush1.msra.mxu0 0.0
      %1039 = vmatprep.subr.mxu0 0.0
      %1040 = vmatpush1.msra.mxu0 0.0
      %1041 = vmatprep.subr.mxu0 0.0
      %1042 = vmatpush1.msra.mxu0 0.0
      %1043 = vmatprep.subr.mxu0 0.0
      %1044 = vmatpush1.msra.mxu0 0.0
      %1045 = vmatprep.subr.mxu0 0.0
      %1046 = vmatpush1.msra.mxu0 0.0
      %1047 = vmatprep.subr.mxu0 0.0
      %1048 = vmatpush1.msra.mxu0 0.0
      %1049 = vmatprep.subr.mxu0 0.0
      %1050 = vmatpush1.msra.mxu0 0.0
      %1051 = vmatprep.mubr.f32.mxu0 0.0
      %1052 = vmatmul.mubr.f32.gmra.mrb[0].mxu0 %v976
      %v1053 = vpop.f32.mrb[0].mxu0
      %v1054 = vadd.f32 0.0, %v1053
      %v1055 = vpop.f32.mrb[0].mxu0
      %1056 = vmatprep.mubr.f32.mxu0 0.0
      %1057 = vmatmul.mubr.f32.gmra.mrb[0].mxu0 %v979
      %v1058 = vpop.f32.mrb[0].mxu0
      %v1059 = vadd.f32 0.0, %v1058
      %v1060 = vpop.f32.mrb[0].mxu0
      %1061 = vmatprep.mubr.f32.mxu0 0.0
      %1062 = vmatmul.mubr.f32.gmra.mrb[0].mxu0 %v982
      %v1063 = vpop.f32.mrb[0].mxu0
      %v1064 = vadd.f32 0.0, %v1063
      %v1065 = vpop.f32.mrb[0].mxu0
      %1066 = vmatprep.mubr.f32.mxu0 0.0
      %1067 = vmatmul.mubr.f32.gmra.mrb[0].mxu0 %v985
      %v1068 = vpop.f32.mrb[0].mxu0
      %v1069 = vadd.f32 0.0, %v1068
      %v1070 = vpop.f32.mrb[0].mxu0
      %1071 = vdwg.mxu0
      %v1072 = vadd.f32 %v960, %v1054
      %v1073 = vadd.f32 %v961, %v1059
      %v1074 = vadd.f32 %v962, %v1064
      %v1075 = vadd.f32 %v963, %v1069
      %s1076 = scalar_lea.vmem %s4, 224
      %v1077 = vld [vmem:[%s1076] sm:$0xff]
      %v1078 = vld [vmem:[%s1076 + $0x8] sm:$0xff]
      %v1079 = vld [vmem:[%s1076 + $0x10] sm:$0xff]
      %v1080 = vld [vmem:[%s1076 + $0x18] sm:$0xff]
      %1083 = vrot.lane.b32.xlu0 %v318, 125
      %v1084 = vpop.permute.xlu0 %1083
      %1085 = vrot.lane.b32.xlu0 %v319, 125
      %v1086 = vpop.permute.xlu0 %1085
      %v1090 = vsel %vm325, %v1077, 0
      %v1093 = vsel %vm325, %v1078, 0
      %v1096 = vsel %vm325, %v1079, 0
      %v1099 = vsel %vm325, %v1080, 0
      %1101 = vmatprep.subr.mxu0 0.0
      %1102 = vmatpush1.msra.mxu0 %v1084
      %1103 = vmatprep.subr.mxu0 0.0
      %1104 = vmatpush1.msra.mxu0 %v1086
      %1105 = vmatprep.subr.mxu0 0.0
      %1106 = vmatpush1.msra.mxu0 0.0
      %1107 = vmatprep.subr.mxu0 0.0
      %1108 = vmatpush1.msra.mxu0 0.0
      %1109 = vmatprep.subr.mxu0 0.0
      %1110 = vmatpush1.msra.mxu0 0.0
      %1111 = vmatprep.subr.mxu0 0.0
      %1112 = vmatpush1.msra.mxu0 0.0
      %1113 = vmatprep.subr.mxu0 0.0
      %1114 = vmatpush1.msra.mxu0 0.0
      %1115 = vmatprep.subr.mxu0 0.0
      %1116 = vmatpush1.msra.mxu0 0.0
      %1117 = vmatprep.subr.mxu0 0.0
      %1118 = vmatpush1.msra.mxu0 0.0
      %1119 = vmatprep.subr.mxu0 0.0
      %1120 = vmatpush1.msra.mxu0 0.0
      %1121 = vmatprep.subr.mxu0 0.0
      %1122 = vmatpush1.msra.mxu0 0.0
      %1123 = vmatprep.subr.mxu0 0.0
      %1124 = vmatpush1.msra.mxu0 0.0
      %1125 = vmatprep.subr.mxu0 0.0
      %1126 = vmatpush1.msra.mxu0 0.0
      %1127 = vmatprep.subr.mxu0 0.0
      %1128 = vmatpush1.msra.mxu0 0.0
      %1129 = vmatprep.subr.mxu0 0.0
      %1130 = vmatpush1.msra.mxu0 0.0
      %1131 = vmatprep.subr.mxu0 0.0
      %1132 = vmatpush1.msra.mxu0 0.0
      %1133 = vmatprep.subr.mxu0 0.0
      %1134 = vmatpush1.msra.mxu0 0.0
      %1135 = vmatprep.subr.mxu0 0.0
      %1136 = vmatpush1.msra.mxu0 0.0
      %1137 = vmatprep.subr.mxu0 0.0
      %1138 = vmatpush1.msra.mxu0 0.0
      %1139 = vmatprep.subr.mxu0 0.0
      %1140 = vmatpush1.msra.mxu0 0.0
      %1141 = vmatprep.subr.mxu0 0.0
      %1142 = vmatpush1.msra.mxu0 0.0
      %1143 = vmatprep.subr.mxu0 0.0
      %1144 = vmatpush1.msra.mxu0 0.0
      %1145 = vmatprep.subr.mxu0 0.0
      %1146 = vmatpush1.msra.mxu0 0.0
      %1147 = vmatprep.subr.mxu0 0.0
      %1148 = vmatpush1.msra.mxu0 0.0
      %1149 = vmatprep.subr.mxu0 0.0
      %1150 = vmatpush1.msra.mxu0 0.0
      %1151 = vmatprep.subr.mxu0 0.0
      %1152 = vmatpush1.msra.mxu0 0.0
      %1153 = vmatprep.subr.mxu0 0.0
      %1154 = vmatpush1.msra.mxu0 0.0
      %1155 = vmatprep.subr.mxu0 0.0
      %1156 = vmatpush1.msra.mxu0 0.0
      %1157 = vmatprep.subr.mxu0 0.0
      %1158 = vmatpush1.msra.mxu0 0.0
      %1159 = vmatprep.subr.mxu0 0.0
      %1160 = vmatpush1.msra.mxu0 0.0
      %1161 = vmatprep.subr.mxu0 0.0
      %1162 = vmatpush1.msra.mxu0 0.0
      %1163 = vmatprep.subr.mxu0 0.0
      %1164 = vmatpush1.msra.mxu0 0.0
      %1165 = vmatprep.mubr.f32.mxu0 0.0
      %1166 = vmatmul.mubr.f32.gmra.mrb[0].mxu0 %v1090
      %v1167 = vpop.f32.mrb[0].mxu0
      %v1168 = vadd.f32 0.0, %v1167
      %v1169 = vpop.f32.mrb[0].mxu0
      %1170 = vmatprep.mubr.f32.mxu0 0.0
      %1171 = vmatmul.mubr.f32.gmra.mrb[0].mxu0 %v1093
      %v1172 = vpop.f32.mrb[0].mxu0
      %v1173 = vadd.f32 0.0, %v1172
      %v1174 = vpop.f32.mrb[0].mxu0
      %1175 = vmatprep.mubr.f32.mxu0 0.0
      %1176 = vmatmul.mubr.f32.gmra.mrb[0].mxu0 %v1096
      %v1177 = vpop.f32.mrb[0].mxu0
      %v1178 = vadd.f32 0.0, %v1177
      %v1179 = vpop.f32.mrb[0].mxu0
      %1180 = vmatprep.mubr.f32.mxu0 0.0
      %1181 = vmatmul.mubr.f32.gmra.mrb[0].mxu0 %v1099
      %v1182 = vpop.f32.mrb[0].mxu0
      %v1183 = vadd.f32 0.0, %v1182
      %v1184 = vpop.f32.mrb[0].mxu0
      %1185 = vdwg.mxu0
      %v1186 = vadd.f32 %v1072, %v1168
      %v1187 = vadd.f32 %v1073, %v1173
      %v1188 = vadd.f32 %v1074, %v1178
      %v1189 = vadd.f32 %v1075, %v1183
      %s1190 = scalar_lea.vmem %s4, 256
      %v1191 = vld [vmem:[%s1190] sm:$0xff]
      %v1192 = vld [vmem:[%s1190 + $0x8] sm:$0xff]
      %v1193 = vld [vmem:[%s1190 + $0x10] sm:$0xff]
      %v1194 = vld [vmem:[%s1190 + $0x18] sm:$0xff]
      %1195 = vrot.lane.b32.xlu0 %v312, 124
      %v1196 = vpop.permute.xlu0 %1195
      %1197 = vrot.lane.b32.xlu0 %v313, 124
      %v1198 = vpop.permute.xlu0 %1197
      %v1202 = vsel %vm325, %v1191, 0
      %v1205 = vsel %vm325, %v1192, 0
      %v1208 = vsel %vm325, %v1193, 0
      %v1211 = vsel %vm325, %v1194, 0
      %1213 = vmatprep.subr.mxu0 0.0
      %1214 = vmatpush1.msra.mxu0 %v1196
      %1215 = vmatprep.subr.mxu0 0.0
      %1216 = vmatpush1.msra.mxu0 %v1198
      %1217 = vmatprep.subr.mxu0 0.0
      %1218 = vmatpush1.msra.mxu0 0.0
      %1219 = vmatprep.subr.mxu0 0.0
      %1220 = vmatpush1.msra.mxu0 0.0
      %1221 = vmatprep.subr.mxu0 0.0
      %1222 = vmatpush1.msra.mxu0 0.0
      %1223 = vmatprep.subr.mxu0 0.0
      %1224 = vmatpush1.msra.mxu0 0.0
      %1225 = vmatprep.subr.mxu0 0.0
      %1226 = vmatpush1.msra.mxu0 0.0
      %1227 = vmatprep.subr.mxu0 0.0
      %1228 = vmatpush1.msra.mxu0 0.0
      %1229 = vmatprep.subr.mxu0 0.0
      %1230 = vmatpush1.msra.mxu0 0.0
      %1231 = vmatprep.subr.mxu0 0.0
      %1232 = vmatpush1.msra.mxu0 0.0
      %1233 = vmatprep.subr.mxu0 0.0
      %1234 = vmatpush1.msra.mxu0 0.0
      %1235 = vmatprep.subr.mxu0 0.0
      %1236 = vmatpush1.msra.mxu0 0.0
      %1237 = vmatprep.subr.mxu0 0.0
      %1238 = vmatpush1.msra.mxu0 0.0
      %1239 = vmatprep.subr.mxu0 0.0
      %1240 = vmatpush1.msra.mxu0 0.0
      %1241 = vmatprep.subr.mxu0 0.0
      %1242 = vmatpush1.msra.mxu0 0.0
      %1243 = vmatprep.subr.mxu0 0.0
      %1244 = vmatpush1.msra.mxu0 0.0
      %1245 = vmatprep.subr.mxu0 0.0
      %1246 = vmatpush1.msra.mxu0 0.0
      %1247 = vmatprep.subr.mxu0 0.0
      %1248 = vmatpush1.msra.mxu0 0.0
      %1249 = vmatprep.subr.mxu0 0.0
      %1250 = vmatpush1.msra.mxu0 0.0
      %1251 = vmatprep.subr.mxu0 0.0
      %1252 = vmatpush1.msra.mxu0 0.0
      %1253 = vmatprep.subr.mxu0 0.0
      %1254 = vmatpush1.msra.mxu0 0.0
      %1255 = vmatprep.subr.mxu0 0.0
      %1256 = vmatpush1.msra.mxu0 0.0
      %1257 = vmatprep.subr.mxu0 0.0
      %1258 = vmatpush1.msra.mxu0 0.0
      %1259 = vmatprep.subr.mxu0 0.0
      %1260 = vmatpush1.msra.mxu0 0.0
      %1261 = vmatprep.subr.mxu0 0.0
      %1262 = vmatpush1.msra.mxu0 0.0
      %1263 = vmatprep.subr.mxu0 0.0
      %1264 = vmatpush1.msra.mxu0 0.0
      %1265 = vmatprep.subr.mxu0 0.0
      %1266 = vmatpush1.msra.mxu0 0.0
      %1267 = vmatprep.subr.mxu0 0.0
      %1268 = vmatpush1.msra.mxu0 0.0
      %1269 = vmatprep.subr.mxu0 0.0
      %1270 = vmatpush1.msra.mxu0 0.0
      %1271 = vmatprep.subr.mxu0 0.0
      %1272 = vmatpush1.msra.mxu0 0.0
      %1273 = vmatprep.subr.mxu0 0.0
      %1274 = vmatpush1.msra.mxu0 0.0
      %1275 = vmatprep.subr.mxu0 0.0
      %1276 = vmatpush1.msra.mxu0 0.0
      %1277 = vmatprep.mubr.f32.mxu0 0.0
      %1278 = vmatmul.mubr.f32.gmra.mrb[0].mxu0 %v1202
      %v1279 = vpop.f32.mrb[0].mxu0
      %v1280 = vadd.f32 0.0, %v1279
      %v1281 = vpop.f32.mrb[0].mxu0
      %1282 = vmatprep.mubr.f32.mxu0 0.0
      %1283 = vmatmul.mubr.f32.gmra.mrb[0].mxu0 %v1205
      %v1284 = vpop.f32.mrb[0].mxu0
      %v1285 = vadd.f32 0.0, %v1284
      %v1286 = vpop.f32.mrb[0].mxu0
      %1287 = vmatprep.mubr.f32.mxu0 0.0
      %1288 = vmatmul.mubr.f32.gmra.mrb[0].mxu0 %v1208
      %v1289 = vpop.f32.mrb[0].mxu0
      %v1290 = vadd.f32 0.0, %v1289
      %v1291 = vpop.f32.mrb[0].mxu0
      %1292 = vmatprep.mubr.f32.mxu0 0.0
      %1293 = vmatmul.mubr.f32.gmra.mrb[0].mxu0 %v1211
      %v1294 = vpop.f32.mrb[0].mxu0
      %v1295 = vadd.f32 0.0, %v1294
      %v1296 = vpop.f32.mrb[0].mxu0
      %1297 = vdwg.mxu0
      %v1298 = vadd.f32 %v1186, %v1280
      %v1299 = vadd.f32 %v1187, %v1285
      %v1300 = vadd.f32 %v1188, %v1290
      %v1301 = vadd.f32 %v1189, %v1295
      %v1302 = vld [vmem:[%s5] sm:$0xff]
      %v1303 = vld [vmem:[%s5 + $0x8] sm:$0xff]
      %v1304 = vld [vmem:[%s5 + $0x10] sm:$0xff]
      %v1305 = vld [vmem:[%s5 + $0x18] sm:$0xff]
      %1307 = vset.pattern.permute.xlu0 0
      %1308 = vperm.xlu0 %1307, %v1302
      %v1309 = vpop.permute.xlu0 %1308
      %1312 = vset.pattern.permute.xlu0 0
      %1313 = vperm.xlu0 %1312, %v1303
      %v1314 = vpop.permute.xlu0 %1313
      %1317 = vset.pattern.permute.xlu0 0
      %1318 = vperm.xlu0 %1317, %v1304
      %v1319 = vpop.permute.xlu0 %1318
      %1322 = vset.pattern.permute.xlu0 0
      %1323 = vperm.xlu0 %1322, %v1305
      %v1324 = vpop.permute.xlu0 %1323
      %v1326 = vadd.f32 %v1298, %v1309
      %v1327 = vadd.f32 %v1299, %v1314
      %v1328 = vadd.f32 %v1300, %v1319
      %v1329 = vadd.f32 %v1301, %v1324
      %vm1330 = vcmp.ge.f32.partialorder %v1326, 0.0
      %vm1331 = vcmp.ge.f32.partialorder %v1327, 0.0
      %vm1332 = vcmp.ge.f32.partialorder %v1328, 0.0
      %vm1333 = vcmp.ge.f32.partialorder %v1329, 0.0
      %v1334 = vmul.f32 %v1326, 0.1
      %v1335 = vmul.f32 %v1327, 0.1
      %v1336 = vmul.f32 %v1328, 0.1
      %v1337 = vmul.f32 %v1329, 0.1
      %v1338 = vsel %vm1330, %v1326, %v1334
      %v1339 = vsel %vm1331, %v1327, %v1335
      %v1340 = vsel %vm1332, %v1328, %v1336
      %v1341 = vsel %vm1333, %v1329, %v1337
      %vm1342 = vcmask 48128
      %1343 = vst.msk [vmem:[%s311] sm:$0xff] %vm1342, %v1338
      %1344 = vst.msk [vmem:[%s311 + $0x8] sm:$0xff] %vm1342, %v1339
      %1345 = vst.msk [vmem:[%s311 + $0x10] sm:$0xff] %vm1342, %v1340
      %1346 = vst.msk [vmem:[%s311 + $0x18] sm:$0xff] %vm1342, %v1341
      %p1347 = scmp.lt.s32.totalorder %s17, 1
      %s1348 = scalar_select %p1347, %s17, 1
      %s1349 = smul.addr %s1348, 4
      %s1350 = smul.addr %s1349, 8
      %s1351 = scalar_lea.vmem %s6, %s1350
      // Predicated region
      $region45: #{_lambda_.10} parent=43 // pred_check
        %p1352 = pneg %p181
      $region46: #{_lambda_.10} parent=43 // pred_check_branch
        %1354 = sbr.rel (%p1352) target = $region48
      $region47: #{_lambda_.10} parent=43 // pred_region
        _
      $region48: #{_lambda_.10} parent=43 // pred_fallthru
        _
    $region44: #{_lambda_.10} parent=5 // pred_fallthru
      _
    %p1355 = scmp.le.s32.totalorder 2, %s12
    // Predicated region
    $region49: #{_lambda_.10} parent=5 // pred_check
      %p1356 = pneg %p1355
    $region50: #{_lambda_.10} parent=5 // pred_check_branch
      %1358 = sbr.rel (%p1356) target = $region52
    $region51: #{_lambda_.10} parent=5 // pred_region
      %s1359 = ssub.s32 %s12, 2
      // Predicated region
      $region53: #{_lambda_.10} parent=51 // pred_check
        %p1360 = pneg %p187
      $region54: #{_lambda_.10} parent=51 // pred_check_branch
        %1362 = sbr.rel (%p1360) target = $region56
      $region55: #{_lambda_.10} parent=51 // pred_region
        %p1363 = scmp.lt.s32.totalorder %s18, 1
        %s1364 = scalar_select %p1363, %s18, 1
        %s1365 = smul.addr %s1364, 4
        %s1366 = smul.addr %s1365, 8
        %s1367 = scalar_lea.vmem %s6, %s1366
      $region56: #{_lambda_.10} parent=51 // pred_fallthru
        _
    $region52: #{_lambda_.10} parent=5 // pred_fallthru
      _
  $region6: #{_lambda_.10} parent=0 // loop_footer
    %s16 = sadd.s32 1, %s12
  $region7: #{_lambda_.10} parent=0 // loop_footer_branch
    %11 = sbr.rel target = $region3
  $region8: #{_lambda_.10} parent=0 // loop_exit
    _

// kernel: _lambda_.11
$region0: #{_lambda_.11}
  #allocation0 [shape = 'u32[]', space=smem, size = 0x4, offset = 0x4, fixed_abs, tag = 'smem constant byte address 0x4 - core index']
  #allocation1 [shape = 'u32[144,128]{1,0:T(1,128)}', space=vmem, size = 0x12000, scoped, tag = 'internal scratch']
  %s0 = inlined_call_operand.vmem [shape: f32[2,32,20], index: 0, kind: input, shape index: {}]
  %s1 = inlined_call_operand.vmem [shape: f32[9,32,32], index: 1, kind: input, shape index: {}]
  %s2 = inlined_call_operand.vmem [shape: f32[32,1], index: 2, kind: input, shape index: {}]
  %s3 = inlined_call_operand.vmem [shape: f32[2,32,8], index: 3, kind: output, shape index: {}]
  %s4 = sld [smem:[#allocation0]]
  $region45: #{_lambda_.11} parent=0
    _
  %s6 = ssub.s32 1, %s4
  %s7 = scalar_select 0, %s6, %s4
  loop: start=0, step=1, limit=4
  $region2: #{_lambda_.11} parent=0 // loop_pre_header
    _
  $region3: #{_lambda_.11} parent=0 // loop_header
    %s9 = sphi 0, %s13
    %p10 = scmp.ge.s32.totalorder %s9, 4
    %s19 = sphi 0, %s21
    %s22 = sphi 0, %s19
    %s23 = sphi 0, %s22
    %s39 = sphi 0, %s23
    %s43 = sphi 0, %s43
    %s45 = sphi 0, %s43
    %s46 = sphi 0, %s45
    %s60 = sphi 0, %s46
    %s64 = sphi 0, %s64
    %s66 = sphi 0, %s64
    %s67 = sphi 0, %s66
    %s81 = sphi 0, %s67
    %s87 = sphi 0, %s89
    %s90 = sphi 0, %s87
    %s91 = sphi 0, %s90
    %s107 = sphi 0, %s91
  $region4: #{_lambda_.11} parent=0 // loop_header_branch
    %12 = sbr.rel (%p10) target = $region8
  $region5: #{_lambda_.11} parent=0 // loop_body
    %s14 = ssub.s32 %s9, 1
    %s15 = ssub.s32 %s9, 2
    %s16 = sadd.s32 %s9, 1
    %s17 = ssub.s32 %s9, %s16
    %p18 = scmp.eq.s32.totalorder %s17, 0
    %s20 = sadd.s32 %s19, 1
    %s21 = scalar_select %p18, %s19, %s20
    %p24 = pneg %p18
    %p25 = scmp.eq.s32.totalorder %s9, 1
    %p26 = por %p24, %p25
    %p27 = scmp.ne.s32.totalorder %s19, %s22
    %p28 = scmp.eq.s32.totalorder %s9, 0
    %p29 = por %p27, %p28
    %p30 = scmp.ne.s32.totalorder %s19, %s22
    %p31 = scmp.eq.s32.totalorder %s14, 1
    %p32 = por %p30, %p31
    %p33 = scmp.ne.s32.totalorder %s22, %s23
    %p34 = scmp.eq.s32.totalorder %s14, 0
    %p35 = por %p33, %p34
    %p36 = scmp.ne.s32.totalorder %s22, %s23
    %p37 = scmp.eq.s32.totalorder %s15, 1
    %p38 = por %p36, %p37
    %p40 = scmp.ne.s32.totalorder %s23, %s39
    %p41 = scmp.eq.s32.totalorder %s15, 0
    %p42 = por %p40, %p41
    %s44 = sadd.s32 %s43, 1
    %p47 = scmp.eq.s32.totalorder %s9, 1
    %p48 = scmp.ne.s32.totalorder %s43, %s45
    %p49 = scmp.eq.s32.totalorder %s9, 0
    %p50 = por %p48, %p49
    %p51 = scmp.ne.s32.totalorder %s43, %s45
    %p52 = scmp.eq.s32.totalorder %s14, 1
    %p53 = por %p51, %p52
    %p54 = scmp.ne.s32.totalorder %s45, %s46
    %p55 = scmp.eq.s32.totalorder %s14, 0
    %p56 = por %p54, %p55
    %p57 = scmp.ne.s32.totalorder %s45, %s46
    %p58 = scmp.eq.s32.totalorder %s15, 1
    %p59 = por %p57, %p58
    %p61 = scmp.ne.s32.totalorder %s46, %s60
    %p62 = scmp.eq.s32.totalorder %s15, 0
    %p63 = por %p61, %p62
    %s65 = sadd.s32 %s64, 1
    %p68 = scmp.eq.s32.totalorder %s9, 1
    %p69 = scmp.ne.s32.totalorder %s64, %s66
    %p70 = scmp.eq.s32.totalorder %s9, 0
    %p71 = por %p69, %p70
    %p72 = scmp.ne.s32.totalorder %s64, %s66
    %p73 = scmp.eq.s32.totalorder %s14, 1
    %p74 = por %p72, %p73
    %p75 = scmp.ne.s32.totalorder %s66, %s67
    %p76 = scmp.eq.s32.totalorder %s14, 0
    %p77 = por %p75, %p76
    %p78 = scmp.ne.s32.totalorder %s66, %s67
    %p79 = scmp.eq.s32.totalorder %s15, 1
    %p80 = por %p78, %p79
    %p82 = scmp.ne.s32.totalorder %s67, %s81
    %p83 = scmp.eq.s32.totalorder %s15, 0
    %p84 = por %p82, %p83
    %s85 = ssub.s32 %s9, %s16
    %p86 = scmp.eq.s32.totalorder %s85, 0
    %s88 = sadd.s32 %s87, 1
    %s89 = scalar_select %p86, %s87, %s88
    %p92 = pneg %p86
    %p93 = scmp.eq.s32.totalorder %s9, 1
    %p94 = por %p92, %p93
    %p95 = scmp.ne.s32.totalorder %s87, %s90
    %p96 = scmp.eq.s32.totalorder %s9, 0
    %p97 = por %p95, %p96
    %p98 = scmp.ne.s32.totalorder %s87, %s90
    %p99 = scmp.eq.s32.totalorder %s14, 1
    %p100 = por %p98, %p99
    %p101 = scmp.ne.s32.totalorder %s90, %s91
    %p102 = scmp.eq.s32.totalorder %s14, 0
    %p103 = por %p101, %p102
    %p104 = scmp.ne.s32.totalorder %s90, %s91
    %p105 = scmp.eq.s32.totalorder %s15, 1
    %p106 = por %p104, %p105
    %p108 = scmp.ne.s32.totalorder %s91, %s107
    %p109 = scmp.eq.s32.totalorder %s15, 0
    %p110 = por %p108, %p109
    %p111 = scmp.le.s32.totalorder 1, %s9
    %p112 = scmp.lt.s32.totalorder %s9, 3
    %p113 = pnand %p111, %p112
    %p114 = pneg %p113
    // Predicated region
    $region9: #{_lambda_.11} parent=5 // pred_check
      _
    $region10: #{_lambda_.11} parent=5 // pred_check_branch
      %116 = sbr.rel (%p113) target = $region12
    $region11: #{_lambda_.11} parent=5 // pred_region
      %s117 = ssub.s32 %s9, 1
      // Predicated region
      $region13: #{_lambda_.11} parent=11 // pred_check
        %p118 = pneg %p56
      $region14: #{_lambda_.11} parent=11 // pred_check_branch
        %120 = sbr.rel (%p118) target = $region16
      $region15: #{_lambda_.11} parent=11 // pred_region
        _
      $region16: #{_lambda_.11} parent=11 // pred_fallthru
        _
      // Predicated region
      $region17: #{_lambda_.11} parent=11 // pred_check
        %p121 = pneg %p77
      $region18: #{_lambda_.11} parent=11 // pred_check_branch
        %123 = sbr.rel (%p121) target = $region20
      $region19: #{_lambda_.11} parent=11 // pred_region
        _
      $region20: #{_lambda_.11} parent=11 // pred_fallthru
        _
    $region12: #{_lambda_.11} parent=5 // pred_fallthru
      _
    %p124 = scmp.lt.s32.totalorder %s9, 2
    // Predicated region
    $region21: #{_lambda_.11} parent=5 // pred_check
      %p125 = pneg %p124
    $region22: #{_lambda_.11} parent=5 // pred_check_branch
      %127 = sbr.rel (%p125) target = $region24
    $region23: #{_lambda_.11} parent=5 // pred_region
      // Predicated region
      $region25: #{_lambda_.11} parent=23 // pred_check
        %p128 = pneg %p29
      $region26: #{_lambda_.11} parent=23 // pred_check_branch
        %130 = sbr.rel (%p128) target = $region28
      $region27: #{_lambda_.11} parent=23 // pred_region
        %p131 = scmp.lt.s32.totalorder %s9, 1
        %s132 = scalar_select %p131, %s9, 1
        %s133 = smul.addr %s132, 4
        %s134 = smul.addr %s133, 8
        %s135 = scalar_lea.vmem %s0, %s134
      $region28: #{_lambda_.11} parent=23 // pred_fallthru
        _
    $region24: #{_lambda_.11} parent=5 // pred_fallthru
      _
    %p136 = scmp.le.s32.totalorder 1, %s9
    %p137 = scmp.lt.s32.totalorder %s9, 3
    %p138 = pnand %p136, %p137
    %p139 = pneg %p138
    // Predicated region
    $region29: #{_lambda_.11} parent=5 // pred_check
      _
    $region30: #{_lambda_.11} parent=5 // pred_check_branch
      %141 = sbr.rel (%p138) target = $region32
    $region31: #{_lambda_.11} parent=5 // pred_region
      %s142 = ssub.s32 %s9, 1
      %p143 = scmp.lt.s32.totalorder %s14, 1
      %s144 = scalar_select %p143, %s14, 1
      %s145 = smul.addr %s144, 4
      %s146 = smul.addr %s145, 8
      %s147 = scalar_lea.vmem %s0, %s146
      %p148 = pneg %p35
      %p149 = pneg %p32
      %p150 = pneg %p56
      %p151 = pneg %p53
      %p152 = pneg %p77
      %p153 = pneg %p74
      %p154 = pneg %p103
      %p155 = pneg %p100
      %p156 = scmp.lt.s32.totalorder %s14, 1
      %s157 = scalar_select %p156, %s14, 1
      %s158 = smul.addr %s157, 4
      %s159 = smul.addr %s158, 8
      %s160 = scalar_lea.vmem %s3, %s159
      %p161 = scmp.lt.s32.totalorder %s14, 1
      %s162 = scalar_select %p161, %s14, 1
      %s163 = smul.addr %s162, 4
      %s164 = smul.addr %s163, 8
      %s165 = scalar_lea.vmem %s0, %s164
      %p166 = scmp.lt.s32.totalorder %s14, 1
      %s167 = scalar_select %p166, %s14, 1
      %s168 = smul.addr %s167, 4
      %s169 = smul.addr %s168, 8
      %s170 = scalar_lea.vmem %s3, %s169
      %v171 = vld [vmem:[%s165] sm:$0xff]
      %v172 = vld [vmem:[%s165 + $0x8] sm:$0xff]
      %v173 = vld [vmem:[%s165 + $0x10] sm:$0xff]
      %v174 = vld [vmem:[%s165 + $0x18] sm:$0xff]
      %v175 = vld [vmem:[%s1] sm:$0xff]
      %v176 = vld [vmem:[%s1 + $0x8] sm:$0xff]
      %v177 = vld [vmem:[%s1 + $0x10] sm:$0xff]
      %v178 = vld [vmem:[%s1 + $0x18] sm:$0xff]
      %s179 = scalar_lea.vmem %s1, 32
      %v180 = vld [vmem:[%s179] sm:$0xff]
      %v181 = vld [vmem:[%s179 + $0x8] sm:$0xff]
      %v182 = vld [vmem:[%s179 + $0x10] sm:$0xff]
      %v183 = vld [vmem:[%s179 + $0x18] sm:$0xff]
      %188 = vrot.lane.b32.xlu0 %v171, 127
      %v189 = vpop.permute.xlu0 %188
      %190 = vrot.lane.b32.xlu0 %v172, 127
      %v191 = vpop.permute.xlu0 %190
      %192 = vrot.lane.b32.xlu0 %v173, 127
      %v193 = vpop.permute.xlu0 %192
      %194 = vrot.lane.b32.xlu0 %v174, 127
      %v195 = vpop.permute.xlu0 %194
      %vm200 = vcmask 261120
      %v202 = vsel %vm200, %v180, 0
      %v205 = vsel %vm200, %v181, 0
      %v208 = vsel %vm200, %v182, 0
      %v211 = vsel %vm200, %v183, 0
      %213 = vmatprep.subr.mxu0 0.0
      %214 = vmatpush1.msra.mxu0 %v189
      %215 = vmatprep.subr.mxu0 0.0
      %216 = vmatpush1.msra.mxu0 %v191
      %217 = vmatprep.subr.mxu0 0.0
      %218 = vmatpush1.msra.mxu0 %v193
      %219 = vmatprep.subr.mxu0 0.0
      %220 = vmatpush1.msra.mxu0 %v195
      %221 = vmatprep.subr.mxu0 0.0
      %222 = vmatpush1.msra.mxu0 0.0
      %223 = vmatprep.subr.mxu0 0.0
      %224 = vmatpush1.msra.mxu0 0.0
      %225 = vmatprep.subr.mxu0 0.0
      %226 = vmatpush1.msra.mxu0 0.0
      %227 = vmatprep.subr.mxu0 0.0
      %228 = vmatpush1.msra.mxu0 0.0
      %229 = vmatprep.subr.mxu0 0.0
      %230 = vmatpush1.msra.mxu0 0.0
      %231 = vmatprep.subr.mxu0 0.0
      %232 = vmatpush1.msra.mxu0 0.0
      %233 = vmatprep.subr.mxu0 0.0
      %234 = vmatpush1.msra.mxu0 0.0
      %235 = vmatprep.subr.mxu0 0.0
      %236 = vmatpush1.msra.mxu0 0.0
      %237 = vmatprep.subr.mxu0 0.0
      %238 = vmatpush1.msra.mxu0 0.0
      %239 = vmatprep.subr.mxu0 0.0
      %240 = vmatpush1.msra.mxu0 0.0
      %241 = vmatprep.subr.mxu0 0.0
      %242 = vmatpush1.msra.mxu0 0.0
      %243 = vmatprep.subr.mxu0 0.0
      %244 = vmatpush1.msra.mxu0 0.0
      %245 = vmatprep.subr.mxu0 0.0
      %246 = vmatpush1.msra.mxu0 0.0
      %247 = vmatprep.subr.mxu0 0.0
      %248 = vmatpush1.msra.mxu0 0.0
      %249 = vmatprep.subr.mxu0 0.0
      %250 = vmatpush1.msra.mxu0 0.0
      %251 = vmatprep.subr.mxu0 0.0
      %252 = vmatpush1.msra.mxu0 0.0
      %253 = vmatprep.subr.mxu0 0.0
      %254 = vmatpush1.msra.mxu0 0.0
      %255 = vmatprep.subr.mxu0 0.0
      %256 = vmatpush1.msra.mxu0 0.0
      %257 = vmatprep.subr.mxu0 0.0
      %258 = vmatpush1.msra.mxu0 0.0
      %259 = vmatprep.subr.mxu0 0.0
      %260 = vmatpush1.msra.mxu0 0.0
      %261 = vmatprep.subr.mxu0 0.0
      %262 = vmatpush1.msra.mxu0 0.0
      %263 = vmatprep.subr.mxu0 0.0
      %264 = vmatpush1.msra.mxu0 0.0
      %265 = vmatprep.subr.mxu0 0.0
      %266 = vmatpush1.msra.mxu0 0.0
      %267 = vmatprep.subr.mxu0 0.0
      %268 = vmatpush1.msra.mxu0 0.0
      %269 = vmatprep.subr.mxu0 0.0
      %270 = vmatpush1.msra.mxu0 0.0
      %271 = vmatprep.subr.mxu0 0.0
      %272 = vmatpush1.msra.mxu0 0.0
      %273 = vmatprep.subr.mxu0 0.0
      %274 = vmatpush1.msra.mxu0 0.0
      %275 = vmatprep.subr.mxu0 0.0
      %276 = vmatpush1.msra.mxu0 0.0
      %277 = vmatprep.mubr.f32.mxu0 0.0
      %278 = vmatmul.mubr.f32.gmra.mrb[0].mxu0 %v202
      %v279 = vpop.f32.mrb[0].mxu0
      %v280 = vadd.f32 0.0, %v279
      %v281 = vpop.f32.mrb[0].mxu0
      %282 = vmatprep.mubr.f32.mxu0 0.0
      %283 = vmatmul.mubr.f32.gmra.mrb[0].mxu0 %v205
      %v284 = vpop.f32.mrb[0].mxu0
      %v285 = vadd.f32 0.0, %v284
      %v286 = vpop.f32.mrb[0].mxu0
      %287 = vmatprep.mubr.f32.mxu0 0.0
      %288 = vmatmul.mubr.f32.gmra.mrb[0].mxu0 %v208
      %v289 = vpop.f32.mrb[0].mxu0
      %v290 = vadd.f32 0.0, %v289
      %v291 = vpop.f32.mrb[0].mxu0
      %292 = vmatprep.mubr.f32.mxu0 0.0
      %293 = vmatmul.mubr.f32.gmra.mrb[0].mxu0 %v211
      %v294 = vpop.f32.mrb[0].mxu0
      %v295 = vadd.f32 0.0, %v294
      %v296 = vpop.f32.mrb[0].mxu0
      %297 = vdwg.mxu0
      %v299 = vsel %vm200, %v175, 0
      %v302 = vsel %vm200, %v176, 0
      %v305 = vsel %vm200, %v177, 0
      %v308 = vsel %vm200, %v178, 0
      %310 = vmatprep.subr.mxu0 0.0
      %311 = vmatpush1.msra.mxu0 %v171
      %312 = vmatprep.subr.mxu0 0.0
      %313 = vmatpush1.msra.mxu0 %v172
      %314 = vmatprep.subr.mxu0 0.0
      %315 = vmatpush1.msra.mxu0 %v173
      %316 = vmatprep.subr.mxu0 0.0
      %317 = vmatpush1.msra.mxu0 %v174
      %318 = vmatprep.subr.mxu0 0.0
      %319 = vmatpush1.msra.mxu0 0.0
      %320 = vmatprep.subr.mxu0 0.0
      %321 = vmatpush1.msra.mxu0 0.0
      %322 = vmatprep.subr.mxu0 0.0
      %323 = vmatpush1.msra.mxu0 0.0
      %324 = vmatprep.subr.mxu0 0.0
      %325 = vmatpush1.msra.mxu0 0.0
      %326 = vmatprep.subr.mxu0 0.0
      %327 = vmatpush1.msra.mxu0 0.0
      %328 = vmatprep.subr.mxu0 0.0
      %329 = vmatpush1.msra.mxu0 0.0
      %330 = vmatprep.subr.mxu0 0.0
      %331 = vmatpush1.msra.mxu0 0.0
      %332 = vmatprep.subr.mxu0 0.0
      %333 = vmatpush1.msra.mxu0 0.0
      %334 = vmatprep.subr.mxu0 0.0
      %335 = vmatpush1.msra.mxu0 0.0
      %336 = vmatprep.subr.mxu0 0.0
      %337 = vmatpush1.msra.mxu0 0.0
      %338 = vmatprep.subr.mxu0 0.0
      %339 = vmatpush1.msra.mxu0 0.0
      %340 = vmatprep.subr.mxu0 0.0
      %341 = vmatpush1.msra.mxu0 0.0
      %342 = vmatprep.subr.mxu0 0.0
      %343 = vmatpush1.msra.mxu0 0.0
      %344 = vmatprep.subr.mxu0 0.0
      %345 = vmatpush1.msra.mxu0 0.0
      %346 = vmatprep.subr.mxu0 0.0
      %347 = vmatpush1.msra.mxu0 0.0
      %348 = vmatprep.subr.mxu0 0.0
      %349 = vmatpush1.msra.mxu0 0.0
      %350 = vmatprep.subr.mxu0 0.0
      %351 = vmatpush1.msra.mxu0 0.0
      %352 = vmatprep.subr.mxu0 0.0
      %353 = vmatpush1.msra.mxu0 0.0
      %354 = vmatprep.subr.mxu0 0.0
      %355 = vmatpush1.msra.mxu0 0.0
      %356 = vmatprep.subr.mxu0 0.0
      %357 = vmatpush1.msra.mxu0 0.0
      %358 = vmatprep.subr.mxu0 0.0
      %359 = vmatpush1.msra.mxu0 0.0
      %360 = vmatprep.subr.mxu0 0.0
      %361 = vmatpush1.msra.mxu0 0.0
      %362 = vmatprep.subr.mxu0 0.0
      %363 = vmatpush1.msra.mxu0 0.0
      %364 = vmatprep.subr.mxu0 0.0
      %365 = vmatpush1.msra.mxu0 0.0
      %366 = vmatprep.subr.mxu0 0.0
      %367 = vmatpush1.msra.mxu0 0.0
      %368 = vmatprep.subr.mxu0 0.0
      %369 = vmatpush1.msra.mxu0 0.0
      %370 = vmatprep.subr.mxu0 0.0
      %371 = vmatpush1.msra.mxu0 0.0
      %372 = vmatprep.subr.mxu0 0.0
      %373 = vmatpush1.msra.mxu0 0.0
      %374 = vmatprep.mubr.f32.mxu0 0.0
      %375 = vmatmul.mubr.f32.gmra.mrb[0].mxu0 %v299
      %v376 = vpop.f32.mrb[0].mxu0
      %v377 = vadd.f32 %v280, %v376
      %v378 = vpop.f32.mrb[0].mxu0
      %379 = vmatprep.mubr.f32.mxu0 0.0
      %380 = vmatmul.mubr.f32.gmra.mrb[0].mxu0 %v302
      %v381 = vpop.f32.mrb[0].mxu0
      %v382 = vadd.f32 %v285, %v381
      %v383 = vpop.f32.mrb[0].mxu0
      %384 = vmatprep.mubr.f32.mxu0 0.0
      %385 = vmatmul.mubr.f32.gmra.mrb[0].mxu0 %v305
      %v386 = vpop.f32.mrb[0].mxu0
      %v387 = vadd.f32 %v290, %v386
      %v388 = vpop.f32.mrb[0].mxu0
      %389 = vmatprep.mubr.f32.mxu0 0.0
      %390 = vmatmul.mubr.f32.gmra.mrb[0].mxu0 %v308
      %v391 = vpop.f32.mrb[0].mxu0
      %v392 = vadd.f32 %v295, %v391
      %v393 = vpop.f32.mrb[0].mxu0
      %394 = vdwg.mxu0
      %s395 = scalar_lea.vmem %s1, 64
      %v396 = vld [vmem:[%s395] sm:$0xff]
      %v397 = vld [vmem:[%s395 + $0x8] sm:$0xff]
      %v398 = vld [vmem:[%s395 + $0x10] sm:$0xff]
      %v399 = vld [vmem:[%s395 + $0x18] sm:$0xff]
      %400 = vrot.lane.b32.xlu0 %v171, 126
      %v401 = vpop.permute.xlu0 %400
      %402 = vrot.lane.b32.xlu0 %v172, 126
      %v403 = vpop.permute.xlu0 %402
      %404 = vrot.lane.b32.xlu0 %v173, 126
      %v405 = vpop.permute.xlu0 %404
      %406 = vrot.lane.b32.xlu0 %v174, 126
      %v407 = vpop.permute.xlu0 %406
      %v413 = vsel %vm200, %v396, 0
      %v416 = vsel %vm200, %v397, 0
      %v419 = vsel %vm200, %v398, 0
      %v422 = vsel %vm200, %v399, 0
      %424 = vmatprep.subr.mxu0 0.0
      %425 = vmatpush1.msra.mxu0 %v401
      %426 = vmatprep.subr.mxu0 0.0
      %427 = vmatpush1.msra.mxu0 %v403
      %428 = vmatprep.subr.mxu0 0.0
      %429 = vmatpush1.msra.mxu0 %v405
      %430 = vmatprep.subr.mxu0 0.0
      %431 = vmatpush1.msra.mxu0 %v407
      %432 = vmatprep.subr.mxu0 0.0
      %433 = vmatpush1.msra.mxu0 0.0
      %434 = vmatprep.subr.mxu0 0.0
      %435 = vmatpush1.msra.mxu0 0.0
      %436 = vmatprep.subr.mxu0 0.0
      %437 = vmatpush1.msra.mxu0 0.0
      %438 = vmatprep.subr.mxu0 0.0
      %439 = vmatpush1.msra.mxu0 0.0
      %440 = vmatprep.subr.mxu0 0.0
      %441 = vmatpush1.msra.mxu0 0.0
      %442 = vmatprep.subr.mxu0 0.0
      %443 = vmatpush1.msra.mxu0 0.0
      %444 = vmatprep.subr.mxu0 0.0
      %445 = vmatpush1.msra.mxu0 0.0
      %446 = vmatprep.subr.mxu0 0.0
      %447 = vmatpush1.msra.mxu0 0.0
      %448 = vmatprep.subr.mxu0 0.0
      %449 = vmatpush1.msra.mxu0 0.0
      %450 = vmatprep.subr.mxu0 0.0
      %451 = vmatpush1.msra.mxu0 0.0
      %452 = vmatprep.subr.mxu0 0.0
      %453 = vmatpush1.msra.mxu0 0.0
      %454 = vmatprep.subr.mxu0 0.0
      %455 = vmatpush1.msra.mxu0 0.0
      %456 = vmatprep.subr.mxu0 0.0
      %457 = vmatpush1.msra.mxu0 0.0
      %458 = vmatprep.subr.mxu0 0.0
      %459 = vmatpush1.msra.mxu0 0.0
      %460 = vmatprep.subr.mxu0 0.0
      %461 = vmatpush1.msra.mxu0 0.0
      %462 = vmatprep.subr.mxu0 0.0
      %463 = vmatpush1.msra.mxu0 0.0
      %464 = vmatprep.subr.mxu0 0.0
      %465 = vmatpush1.msra.mxu0 0.0
      %466 = vmatprep.subr.mxu0 0.0
      %467 = vmatpush1.msra.mxu0 0.0
      %468 = vmatprep.subr.mxu0 0.0
      %469 = vmatpush1.msra.mxu0 0.0
      %470 = vmatprep.subr.mxu0 0.0
      %471 = vmatpush1.msra.mxu0 0.0
      %472 = vmatprep.subr.mxu0 0.0
      %473 = vmatpush1.msra.mxu0 0.0
      %474 = vmatprep.subr.mxu0 0.0
      %475 = vmatpush1.msra.mxu0 0.0
      %476 = vmatprep.subr.mxu0 0.0
      %477 = vmatpush1.msra.mxu0 0.0
      %478 = vmatprep.subr.mxu0 0.0
      %479 = vmatpush1.msra.mxu0 0.0
      %480 = vmatprep.subr.mxu0 0.0
      %481 = vmatpush1.msra.mxu0 0.0
      %482 = vmatprep.subr.mxu0 0.0
      %483 = vmatpush1.msra.mxu0 0.0
      %484 = vmatprep.subr.mxu0 0.0
      %485 = vmatpush1.msra.mxu0 0.0
      %486 = vmatprep.subr.mxu0 0.0
      %487 = vmatpush1.msra.mxu0 0.0
      %488 = vmatprep.mubr.f32.mxu0 0.0
      %489 = vmatmul.mubr.f32.gmra.mrb[0].mxu0 %v413
      %v490 = vpop.f32.mrb[0].mxu0
      %v491 = vadd.f32 0.0, %v490
      %v492 = vpop.f32.mrb[0].mxu0
      %493 = vmatprep.mubr.f32.mxu0 0.0
      %494 = vmatmul.mubr.f32.gmra.mrb[0].mxu0 %v416
      %v495 = vpop.f32.mrb[0].mxu0
      %v496 = vadd.f32 0.0, %v495
      %v497 = vpop.f32.mrb[0].mxu0
      %498 = vmatprep.mubr.f32.mxu0 0.0
      %499 = vmatmul.mubr.f32.gmra.mrb[0].mxu0 %v419
      %v500 = vpop.f32.mrb[0].mxu0
      %v501 = vadd.f32 0.0, %v500
      %v502 = vpop.f32.mrb[0].mxu0
      %503 = vmatprep.mubr.f32.mxu0 0.0
      %504 = vmatmul.mubr.f32.gmra.mrb[0].mxu0 %v422
      %v505 = vpop.f32.mrb[0].mxu0
      %v506 = vadd.f32 0.0, %v505
      %v507 = vpop.f32.mrb[0].mxu0
      %508 = vdwg.mxu0
      %v509 = vadd.f32 %v377, %v491
      %v510 = vadd.f32 %v382, %v496
      %v511 = vadd.f32 %v387, %v501
      %v512 = vadd.f32 %v392, %v506
      %s513 = scalar_lea.vmem %s1, 96
      %v514 = vld [vmem:[%s513] sm:$0xff]
      %v515 = vld [vmem:[%s513 + $0x8] sm:$0xff]
      %v516 = vld [vmem:[%s513 + $0x10] sm:$0xff]
      %v517 = vld [vmem:[%s513 + $0x18] sm:$0xff]
      %518 = vrot.lane.b32.xlu0 %v171, 124
      %v519 = vpop.permute.xlu0 %518
      %520 = vrot.lane.b32.xlu0 %v172, 124
      %v521 = vpop.permute.xlu0 %520
      %522 = vrot.lane.b32.xlu0 %v173, 124
      %v523 = vpop.permute.xlu0 %522
      %524 = vrot.lane.b32.xlu0 %v174, 124
      %v525 = vpop.permute.xlu0 %524
      %v531 = vsel %vm200, %v514, 0
      %v534 = vsel %vm200, %v515, 0
      %v537 = vsel %vm200, %v516, 0
      %v540 = vsel %vm200, %v517, 0
      %542 = vmatprep.subr.mxu0 0.0
      %543 = vmatpush1.msra.mxu0 %v519
      %544 = vmatprep.subr.mxu0 0.0
      %545 = vmatpush1.msra.mxu0 %v521
      %546 = vmatprep.subr.mxu0 0.0
      %547 = vmatpush1.msra.mxu0 %v523
      %548 = vmatprep.subr.mxu0 0.0
      %549 = vmatpush1.msra.mxu0 %v525
      %550 = vmatprep.subr.mxu0 0.0
      %551 = vmatpush1.msra.mxu0 0.0
      %552 = vmatprep.subr.mxu0 0.0
      %553 = vmatpush1.msra.mxu0 0.0
      %554 = vmatprep.subr.mxu0 0.0
      %555 = vmatpush1.msra.mxu0 0.0
      %556 = vmatprep.subr.mxu0 0.0
      %557 = vmatpush1.msra.mxu0 0.0
      %558 = vmatprep.subr.mxu0 0.0
      %559 = vmatpush1.msra.mxu0 0.0
      %560 = vmatprep.subr.mxu0 0.0
      %561 = vmatpush1.msra.mxu0 0.0
      %562 = vmatprep.subr.mxu0 0.0
      %563 = vmatpush1.msra.mxu0 0.0
      %564 = vmatprep.subr.mxu0 0.0
      %565 = vmatpush1.msra.mxu0 0.0
      %566 = vmatprep.subr.mxu0 0.0
      %567 = vmatpush1.msra.mxu0 0.0
      %568 = vmatprep.subr.mxu0 0.0
      %569 = vmatpush1.msra.mxu0 0.0
      %570 = vmatprep.subr.mxu0 0.0
      %571 = vmatpush1.msra.mxu0 0.0
      %572 = vmatprep.subr.mxu0 0.0
      %573 = vmatpush1.msra.mxu0 0.0
      %574 = vmatprep.subr.mxu0 0.0
      %575 = vmatpush1.msra.mxu0 0.0
      %576 = vmatprep.subr.mxu0 0.0
      %577 = vmatpush1.msra.mxu0 0.0
      %578 = vmatprep.subr.mxu0 0.0
      %579 = vmatpush1.msra.mxu0 0.0
      %580 = vmatprep.subr.mxu0 0.0
      %581 = vmatpush1.msra.mxu0 0.0
      %582 = vmatprep.subr.mxu0 0.0
      %583 = vmatpush1.msra.mxu0 0.0
      %584 = vmatprep.subr.mxu0 0.0
      %585 = vmatpush1.msra.mxu0 0.0
      %586 = vmatprep.subr.mxu0 0.0
      %587 = vmatpush1.msra.mxu0 0.0
      %588 = vmatprep.subr.mxu0 0.0
      %589 = vmatpush1.msra.mxu0 0.0
      %590 = vmatprep.subr.mxu0 0.0
      %591 = vmatpush1.msra.mxu0 0.0
      %592 = vmatprep.subr.mxu0 0.0
      %593 = vmatpush1.msra.mxu0 0.0
      %594 = vmatprep.subr.mxu0 0.0
      %595 = vmatpush1.msra.mxu0 0.0
      %596 = vmatprep.subr.mxu0 0.0
      %597 = vmatpush1.msra.mxu0 0.0
      %598 = vmatprep.subr.mxu0 0.0
      %599 = vmatpush1.msra.mxu0 0.0
      %600 = vmatprep.subr.mxu0 0.0
      %601 = vmatpush1.msra.mxu0 0.0
      %602 = vmatprep.subr.mxu0 0.0
      %603 = vmatpush1.msra.mxu0 0.0
      %604 = vmatprep.subr.mxu0 0.0
      %605 = vmatpush1.msra.mxu0 0.0
      %606 = vmatprep.mubr.f32.mxu0 0.0
      %607 = vmatmul.mubr.f32.gmra.mrb[0].mxu0 %v531
      %v608 = vpop.f32.mrb[0].mxu0
      %v609 = vadd.f32 0.0, %v608
      %v610 = vpop.f32.mrb[0].mxu0
      %611 = vmatprep.mubr.f32.mxu0 0.0
      %612 = vmatmul.mubr.f32.gmra.mrb[0].mxu0 %v534
      %v613 = vpop.f32.mrb[0].mxu0
      %v614 = vadd.f32 0.0, %v613
      %v615 = vpop.f32.mrb[0].mxu0
      %616 = vmatprep.mubr.f32.mxu0 0.0
      %617 = vmatmul.mubr.f32.gmra.mrb[0].mxu0 %v537
      %v618 = vpop.f32.mrb[0].mxu0
      %v619 = vadd.f32 0.0, %v618
      %v620 = vpop.f32.mrb[0].mxu0
      %621 = vmatprep.mubr.f32.mxu0 0.0
      %622 = vmatmul.mubr.f32.gmra.mrb[0].mxu0 %v540
      %v623 = vpop.f32.mrb[0].mxu0
      %v624 = vadd.f32 0.0, %v623
      %v625 = vpop.f32.mrb[0].mxu0
      %626 = vdwg.mxu0
      %v627 = vadd.f32 %v509, %v609
      %v628 = vadd.f32 %v510, %v614
      %v629 = vadd.f32 %v511, %v619
      %v630 = vadd.f32 %v512, %v624
      %s631 = scalar_lea.vmem %s1, 128
      %v632 = vld [vmem:[%s631] sm:$0xff]
      %v633 = vld [vmem:[%s631 + $0x8] sm:$0xff]
      %v634 = vld [vmem:[%s631 + $0x10] sm:$0xff]
      %v635 = vld [vmem:[%s631 + $0x18] sm:$0xff]
      %636 = vrot.lane.b32.xlu0 %v171, 123
      %v637 = vpop.permute.xlu0 %636
      %638 = vrot.lane.b32.xlu0 %v172, 123
      %v639 = vpop.permute.xlu0 %638
      %640 = vrot.lane.b32.xlu0 %v173, 123
      %v641 = vpop.permute.xlu0 %640
      %642 = vrot.lane.b32.xlu0 %v174, 123
      %v643 = vpop.permute.xlu0 %642
      %v649 = vsel %vm200, %v632, 0
      %v652 = vsel %vm200, %v633, 0
      %v655 = vsel %vm200, %v634, 0
      %v658 = vsel %vm200, %v635, 0
      %660 = vmatprep.subr.mxu0 0.0
      %661 = vmatpush1.msra.mxu0 %v637
      %662 = vmatprep.subr.mxu0 0.0
      %663 = vmatpush1.msra.mxu0 %v639
      %664 = vmatprep.subr.mxu0 0.0
      %665 = vmatpush1.msra.mxu0 %v641
      %666 = vmatprep.subr.mxu0 0.0
      %667 = vmatpush1.msra.mxu0 %v643
      %668 = vmatprep.subr.mxu0 0.0
      %669 = vmatpush1.msra.mxu0 0.0
      %670 = vmatprep.subr.mxu0 0.0
      %671 = vmatpush1.msra.mxu0 0.0
      %672 = vmatprep.subr.mxu0 0.0
      %673 = vmatpush1.msra.mxu0 0.0
      %674 = vmatprep.subr.mxu0 0.0
      %675 = vmatpush1.msra.mxu0 0.0
      %676 = vmatprep.subr.mxu0 0.0
      %677 = vmatpush1.msra.mxu0 0.0
      %678 = vmatprep.subr.mxu0 0.0
      %679 = vmatpush1.msra.mxu0 0.0
      %680 = vmatprep.subr.mxu0 0.0
      %681 = vmatpush1.msra.mxu0 0.0
      %682 = vmatprep.subr.mxu0 0.0
      %683 = vmatpush1.msra.mxu0 0.0
      %684 = vmatprep.subr.mxu0 0.0
      %685 = vmatpush1.msra.mxu0 0.0
      %686 = vmatprep.subr.mxu0 0.0
      %687 = vmatpush1.msra.mxu0 0.0
      %688 = vmatprep.subr.mxu0 0.0
      %689 = vmatpush1.msra.mxu0 0.0
      %690 = vmatprep.subr.mxu0 0.0
      %691 = vmatpush1.msra.mxu0 0.0
      %692 = vmatprep.subr.mxu0 0.0
      %693 = vmatpush1.msra.mxu0 0.0
      %694 = vmatprep.subr.mxu0 0.0
      %695 = vmatpush1.msra.mxu0 0.0
      %696 = vmatprep.subr.mxu0 0.0
      %697 = vmatpush1.msra.mxu0 0.0
      %698 = vmatprep.subr.mxu0 0.0
      %699 = vmatpush1.msra.mxu0 0.0
      %700 = vmatprep.subr.mxu0 0.0
      %701 = vmatpush1.msra.mxu0 0.0
      %702 = vmatprep.subr.mxu0 0.0
      %703 = vmatpush1.msra.mxu0 0.0
      %704 = vmatprep.subr.mxu0 0.0
      %705 = vmatpush1.msra.mxu0 0.0
      %706 = vmatprep.subr.mxu0 0.0
      %707 = vmatpush1.msra.mxu0 0.0
      %708 = vmatprep.subr.mxu0 0.0
      %709 = vmatpush1.msra.mxu0 0.0
      %710 = vmatprep.subr.mxu0 0.0
      %711 = vmatpush1.msra.mxu0 0.0
      %712 = vmatprep.subr.mxu0 0.0
      %713 = vmatpush1.msra.mxu0 0.0
      %714 = vmatprep.subr.mxu0 0.0
      %715 = vmatpush1.msra.mxu0 0.0
      %716 = vmatprep.subr.mxu0 0.0
      %717 = vmatpush1.msra.mxu0 0.0
      %718 = vmatprep.subr.mxu0 0.0
      %719 = vmatpush1.msra.mxu0 0.0
      %720 = vmatprep.subr.mxu0 0.0
      %721 = vmatpush1.msra.mxu0 0.0
      %722 = vmatprep.subr.mxu0 0.0
      %723 = vmatpush1.msra.mxu0 0.0
      %724 = vmatprep.mubr.f32.mxu0 0.0
      %725 = vmatmul.mubr.f32.gmra.mrb[0].mxu0 %v649
      %v726 = vpop.f32.mrb[0].mxu0
      %v727 = vadd.f32 0.0, %v726
      %v728 = vpop.f32.mrb[0].mxu0
      %729 = vmatprep.mubr.f32.mxu0 0.0
      %730 = vmatmul.mubr.f32.gmra.mrb[0].mxu0 %v652
      %v731 = vpop.f32.mrb[0].mxu0
      %v732 = vadd.f32 0.0, %v731
      %v733 = vpop.f32.mrb[0].mxu0
      %734 = vmatprep.mubr.f32.mxu0 0.0
      %735 = vmatmul.mubr.f32.gmra.mrb[0].mxu0 %v655
      %v736 = vpop.f32.mrb[0].mxu0
      %v737 = vadd.f32 0.0, %v736
      %v738 = vpop.f32.mrb[0].mxu0
      %739 = vmatprep.mubr.f32.mxu0 0.0
      %740 = vmatmul.mubr.f32.gmra.mrb[0].mxu0 %v658
      %v741 = vpop.f32.mrb[0].mxu0
      %v742 = vadd.f32 0.0, %v741
      %v743 = vpop.f32.mrb[0].mxu0
      %744 = vdwg.mxu0
      %v745 = vadd.f32 %v627, %v727
      %v746 = vadd.f32 %v628, %v732
      %v747 = vadd.f32 %v629, %v737
      %v748 = vadd.f32 %v630, %v742
      %s749 = scalar_lea.vmem %s1, 160
      %v750 = vld [vmem:[%s749] sm:$0xff]
      %v751 = vld [vmem:[%s749 + $0x8] sm:$0xff]
      %v752 = vld [vmem:[%s749 + $0x10] sm:$0xff]
      %v753 = vld [vmem:[%s749 + $0x18] sm:$0xff]
      %754 = vrot.lane.b32.xlu0 %v171, 122
      %v755 = vpop.permute.xlu0 %754
      %756 = vrot.lane.b32.xlu0 %v172, 122
      %v757 = vpop.permute.xlu0 %756
      %758 = vrot.lane.b32.xlu0 %v173, 122
      %v759 = vpop.permute.xlu0 %758
      %760 = vrot.lane.b32.xlu0 %v174, 122
      %v761 = vpop.permute.xlu0 %760
      %v767 = vsel %vm200, %v750, 0
      %v770 = vsel %vm200, %v751, 0
      %v773 = vsel %vm200, %v752, 0
      %v776 = vsel %vm200, %v753, 0
      %778 = vmatprep.subr.mxu0 0.0
      %779 = vmatpush1.msra.mxu0 %v755
      %780 = vmatprep.subr.mxu0 0.0
      %781 = vmatpush1.msra.mxu0 %v757
      %782 = vmatprep.subr.mxu0 0.0
      %783 = vmatpush1.msra.mxu0 %v759
      %784 = vmatprep.subr.mxu0 0.0
      %785 = vmatpush1.msra.mxu0 %v761
      %786 = vmatprep.subr.mxu0 0.0
      %787 = vmatpush1.msra.mxu0 0.0
      %788 = vmatprep.subr.mxu0 0.0
      %789 = vmatpush1.msra.mxu0 0.0
      %790 = vmatprep.subr.mxu0 0.0
      %791 = vmatpush1.msra.mxu0 0.0
      %792 = vmatprep.subr.mxu0 0.0
      %793 = vmatpush1.msra.mxu0 0.0
      %794 = vmatprep.subr.mxu0 0.0
      %795 = vmatpush1.msra.mxu0 0.0
      %796 = vmatprep.subr.mxu0 0.0
      %797 = vmatpush1.msra.mxu0 0.0
      %798 = vmatprep.subr.mxu0 0.0
      %799 = vmatpush1.msra.mxu0 0.0
      %800 = vmatprep.subr.mxu0 0.0
      %801 = vmatpush1.msra.mxu0 0.0
      %802 = vmatprep.subr.mxu0 0.0
      %803 = vmatpush1.msra.mxu0 0.0
      %804 = vmatprep.subr.mxu0 0.0
      %805 = vmatpush1.msra.mxu0 0.0
      %806 = vmatprep.subr.mxu0 0.0
      %807 = vmatpush1.msra.mxu0 0.0
      %808 = vmatprep.subr.mxu0 0.0
      %809 = vmatpush1.msra.mxu0 0.0
      %810 = vmatprep.subr.mxu0 0.0
      %811 = vmatpush1.msra.mxu0 0.0
      %812 = vmatprep.subr.mxu0 0.0
      %813 = vmatpush1.msra.mxu0 0.0
      %814 = vmatprep.subr.mxu0 0.0
      %815 = vmatpush1.msra.mxu0 0.0
      %816 = vmatprep.subr.mxu0 0.0
      %817 = vmatpush1.msra.mxu0 0.0
      %818 = vmatprep.subr.mxu0 0.0
      %819 = vmatpush1.msra.mxu0 0.0
      %820 = vmatprep.subr.mxu0 0.0
      %821 = vmatpush1.msra.mxu0 0.0
      %822 = vmatprep.subr.mxu0 0.0
      %823 = vmatpush1.msra.mxu0 0.0
      %824 = vmatprep.subr.mxu0 0.0
      %825 = vmatpush1.msra.mxu0 0.0
      %826 = vmatprep.subr.mxu0 0.0
      %827 = vmatpush1.msra.mxu0 0.0
      %828 = vmatprep.subr.mxu0 0.0
      %829 = vmatpush1.msra.mxu0 0.0
      %830 = vmatprep.subr.mxu0 0.0
      %831 = vmatpush1.msra.mxu0 0.0
      %832 = vmatprep.subr.mxu0 0.0
      %833 = vmatpush1.msra.mxu0 0.0
      %834 = vmatprep.subr.mxu0 0.0
      %835 = vmatpush1.msra.mxu0 0.0
      %836 = vmatprep.subr.mxu0 0.0
      %837 = vmatpush1.msra.mxu0 0.0
      %838 = vmatprep.subr.mxu0 0.0
      %839 = vmatpush1.msra.mxu0 0.0
      %840 = vmatprep.subr.mxu0 0.0
      %841 = vmatpush1.msra.mxu0 0.0
      %842 = vmatprep.mubr.f32.mxu0 0.0
      %843 = vmatmul.mubr.f32.gmra.mrb[0].mxu0 %v767
      %v844 = vpop.f32.mrb[0].mxu0
      %v845 = vadd.f32 0.0, %v844
      %v846 = vpop.f32.mrb[0].mxu0
      %847 = vmatprep.mubr.f32.mxu0 0.0
      %848 = vmatmul.mubr.f32.gmra.mrb[0].mxu0 %v770
      %v849 = vpop.f32.mrb[0].mxu0
      %v850 = vadd.f32 0.0, %v849
      %v851 = vpop.f32.mrb[0].mxu0
      %852 = vmatprep.mubr.f32.mxu0 0.0
      %853 = vmatmul.mubr.f32.gmra.mrb[0].mxu0 %v773
      %v854 = vpop.f32.mrb[0].mxu0
      %v855 = vadd.f32 0.0, %v854
      %v856 = vpop.f32.mrb[0].mxu0
      %857 = vmatprep.mubr.f32.mxu0 0.0
      %858 = vmatmul.mubr.f32.gmra.mrb[0].mxu0 %v776
      %v859 = vpop.f32.mrb[0].mxu0
      %v860 = vadd.f32 0.0, %v859
      %v861 = vpop.f32.mrb[0].mxu0
      %862 = vdwg.mxu0
      %v863 = vadd.f32 %v745, %v845
      %v864 = vadd.f32 %v746, %v850
      %v865 = vadd.f32 %v747, %v855
      %v866 = vadd.f32 %v748, %v860
      %s867 = scalar_lea.vmem %s1, 192
      %v868 = vld [vmem:[%s867] sm:$0xff]
      %v869 = vld [vmem:[%s867 + $0x8] sm:$0xff]
      %v870 = vld [vmem:[%s867 + $0x10] sm:$0xff]
      %v871 = vld [vmem:[%s867 + $0x18] sm:$0xff]
      %872 = vrot.lane.b32.xlu0 %v171, 120
      %v873 = vpop.permute.xlu0 %872
      %874 = vrot.lane.b32.xlu0 %v172, 120
      %v875 = vpop.permute.xlu0 %874
      %876 = vrot.lane.b32.xlu0 %v173, 120
      %v877 = vpop.permute.xlu0 %876
      %878 = vrot.lane.b32.xlu0 %v174, 120
      %v879 = vpop.permute.xlu0 %878
      %v885 = vsel %vm200, %v868, 0
      %v888 = vsel %vm200, %v869, 0
      %v891 = vsel %vm200, %v870, 0
      %v894 = vsel %vm200, %v871, 0
      %896 = vmatprep.subr.mxu0 0.0
      %897 = vmatpush1.msra.mxu0 %v873
      %898 = vmatprep.subr.mxu0 0.0
      %899 = vmatpush1.msra.mxu0 %v875
      %900 = vmatprep.subr.mxu0 0.0
      %901 = vmatpush1.msra.mxu0 %v877
      %902 = vmatprep.subr.mxu0 0.0
      %903 = vmatpush1.msra.mxu0 %v879
      %904 = vmatprep.subr.mxu0 0.0
      %905 = vmatpush1.msra.mxu0 0.0
      %906 = vmatprep.subr.mxu0 0.0
      %907 = vmatpush1.msra.mxu0 0.0
      %908 = vmatprep.subr.mxu0 0.0
      %909 = vmatpush1.msra.mxu0 0.0
      %910 = vmatprep.subr.mxu0 0.0
      %911 = vmatpush1.msra.mxu0 0.0
      %912 = vmatprep.subr.mxu0 0.0
      %913 = vmatpush1.msra.mxu0 0.0
      %914 = vmatprep.subr.mxu0 0.0
      %915 = vmatpush1.msra.mxu0 0.0
      %916 = vmatprep.subr.mxu0 0.0
      %917 = vmatpush1.msra.mxu0 0.0
      %918 = vmatprep.subr.mxu0 0.0
      %919 = vmatpush1.msra.mxu0 0.0
      %920 = vmatprep.subr.mxu0 0.0
      %921 = vmatpush1.msra.mxu0 0.0
      %922 = vmatprep.subr.mxu0 0.0
      %923 = vmatpush1.msra.mxu0 0.0
      %924 = vmatprep.subr.mxu0 0.0
      %925 = vmatpush1.msra.mxu0 0.0
      %926 = vmatprep.subr.mxu0 0.0
      %927 = vmatpush1.msra.mxu0 0.0
      %928 = vmatprep.subr.mxu0 0.0
      %929 = vmatpush1.msra.mxu0 0.0
      %930 = vmatprep.subr.mxu0 0.0
      %931 = vmatpush1.msra.mxu0 0.0
      %932 = vmatprep.subr.mxu0 0.0
      %933 = vmatpush1.msra.mxu0 0.0
      %934 = vmatprep.subr.mxu0 0.0
      %935 = vmatpush1.msra.mxu0 0.0
      %936 = vmatprep.subr.mxu0 0.0
      %937 = vmatpush1.msra.mxu0 0.0
      %938 = vmatprep.subr.mxu0 0.0
      %939 = vmatpush1.msra.mxu0 0.0
      %940 = vmatprep.subr.mxu0 0.0
      %941 = vmatpush1.msra.mxu0 0.0
      %942 = vmatprep.subr.mxu0 0.0
      %943 = vmatpush1.msra.mxu0 0.0
      %944 = vmatprep.subr.mxu0 0.0
      %945 = vmatpush1.msra.mxu0 0.0
      %946 = vmatprep.subr.mxu0 0.0
      %947 = vmatpush1.msra.mxu0 0.0
      %948 = vmatprep.subr.mxu0 0.0
      %949 = vmatpush1.msra.mxu0 0.0
      %950 = vmatprep.subr.mxu0 0.0
      %951 = vmatpush1.msra.mxu0 0.0
      %952 = vmatprep.subr.mxu0 0.0
      %953 = vmatpush1.msra.mxu0 0.0
      %954 = vmatprep.subr.mxu0 0.0
      %955 = vmatpush1.msra.mxu0 0.0
      %956 = vmatprep.subr.mxu0 0.0
      %957 = vmatpush1.msra.mxu0 0.0
      %958 = vmatprep.subr.mxu0 0.0
      %959 = vmatpush1.msra.mxu0 0.0
      %960 = vmatprep.mubr.f32.mxu0 0.0
      %961 = vmatmul.mubr.f32.gmra.mrb[0].mxu0 %v885
      %v962 = vpop.f32.mrb[0].mxu0
      %v963 = vadd.f32 0.0, %v962
      %v964 = vpop.f32.mrb[0].mxu0
      %965 = vmatprep.mubr.f32.mxu0 0.0
      %966 = vmatmul.mubr.f32.gmra.mrb[0].mxu0 %v888
      %v967 = vpop.f32.mrb[0].mxu0
      %v968 = vadd.f32 0.0, %v967
      %v969 = vpop.f32.mrb[0].mxu0
      %970 = vmatprep.mubr.f32.mxu0 0.0
      %971 = vmatmul.mubr.f32.gmra.mrb[0].mxu0 %v891
      %v972 = vpop.f32.mrb[0].mxu0
      %v973 = vadd.f32 0.0, %v972
      %v974 = vpop.f32.mrb[0].mxu0
      %975 = vmatprep.mubr.f32.mxu0 0.0
      %976 = vmatmul.mubr.f32.gmra.mrb[0].mxu0 %v894
      %v977 = vpop.f32.mrb[0].mxu0
      %v978 = vadd.f32 0.0, %v977
      %v979 = vpop.f32.mrb[0].mxu0
      %980 = vdwg.mxu0
      %v981 = vadd.f32 %v863, %v963
      %v982 = vadd.f32 %v864, %v968
      %v983 = vadd.f32 %v865, %v973
      %v984 = vadd.f32 %v866, %v978
      %s985 = scalar_lea.vmem %s1, 224
      %v986 = vld [vmem:[%s985] sm:$0xff]
      %v987 = vld [vmem:[%s985 + $0x8] sm:$0xff]
      %v988 = vld [vmem:[%s985 + $0x10] sm:$0xff]
      %v989 = vld [vmem:[%s985 + $0x18] sm:$0xff]
      %990 = vrot.lane.b32.xlu0 %v171, 119
      %v991 = vpop.permute.xlu0 %990
      %992 = vrot.lane.b32.xlu0 %v172, 119
      %v993 = vpop.permute.xlu0 %992
      %994 = vrot.lane.b32.xlu0 %v173, 119
      %v995 = vpop.permute.xlu0 %994
      %996 = vrot.lane.b32.xlu0 %v174, 119
      %v997 = vpop.permute.xlu0 %996
      %v1003 = vsel %vm200, %v986, 0
      %v1006 = vsel %vm200, %v987, 0
      %v1009 = vsel %vm200, %v988, 0
      %v1012 = vsel %vm200, %v989, 0
      %1014 = vmatprep.subr.mxu0 0.0
      %1015 = vmatpush1.msra.mxu0 %v991
      %1016 = vmatprep.subr.mxu0 0.0
      %1017 = vmatpush1.msra.mxu0 %v993
      %1018 = vmatprep.subr.mxu0 0.0
      %1019 = vmatpush1.msra.mxu0 %v995
      %1020 = vmatprep.subr.mxu0 0.0
      %1021 = vmatpush1.msra.mxu0 %v997
      %1022 = vmatprep.subr.mxu0 0.0
      %1023 = vmatpush1.msra.mxu0 0.0
      %1024 = vmatprep.subr.mxu0 0.0
      %1025 = vmatpush1.msra.mxu0 0.0
      %1026 = vmatprep.subr.mxu0 0.0
      %1027 = vmatpush1.msra.mxu0 0.0
      %1028 = vmatprep.subr.mxu0 0.0
      %1029 = vmatpush1.msra.mxu0 0.0
      %1030 = vmatprep.subr.mxu0 0.0
      %1031 = vmatpush1.msra.mxu0 0.0
      %1032 = vmatprep.subr.mxu0 0.0
      %1033 = vmatpush1.msra.mxu0 0.0
      %1034 = vmatprep.subr.mxu0 0.0
      %1035 = vmatpush1.msra.mxu0 0.0
      %1036 = vmatprep.subr.mxu0 0.0
      %1037 = vmatpush1.msra.mxu0 0.0
      %1038 = vmatprep.subr.mxu0 0.0
      %1039 = vmatpush1.msra.mxu0 0.0
      %1040 = vmatprep.subr.mxu0 0.0
      %1041 = vmatpush1.msra.mxu0 0.0
      %1042 = vmatprep.subr.mxu0 0.0
      %1043 = vmatpush1.msra.mxu0 0.0
      %1044 = vmatprep.subr.mxu0 0.0
      %1045 = vmatpush1.msra.mxu0 0.0
      %1046 = vmatprep.subr.mxu0 0.0
      %1047 = vmatpush1.msra.mxu0 0.0
      %1048 = vmatprep.subr.mxu0 0.0
      %1049 = vmatpush1.msra.mxu0 0.0
      %1050 = vmatprep.subr.mxu0 0.0
      %1051 = vmatpush1.msra.mxu0 0.0
      %1052 = vmatprep.subr.mxu0 0.0
      %1053 = vmatpush1.msra.mxu0 0.0
      %1054 = vmatprep.subr.mxu0 0.0
      %1055 = vmatpush1.msra.mxu0 0.0
      %1056 = vmatprep.subr.mxu0 0.0
      %1057 = vmatpush1.msra.mxu0 0.0
      %1058 = vmatprep.subr.mxu0 0.0
      %1059 = vmatpush1.msra.mxu0 0.0
      %1060 = vmatprep.subr.mxu0 0.0
      %1061 = vmatpush1.msra.mxu0 0.0
      %1062 = vmatprep.subr.mxu0 0.0
      %1063 = vmatpush1.msra.mxu0 0.0
      %1064 = vmatprep.subr.mxu0 0.0
      %1065 = vmatpush1.msra.mxu0 0.0
      %1066 = vmatprep.subr.mxu0 0.0
      %1067 = vmatpush1.msra.mxu0 0.0
      %1068 = vmatprep.subr.mxu0 0.0
      %1069 = vmatpush1.msra.mxu0 0.0
      %1070 = vmatprep.subr.mxu0 0.0
      %1071 = vmatpush1.msra.mxu0 0.0
      %1072 = vmatprep.subr.mxu0 0.0
      %1073 = vmatpush1.msra.mxu0 0.0
      %1074 = vmatprep.subr.mxu0 0.0
      %1075 = vmatpush1.msra.mxu0 0.0
      %1076 = vmatprep.subr.mxu0 0.0
      %1077 = vmatpush1.msra.mxu0 0.0
      %1078 = vmatprep.mubr.f32.mxu0 0.0
      %1079 = vmatmul.mubr.f32.gmra.mrb[0].mxu0 %v1003
      %v1080 = vpop.f32.mrb[0].mxu0
      %v1081 = vadd.f32 0.0, %v1080
      %v1082 = vpop.f32.mrb[0].mxu0
      %1083 = vmatprep.mubr.f32.mxu0 0.0
      %1084 = vmatmul.mubr.f32.gmra.mrb[0].mxu0 %v1006
      %v1085 = vpop.f32.mrb[0].mxu0
      %v1086 = vadd.f32 0.0, %v1085
      %v1087 = vpop.f32.mrb[0].mxu0
      %1088 = vmatprep.mubr.f32.mxu0 0.0
      %1089 = vmatmul.mubr.f32.gmra.mrb[0].mxu0 %v1009
      %v1090 = vpop.f32.mrb[0].mxu0
      %v1091 = vadd.f32 0.0, %v1090
      %v1092 = vpop.f32.mrb[0].mxu0
      %1093 = vmatprep.mubr.f32.mxu0 0.0
      %1094 = vmatmul.mubr.f32.gmra.mrb[0].mxu0 %v1012
      %v1095 = vpop.f32.mrb[0].mxu0
      %v1096 = vadd.f32 0.0, %v1095
      %v1097 = vpop.f32.mrb[0].mxu0
      %1098 = vdwg.mxu0
      %v1099 = vadd.f32 %v981, %v1081
      %v1100 = vadd.f32 %v982, %v1086
      %v1101 = vadd.f32 %v983, %v1091
      %v1102 = vadd.f32 %v984, %v1096
      %s1103 = scalar_lea.vmem %s1, 256
      %v1104 = vld [vmem:[%s1103] sm:$0xff]
      %v1105 = vld [vmem:[%s1103 + $0x8] sm:$0xff]
      %v1106 = vld [vmem:[%s1103 + $0x10] sm:$0xff]
      %v1107 = vld [vmem:[%s1103 + $0x18] sm:$0xff]
      %1108 = vrot.lane.b32.xlu0 %v171, 118
      %v1109 = vpop.permute.xlu0 %1108
      %1110 = vrot.lane.b32.xlu0 %v172, 118
      %v1111 = vpop.permute.xlu0 %1110
      %1112 = vrot.lane.b32.xlu0 %v173, 118
      %v1113 = vpop.permute.xlu0 %1112
      %1114 = vrot.lane.b32.xlu0 %v174, 118
      %v1115 = vpop.permute.xlu0 %1114
      %v1121 = vsel %vm200, %v1104, 0
      %v1124 = vsel %vm200, %v1105, 0
      %v1127 = vsel %vm200, %v1106, 0
      %v1130 = vsel %vm200, %v1107, 0
      %1132 = vmatprep.subr.mxu0 0.0
      %1133 = vmatpush1.msra.mxu0 %v1109
      %1134 = vmatprep.subr.mxu0 0.0
      %1135 = vmatpush1.msra.mxu0 %v1111
      %1136 = vmatprep.subr.mxu0 0.0
      %1137 = vmatpush1.msra.mxu0 %v1113
      %1138 = vmatprep.subr.mxu0 0.0
      %1139 = vmatpush1.msra.mxu0 %v1115
      %1140 = vmatprep.subr.mxu0 0.0
      %1141 = vmatpush1.msra.mxu0 0.0
      %1142 = vmatprep.subr.mxu0 0.0
      %1143 = vmatpush1.msra.mxu0 0.0
      %1144 = vmatprep.subr.mxu0 0.0
      %1145 = vmatpush1.msra.mxu0 0.0
      %1146 = vmatprep.subr.mxu0 0.0
      %1147 = vmatpush1.msra.mxu0 0.0
      %1148 = vmatprep.subr.mxu0 0.0
      %1149 = vmatpush1.msra.mxu0 0.0
      %1150 = vmatprep.subr.mxu0 0.0
      %1151 = vmatpush1.msra.mxu0 0.0
      %1152 = vmatprep.subr.mxu0 0.0
      %1153 = vmatpush1.msra.mxu0 0.0
      %1154 = vmatprep.subr.mxu0 0.0
      %1155 = vmatpush1.msra.mxu0 0.0
      %1156 = vmatprep.subr.mxu0 0.0
      %1157 = vmatpush1.msra.mxu0 0.0
      %1158 = vmatprep.subr.mxu0 0.0
      %1159 = vmatpush1.msra.mxu0 0.0
      %1160 = vmatprep.subr.mxu0 0.0
      %1161 = vmatpush1.msra.mxu0 0.0
      %1162 = vmatprep.subr.mxu0 0.0
      %1163 = vmatpush1.msra.mxu0 0.0
      %1164 = vmatprep.subr.mxu0 0.0
      %1165 = vmatpush1.msra.mxu0 0.0
      %1166 = vmatprep.subr.mxu0 0.0
      %1167 = vmatpush1.msra.mxu0 0.0
      %1168 = vmatprep.subr.mxu0 0.0
      %1169 = vmatpush1.msra.mxu0 0.0
      %1170 = vmatprep.subr.mxu0 0.0
      %1171 = vmatpush1.msra.mxu0 0.0
      %1172 = vmatprep.subr.mxu0 0.0
      %1173 = vmatpush1.msra.mxu0 0.0
      %1174 = vmatprep.subr.mxu0 0.0
      %1175 = vmatpush1.msra.mxu0 0.0
      %1176 = vmatprep.subr.mxu0 0.0
      %1177 = vmatpush1.msra.mxu0 0.0
      %1178 = vmatprep.subr.mxu0 0.0
      %1179 = vmatpush1.msra.mxu0 0.0
      %1180 = vmatprep.subr.mxu0 0.0
      %1181 = vmatpush1.msra.mxu0 0.0
      %1182 = vmatprep.subr.mxu0 0.0
      %1183 = vmatpush1.msra.mxu0 0.0
      %1184 = vmatprep.subr.mxu0 0.0
      %1185 = vmatpush1.msra.mxu0 0.0
      %1186 = vmatprep.subr.mxu0 0.0
      %1187 = vmatpush1.msra.mxu0 0.0
      %1188 = vmatprep.subr.mxu0 0.0
      %1189 = vmatpush1.msra.mxu0 0.0
      %1190 = vmatprep.subr.mxu0 0.0
      %1191 = vmatpush1.msra.mxu0 0.0
      %1192 = vmatprep.subr.mxu0 0.0
      %1193 = vmatpush1.msra.mxu0 0.0
      %1194 = vmatprep.subr.mxu0 0.0
      %1195 = vmatpush1.msra.mxu0 0.0
      %1196 = vmatprep.mubr.f32.mxu0 0.0
      %1197 = vmatmul.mubr.f32.gmra.mrb[0].mxu0 %v1121
      %v1198 = vpop.f32.mrb[0].mxu0
      %v1199 = vadd.f32 0.0, %v1198
      %v1200 = vpop.f32.mrb[0].mxu0
      %1201 = vmatprep.mubr.f32.mxu0 0.0
      %1202 = vmatmul.mubr.f32.gmra.mrb[0].mxu0 %v1124
      %v1203 = vpop.f32.mrb[0].mxu0
      %v1204 = vadd.f32 0.0, %v1203
      %v1205 = vpop.f32.mrb[0].mxu0
      %1206 = vmatprep.mubr.f32.mxu0 0.0
      %1207 = vmatmul.mubr.f32.gmra.mrb[0].mxu0 %v1127
      %v1208 = vpop.f32.mrb[0].mxu0
      %v1209 = vadd.f32 0.0, %v1208
      %v1210 = vpop.f32.mrb[0].mxu0
      %1211 = vmatprep.mubr.f32.mxu0 0.0
      %1212 = vmatmul.mubr.f32.gmra.mrb[0].mxu0 %v1130
      %v1213 = vpop.f32.mrb[0].mxu0
      %v1214 = vadd.f32 0.0, %v1213
      %v1215 = vpop.f32.mrb[0].mxu0
      %1216 = vdwg.mxu0
      %v1217 = vadd.f32 %v1099, %v1199
      %v1218 = vadd.f32 %v1100, %v1204
      %v1219 = vadd.f32 %v1101, %v1209
      %v1220 = vadd.f32 %v1102, %v1214
      %v1221 = vld [vmem:[%s2] sm:$0xff]
      %v1222 = vld [vmem:[%s2 + $0x8] sm:$0xff]
      %v1223 = vld [vmem:[%s2 + $0x10] sm:$0xff]
      %v1224 = vld [vmem:[%s2 + $0x18] sm:$0xff]
      %1226 = vset.pattern.permute.xlu0 0
      %1227 = vperm.xlu0 %1226, %v1221
      %v1228 = vpop.permute.xlu0 %1227
      %1231 = vset.pattern.permute.xlu0 0
      %1232 = vperm.xlu0 %1231, %v1222
      %v1233 = vpop.permute.xlu0 %1232
      %1236 = vset.pattern.permute.xlu0 0
      %1237 = vperm.xlu0 %1236, %v1223
      %v1238 = vpop.permute.xlu0 %1237
      %1241 = vset.pattern.permute.xlu0 0
      %1242 = vperm.xlu0 %1241, %v1224
      %v1243 = vpop.permute.xlu0 %1242
      %v1245 = vadd.f32 %v1217, %v1228
      %v1246 = vadd.f32 %v1218, %v1233
      %v1247 = vadd.f32 %v1219, %v1238
      %v1248 = vadd.f32 %v1220, %v1243
      %vm1249 = vcmp.ge.f32.partialorder %v1245, 0.0
      %vm1250 = vcmp.ge.f32.partialorder %v1246, 0.0
      %vm1251 = vcmp.ge.f32.partialorder %v1247, 0.0
      %vm1252 = vcmp.ge.f32.partialorder %v1248, 0.0
      %v1253 = vmul.f32 %v1245, 0.1
      %v1254 = vmul.f32 %v1246, 0.1
      %v1255 = vmul.f32 %v1247, 0.1
      %v1256 = vmul.f32 %v1248, 0.1
      %v1257 = vsel %vm1249, %v1245, %v1253
      %v1258 = vsel %vm1250, %v1246, %v1254
      %v1259 = vsel %vm1251, %v1247, %v1255
      %v1260 = vsel %vm1252, %v1248, %v1256
      %vm1261 = vcmask 64512
      %1262 = vst.msk [vmem:[%s170] sm:$0xff] %vm1261, %v1257
      %1263 = vst.msk [vmem:[%s170 + $0x8] sm:$0xff] %vm1261, %v1258
      %1264 = vst.msk [vmem:[%s170 + $0x10] sm:$0xff] %vm1261, %v1259
      %1265 = vst.msk [vmem:[%s170 + $0x18] sm:$0xff] %vm1261, %v1260
      %p1266 = scmp.lt.s32.totalorder %s14, 1
      %s1267 = scalar_select %p1266, %s14, 1
      %s1268 = smul.addr %s1267, 4
      %s1269 = smul.addr %s1268, 8
      %s1270 = scalar_lea.vmem %s3, %s1269
      // Predicated region
      $region33: #{_lambda_.11} parent=31 // pred_check
        %p1271 = pneg %p100
      $region34: #{_lambda_.11} parent=31 // pred_check_branch
        %1273 = sbr.rel (%p1271) target = $region36
      $region35: #{_lambda_.11} parent=31 // pred_region
        _
      $region36: #{_lambda_.11} parent=31 // pred_fallthru
        _
    $region32: #{_lambda_.11} parent=5 // pred_fallthru
      _
    %p1274 = scmp.le.s32.totalorder 2, %s9
    // Predicated region
    $region37: #{_lambda_.11} parent=5 // pred_check
      %p1275 = pneg %p1274
    $region38: #{_lambda_.11} parent=5 // pred_check_branch
      %1277 = sbr.rel (%p1275) target = $region40
    $region39: #{_lambda_.11} parent=5 // pred_region
      %s1278 = ssub.s32 %s9, 2
      // Predicated region
      $region41: #{_lambda_.11} parent=39 // pred_check
        %p1279 = pneg %p106
      $region42: #{_lambda_.11} parent=39 // pred_check_branch
        %1281 = sbr.rel (%p1279) target = $region44
      $region43: #{_lambda_.11} parent=39 // pred_region
        %p1282 = scmp.lt.s32.totalorder %s15, 1
        %s1283 = scalar_select %p1282, %s15, 1
        %s1284 = smul.addr %s1283, 4
        %s1285 = smul.addr %s1284, 8
        %s1286 = scalar_lea.vmem %s3, %s1285
      $region44: #{_lambda_.11} parent=39 // pred_fallthru
        _
    $region40: #{_lambda_.11} parent=5 // pred_fallthru
      _
  $region6: #{_lambda_.11} parent=0 // loop_footer
    %s13 = sadd.s32 1, %s9
  $region7: #{_lambda_.11} parent=0 // loop_footer_branch
    %8 = sbr.rel target = $region3
  $region8: #{_lambda_.11} parent=0 // loop_exit
    _

</llo_original>
